<compile_context>
chip_gen: v7x
topology: tpu7x:2x2x1
jax: 0.10.0
libtpu: 0.0.40
codegen_flags: <defaults>
</compile_context>

<pallas_src>
import functools

import jax
import jax.numpy as jnp
from jax.experimental import pallas as pl
from jax.experimental.pallas import tpu as pltpu


# ----------------------------- weight packing ------------------------------ #

def _pack_conv1_weight(w, cin):
    """(Cout, Cin, 4, 4, 4) stride-2 weight -> (8 taps * 8 phases * Cin, Cout).

    kd = 2*a + pa (a = phase-grid tap, pa = stride phase); row layout is
    t*(8*Cin) + ph*Cin + i with t = a*4+b*2+c, ph = pa*4+pb*2+pc, matching the
    phase-packed input channels and the in-kernel tap concat order."""
    co = w.shape[0]
    wr = w.reshape(co, cin, 2, 2, 2, 2, 2, 2)           # (o,i,a,pa,b,pb,c,pc)
    wr = jnp.transpose(wr, (2, 4, 6, 3, 5, 7, 1, 0))    # (a,b,c,pa,pb,pc,i,o)
    return wr.reshape(64 * cin, co).astype(jnp.bfloat16)


def _pack_conv3_weight(w):
    """(Cout, Cin, 3, 3, 3) -> (27*Cin, Cout), tap-major / channel-minor."""
    co, ci = w.shape[0], w.shape[1]
    wr = jnp.transpose(w, (2, 3, 4, 1, 0))              # (a,b,c,i,o)
    return wr.reshape(27 * ci, co).astype(jnp.bfloat16)


# ------------------------------ fused kernel ------------------------------- #

def _make_encoder_kernel(hp_wp, wp, L, halo, do, ho, wo):
    """Kernel over one batch element; geometry constants are baked in.

    All spatial buffers are flattened over the padded (do+2, ho+2, wo+2) grid
    (L rows) with `halo` extra zero rows in front/back so every tap window is
    a contiguous forward slice."""
    offs1 = tuple(a * hp_wp + b * wp + c
                  for a in range(2) for b in range(2) for c in range(2))
    offs3 = tuple(a * hp_wp + b * wp + c
                  for a in range(3) for b in range(3) for c in range(3))

    def kernel(x1_ref, w1_ref, b1_ref, w2_ref, b2_ref, w3_ref, b3_ref,
               w4_ref, b4_ref, mask_ref, o_ref, buf_a, buf_b):
        mask = mask_ref[...]                 # (L, 1) f32, 1.0 on interior rows

        # Halo / padding rows must be zero (they play the role of the conv
        # zero-padding); the data region is fully overwritten below.
        buf_a[...] = jnp.zeros_like(buf_a)
        buf_b[...] = jnp.zeros_like(buf_b)

        def conv(read, offs, w_ref, b_ref, relu, masked):
            # Big-K im2col: concat shifted windows on the lane axis, then one
            # MXU matmul with f32 accumulation; bias + ReLU fused.
            patches = jnp.concatenate([read(off) for off in offs], axis=-1)
            acc = jnp.dot(patches, w_ref[...],
                          preferred_element_type=jnp.float32)
            acc = acc + b_ref[...]
            if relu:
                acc = jnp.maximum(acc, 0.0)
            if masked:
                acc = acc * mask             # zero the padding ring directly
            return acc

        # layer 1: k=4 s=2 conv (stride phases pre-packed into channels)
        y = conv(lambda off: x1_ref[0, off:off + L, :], offs1,
                 w1_ref, b1_ref, relu=True, masked=True)
        buf_a[halo:halo + L, :] = y.astype(buf_a.dtype)

        # layer 2: k=3 s=1
        y = conv(lambda off: buf_a[off:off + L, :], offs3,
                 w2_ref, b2_ref, relu=True, masked=True)
        buf_b[halo:halo + L, :] = y.astype(buf_b.dtype)

        # layer 3: k=3 s=1
        y = conv(lambda off: buf_b[off:off + L, :], offs3,
                 w3_ref, b3_ref, relu=True, masked=True)
        buf_a[halo:halo + L, :] = y.astype(buf_a.dtype)

        # layer 4: k=3 s=1, no ReLU; emit only the valid output voxels
        y = conv(lambda off: buf_a[off:off + L, :], offs3,
                 w4_ref, b4_ref, relu=False, masked=False)
        for z in range(do):
            for yy in range(ho):
                src = (z + 1) * hp_wp + (yy + 1) * wp + 1
                dst = (z * ho + yy) * wo
                o_ref[0, dst:dst + wo, :] = y[src:src + wo, :].astype(o_ref.dtype)

    return kernel


# --------------------------------- Encoder --------------------------------- #

def encoder_forward(x_ncdhw, params):
    n, cin, d, h, w = x_ncdhw.shape
    assert d % 2 == 0 and h % 2 == 0 and w % 2 == 0
    hid = params["w2"].shape[0]
    emb = params["w4"].shape[0]
    do, ho, wo = d // 2, h // 2, w // 2                  # spatial after conv1
    hp, wp = ho + 2, wo + 2
    hp_wp = hp * wp
    L = (do + 2) * hp_wp                                 # padded flat length
    halo = hp_wp + wp + 1                                # centered-tap shift
    l_out = do * ho * wo

    # --- layer-1 input prep: pad, pack the 8 stride phases into channels ---
    x = jnp.transpose(x_ncdhw, (0, 2, 3, 4, 1))                  # NDHWC
    xp = jnp.pad(x, ((0, 0), (1, 1), (1, 1), (1, 1), (0, 0)))
    phases = [xp[:, pa::2, pb::2, pc::2, :]
              for pa in range(2) for pb in range(2) for pc in range(2)]
    xpk = jnp.concatenate(phases, axis=-1)       # (N, do+1, ho+1, wo+1, 8*cin)
    # one trailing zero plane per axis so the flat strides match the padded
    # output grid, then `halo` zero rows in front for the centered taps
    x6 = jnp.pad(xpk, ((0, 0), (0, 1), (0, 1), (0, 1), (0, 0)))
    x_in = jnp.pad(x6.reshape(n, L, 8 * cin),
                   ((0, 0), (halo, 0), (0, 0))).astype(jnp.bfloat16)

    # --- weights / biases / interior mask (tiny, folded by XLA) ---
    w1b = _pack_conv1_weight(params["w1"], cin)
    w2b = _pack_conv3_weight(params["w2"])
    w3b = _pack_conv3_weight(params["w3"])
    w4b = _pack_conv3_weight(params["w4"])
    b1 = params["b1"].reshape(1, hid).astype(jnp.float32)
    b2 = params["b2"].reshape(1, hid).astype(jnp.float32)
    b3 = params["b3"].reshape(1, hid).astype(jnp.float32)
    b4 = params["b4"].reshape(1, emb).astype(jnp.float32)

    idx = jnp.arange(L)
    zz, rr = idx // hp_wp, idx % hp_wp
    yy, xx = rr // wp, rr % wp
    interior = ((zz >= 1) & (zz <= do) & (yy >= 1) & (yy <= ho)
                & (xx >= 1) & (xx <= wo))
    mask = interior.astype(jnp.float32).reshape(L, 1)

    k1, k3 = 64 * cin, 27 * hid
    cost = pl.CostEstimate(
        flops=2 * n * L * (k1 * hid + 2 * k3 * hid + k3 * emb),
        transcendentals=0,
        bytes_accessed=int(x_in.size * 2
                           + (w1b.size + w2b.size + w3b.size + w4b.size) * 2
                           + (3 * hid + emb) * 4 + mask.size * 4
                           + n * l_out * emb * 4))

    kernel = _make_encoder_kernel(hp_wp, wp, L, halo, do, ho, wo)

    def wspec(shape):
        return pl.BlockSpec(shape, lambda i: (0, 0))     # resident across grid

    out_rows = pl.pallas_call(
        kernel,
        out_shape=jax.ShapeDtypeStruct((n, l_out, emb), jnp.float32),
        grid_spec=pltpu.PrefetchScalarGridSpec(
            num_scalar_prefetch=0,
            grid=(n,),
            in_specs=[
                pl.BlockSpec((1, L + halo, 8 * cin), lambda i: (i, 0, 0)),
                wspec((k1, hid)), wspec((1, hid)),
                wspec((k3, hid)), wspec((1, hid)),
                wspec((k3, hid)), wspec((1, hid)),
                wspec((k3, emb)), wspec((1, emb)),
                wspec((L, 1)),
            ],
            out_specs=pl.BlockSpec((1, l_out, emb), lambda i: (i, 0, 0)),
            scratch_shapes=[pltpu.VMEM((L + 2 * halo, hid), jnp.bfloat16),
                            pltpu.VMEM((L + 2 * halo, hid), jnp.bfloat16)],
        ),
        compiler_params=pltpu.CompilerParams(
            dimension_semantics=("parallel",)),
        cost_estimate=cost,
    )(x_in, w1b, b1, w2b, b2, w3b, b3, w4b, b4, mask)

    out = out_rows.reshape(n, do, ho, wo, emb)
    return jnp.transpose(out, (0, 4, 1, 2, 3))           # back to NCDHW


# ------------------------------ params / ref -------------------------------- #

def init_encoder_params(key, input_channels, hidden_channels, embedding_dim):
    ks = jax.random.split(key, 8)

    def w(kk, cout, cin, ksz):
        scale = 1.0 / jnp.sqrt(cin * ksz ** 3)
        return (jax.random.uniform(kk, (cout, cin, ksz, ksz, ksz),
                                   minval=-1.0, maxval=1.0) * scale
                ).astype(jnp.float32)

    def bias(kk, cout, cin, ksz):
        scale = 1.0 / jnp.sqrt(cin * ksz ** 3)
        return (jax.random.uniform(kk, (cout,), minval=-1.0, maxval=1.0)
                * scale).astype(jnp.float32)

    return {
        "w1": w(ks[0], hidden_channels, input_channels, 4),
        "b1": bias(ks[1], hidden_channels, input_channels, 4),
        "w2": w(ks[2], hidden_channels, hidden_channels, 3),
        "b2": bias(ks[3], hidden_channels, hidden_channels, 3),
        "w3": w(ks[4], hidden_channels, hidden_channels, 3),
        "b3": bias(ks[5], hidden_channels, hidden_channels, 3),
        "w4": w(ks[6], embedding_dim, hidden_channels, 3),
        "b4": bias(ks[7], embedding_dim, hidden_channels, 3),
    }


def _reference_forward(x, params):
    """Pure-JAX f32 reference (lax.conv_general_dilated) for correctness."""
    dn = ("NCDHW", "OIDHW", "NCDHW")

    def conv(x, w, b, stride, pad):
        y = jax.lax.conv_general_dilated(
            x, w, window_strides=(stride,) * 3,
            padding=[(pad, pad)] * 3, dimension_numbers=dn)
        return y + b.reshape(1, -1, 1, 1, 1)

    y = jax.nn.relu(conv(x, params["w1"], params["b1"], 2, 1))
    y = jax.nn.relu(conv(y, params["w2"], params["b2"], 1, 1))
    y = jax.nn.relu(conv(y, params["w3"], params["b3"], 1, 1))
    y = conv(y, params["w4"], params["b4"], 1, 1)
    return y


if __name__ == "__main__":
    input_channels, hidden_channels, embedding_dim = 4, 16, 8
    key = jax.random.PRNGKey(0)
    k_x, k_p = jax.random.split(key)

    # NCDHW input, as in PyTorch Conv3d
    x = jax.random.normal(k_x, (2, input_channels, 8, 8, 8), dtype=jnp.float32)
    params = init_encoder_params(k_p, input_channels, hidden_channels,
                                 embedding_dim)

    fwd = jax.jit(encoder_forward)
    out = jax.block_until_ready(fwd(x, params))
    assert out.shape == (2, embedding_dim, 4, 4, 4), out.shape

    ref = jax.block_until_ready(_reference_forward(x, params))
    err = float(jnp.max(jnp.abs(out - ref)))
    scale = float(jnp.max(jnp.abs(ref)))
    # bf16-streamed operands with f32 accumulation -> allow bf16-level error.
    assert err <= 5e-2 * scale + 1e-3, (err, scale)

    print("KERNEL_OK")
</pallas_src>

<mosaic_0001>
module attributes {stable_mosaic.version = 11 : i64} {
  func.func @kernel(%arg0: i32, %arg1: memref<1x259x32xbf16, #tpu.memory_space<vmem>>, %arg2: memref<256x16xbf16, #tpu.memory_space<vmem>>, %arg3: memref<1x16xf32, #tpu.memory_space<vmem>>, %arg4: memref<432x16xbf16, #tpu.memory_space<vmem>>, %arg5: memref<1x16xf32, #tpu.memory_space<vmem>>, %arg6: memref<432x16xbf16, #tpu.memory_space<vmem>>, %arg7: memref<1x16xf32, #tpu.memory_space<vmem>>, %arg8: memref<432x8xbf16, #tpu.memory_space<vmem>>, %arg9: memref<1x8xf32, #tpu.memory_space<vmem>>, %arg10: memref<216x1xf32, #tpu.memory_space<vmem>>, %arg11: memref<1x64x8xf32, #tpu.memory_space<vmem>>, %arg12: memref<302x16xbf16, #tpu.memory_space<vmem>>, %arg13: memref<302x16xbf16, #tpu.memory_space<vmem>>) attributes {dimension_semantics = [#tpu.dimension_semantics<parallel>], iteration_bounds = array<i64: 2>, scalar_prefetch = 0 : i64, scratch_operands = 2 : i64, tpu.core_type = #tpu.core_type<tc>, window_params = [{transform_indices = @transform_0, window_bounds = array<i64: 1, 259, 32>}, {pipeline_mode = #tpu.pipeline_mode<synchronous>, transform_indices = @transform_1, window_bounds = array<i64: 256, 16>}, {pipeline_mode = #tpu.pipeline_mode<synchronous>, transform_indices = @transform_2, window_bounds = array<i64: 1, 16>}, {pipeline_mode = #tpu.pipeline_mode<synchronous>, transform_indices = @transform_3, window_bounds = array<i64: 432, 16>}, {pipeline_mode = #tpu.pipeline_mode<synchronous>, transform_indices = @transform_4, window_bounds = array<i64: 1, 16>}, {pipeline_mode = #tpu.pipeline_mode<synchronous>, transform_indices = @transform_5, window_bounds = array<i64: 432, 16>}, {pipeline_mode = #tpu.pipeline_mode<synchronous>, transform_indices = @transform_6, window_bounds = array<i64: 1, 16>}, {pipeline_mode = #tpu.pipeline_mode<synchronous>, transform_indices = @transform_7, window_bounds = array<i64: 432, 8>}, {pipeline_mode = #tpu.pipeline_mode<synchronous>, transform_indices = @transform_8, window_bounds = array<i64: 1, 8>}, {pipeline_mode = #tpu.pipeline_mode<synchronous>, transform_indices = @transform_9, window_bounds = array<i64: 216, 1>}, {transform_indices = @transform_10, window_bounds = array<i64: 1, 64, 8>}]} {
    %c0 = arith.constant 0 : index
    %c0_0 = arith.constant 0 : index
    %0 = vector.load %arg10[%c0, %c0_0] : memref<216x1xf32, #tpu.memory_space<vmem>>, vector<216x1xf32>
    %cst = arith.constant 0.000000e+00 : bf16
    %1 = vector.broadcast %cst : bf16 to vector<302x16xbf16>
    %c0_1 = arith.constant 0 : index
    %c0_2 = arith.constant 0 : index
    %2 = vector.load %arg12[%c0_1, %c0_2] : memref<302x16xbf16, #tpu.memory_space<vmem>>, vector<302x16xbf16>
    tpu.vector_store %arg12[%c0_1, %c0_2], %1 {strides = array<i32>} : memref<302x16xbf16, #tpu.memory_space<vmem>>, vector<302x16xbf16>,
    %cst_3 = arith.constant 0.000000e+00 : bf16
    %3 = vector.broadcast %cst_3 : bf16 to vector<302x16xbf16>
    %c0_4 = arith.constant 0 : index
    %c0_5 = arith.constant 0 : index
    %4 = vector.load %arg13[%c0_4, %c0_5] : memref<302x16xbf16, #tpu.memory_space<vmem>>, vector<302x16xbf16>
    tpu.vector_store %arg13[%c0_4, %c0_5], %3 {strides = array<i32>} : memref<302x16xbf16, #tpu.memory_space<vmem>>, vector<302x16xbf16>,
    %c0_6 = arith.constant 0 : index
    %c0_7 = arith.constant 0 : index
    %c0_8 = arith.constant 0 : index
    %5 = vector.load %arg1[%c0_6, %c0_7, %c0_8] : memref<1x259x32xbf16, #tpu.memory_space<vmem>>, vector<1x216x32xbf16>
    %6 = vector.shape_cast %5 : vector<1x216x32xbf16> to vector<216x32xbf16>
    %c0_9 = arith.constant 0 : index
    %c1 = arith.constant 1 : index
    %c0_10 = arith.constant 0 : index
    %7 = vector.load %arg1[%c0_9, %c1, %c0_10] : memref<1x259x32xbf16, #tpu.memory_space<vmem>>, vector<1x216x32xbf16>
    %8 = vector.shape_cast %7 : vector<1x216x32xbf16> to vector<216x32xbf16>
    %c0_11 = arith.constant 0 : index
    %c6 = arith.constant 6 : index
    %c0_12 = arith.constant 0 : index
    %9 = vector.load %arg1[%c0_11, %c6, %c0_12] : memref<1x259x32xbf16, #tpu.memory_space<vmem>>, vector<1x216x32xbf16>
    %10 = vector.shape_cast %9 : vector<1x216x32xbf16> to vector<216x32xbf16>
    %c0_13 = arith.constant 0 : index
    %c7 = arith.constant 7 : index
    %c0_14 = arith.constant 0 : index
    %11 = vector.load %arg1[%c0_13, %c7, %c0_14] : memref<1x259x32xbf16, #tpu.memory_space<vmem>>, vector<1x216x32xbf16>
    %12 = vector.shape_cast %11 : vector<1x216x32xbf16> to vector<216x32xbf16>
    %c0_15 = arith.constant 0 : index
    %c36 = arith.constant 36 : index
    %c0_16 = arith.constant 0 : index
    %13 = vector.load %arg1[%c0_15, %c36, %c0_16] : memref<1x259x32xbf16, #tpu.memory_space<vmem>>, vector<1x216x32xbf16>
    %14 = vector.shape_cast %13 : vector<1x216x32xbf16> to vector<216x32xbf16>
    %c0_17 = arith.constant 0 : index
    %c37 = arith.constant 37 : index
    %c0_18 = arith.constant 0 : index
    %15 = vector.load %arg1[%c0_17, %c37, %c0_18] : memref<1x259x32xbf16, #tpu.memory_space<vmem>>, vector<1x216x32xbf16>
    %16 = vector.shape_cast %15 : vector<1x216x32xbf16> to vector<216x32xbf16>
    %c0_19 = arith.constant 0 : index
    %c42 = arith.constant 42 : index
    %c0_20 = arith.constant 0 : index
    %17 = vector.load %arg1[%c0_19, %c42, %c0_20] : memref<1x259x32xbf16, #tpu.memory_space<vmem>>, vector<1x216x32xbf16>
    %18 = vector.shape_cast %17 : vector<1x216x32xbf16> to vector<216x32xbf16>
    %c0_21 = arith.constant 0 : index
    %c43 = arith.constant 43 : index
    %c0_22 = arith.constant 0 : index
    %19 = vector.load %arg1[%c0_21, %c43, %c0_22] : memref<1x259x32xbf16, #tpu.memory_space<vmem>>, vector<1x216x32xbf16>
    %20 = vector.shape_cast %19 : vector<1x216x32xbf16> to vector<216x32xbf16>
    %21 = tpu.concatenate %6, %8, %10, %12, %14, %16, %18, %20 in 1 : vector<216x32xbf16>, vector<216x32xbf16>, vector<216x32xbf16>, vector<216x32xbf16>, vector<216x32xbf16>, vector<216x32xbf16>, vector<216x32xbf16>, vector<216x32xbf16> -> vector<216x256xbf16>
    %c0_23 = arith.constant 0 : index
    %c0_24 = arith.constant 0 : index
    %22 = vector.load %arg2[%c0_23, %c0_24] : memref<256x16xbf16, #tpu.memory_space<vmem>>, vector<256x16xbf16>
    %cst_25 = arith.constant dense<0.000000e+00> : vector<216x16xf32>
    %23 = tpu.matmul %21, %22, %cst_25 {dimension_numbers = #tpu.dot_dimension_numbers<[1], [0], [0], [1], [0, 0, 1, 1], [], []>} : vector<216x256xbf16>, vector<256x16xbf16>, vector<216x16xf32> -> vector<216x16xf32>
    %c0_26 = arith.constant 0 : index
    %c0_27 = arith.constant 0 : index
    %24 = vector.load %arg3[%c0_26, %c0_27] : memref<1x16xf32, #tpu.memory_space<vmem>>, vector<1x16xf32>
    %25 = vector.broadcast %24 : vector<1x16xf32> to vector<216x16xf32>
    %26 = arith.addf %23, %25 : vector<216x16xf32>
    %cst_28 = arith.constant 0.000000e+00 : f32
    %27 = vector.broadcast %cst_28 : f32 to vector<216x16xf32>
    %28 = arith.maximumf %26, %27 : vector<216x16xf32>
    %29 = vector.broadcast %0 : vector<216x1xf32> to vector<216x16xf32>
    %30 = arith.mulf %28, %29 : vector<216x16xf32>
    %31 = arith.truncf %30 : vector<216x16xf32> to vector<216x16xbf16>
    %c43_29 = arith.constant 43 : index
    %c0_30 = arith.constant 0 : index
    %32 = vector.load %arg12[%c43_29, %c0_30] : memref<302x16xbf16, #tpu.memory_space<vmem>>, vector<216x16xbf16>
    tpu.vector_store %arg12[%c43_29, %c0_30], %31 {strides = array<i32>} : memref<302x16xbf16, #tpu.memory_space<vmem>>, vector<216x16xbf16>,
    %c0_31 = arith.constant 0 : index
    %c0_32 = arith.constant 0 : index
    %33 = vector.load %arg12[%c0_31, %c0_32] : memref<302x16xbf16, #tpu.memory_space<vmem>>, vector<216x16xbf16>
    %c1_33 = arith.constant 1 : index
    %c0_34 = arith.constant 0 : index
    %34 = vector.load %arg12[%c1_33, %c0_34] : memref<302x16xbf16, #tpu.memory_space<vmem>>, vector<216x16xbf16>
    %c2 = arith.constant 2 : index
    %c0_35 = arith.constant 0 : index
    %35 = vector.load %arg12[%c2, %c0_35] : memref<302x16xbf16, #tpu.memory_space<vmem>>, vector<216x16xbf16>
    %c6_36 = arith.constant 6 : index
    %c0_37 = arith.constant 0 : index
    %36 = vector.load %arg12[%c6_36, %c0_37] : memref<302x16xbf16, #tpu.memory_space<vmem>>, vector<216x16xbf16>
    %c7_38 = arith.constant 7 : index
    %c0_39 = arith.constant 0 : index
    %37 = vector.load %arg12[%c7_38, %c0_39] : memref<302x16xbf16, #tpu.memory_space<vmem>>, vector<216x16xbf16>
    %c8 = arith.constant 8 : index
    %c0_40 = arith.constant 0 : index
    %38 = vector.load %arg12[%c8, %c0_40] : memref<302x16xbf16, #tpu.memory_space<vmem>>, vector<216x16xbf16>
    %c12 = arith.constant 12 : index
    %c0_41 = arith.constant 0 : index
    %39 = vector.load %arg12[%c12, %c0_41] : memref<302x16xbf16, #tpu.memory_space<vmem>>, vector<216x16xbf16>
    %c13 = arith.constant 13 : index
    %c0_42 = arith.constant 0 : index
    %40 = vector.load %arg12[%c13, %c0_42] : memref<302x16xbf16, #tpu.memory_space<vmem>>, vector<216x16xbf16>
    %c14 = arith.constant 14 : index
    %c0_43 = arith.constant 0 : index
    %41 = vector.load %arg12[%c14, %c0_43] : memref<302x16xbf16, #tpu.memory_space<vmem>>, vector<216x16xbf16>
    %c36_44 = arith.constant 36 : index
    %c0_45 = arith.constant 0 : index
    %42 = vector.load %arg12[%c36_44, %c0_45] : memref<302x16xbf16, #tpu.memory_space<vmem>>, vector<216x16xbf16>
    %c37_46 = arith.constant 37 : index
    %c0_47 = arith.constant 0 : index
    %43 = vector.load %arg12[%c37_46, %c0_47] : memref<302x16xbf16, #tpu.memory_space<vmem>>, vector<216x16xbf16>
    %c38 = arith.constant 38 : index
    %c0_48 = arith.constant 0 : index
    %44 = vector.load %arg12[%c38, %c0_48] : memref<302x16xbf16, #tpu.memory_space<vmem>>, vector<216x16xbf16>
    %c42_49 = arith.constant 42 : index
    %c0_50 = arith.constant 0 : index
    %45 = vector.load %arg12[%c42_49, %c0_50] : memref<302x16xbf16, #tpu.memory_space<vmem>>, vector<216x16xbf16>
    %c43_51 = arith.constant 43 : index
    %c0_52 = arith.constant 0 : index
    %46 = vector.load %arg12[%c43_51, %c0_52] : memref<302x16xbf16, #tpu.memory_space<vmem>>, vector<216x16xbf16>
    %c44 = arith.constant 44 : index
    %c0_53 = arith.constant 0 : index
    %47 = vector.load %arg12[%c44, %c0_53] : memref<302x16xbf16, #tpu.memory_space<vmem>>, vector<216x16xbf16>
    %c48 = arith.constant 48 : index
    %c0_54 = arith.constant 0 : index
    %48 = vector.load %arg12[%c48, %c0_54] : memref<302x16xbf16, #tpu.memory_space<vmem>>, vector<216x16xbf16>
    %c49 = arith.constant 49 : index
    %c0_55 = arith.constant 0 : index
    %49 = vector.load %arg12[%c49, %c0_55] : memref<302x16xbf16, #tpu.memory_space<vmem>>, vector<216x16xbf16>
    %c50 = arith.constant 50 : index
    %c0_56 = arith.constant 0 : index
    %50 = vector.load %arg12[%c50, %c0_56] : memref<302x16xbf16, #tpu.memory_space<vmem>>, vector<216x16xbf16>
    %c72 = arith.constant 72 : index
    %c0_57 = arith.constant 0 : index
    %51 = vector.load %arg12[%c72, %c0_57] : memref<302x16xbf16, #tpu.memory_space<vmem>>, vector<216x16xbf16>
    %c73 = arith.constant 73 : index
    %c0_58 = arith.constant 0 : index
    %52 = vector.load %arg12[%c73, %c0_58] : memref<302x16xbf16, #tpu.memory_space<vmem>>, vector<216x16xbf16>
    %c74 = arith.constant 74 : index
    %c0_59 = arith.constant 0 : index
    %53 = vector.load %arg12[%c74, %c0_59] : memref<302x16xbf16, #tpu.memory_space<vmem>>, vector<216x16xbf16>
    %c78 = arith.constant 78 : index
    %c0_60 = arith.constant 0 : index
    %54 = vector.load %arg12[%c78, %c0_60] : memref<302x16xbf16, #tpu.memory_space<vmem>>, vector<216x16xbf16>
    %c79 = arith.constant 79 : index
    %c0_61 = arith.constant 0 : index
    %55 = vector.load %arg12[%c79, %c0_61] : memref<302x16xbf16, #tpu.memory_space<vmem>>, vector<216x16xbf16>
    %c80 = arith.constant 80 : index
    %c0_62 = arith.constant 0 : index
    %56 = vector.load %arg12[%c80, %c0_62] : memref<302x16xbf16, #tpu.memory_space<vmem>>, vector<216x16xbf16>
    %c84 = arith.constant 84 : index
    %c0_63 = arith.constant 0 : index
    %57 = vector.load %arg12[%c84, %c0_63] : memref<302x16xbf16, #tpu.memory_space<vmem>>, vector<216x16xbf16>
    %c85 = arith.constant 85 : index
    %c0_64 = arith.constant 0 : index
    %58 = vector.load %arg12[%c85, %c0_64] : memref<302x16xbf16, #tpu.memory_space<vmem>>, vector<216x16xbf16>
    %c86 = arith.constant 86 : index
    %c0_65 = arith.constant 0 : index
    %59 = vector.load %arg12[%c86, %c0_65] : memref<302x16xbf16, #tpu.memory_space<vmem>>, vector<216x16xbf16>
    %60 = tpu.concatenate %33, %34, %35, %36, %37, %38, %39, %40, %41, %42, %43, %44, %45, %46, %47, %48 in 1 : vector<216x16xbf16>, vector<216x16xbf16>, vector<216x16xbf16>, vector<216x16xbf16>, vector<216x16xbf16>, vector<216x16xbf16>, vector<216x16xbf16>, vector<216x16xbf16>, vector<216x16xbf16>, vector<216x16xbf16>, vector<216x16xbf16>, vector<216x16xbf16>, vector<216x16xbf16>, vector<216x16xbf16>, vector<216x16xbf16>, vector<216x16xbf16> -> vector<216x256xbf16>
    %61 = tpu.concatenate %49, %50, %51, %52, %53, %54, %55, %56, %57, %58, %59 in 1 : vector<216x16xbf16>, vector<216x16xbf16>, vector<216x16xbf16>, vector<216x16xbf16>, vector<216x16xbf16>, vector<216x16xbf16>, vector<216x16xbf16>, vector<216x16xbf16>, vector<216x16xbf16>, vector<216x16xbf16>, vector<216x16xbf16> -> vector<216x176xbf16>
    %62 = tpu.concatenate %60, %61 in 1 : vector<216x256xbf16>, vector<216x176xbf16> -> vector<216x432xbf16>
    %c0_66 = arith.constant 0 : index
    %c0_67 = arith.constant 0 : index
    %63 = vector.load %arg4[%c0_66, %c0_67] : memref<432x16xbf16, #tpu.memory_space<vmem>>, vector<432x16xbf16>
    %cst_68 = arith.constant dense<0.000000e+00> : vector<216x16xf32>
    %64 = tpu.matmul %62, %63, %cst_68 {dimension_numbers = #tpu.dot_dimension_numbers<[1], [0], [0], [1], [0, 0, 1, 1], [], []>} : vector<216x432xbf16>, vector<432x16xbf16>, vector<216x16xf32> -> vector<216x16xf32>
    %c0_69 = arith.constant 0 : index
    %c0_70 = arith.constant 0 : index
    %65 = vector.load %arg5[%c0_69, %c0_70] : memref<1x16xf32, #tpu.memory_space<vmem>>, vector<1x16xf32>
    %66 = vector.broadcast %65 : vector<1x16xf32> to vector<216x16xf32>
    %67 = arith.addf %64, %66 : vector<216x16xf32>
    %cst_71 = arith.constant 0.000000e+00 : f32
    %68 = vector.broadcast %cst_71 : f32 to vector<216x16xf32>
    %69 = arith.maximumf %67, %68 : vector<216x16xf32>
    %70 = vector.broadcast %0 : vector<216x1xf32> to vector<216x16xf32>
    %71 = arith.mulf %69, %70 : vector<216x16xf32>
    %72 = arith.truncf %71 : vector<216x16xf32> to vector<216x16xbf16>
    %c43_72 = arith.constant 43 : index
    %c0_73 = arith.constant 0 : index
    %73 = vector.load %arg13[%c43_72, %c0_73] : memref<302x16xbf16, #tpu.memory_space<vmem>>, vector<216x16xbf16>
    tpu.vector_store %arg13[%c43_72, %c0_73], %72 {strides = array<i32>} : memref<302x16xbf16, #tpu.memory_space<vmem>>, vector<216x16xbf16>,
    %c0_74 = arith.constant 0 : index
    %c0_75 = arith.constant 0 : index
    %74 = vector.load %arg13[%c0_74, %c0_75] : memref<302x16xbf16, #tpu.memory_space<vmem>>, vector<216x16xbf16>
    %c1_76 = arith.constant 1 : index
    %c0_77 = arith.constant 0 : index
    %75 = vector.load %arg13[%c1_76, %c0_77] : memref<302x16xbf16, #tpu.memory_space<vmem>>, vector<216x16xbf16>
    %c2_78 = arith.constant 2 : index
    %c0_79 = arith.constant 0 : index
    %76 = vector.load %arg13[%c2_78, %c0_79] : memref<302x16xbf16, #tpu.memory_space<vmem>>, vector<216x16xbf16>
    %c6_80 = arith.constant 6 : index
    %c0_81 = arith.constant 0 : index
    %77 = vector.load %arg13[%c6_80, %c0_81] : memref<302x16xbf16, #tpu.memory_space<vmem>>, vector<216x16xbf16>
    %c7_82 = arith.constant 7 : index
    %c0_83 = arith.constant 0 : index
    %78 = vector.load %arg13[%c7_82, %c0_83] : memref<302x16xbf16, #tpu.memory_space<vmem>>, vector<216x16xbf16>
    %c8_84 = arith.constant 8 : index
    %c0_85 = arith.constant 0 : index
    %79 = vector.load %arg13[%c8_84, %c0_85] : memref<302x16xbf16, #tpu.memory_space<vmem>>, vector<216x16xbf16>
    %c12_86 = arith.constant 12 : index
    %c0_87 = arith.constant 0 : index
    %80 = vector.load %arg13[%c12_86, %c0_87] : memref<302x16xbf16, #tpu.memory_space<vmem>>, vector<216x16xbf16>
    %c13_88 = arith.constant 13 : index
    %c0_89 = arith.constant 0 : index
    %81 = vector.load %arg13[%c13_88, %c0_89] : memref<302x16xbf16, #tpu.memory_space<vmem>>, vector<216x16xbf16>
    %c14_90 = arith.constant 14 : index
    %c0_91 = arith.constant 0 : index
    %82 = vector.load %arg13[%c14_90, %c0_91] : memref<302x16xbf16, #tpu.memory_space<vmem>>, vector<216x16xbf16>
    %c36_92 = arith.constant 36 : index
    %c0_93 = arith.constant 0 : index
    %83 = vector.load %arg13[%c36_92, %c0_93] : memref<302x16xbf16, #tpu.memory_space<vmem>>, vector<216x16xbf16>
    %c37_94 = arith.constant 37 : index
    %c0_95 = arith.constant 0 : index
    %84 = vector.load %arg13[%c37_94, %c0_95] : memref<302x16xbf16, #tpu.memory_space<vmem>>, vector<216x16xbf16>
    %c38_96 = arith.constant 38 : index
    %c0_97 = arith.constant 0 : index
    %85 = vector.load %arg13[%c38_96, %c0_97] : memref<302x16xbf16, #tpu.memory_space<vmem>>, vector<216x16xbf16>
    %c42_98 = arith.constant 42 : index
    %c0_99 = arith.constant 0 : index
    %86 = vector.load %arg13[%c42_98, %c0_99] : memref<302x16xbf16, #tpu.memory_space<vmem>>, vector<216x16xbf16>
    %c43_100 = arith.constant 43 : index
    %c0_101 = arith.constant 0 : index
    %87 = vector.load %arg13[%c43_100, %c0_101] : memref<302x16xbf16, #tpu.memory_space<vmem>>, vector<216x16xbf16>
    %c44_102 = arith.constant 44 : index
    %c0_103 = arith.constant 0 : index
    %88 = vector.load %arg13[%c44_102, %c0_103] : memref<302x16xbf16, #tpu.memory_space<vmem>>, vector<216x16xbf16>
    %c48_104 = arith.constant 48 : index
    %c0_105 = arith.constant 0 : index
    %89 = vector.load %arg13[%c48_104, %c0_105] : memref<302x16xbf16, #tpu.memory_space<vmem>>, vector<216x16xbf16>
    %c49_106 = arith.constant 49 : index
    %c0_107 = arith.constant 0 : index
    %90 = vector.load %arg13[%c49_106, %c0_107] : memref<302x16xbf16, #tpu.memory_space<vmem>>, vector<216x16xbf16>
    %c50_108 = arith.constant 50 : index
    %c0_109 = arith.constant 0 : index
    %91 = vector.load %arg13[%c50_108, %c0_109] : memref<302x16xbf16, #tpu.memory_space<vmem>>, vector<216x16xbf16>
    %c72_110 = arith.constant 72 : index
    %c0_111 = arith.constant 0 : index
    %92 = vector.load %arg13[%c72_110, %c0_111] : memref<302x16xbf16, #tpu.memory_space<vmem>>, vector<216x16xbf16>
    %c73_112 = arith.constant 73 : index
    %c0_113 = arith.constant 0 : index
    %93 = vector.load %arg13[%c73_112, %c0_113] : memref<302x16xbf16, #tpu.memory_space<vmem>>, vector<216x16xbf16>
    %c74_114 = arith.constant 74 : index
    %c0_115 = arith.constant 0 : index
    %94 = vector.load %arg13[%c74_114, %c0_115] : memref<302x16xbf16, #tpu.memory_space<vmem>>, vector<216x16xbf16>
    %c78_116 = arith.constant 78 : index
    %c0_117 = arith.constant 0 : index
    %95 = vector.load %arg13[%c78_116, %c0_117] : memref<302x16xbf16, #tpu.memory_space<vmem>>, vector<216x16xbf16>
    %c79_118 = arith.constant 79 : index
    %c0_119 = arith.constant 0 : index
    %96 = vector.load %arg13[%c79_118, %c0_119] : memref<302x16xbf16, #tpu.memory_space<vmem>>, vector<216x16xbf16>
    %c80_120 = arith.constant 80 : index
    %c0_121 = arith.constant 0 : index
    %97 = vector.load %arg13[%c80_120, %c0_121] : memref<302x16xbf16, #tpu.memory_space<vmem>>, vector<216x16xbf16>
    %c84_122 = arith.constant 84 : index
    %c0_123 = arith.constant 0 : index
    %98 = vector.load %arg13[%c84_122, %c0_123] : memref<302x16xbf16, #tpu.memory_space<vmem>>, vector<216x16xbf16>
    %c85_124 = arith.constant 85 : index
    %c0_125 = arith.constant 0 : index
    %99 = vector.load %arg13[%c85_124, %c0_125] : memref<302x16xbf16, #tpu.memory_space<vmem>>, vector<216x16xbf16>
    %c86_126 = arith.constant 86 : index
    %c0_127 = arith.constant 0 : index
    %100 = vector.load %arg13[%c86_126, %c0_127] : memref<302x16xbf16, #tpu.memory_space<vmem>>, vector<216x16xbf16>
    %101 = tpu.concatenate %74, %75, %76, %77, %78, %79, %80, %81, %82, %83, %84, %85, %86, %87, %88, %89 in 1 : vector<216x16xbf16>, vector<216x16xbf16>, vector<216x16xbf16>, vector<216x16xbf16>, vector<216x16xbf16>, vector<216x16xbf16>, vector<216x16xbf16>, vector<216x16xbf16>, vector<216x16xbf16>, vector<216x16xbf16>, vector<216x16xbf16>, vector<216x16xbf16>, vector<216x16xbf16>, vector<216x16xbf16>, vector<216x16xbf16>, vector<216x16xbf16> -> vector<216x256xbf16>
    %102 = tpu.concatenate %90, %91, %92, %93, %94, %95, %96, %97, %98, %99, %100 in 1 : vector<216x16xbf16>, vector<216x16xbf16>, vector<216x16xbf16>, vector<216x16xbf16>, vector<216x16xbf16>, vector<216x16xbf16>, vector<216x16xbf16>, vector<216x16xbf16>, vector<216x16xbf16>, vector<216x16xbf16>, vector<216x16xbf16> -> vector<216x176xbf16>
    %103 = tpu.concatenate %101, %102 in 1 : vector<216x256xbf16>, vector<216x176xbf16> -> vector<216x432xbf16>
    %c0_128 = arith.constant 0 : index
    %c0_129 = arith.constant 0 : index
    %104 = vector.load %arg6[%c0_128, %c0_129] : memref<432x16xbf16, #tpu.memory_space<vmem>>, vector<432x16xbf16>
    %cst_130 = arith.constant dense<0.000000e+00> : vector<216x16xf32>
    %105 = tpu.matmul %103, %104, %cst_130 {dimension_numbers = #tpu.dot_dimension_numbers<[1], [0], [0], [1], [0, 0, 1, 1], [], []>} : vector<216x432xbf16>, vector<432x16xbf16>, vector<216x16xf32> -> vector<216x16xf32>
    %c0_131 = arith.constant 0 : index
    %c0_132 = arith.constant 0 : index
    %106 = vector.load %arg7[%c0_131, %c0_132] : memref<1x16xf32, #tpu.memory_space<vmem>>, vector<1x16xf32>
    %107 = vector.broadcast %106 : vector<1x16xf32> to vector<216x16xf32>
    %108 = arith.addf %105, %107 : vector<216x16xf32>
    %cst_133 = arith.constant 0.000000e+00 : f32
    %109 = vector.broadcast %cst_133 : f32 to vector<216x16xf32>
    %110 = arith.maximumf %108, %109 : vector<216x16xf32>
    %111 = vector.broadcast %0 : vector<216x1xf32> to vector<216x16xf32>
    %112 = arith.mulf %110, %111 : vector<216x16xf32>
    %113 = arith.truncf %112 : vector<216x16xf32> to vector<216x16xbf16>
    %c43_134 = arith.constant 43 : index
    %c0_135 = arith.constant 0 : index
    %114 = vector.load %arg12[%c43_134, %c0_135] : memref<302x16xbf16, #tpu.memory_space<vmem>>, vector<216x16xbf16>
    tpu.vector_store %arg12[%c43_134, %c0_135], %113 {strides = array<i32>} : memref<302x16xbf16, #tpu.memory_space<vmem>>, vector<216x16xbf16>,
    %c0_136 = arith.constant 0 : index
    %c0_137 = arith.constant 0 : index
    %115 = vector.load %arg12[%c0_136, %c0_137] : memref<302x16xbf16, #tpu.memory_space<vmem>>, vector<216x16xbf16>
    %c1_138 = arith.constant 1 : index
    %c0_139 = arith.constant 0 : index
    %116 = vector.load %arg12[%c1_138, %c0_139] : memref<302x16xbf16, #tpu.memory_space<vmem>>, vector<216x16xbf16>
    %c2_140 = arith.constant 2 : index
    %c0_141 = arith.constant 0 : index
    %117 = vector.load %arg12[%c2_140, %c0_141] : memref<302x16xbf16, #tpu.memory_space<vmem>>, vector<216x16xbf16>
    %c6_142 = arith.constant 6 : index
    %c0_143 = arith.constant 0 : index
    %118 = vector.load %arg12[%c6_142, %c0_143] : memref<302x16xbf16, #tpu.memory_space<vmem>>, vector<216x16xbf16>
    %c7_144 = arith.constant 7 : index
    %c0_145 = arith.constant 0 : index
    %119 = vector.load %arg12[%c7_144, %c0_145] : memref<302x16xbf16, #tpu.memory_space<vmem>>, vector<216x16xbf16>
    %c8_146 = arith.constant 8 : index
    %c0_147 = arith.constant 0 : index
    %120 = vector.load %arg12[%c8_146, %c0_147] : memref<302x16xbf16, #tpu.memory_space<vmem>>, vector<216x16xbf16>
    %c12_148 = arith.constant 12 : index
    %c0_149 = arith.constant 0 : index
    %121 = vector.load %arg12[%c12_148, %c0_149] : memref<302x16xbf16, #tpu.memory_space<vmem>>, vector<216x16xbf16>
    %c13_150 = arith.constant 13 : index
    %c0_151 = arith.constant 0 : index
    %122 = vector.load %arg12[%c13_150, %c0_151] : memref<302x16xbf16, #tpu.memory_space<vmem>>, vector<216x16xbf16>
    %c14_152 = arith.constant 14 : index
    %c0_153 = arith.constant 0 : index
    %123 = vector.load %arg12[%c14_152, %c0_153] : memref<302x16xbf16, #tpu.memory_space<vmem>>, vector<216x16xbf16>
    %c36_154 = arith.constant 36 : index
    %c0_155 = arith.constant 0 : index
    %124 = vector.load %arg12[%c36_154, %c0_155] : memref<302x16xbf16, #tpu.memory_space<vmem>>, vector<216x16xbf16>
    %c37_156 = arith.constant 37 : index
    %c0_157 = arith.constant 0 : index
    %125 = vector.load %arg12[%c37_156, %c0_157] : memref<302x16xbf16, #tpu.memory_space<vmem>>, vector<216x16xbf16>
    %c38_158 = arith.constant 38 : index
    %c0_159 = arith.constant 0 : index
    %126 = vector.load %arg12[%c38_158, %c0_159] : memref<302x16xbf16, #tpu.memory_space<vmem>>, vector<216x16xbf16>
    %c42_160 = arith.constant 42 : index
    %c0_161 = arith.constant 0 : index
    %127 = vector.load %arg12[%c42_160, %c0_161] : memref<302x16xbf16, #tpu.memory_space<vmem>>, vector<216x16xbf16>
    %c43_162 = arith.constant 43 : index
    %c0_163 = arith.constant 0 : index
    %128 = vector.load %arg12[%c43_162, %c0_163] : memref<302x16xbf16, #tpu.memory_space<vmem>>, vector<216x16xbf16>
    %c44_164 = arith.constant 44 : index
    %c0_165 = arith.constant 0 : index
    %129 = vector.load %arg12[%c44_164, %c0_165] : memref<302x16xbf16, #tpu.memory_space<vmem>>, vector<216x16xbf16>
    %c48_166 = arith.constant 48 : index
    %c0_167 = arith.constant 0 : index
    %130 = vector.load %arg12[%c48_166, %c0_167] : memref<302x16xbf16, #tpu.memory_space<vmem>>, vector<216x16xbf16>
    %c49_168 = arith.constant 49 : index
    %c0_169 = arith.constant 0 : index
    %131 = vector.load %arg12[%c49_168, %c0_169] : memref<302x16xbf16, #tpu.memory_space<vmem>>, vector<216x16xbf16>
    %c50_170 = arith.constant 50 : index
    %c0_171 = arith.constant 0 : index
    %132 = vector.load %arg12[%c50_170, %c0_171] : memref<302x16xbf16, #tpu.memory_space<vmem>>, vector<216x16xbf16>
    %c72_172 = arith.constant 72 : index
    %c0_173 = arith.constant 0 : index
    %133 = vector.load %arg12[%c72_172, %c0_173] : memref<302x16xbf16, #tpu.memory_space<vmem>>, vector<216x16xbf16>
    %c73_174 = arith.constant 73 : index
    %c0_175 = arith.constant 0 : index
    %134 = vector.load %arg12[%c73_174, %c0_175] : memref<302x16xbf16, #tpu.memory_space<vmem>>, vector<216x16xbf16>
    %c74_176 = arith.constant 74 : index
    %c0_177 = arith.constant 0 : index
    %135 = vector.load %arg12[%c74_176, %c0_177] : memref<302x16xbf16, #tpu.memory_space<vmem>>, vector<216x16xbf16>
    %c78_178 = arith.constant 78 : index
    %c0_179 = arith.constant 0 : index
    %136 = vector.load %arg12[%c78_178, %c0_179] : memref<302x16xbf16, #tpu.memory_space<vmem>>, vector<216x16xbf16>
    %c79_180 = arith.constant 79 : index
    %c0_181 = arith.constant 0 : index
    %137 = vector.load %arg12[%c79_180, %c0_181] : memref<302x16xbf16, #tpu.memory_space<vmem>>, vector<216x16xbf16>
    %c80_182 = arith.constant 80 : index
    %c0_183 = arith.constant 0 : index
    %138 = vector.load %arg12[%c80_182, %c0_183] : memref<302x16xbf16, #tpu.memory_space<vmem>>, vector<216x16xbf16>
    %c84_184 = arith.constant 84 : index
    %c0_185 = arith.constant 0 : index
    %139 = vector.load %arg12[%c84_184, %c0_185] : memref<302x16xbf16, #tpu.memory_space<vmem>>, vector<216x16xbf16>
    %c85_186 = arith.constant 85 : index
    %c0_187 = arith.constant 0 : index
    %140 = vector.load %arg12[%c85_186, %c0_187] : memref<302x16xbf16, #tpu.memory_space<vmem>>, vector<216x16xbf16>
    %c86_188 = arith.constant 86 : index
    %c0_189 = arith.constant 0 : index
    %141 = vector.load %arg12[%c86_188, %c0_189] : memref<302x16xbf16, #tpu.memory_space<vmem>>, vector<216x16xbf16>
    %142 = tpu.concatenate %115, %116, %117, %118, %119, %120, %121, %122, %123, %124, %125, %126, %127, %128, %129, %130 in 1 : vector<216x16xbf16>, vector<216x16xbf16>, vector<216x16xbf16>, vector<216x16xbf16>, vector<216x16xbf16>, vector<216x16xbf16>, vector<216x16xbf16>, vector<216x16xbf16>, vector<216x16xbf16>, vector<216x16xbf16>, vector<216x16xbf16>, vector<216x16xbf16>, vector<216x16xbf16>, vector<216x16xbf16>, vector<216x16xbf16>, vector<216x16xbf16> -> vector<216x256xbf16>
    %143 = tpu.concatenate %131, %132, %133, %134, %135, %136, %137, %138, %139, %140, %141 in 1 : vector<216x16xbf16>, vector<216x16xbf16>, vector<216x16xbf16>, vector<216x16xbf16>, vector<216x16xbf16>, vector<216x16xbf16>, vector<216x16xbf16>, vector<216x16xbf16>, vector<216x16xbf16>, vector<216x16xbf16>, vector<216x16xbf16> -> vector<216x176xbf16>
    %144 = tpu.concatenate %142, %143 in 1 : vector<216x256xbf16>, vector<216x176xbf16> -> vector<216x432xbf16>
    %c0_190 = arith.constant 0 : index
    %c0_191 = arith.constant 0 : index
    %145 = vector.load %arg8[%c0_190, %c0_191] : memref<432x8xbf16, #tpu.memory_space<vmem>>, vector<432x8xbf16>
    %cst_192 = arith.constant dense<0.000000e+00> : vector<216x8xf32>
    %146 = tpu.matmul %144, %145, %cst_192 {dimension_numbers = #tpu.dot_dimension_numbers<[1], [0], [0], [1], [0, 0, 1, 1], [], []>} : vector<216x432xbf16>, vector<432x8xbf16>, vector<216x8xf32> -> vector<216x8xf32>
    %c0_193 = arith.constant 0 : index
    %c0_194 = arith.constant 0 : index
    %147 = vector.load %arg9[%c0_193, %c0_194] : memref<1x8xf32, #tpu.memory_space<vmem>>, vector<1x8xf32>
    %148 = vector.broadcast %147 : vector<1x8xf32> to vector<216x8xf32>
    %149 = arith.addf %146, %148 : vector<216x8xf32>
    %150 = vector.extract_strided_slice %149 {offsets = [43, 0], sizes = [4, 8], strides = [1, 1]} : vector<216x8xf32> to vector<4x8xf32>
    %c0_195 = arith.constant 0 : index
    %c0_196 = arith.constant 0 : index
    %c0_197 = arith.constant 0 : index
    %151 = vector.load %arg11[%c0_195, %c0_196, %c0_197] : memref<1x64x8xf32, #tpu.memory_space<vmem>>, vector<1x4x8xf32>
    %152 = vector.shape_cast %151 : vector<1x4x8xf32> to vector<4x8xf32>
    %153 = vector.shape_cast %150 : vector<4x8xf32> to vector<1x4x8xf32>
    tpu.vector_store %arg11[%c0_195, %c0_196, %c0_197], %153 {strides = array<i32>} : memref<1x64x8xf32, #tpu.memory_space<vmem>>, vector<1x4x8xf32>,
    %154 = vector.extract_strided_slice %149 {offsets = [49, 0], sizes = [4, 8], strides = [1, 1]} : vector<216x8xf32> to vector<4x8xf32>
    %c0_198 = arith.constant 0 : index
    %c4 = arith.constant 4 : index
    %c0_199 = arith.constant 0 : index
    %155 = vector.load %arg11[%c0_198, %c4, %c0_199] : memref<1x64x8xf32, #tpu.memory_space<vmem>>, vector<1x4x8xf32>
    %156 = vector.shape_cast %155 : vector<1x4x8xf32> to vector<4x8xf32>
    %157 = vector.shape_cast %154 : vector<4x8xf32> to vector<1x4x8xf32>
    tpu.vector_store %arg11[%c0_198, %c4, %c0_199], %157 {strides = array<i32>} : memref<1x64x8xf32, #tpu.memory_space<vmem>>, vector<1x4x8xf32>,
    %158 = vector.extract_strided_slice %149 {offsets = [55, 0], sizes = [4, 8], strides = [1, 1]} : vector<216x8xf32> to vector<4x8xf32>
    %c0_200 = arith.constant 0 : index
    %c8_201 = arith.constant 8 : index
    %c0_202 = arith.constant 0 : index
    %159 = vector.load %arg11[%c0_200, %c8_201, %c0_202] : memref<1x64x8xf32, #tpu.memory_space<vmem>>, vector<1x4x8xf32>
    %160 = vector.shape_cast %159 : vector<1x4x8xf32> to vector<4x8xf32>
    %161 = vector.shape_cast %158 : vector<4x8xf32> to vector<1x4x8xf32>
    tpu.vector_store %arg11[%c0_200, %c8_201, %c0_202], %161 {strides = array<i32>} : memref<1x64x8xf32, #tpu.memory_space<vmem>>, vector<1x4x8xf32>,
    %162 = vector.extract_strided_slice %149 {offsets = [61, 0], sizes = [4, 8], strides = [1, 1]} : vector<216x8xf32> to vector<4x8xf32>
    %c0_203 = arith.constant 0 : index
    %c12_204 = arith.constant 12 : index
    %c0_205 = arith.constant 0 : index
    %163 = vector.load %arg11[%c0_203, %c12_204, %c0_205] : memref<1x64x8xf32, #tpu.memory_space<vmem>>, vector<1x4x8xf32>
    %164 = vector.shape_cast %163 : vector<1x4x8xf32> to vector<4x8xf32>
    %165 = vector.shape_cast %162 : vector<4x8xf32> to vector<1x4x8xf32>
    tpu.vector_store %arg11[%c0_203, %c12_204, %c0_205], %165 {strides = array<i32>} : memref<1x64x8xf32, #tpu.memory_space<vmem>>, vector<1x4x8xf32>,
    %166 = vector.extract_strided_slice %149 {offsets = [79, 0], sizes = [4, 8], strides = [1, 1]} : vector<216x8xf32> to vector<4x8xf32>
    %c0_206 = arith.constant 0 : index
    %c16 = arith.constant 16 : index
    %c0_207 = arith.constant 0 : index
    %167 = vector.load %arg11[%c0_206, %c16, %c0_207] : memref<1x64x8xf32, #tpu.memory_space<vmem>>, vector<1x4x8xf32>
    %168 = vector.shape_cast %167 : vector<1x4x8xf32> to vector<4x8xf32>
    %169 = vector.shape_cast %166 : vector<4x8xf32> to vector<1x4x8xf32>
    tpu.vector_store %arg11[%c0_206, %c16, %c0_207], %169 {strides = array<i32>} : memref<1x64x8xf32, #tpu.memory_space<vmem>>, vector<1x4x8xf32>,
    %170 = vector.extract_strided_slice %149 {offsets = [85, 0], sizes = [4, 8], strides = [1, 1]} : vector<216x8xf32> to vector<4x8xf32>
    %c0_208 = arith.constant 0 : index
    %c20 = arith.constant 20 : index
    %c0_209 = arith.constant 0 : index
    %171 = vector.load %arg11[%c0_208, %c20, %c0_209] : memref<1x64x8xf32, #tpu.memory_space<vmem>>, vector<1x4x8xf32>
    %172 = vector.shape_cast %171 : vector<1x4x8xf32> to vector<4x8xf32>
    %173 = vector.shape_cast %170 : vector<4x8xf32> to vector<1x4x8xf32>
    tpu.vector_store %arg11[%c0_208, %c20, %c0_209], %173 {strides = array<i32>} : memref<1x64x8xf32, #tpu.memory_space<vmem>>, vector<1x4x8xf32>,
    %174 = vector.extract_strided_slice %149 {offsets = [91, 0], sizes = [4, 8], strides = [1, 1]} : vector<216x8xf32> to vector<4x8xf32>
    %c0_210 = arith.constant 0 : index
    %c24 = arith.constant 24 : index
    %c0_211 = arith.constant 0 : index
    %175 = vector.load %arg11[%c0_210, %c24, %c0_211] : memref<1x64x8xf32, #tpu.memory_space<vmem>>, vector<1x4x8xf32>
    %176 = vector.shape_cast %175 : vector<1x4x8xf32> to vector<4x8xf32>
    %177 = vector.shape_cast %174 : vector<4x8xf32> to vector<1x4x8xf32>
    tpu.vector_store %arg11[%c0_210, %c24, %c0_211], %177 {strides = array<i32>} : memref<1x64x8xf32, #tpu.memory_space<vmem>>, vector<1x4x8xf32>,
    %178 = vector.extract_strided_slice %149 {offsets = [97, 0], sizes = [4, 8], strides = [1, 1]} : vector<216x8xf32> to vector<4x8xf32>
    %c0_212 = arith.constant 0 : index
    %c28 = arith.constant 28 : index
    %c0_213 = arith.constant 0 : index
    %179 = vector.load %arg11[%c0_212, %c28, %c0_213] : memref<1x64x8xf32, #tpu.memory_space<vmem>>, vector<1x4x8xf32>
    %180 = vector.shape_cast %179 : vector<1x4x8xf32> to vector<4x8xf32>
    %181 = vector.shape_cast %178 : vector<4x8xf32> to vector<1x4x8xf32>
    tpu.vector_store %arg11[%c0_212, %c28, %c0_213], %181 {strides = array<i32>} : memref<1x64x8xf32, #tpu.memory_space<vmem>>, vector<1x4x8xf32>,
    %182 = vector.extract_strided_slice %149 {offsets = [115, 0], sizes = [4, 8], strides = [1, 1]} : vector<216x8xf32> to vector<4x8xf32>
    %c0_214 = arith.constant 0 : index
    %c32 = arith.constant 32 : index
    %c0_215 = arith.constant 0 : index
    %183 = vector.load %arg11[%c0_214, %c32, %c0_215] : memref<1x64x8xf32, #tpu.memory_space<vmem>>, vector<1x4x8xf32>
    %184 = vector.shape_cast %183 : vector<1x4x8xf32> to vector<4x8xf32>
    %185 = vector.shape_cast %182 : vector<4x8xf32> to vector<1x4x8xf32>
    tpu.vector_store %arg11[%c0_214, %c32, %c0_215], %185 {strides = array<i32>} : memref<1x64x8xf32, #tpu.memory_space<vmem>>, vector<1x4x8xf32>,
    %186 = vector.extract_strided_slice %149 {offsets = [121, 0], sizes = [4, 8], strides = [1, 1]} : vector<216x8xf32> to vector<4x8xf32>
    %c0_216 = arith.constant 0 : index
    %c36_217 = arith.constant 36 : index
    %c0_218 = arith.constant 0 : index
    %187 = vector.load %arg11[%c0_216, %c36_217, %c0_218] : memref<1x64x8xf32, #tpu.memory_space<vmem>>, vector<1x4x8xf32>
    %188 = vector.shape_cast %187 : vector<1x4x8xf32> to vector<4x8xf32>
    %189 = vector.shape_cast %186 : vector<4x8xf32> to vector<1x4x8xf32>
    tpu.vector_store %arg11[%c0_216, %c36_217, %c0_218], %189 {strides = array<i32>} : memref<1x64x8xf32, #tpu.memory_space<vmem>>, vector<1x4x8xf32>,
    %190 = vector.extract_strided_slice %149 {offsets = [127, 0], sizes = [4, 8], strides = [1, 1]} : vector<216x8xf32> to vector<4x8xf32>
    %c0_219 = arith.constant 0 : index
    %c40 = arith.constant 40 : index
    %c0_220 = arith.constant 0 : index
    %191 = vector.load %arg11[%c0_219, %c40, %c0_220] : memref<1x64x8xf32, #tpu.memory_space<vmem>>, vector<1x4x8xf32>
    %192 = vector.shape_cast %191 : vector<1x4x8xf32> to vector<4x8xf32>
    %193 = vector.shape_cast %190 : vector<4x8xf32> to vector<1x4x8xf32>
    tpu.vector_store %arg11[%c0_219, %c40, %c0_220], %193 {strides = array<i32>} : memref<1x64x8xf32, #tpu.memory_space<vmem>>, vector<1x4x8xf32>,
    %194 = vector.extract_strided_slice %149 {offsets = [133, 0], sizes = [4, 8], strides = [1, 1]} : vector<216x8xf32> to vector<4x8xf32>
    %c0_221 = arith.constant 0 : index
    %c44_222 = arith.constant 44 : index
    %c0_223 = arith.constant 0 : index
    %195 = vector.load %arg11[%c0_221, %c44_222, %c0_223] : memref<1x64x8xf32, #tpu.memory_space<vmem>>, vector<1x4x8xf32>
    %196 = vector.shape_cast %195 : vector<1x4x8xf32> to vector<4x8xf32>
    %197 = vector.shape_cast %194 : vector<4x8xf32> to vector<1x4x8xf32>
    tpu.vector_store %arg11[%c0_221, %c44_222, %c0_223], %197 {strides = array<i32>} : memref<1x64x8xf32, #tpu.memory_space<vmem>>, vector<1x4x8xf32>,
    %198 = vector.extract_strided_slice %149 {offsets = [151, 0], sizes = [4, 8], strides = [1, 1]} : vector<216x8xf32> to vector<4x8xf32>
    %c0_224 = arith.constant 0 : index
    %c48_225 = arith.constant 48 : index
    %c0_226 = arith.constant 0 : index
    %199 = vector.load %arg11[%c0_224, %c48_225, %c0_226] : memref<1x64x8xf32, #tpu.memory_space<vmem>>, vector<1x4x8xf32>
    %200 = vector.shape_cast %199 : vector<1x4x8xf32> to vector<4x8xf32>
    %201 = vector.shape_cast %198 : vector<4x8xf32> to vector<1x4x8xf32>
    tpu.vector_store %arg11[%c0_224, %c48_225, %c0_226], %201 {strides = array<i32>} : memref<1x64x8xf32, #tpu.memory_space<vmem>>, vector<1x4x8xf32>,
    %202 = vector.extract_strided_slice %149 {offsets = [157, 0], sizes = [4, 8], strides = [1, 1]} : vector<216x8xf32> to vector<4x8xf32>
    %c0_227 = arith.constant 0 : index
    %c52 = arith.constant 52 : index
    %c0_228 = arith.constant 0 : index
    %203 = vector.load %arg11[%c0_227, %c52, %c0_228] : memref<1x64x8xf32, #tpu.memory_space<vmem>>, vector<1x4x8xf32>
    %204 = vector.shape_cast %203 : vector<1x4x8xf32> to vector<4x8xf32>
    %205 = vector.shape_cast %202 : vector<4x8xf32> to vector<1x4x8xf32>
    tpu.vector_store %arg11[%c0_227, %c52, %c0_228], %205 {strides = array<i32>} : memref<1x64x8xf32, #tpu.memory_space<vmem>>, vector<1x4x8xf32>,
    %206 = vector.extract_strided_slice %149 {offsets = [163, 0], sizes = [4, 8], strides = [1, 1]} : vector<216x8xf32> to vector<4x8xf32>
    %c0_229 = arith.constant 0 : index
    %c56 = arith.constant 56 : index
    %c0_230 = arith.constant 0 : index
    %207 = vector.load %arg11[%c0_229, %c56, %c0_230] : memref<1x64x8xf32, #tpu.memory_space<vmem>>, vector<1x4x8xf32>
    %208 = vector.shape_cast %207 : vector<1x4x8xf32> to vector<4x8xf32>
    %209 = vector.shape_cast %206 : vector<4x8xf32> to vector<1x4x8xf32>
    tpu.vector_store %arg11[%c0_229, %c56, %c0_230], %209 {strides = array<i32>} : memref<1x64x8xf32, #tpu.memory_space<vmem>>, vector<1x4x8xf32>,
    %210 = vector.extract_strided_slice %149 {offsets = [169, 0], sizes = [4, 8], strides = [1, 1]} : vector<216x8xf32> to vector<4x8xf32>
    %c0_231 = arith.constant 0 : index
    %c60 = arith.constant 60 : index
    %c0_232 = arith.constant 0 : index
    %211 = vector.load %arg11[%c0_231, %c60, %c0_232] : memref<1x64x8xf32, #tpu.memory_space<vmem>>, vector<1x4x8xf32>
    %212 = vector.shape_cast %211 : vector<1x4x8xf32> to vector<4x8xf32>
    %213 = vector.shape_cast %210 : vector<4x8xf32> to vector<1x4x8xf32>
    tpu.vector_store %arg11[%c0_231, %c60, %c0_232], %213 {strides = array<i32>} : memref<1x64x8xf32, #tpu.memory_space<vmem>>, vector<1x4x8xf32>,
    return
  }
  func.func @transform_0(%arg0: i32) -> (i32, i32, i32) {
    %c0_i32 = arith.constant 0 : i32
    %c0_i32_0 = arith.constant 0 : i32
    %c0_i32_1 = arith.constant 0 : i32
    return %arg0, %c0_i32, %c0_i32_0 : i32, i32, i32
  }
  func.func @transform_1(%arg0: i32) -> (i32, i32) {
    %c0_i32 = arith.constant 0 : i32
    %c0_i32_0 = arith.constant 0 : i32
    %c0_i32_1 = arith.constant 0 : i32
    return %c0_i32, %c0_i32_0 : i32, i32
  }
  func.func @transform_2(%arg0: i32) -> (i32, i32) {
    %c0_i32 = arith.constant 0 : i32
    %c0_i32_0 = arith.constant 0 : i32
    %c0_i32_1 = arith.constant 0 : i32
    return %c0_i32, %c0_i32_0 : i32, i32
  }
  func.func @transform_3(%arg0: i32) -> (i32, i32) {
    %c0_i32 = arith.constant 0 : i32
    %c0_i32_0 = arith.constant 0 : i32
    %c0_i32_1 = arith.constant 0 : i32
    return %c0_i32, %c0_i32_0 : i32, i32
  }
  func.func @transform_4(%arg0: i32) -> (i32, i32) {
    %c0_i32 = arith.constant 0 : i32
    %c0_i32_0 = arith.constant 0 : i32
    %c0_i32_1 = arith.constant 0 : i32
    return %c0_i32, %c0_i32_0 : i32, i32
  }
  func.func @transform_5(%arg0: i32) -> (i32, i32) {
    %c0_i32 = arith.constant 0 : i32
    %c0_i32_0 = arith.constant 0 : i32
    %c0_i32_1 = arith.constant 0 : i32
    return %c0_i32, %c0_i32_0 : i32, i32
  }
  func.func @transform_6(%arg0: i32) -> (i32, i32) {
    %c0_i32 = arith.constant 0 : i32
    %c0_i32_0 = arith.constant 0 : i32
    %c0_i32_1 = arith.constant 0 : i32
    return %c0_i32, %c0_i32_0 : i32, i32
  }
  func.func @transform_7(%arg0: i32) -> (i32, i32) {
    %c0_i32 = arith.constant 0 : i32
    %c0_i32_0 = arith.constant 0 : i32
    %c0_i32_1 = arith.constant 0 : i32
    return %c0_i32, %c0_i32_0 : i32, i32
  }
  func.func @transform_8(%arg0: i32) -> (i32, i32) {
    %c0_i32 = arith.constant 0 : i32
    %c0_i32_0 = arith.constant 0 : i32
    %c0_i32_1 = arith.constant 0 : i32
    return %c0_i32, %c0_i32_0 : i32, i32
  }
  func.func @transform_9(%arg0: i32) -> (i32, i32) {
    %c0_i32 = arith.constant 0 : i32
    %c0_i32_0 = arith.constant 0 : i32
    %c0_i32_1 = arith.constant 0 : i32
    return %c0_i32, %c0_i32_0 : i32, i32
  }
  func.func @transform_10(%arg0: i32) -> (i32, i32, i32) {
    %c0_i32 = arith.constant 0 : i32
    %c0_i32_0 = arith.constant 0 : i32
    %c0_i32_1 = arith.constant 0 : i32
    return %arg0, %c0_i32, %c0_i32_0 : i32, i32, i32
  }
}

</mosaic_0001>

<llo_original>
// kernel: encoder_forward.1
$region0: #{encoder_forward.1}
  #allocation0 [shape = 'u32[]', space=smem, size = 0x4, offset = 0x4, fixed_abs, tag = 'smem constant byte address 0x4 - core index']
  #allocation1 [shape = 'u32[144,128]{1,0:T(1,128)}', space=vmem, size = 0x12000, scoped, tag = 'internal scratch']
  #allocation2 [shape = 'bf16[302,16]{1,0:T(8,128)(2,1)}', space=vmem, size = 0x13000, scoped, tag = 'scratch operand']
  #allocation3 [shape = 'bf16[302,16]{1,0:T(8,128)(2,1)}', space=vmem, size = 0x13000, scoped, tag = 'scratch operand']
  %s0 = inlined_call_operand.vmem [shape: bf16[2,259,32], index: 0, kind: input, shape index: {}]
  %s1 = inlined_call_operand.vmem [shape: bf16[256,16], index: 1, kind: input, shape index: {}]
  %s2 = inlined_call_operand.vmem [shape: f32[1,16], index: 2, kind: input, shape index: {}]
  %s3 = inlined_call_operand.vmem [shape: bf16[432,16], index: 3, kind: input, shape index: {}]
  %s4 = inlined_call_operand.vmem [shape: f32[1,16], index: 4, kind: input, shape index: {}]
  %s5 = inlined_call_operand.vmem [shape: bf16[432,16], index: 5, kind: input, shape index: {}]
  %s6 = inlined_call_operand.vmem [shape: f32[1,16], index: 6, kind: input, shape index: {}]
  %s7 = inlined_call_operand.vmem [shape: bf16[432,8], index: 7, kind: input, shape index: {}]
  %s8 = inlined_call_operand.vmem [shape: f32[1,8], index: 8, kind: input, shape index: {}]
  %s9 = inlined_call_operand.vmem [shape: f32[216,1], index: 9, kind: input, shape index: {}]
  %s10 = inlined_call_operand.hbm [shape: f32[2,64,8], index: 10, kind: output, shape index: {}]
  %s11 = sld [smem:[#allocation0]]
  $region73: #{encoder_forward.1} parent=0
    _
  %s13 = ssub.s32 1, %s11
  %s14 = scalar_select 0, %s13, %s11
  $region1: #{encoder_forward.1} parent=0
    #allocation4 [shape = 'u8[65536]{0}', space=vmem, size = 0x10000, scoped, tag = 'output window, operand 0']
    #allocation5 [shape = 's32[2]{0}', space=sflag, size = 0x8, scoped, tag = 'scoped memory for encoder_forward.1']
    %15 = vsyncpa [#allocation5], 0
    %s16 = scalar_lea.sflag [#allocation5], 1
    %17 = vsyncpa %s16, 0
    loop: start=0, step=1, limit=4
    $region2: #{encoder_forward.1} parent=1 // loop_pre_header
      _
    $region3: #{encoder_forward.1} parent=1 // loop_header
      %s19 = sphi 0, %s23
      %p20 = scmp.ge.s32.totalorder %s19, 4
      %s29 = sphi 0, %s31
      %s32 = sphi 0, %s29
      %s33 = sphi 0, %s32
      %s49 = sphi 0, %s33
      %s53 = sphi 0, %s53
      %s55 = sphi 0, %s53
      %s56 = sphi 0, %s55
      %s70 = sphi 0, %s56
      %s74 = sphi 0, %s74
      %s76 = sphi 0, %s74
      %s77 = sphi 0, %s76
      %s91 = sphi 0, %s77
      %s95 = sphi 0, %s95
      %s97 = sphi 0, %s95
      %s98 = sphi 0, %s97
      %s112 = sphi 0, %s98
      %s116 = sphi 0, %s116
      %s118 = sphi 0, %s116
      %s119 = sphi 0, %s118
      %s133 = sphi 0, %s119
      %s137 = sphi 0, %s137
      %s139 = sphi 0, %s137
      %s140 = sphi 0, %s139
      %s154 = sphi 0, %s140
      %s158 = sphi 0, %s158
      %s160 = sphi 0, %s158
      %s161 = sphi 0, %s160
      %s175 = sphi 0, %s161
      %s179 = sphi 0, %s179
      %s181 = sphi 0, %s179
      %s182 = sphi 0, %s181
      %s196 = sphi 0, %s182
      %s200 = sphi 0, %s200
      %s202 = sphi 0, %s200
      %s203 = sphi 0, %s202
      %s217 = sphi 0, %s203
      %s221 = sphi 0, %s221
      %s223 = sphi 0, %s221
      %s224 = sphi 0, %s223
      %s238 = sphi 0, %s224
      %s244 = sphi 0, %s246
      %s247 = sphi 0, %s244
      %s248 = sphi 0, %s247
      %s264 = sphi 0, %s248
    $region4: #{encoder_forward.1} parent=1 // loop_header_branch
      %22 = sbr.rel (%p20) target = $region8
    $region5: #{encoder_forward.1} parent=1 // loop_body
      %s24 = ssub.s32 %s19, 1
      %s25 = ssub.s32 %s19, 2
      %s26 = sadd.s32 %s19, 1
      %s27 = ssub.s32 %s19, %s26
      %p28 = scmp.eq.s32.totalorder %s27, 0
      %s30 = sadd.s32 %s29, 1
      %s31 = scalar_select %p28, %s29, %s30
      %p34 = pneg %p28
      %p35 = scmp.eq.s32.totalorder %s19, 1
      %p36 = por %p34, %p35
      %p37 = scmp.ne.s32.totalorder %s29, %s32
      %p38 = scmp.eq.s32.totalorder %s19, 0
      %p39 = por %p37, %p38
      %p40 = scmp.ne.s32.totalorder %s29, %s32
      %p41 = scmp.eq.s32.totalorder %s24, 1
      %p42 = por %p40, %p41
      %p43 = scmp.ne.s32.totalorder %s32, %s33
      %p44 = scmp.eq.s32.totalorder %s24, 0
      %p45 = por %p43, %p44
      %p46 = scmp.ne.s32.totalorder %s32, %s33
      %p47 = scmp.eq.s32.totalorder %s25, 1
      %p48 = por %p46, %p47
      %p50 = scmp.ne.s32.totalorder %s33, %s49
      %p51 = scmp.eq.s32.totalorder %s25, 0
      %p52 = por %p50, %p51
      %s54 = sadd.s32 %s53, 1
      %p57 = scmp.eq.s32.totalorder %s19, 1
      %p58 = scmp.ne.s32.totalorder %s53, %s55
      %p59 = scmp.eq.s32.totalorder %s19, 0
      %p60 = por %p58, %p59
      %p61 = scmp.ne.s32.totalorder %s53, %s55
      %p62 = scmp.eq.s32.totalorder %s24, 1
      %p63 = por %p61, %p62
      %p64 = scmp.ne.s32.totalorder %s55, %s56
      %p65 = scmp.eq.s32.totalorder %s24, 0
      %p66 = por %p64, %p65
      %p67 = scmp.ne.s32.totalorder %s55, %s56
      %p68 = scmp.eq.s32.totalorder %s25, 1
      %p69 = por %p67, %p68
      %p71 = scmp.ne.s32.totalorder %s56, %s70
      %p72 = scmp.eq.s32.totalorder %s25, 0
      %p73 = por %p71, %p72
      %s75 = sadd.s32 %s74, 1
      %p78 = scmp.eq.s32.totalorder %s19, 1
      %p79 = scmp.ne.s32.totalorder %s74, %s76
      %p80 = scmp.eq.s32.totalorder %s19, 0
      %p81 = por %p79, %p80
      %p82 = scmp.ne.s32.totalorder %s74, %s76
      %p83 = scmp.eq.s32.totalorder %s24, 1
      %p84 = por %p82, %p83
      %p85 = scmp.ne.s32.totalorder %s76, %s77
      %p86 = scmp.eq.s32.totalorder %s24, 0
      %p87 = por %p85, %p86
      %p88 = scmp.ne.s32.totalorder %s76, %s77
      %p89 = scmp.eq.s32.totalorder %s25, 1
      %p90 = por %p88, %p89
      %p92 = scmp.ne.s32.totalorder %s77, %s91
      %p93 = scmp.eq.s32.totalorder %s25, 0
      %p94 = por %p92, %p93
      %s96 = sadd.s32 %s95, 1
      %p99 = scmp.eq.s32.totalorder %s19, 1
      %p100 = scmp.ne.s32.totalorder %s95, %s97
      %p101 = scmp.eq.s32.totalorder %s19, 0
      %p102 = por %p100, %p101
      %p103 = scmp.ne.s32.totalorder %s95, %s97
      %p104 = scmp.eq.s32.totalorder %s24, 1
      %p105 = por %p103, %p104
      %p106 = scmp.ne.s32.totalorder %s97, %s98
      %p107 = scmp.eq.s32.totalorder %s24, 0
      %p108 = por %p106, %p107
      %p109 = scmp.ne.s32.totalorder %s97, %s98
      %p110 = scmp.eq.s32.totalorder %s25, 1
      %p111 = por %p109, %p110
      %p113 = scmp.ne.s32.totalorder %s98, %s112
      %p114 = scmp.eq.s32.totalorder %s25, 0
      %p115 = por %p113, %p114
      %s117 = sadd.s32 %s116, 1
      %p120 = scmp.eq.s32.totalorder %s19, 1
      %p121 = scmp.ne.s32.totalorder %s116, %s118
      %p122 = scmp.eq.s32.totalorder %s19, 0
      %p123 = por %p121, %p122
      %p124 = scmp.ne.s32.totalorder %s116, %s118
      %p125 = scmp.eq.s32.totalorder %s24, 1
      %p126 = por %p124, %p125
      %p127 = scmp.ne.s32.totalorder %s118, %s119
      %p128 = scmp.eq.s32.totalorder %s24, 0
      %p129 = por %p127, %p128
      %p130 = scmp.ne.s32.totalorder %s118, %s119
      %p131 = scmp.eq.s32.totalorder %s25, 1
      %p132 = por %p130, %p131
      %p134 = scmp.ne.s32.totalorder %s119, %s133
      %p135 = scmp.eq.s32.totalorder %s25, 0
      %p136 = por %p134, %p135
      %s138 = sadd.s32 %s137, 1
      %p141 = scmp.eq.s32.totalorder %s19, 1
      %p142 = scmp.ne.s32.totalorder %s137, %s139
      %p143 = scmp.eq.s32.totalorder %s19, 0
      %p144 = por %p142, %p143
      %p145 = scmp.ne.s32.totalorder %s137, %s139
      %p146 = scmp.eq.s32.totalorder %s24, 1
      %p147 = por %p145, %p146
      %p148 = scmp.ne.s32.totalorder %s139, %s140
      %p149 = scmp.eq.s32.totalorder %s24, 0
      %p150 = por %p148, %p149
      %p151 = scmp.ne.s32.totalorder %s139, %s140
      %p152 = scmp.eq.s32.totalorder %s25, 1
      %p153 = por %p151, %p152
      %p155 = scmp.ne.s32.totalorder %s140, %s154
      %p156 = scmp.eq.s32.totalorder %s25, 0
      %p157 = por %p155, %p156
      %s159 = sadd.s32 %s158, 1
      %p162 = scmp.eq.s32.totalorder %s19, 1
      %p163 = scmp.ne.s32.totalorder %s158, %s160
      %p164 = scmp.eq.s32.totalorder %s19, 0
      %p165 = por %p163, %p164
      %p166 = scmp.ne.s32.totalorder %s158, %s160
      %p167 = scmp.eq.s32.totalorder %s24, 1
      %p168 = por %p166, %p167
      %p169 = scmp.ne.s32.totalorder %s160, %s161
      %p170 = scmp.eq.s32.totalorder %s24, 0
      %p171 = por %p169, %p170
      %p172 = scmp.ne.s32.totalorder %s160, %s161
      %p173 = scmp.eq.s32.totalorder %s25, 1
      %p174 = por %p172, %p173
      %p176 = scmp.ne.s32.totalorder %s161, %s175
      %p177 = scmp.eq.s32.totalorder %s25, 0
      %p178 = por %p176, %p177
      %s180 = sadd.s32 %s179, 1
      %p183 = scmp.eq.s32.totalorder %s19, 1
      %p184 = scmp.ne.s32.totalorder %s179, %s181
      %p185 = scmp.eq.s32.totalorder %s19, 0
      %p186 = por %p184, %p185
      %p187 = scmp.ne.s32.totalorder %s179, %s181
      %p188 = scmp.eq.s32.totalorder %s24, 1
      %p189 = por %p187, %p188
      %p190 = scmp.ne.s32.totalorder %s181, %s182
      %p191 = scmp.eq.s32.totalorder %s24, 0
      %p192 = por %p190, %p191
      %p193 = scmp.ne.s32.totalorder %s181, %s182
      %p194 = scmp.eq.s32.totalorder %s25, 1
      %p195 = por %p193, %p194
      %p197 = scmp.ne.s32.totalorder %s182, %s196
      %p198 = scmp.eq.s32.totalorder %s25, 0
      %p199 = por %p197, %p198
      %s201 = sadd.s32 %s200, 1
      %p204 = scmp.eq.s32.totalorder %s19, 1
      %p205 = scmp.ne.s32.totalorder %s200, %s202
      %p206 = scmp.eq.s32.totalorder %s19, 0
      %p207 = por %p205, %p206
      %p208 = scmp.ne.s32.totalorder %s200, %s202
      %p209 = scmp.eq.s32.totalorder %s24, 1
      %p210 = por %p208, %p209
      %p211 = scmp.ne.s32.totalorder %s202, %s203
      %p212 = scmp.eq.s32.totalorder %s24, 0
      %p213 = por %p211, %p212
      %p214 = scmp.ne.s32.totalorder %s202, %s203
      %p215 = scmp.eq.s32.totalorder %s25, 1
      %p216 = por %p214, %p215
      %p218 = scmp.ne.s32.totalorder %s203, %s217
      %p219 = scmp.eq.s32.totalorder %s25, 0
      %p220 = por %p218, %p219
      %s222 = sadd.s32 %s221, 1
      %p225 = scmp.eq.s32.totalorder %s19, 1
      %p226 = scmp.ne.s32.totalorder %s221, %s223
      %p227 = scmp.eq.s32.totalorder %s19, 0
      %p228 = por %p226, %p227
      %p229 = scmp.ne.s32.totalorder %s221, %s223
      %p230 = scmp.eq.s32.totalorder %s24, 1
      %p231 = por %p229, %p230
      %p232 = scmp.ne.s32.totalorder %s223, %s224
      %p233 = scmp.eq.s32.totalorder %s24, 0
      %p234 = por %p232, %p233
      %p235 = scmp.ne.s32.totalorder %s223, %s224
      %p236 = scmp.eq.s32.totalorder %s25, 1
      %p237 = por %p235, %p236
      %p239 = scmp.ne.s32.totalorder %s224, %s238
      %p240 = scmp.eq.s32.totalorder %s25, 0
      %p241 = por %p239, %p240
      %s242 = ssub.s32 %s19, %s26
      %p243 = scmp.eq.s32.totalorder %s242, 0
      %s245 = sadd.s32 %s244, 1
      %s246 = scalar_select %p243, %s244, %s245
      %p249 = pneg %p243
      %p250 = scmp.eq.s32.totalorder %s19, 1
      %p251 = por %p249, %p250
      %p252 = scmp.ne.s32.totalorder %s244, %s247
      %p253 = scmp.eq.s32.totalorder %s19, 0
      %p254 = por %p252, %p253
      %p255 = scmp.ne.s32.totalorder %s244, %s247
      %p256 = scmp.eq.s32.totalorder %s24, 1
      %p257 = por %p255, %p256
      %p258 = scmp.ne.s32.totalorder %s247, %s248
      %p259 = scmp.eq.s32.totalorder %s24, 0
      %p260 = por %p258, %p259
      %p261 = scmp.ne.s32.totalorder %s247, %s248
      %p262 = scmp.eq.s32.totalorder %s25, 1
      %p263 = por %p261, %p262
      %p265 = scmp.ne.s32.totalorder %s248, %s264
      %p266 = scmp.eq.s32.totalorder %s25, 0
      %p267 = por %p265, %p266
      %p268 = scmp.le.s32.totalorder 1, %s19
      %p269 = scmp.lt.s32.totalorder %s19, 3
      %p270 = pnand %p268, %p269
      %p271 = pneg %p270
      // Predicated region
      $region9: #{encoder_forward.1} parent=5 // pred_check
        _
      $region10: #{encoder_forward.1} parent=5 // pred_check_branch
        %273 = sbr.rel (%p270) target = $region12
      $region11: #{encoder_forward.1} parent=5 // pred_region
        %s274 = ssub.s32 %s19, 1
        // Predicated region
        $region13: #{encoder_forward.1} parent=11 // pred_check
          %p275 = pneg %p66
        $region14: #{encoder_forward.1} parent=11 // pred_check_branch
          %277 = sbr.rel (%p275) target = $region16
        $region15: #{encoder_forward.1} parent=11 // pred_region
          _
        $region16: #{encoder_forward.1} parent=11 // pred_fallthru
          _
        // Predicated region
        $region17: #{encoder_forward.1} parent=11 // pred_check
          %p278 = pneg %p87
        $region18: #{encoder_forward.1} parent=11 // pred_check_branch
          %280 = sbr.rel (%p278) target = $region20
        $region19: #{encoder_forward.1} parent=11 // pred_region
          _
        $region20: #{encoder_forward.1} parent=11 // pred_fallthru
          _
        // Predicated region
        $region21: #{encoder_forward.1} parent=11 // pred_check
          %p281 = pneg %p108
        $region22: #{encoder_forward.1} parent=11 // pred_check_branch
          %283 = sbr.rel (%p281) target = $region24
        $region23: #{encoder_forward.1} parent=11 // pred_region
          _
        $region24: #{encoder_forward.1} parent=11 // pred_fallthru
          _
        // Predicated region
        $region25: #{encoder_forward.1} parent=11 // pred_check
          %p284 = pneg %p129
        $region26: #{encoder_forward.1} parent=11 // pred_check_branch
          %286 = sbr.rel (%p284) target = $region28
        $region27: #{encoder_forward.1} parent=11 // pred_region
          _
        $region28: #{encoder_forward.1} parent=11 // pred_fallthru
          _
        // Predicated region
        $region29: #{encoder_forward.1} parent=11 // pred_check
          %p287 = pneg %p150
        $region30: #{encoder_forward.1} parent=11 // pred_check_branch
          %289 = sbr.rel (%p287) target = $region32
        $region31: #{encoder_forward.1} parent=11 // pred_region
          _
        $region32: #{encoder_forward.1} parent=11 // pred_fallthru
          _
        // Predicated region
        $region33: #{encoder_forward.1} parent=11 // pred_check
          %p290 = pneg %p171
        $region34: #{encoder_forward.1} parent=11 // pred_check_branch
          %292 = sbr.rel (%p290) target = $region36
        $region35: #{encoder_forward.1} parent=11 // pred_region
          _
        $region36: #{encoder_forward.1} parent=11 // pred_fallthru
          _
        // Predicated region
        $region37: #{encoder_forward.1} parent=11 // pred_check
          %p293 = pneg %p192
        $region38: #{encoder_forward.1} parent=11 // pred_check_branch
          %295 = sbr.rel (%p293) target = $region40
        $region39: #{encoder_forward.1} parent=11 // pred_region
          _
        $region40: #{encoder_forward.1} parent=11 // pred_fallthru
          _
        // Predicated region
        $region41: #{encoder_forward.1} parent=11 // pred_check
          %p296 = pneg %p213
        $region42: #{encoder_forward.1} parent=11 // pred_check_branch
          %298 = sbr.rel (%p296) target = $region44
        $region43: #{encoder_forward.1} parent=11 // pred_region
          _
        $region44: #{encoder_forward.1} parent=11 // pred_fallthru
          _
        // Predicated region
        $region45: #{encoder_forward.1} parent=11 // pred_check
          %p299 = pneg %p234
        $region46: #{encoder_forward.1} parent=11 // pred_check_branch
          %301 = sbr.rel (%p299) target = $region48
        $region47: #{encoder_forward.1} parent=11 // pred_region
          _
        $region48: #{encoder_forward.1} parent=11 // pred_fallthru
          _
      $region12: #{encoder_forward.1} parent=5 // pred_fallthru
        _
      %p302 = scmp.lt.s32.totalorder %s19, 2
      // Predicated region
      $region49: #{encoder_forward.1} parent=5 // pred_check
        %p303 = pneg %p302
      $region50: #{encoder_forward.1} parent=5 // pred_check_branch
        %305 = sbr.rel (%p303) target = $region52
      $region51: #{encoder_forward.1} parent=5 // pred_region
        // Predicated region
        $region53: #{encoder_forward.1} parent=51 // pred_check
          %p306 = pneg %p39
        $region54: #{encoder_forward.1} parent=51 // pred_check_branch
          %308 = sbr.rel (%p306) target = $region56
        $region55: #{encoder_forward.1} parent=51 // pred_region
          %p309 = scmp.lt.s32.totalorder %s19, 1
          %s310 = scalar_select %p309, %s19, 1
          %s311 = smul.addr %s310, 33
          %s312 = smul.addr %s311, 4
          %s313 = scalar_lea.vmem %s0, %s312
        $region56: #{encoder_forward.1} parent=51 // pred_fallthru
          _
      $region52: #{encoder_forward.1} parent=5 // pred_fallthru
        _
      %p314 = scmp.le.s32.totalorder 1, %s19
      %p315 = scmp.lt.s32.totalorder %s19, 3
      %p316 = pnand %p314, %p315
      %p317 = pneg %p316
      // Predicated region
      $region57: #{encoder_forward.1} parent=5 // pred_check
        _
      $region58: #{encoder_forward.1} parent=5 // pred_check_branch
        %319 = sbr.rel (%p316) target = $region60
      $region59: #{encoder_forward.1} parent=5 // pred_region
        %s320 = ssub.s32 %s19, 1
        %p321 = scmp.lt.s32.totalorder %s24, 1
        %s322 = scalar_select %p321, %s24, 1
        %s323 = smul.addr %s322, 33
        %s324 = smul.addr %s323, 4
        %s325 = scalar_lea.vmem %s0, %s324
        %p326 = pneg %p45
        %p327 = pneg %p42
        %p328 = pneg %p66
        %p329 = pneg %p63
        %p330 = pneg %p87
        %p331 = pneg %p84
        %p332 = pneg %p108
        %p333 = pneg %p105
        %p334 = pneg %p129
        %p335 = pneg %p126
        %p336 = pneg %p150
        %p337 = pneg %p147
        %p338 = pneg %p171
        %p339 = pneg %p168
        %p340 = pneg %p192
        %p341 = pneg %p189
        %p342 = pneg %p213
        %p343 = pneg %p210
        %p344 = pneg %p234
        %p345 = pneg %p231
        %p346 = pneg %p260
        %p347 = pneg %p257
        %s348 = sand.u32 %s247, 1
        %s349 = scalar_lea.sflag [#allocation5], %s348
        %s350 = sand.u32 %s247, 1
        %s351 = smul.addr %s350, 64
        %s352 = scalar_lea.vmem [#allocation4], %s351
        %p353 = scmp.lt.s32.totalorder %s24, 1
        %s354 = scalar_select %p353, %s24, 1
        %s355 = smul.addr %s354, 33
        %s356 = smul.addr %s355, 4
        %s357 = scalar_lea.vmem %s0, %s356
        %v359 = vld [vmem:[%s9] sm:$0xff]
        %v360 = vld [vmem:[%s9 + $0x8] sm:$0xff]
        %v361 = vld [vmem:[%s9 + $0x10] sm:$0xff]
        %v362 = vld [vmem:[%s9 + $0x18] sm:$0xff]
        %v363 = vld [vmem:[%s9 + $0x20] sm:$0xff]
        %v364 = vld [vmem:[%s9 + $0x28] sm:$0xff]
        %v365 = vld [vmem:[%s9 + $0x30] sm:$0xff]
        %v366 = vld [vmem:[%s9 + $0x38] sm:$0xff]
        %v367 = vld [vmem:[%s9 + $0x40] sm:$0xff]
        %v368 = vld [vmem:[%s9 + $0x48] sm:$0xff]
        %v369 = vld [vmem:[%s9 + $0x50] sm:$0xff]
        %v370 = vld [vmem:[%s9 + $0x58] sm:$0xff]
        %v371 = vld [vmem:[%s9 + $0x60] sm:$0xff]
        %v372 = vld [vmem:[%s9 + $0x68] sm:$0xff]
        %v373 = vld [vmem:[%s9 + $0x70] sm:$0xff]
        %v374 = vld [vmem:[%s9 + $0x78] sm:$0xff]
        %v375 = vld [vmem:[%s9 + $0x80] sm:$0xff]
        %v376 = vld [vmem:[%s9 + $0x88] sm:$0xff]
        %v377 = vld [vmem:[%s9 + $0x90] sm:$0xff]
        %v378 = vld [vmem:[%s9 + $0x98] sm:$0xff]
        %v379 = vld [vmem:[%s9 + $0xa0] sm:$0xff]
        %v380 = vld [vmem:[%s9 + $0xa8] sm:$0xff]
        %v381 = vld [vmem:[%s9 + $0xb0] sm:$0xff]
        %v382 = vld [vmem:[%s9 + $0xb8] sm:$0xff]
        %v383 = vld [vmem:[%s9 + $0xc0] sm:$0xff]
        %v384 = vld [vmem:[%s9 + $0xc8] sm:$0xff]
        %v385 = vld [vmem:[%s9 + $0xd0] sm:$0xff]
        %vm386 = vcmask 125952
        %387 = vst.msk [vmem:[#allocation2] sm:$0xf] %vm386, 0
        %388 = vst.msk [vmem:[#allocation2 + $0x4] sm:$0xf] %vm386, 0
        %389 = vst.msk [vmem:[#allocation2 + $0x8] sm:$0xf] %vm386, 0
        %390 = vst.msk [vmem:[#allocation2 + $0xc] sm:$0xf] %vm386, 0
        %391 = vst.msk [vmem:[#allocation2 + $0x10] sm:$0xf] %vm386, 0
        %392 = vst.msk [vmem:[#allocation2 + $0x14] sm:$0xf] %vm386, 0
        %393 = vst.msk [vmem:[#allocation2 + $0x18] sm:$0xf] %vm386, 0
        %394 = vst.msk [vmem:[#allocation2 + $0x1c] sm:$0xf] %vm386, 0
        %395 = vst.msk [vmem:[#allocation2 + $0x20] sm:$0xf] %vm386, 0
        %396 = vst.msk [vmem:[#allocation2 + $0x24] sm:$0xf] %vm386, 0
        %397 = vst.msk [vmem:[#allocation2 + $0x28] sm:$0xf] %vm386, 0
        %398 = vst.msk [vmem:[#allocation2 + $0x2c] sm:$0xf] %vm386, 0
        %399 = vst.msk [vmem:[#allocation2 + $0x30] sm:$0xf] %vm386, 0
        %400 = vst.msk [vmem:[#allocation2 + $0x34] sm:$0xf] %vm386, 0
        %401 = vst.msk [vmem:[#allocation2 + $0x38] sm:$0xf] %vm386, 0
        %402 = vst.msk [vmem:[#allocation2 + $0x3c] sm:$0xf] %vm386, 0
        %403 = vst.msk [vmem:[#allocation2 + $0x40] sm:$0xf] %vm386, 0
        %404 = vst.msk [vmem:[#allocation2 + $0x44] sm:$0xf] %vm386, 0
        %405 = vst.msk [vmem:[#allocation2 + $0x48] sm:$0xf] %vm386, 0
        %406 = vst.msk [vmem:[#allocation2 + $0x4c] sm:$0xf] %vm386, 0
        %407 = vst.msk [vmem:[#allocation2 + $0x50] sm:$0xf] %vm386, 0
        %408 = vst.msk [vmem:[#allocation2 + $0x54] sm:$0xf] %vm386, 0
        %409 = vst.msk [vmem:[#allocation2 + $0x58] sm:$0xf] %vm386, 0
        %410 = vst.msk [vmem:[#allocation2 + $0x5c] sm:$0xf] %vm386, 0
        %411 = vst.msk [vmem:[#allocation2 + $0x60] sm:$0xf] %vm386, 0
        %412 = vst.msk [vmem:[#allocation2 + $0x64] sm:$0xf] %vm386, 0
        %413 = vst.msk [vmem:[#allocation2 + $0x68] sm:$0xf] %vm386, 0
        %414 = vst.msk [vmem:[#allocation2 + $0x6c] sm:$0xf] %vm386, 0
        %415 = vst.msk [vmem:[#allocation2 + $0x70] sm:$0xf] %vm386, 0
        %416 = vst.msk [vmem:[#allocation2 + $0x74] sm:$0xf] %vm386, 0
        %417 = vst.msk [vmem:[#allocation2 + $0x78] sm:$0xf] %vm386, 0
        %418 = vst.msk [vmem:[#allocation2 + $0x7c] sm:$0xf] %vm386, 0
        %419 = vst.msk [vmem:[#allocation2 + $0x80] sm:$0xf] %vm386, 0
        %420 = vst.msk [vmem:[#allocation2 + $0x84] sm:$0xf] %vm386, 0
        %421 = vst.msk [vmem:[#allocation2 + $0x88] sm:$0xf] %vm386, 0
        %422 = vst.msk [vmem:[#allocation2 + $0x8c] sm:$0xf] %vm386, 0
        %423 = vst.msk [vmem:[#allocation2 + $0x90] sm:$0xf] %vm386, 0
        %vm424 = vcmask 124928
        %425 = vst.msk [vmem:[#allocation2 + $0x94] sm:$0x7] %vm424, 0
        %426 = vst.msk [vmem:[#allocation3] sm:$0xf] %vm386, 0
        %427 = vst.msk [vmem:[#allocation3 + $0x4] sm:$0xf] %vm386, 0
        %428 = vst.msk [vmem:[#allocation3 + $0x8] sm:$0xf] %vm386, 0
        %429 = vst.msk [vmem:[#allocation3 + $0xc] sm:$0xf] %vm386, 0
        %430 = vst.msk [vmem:[#allocation3 + $0x10] sm:$0xf] %vm386, 0
        %431 = vst.msk [vmem:[#allocation3 + $0x14] sm:$0xf] %vm386, 0
        %432 = vst.msk [vmem:[#allocation3 + $0x18] sm:$0xf] %vm386, 0
        %433 = vst.msk [vmem:[#allocation3 + $0x1c] sm:$0xf] %vm386, 0
        %434 = vst.msk [vmem:[#allocation3 + $0x20] sm:$0xf] %vm386, 0
        %435 = vst.msk [vmem:[#allocation3 + $0x24] sm:$0xf] %vm386, 0
        %436 = vst.msk [vmem:[#allocation3 + $0x28] sm:$0xf] %vm386, 0
        %437 = vst.msk [vmem:[#allocation3 + $0x2c] sm:$0xf] %vm386, 0
        %438 = vst.msk [vmem:[#allocation3 + $0x30] sm:$0xf] %vm386, 0
        %439 = vst.msk [vmem:[#allocation3 + $0x34] sm:$0xf] %vm386, 0
        %440 = vst.msk [vmem:[#allocation3 + $0x38] sm:$0xf] %vm386, 0
        %441 = vst.msk [vmem:[#allocation3 + $0x3c] sm:$0xf] %vm386, 0
        %442 = vst.msk [vmem:[#allocation3 + $0x40] sm:$0xf] %vm386, 0
        %443 = vst.msk [vmem:[#allocation3 + $0x44] sm:$0xf] %vm386, 0
        %444 = vst.msk [vmem:[#allocation3 + $0x48] sm:$0xf] %vm386, 0
        %445 = vst.msk [vmem:[#allocation3 + $0x4c] sm:$0xf] %vm386, 0
        %446 = vst.msk [vmem:[#allocation3 + $0x50] sm:$0xf] %vm386, 0
        %447 = vst.msk [vmem:[#allocation3 + $0x54] sm:$0xf] %vm386, 0
        %448 = vst.msk [vmem:[#allocation3 + $0x58] sm:$0xf] %vm386, 0
        %449 = vst.msk [vmem:[#allocation3 + $0x5c] sm:$0xf] %vm386, 0
        %450 = vst.msk [vmem:[#allocation3 + $0x60] sm:$0xf] %vm386, 0
        %451 = vst.msk [vmem:[#allocation3 + $0x64] sm:$0xf] %vm386, 0
        %452 = vst.msk [vmem:[#allocation3 + $0x68] sm:$0xf] %vm386, 0
        %453 = vst.msk [vmem:[#allocation3 + $0x6c] sm:$0xf] %vm386, 0
        %454 = vst.msk [vmem:[#allocation3 + $0x70] sm:$0xf] %vm386, 0
        %455 = vst.msk [vmem:[#allocation3 + $0x74] sm:$0xf] %vm386, 0
        %456 = vst.msk [vmem:[#allocation3 + $0x78] sm:$0xf] %vm386, 0
        %457 = vst.msk [vmem:[#allocation3 + $0x7c] sm:$0xf] %vm386, 0
        %458 = vst.msk [vmem:[#allocation3 + $0x80] sm:$0xf] %vm386, 0
        %459 = vst.msk [vmem:[#allocation3 + $0x84] sm:$0xf] %vm386, 0
        %460 = vst.msk [vmem:[#allocation3 + $0x88] sm:$0xf] %vm386, 0
        %461 = vst.msk [vmem:[#allocation3 + $0x8c] sm:$0xf] %vm386, 0
        %462 = vst.msk [vmem:[#allocation3 + $0x90] sm:$0xf] %vm386, 0
        %463 = vst.msk [vmem:[#allocation3 + $0x94] sm:$0x7] %vm424, 0
        %v464 = vld [vmem:[%s357] sm:$0xf]
        %v465 = vld [vmem:[%s357 + $0x4] sm:$0xf]
        %v466 = vld [vmem:[%s357 + $0x8] sm:$0xf]
        %v467 = vld [vmem:[%s357 + $0xc] sm:$0xf]
        %v468 = vld [vmem:[%s357 + $0x10] sm:$0xf]
        %v469 = vld [vmem:[%s357 + $0x14] sm:$0xf]
        %v470 = vld [vmem:[%s357 + $0x18] sm:$0xf]
        %v471 = vld [vmem:[%s357 + $0x1c] sm:$0xf]
        %v472 = vld [vmem:[%s357 + $0x20] sm:$0xf]
        %v473 = vld [vmem:[%s357 + $0x24] sm:$0xf]
        %v474 = vld [vmem:[%s357 + $0x28] sm:$0xf]
        %v475 = vld [vmem:[%s357 + $0x2c] sm:$0xf]
        %v476 = vld [vmem:[%s357 + $0x30] sm:$0xf]
        %v477 = vld [vmem:[%s357 + $0x34] sm:$0xf]
        %v478 = vld [vmem:[%s357 + $0x38] sm:$0xf]
        %v479 = vld [vmem:[%s357 + $0x3c] sm:$0xf]
        %v480 = vld [vmem:[%s357 + $0x40] sm:$0xf]
        %v481 = vld [vmem:[%s357 + $0x44] sm:$0xf]
        %v482 = vld [vmem:[%s357 + $0x48] sm:$0xf]
        %v483 = vld [vmem:[%s357 + $0x4c] sm:$0xf]
        %v484 = vld [vmem:[%s357 + $0x50] sm:$0xf]
        %v485 = vld [vmem:[%s357 + $0x54] sm:$0xf]
        %v486 = vld [vmem:[%s357 + $0x58] sm:$0xf]
        %v487 = vld [vmem:[%s357 + $0x5c] sm:$0xf]
        %v488 = vld [vmem:[%s357 + $0x60] sm:$0xf]
        %v489 = vld [vmem:[%s357 + $0x64] sm:$0xf]
        %v490 = vld [vmem:[%s357 + $0x68] sm:$0xf]
        %v491 = vld [vmem:[%s357 + $0x6c] sm:$0x1]
        %v492 = vld [vmem:[%s357] sm:$0x8]
        %v493 = vld [vmem:[%s357 + $0x6c] sm:$0x7]
        %v494 = vld [vmem:[%s357 + $0x6c] sm:$0xf]
        %v495 = vld [vmem:[%s357 + $0x10] sm:$0xc]
        %v496 = vld [vmem:[%s357 + $0x70] sm:$0xf]
        %v497 = vld [vmem:[%s357 + $0x74] sm:$0xf]
        %v498 = vld [vmem:[%s357 + $0x78] sm:$0xf]
        %v499 = vld [vmem:[%s357 + $0x7c] sm:$0x3]
        %v500 = vld [vmem:[%s357 + $0x7c] sm:$0x7]
        %v501 = vld [vmem:[%s357 + $0x14] sm:$0xe]
        %v502 = vld [vmem:[%s357 + $0x7c] sm:$0xf]
        %v503 = vld [vmem:[%s357 + $0x80] sm:$0x1]
        %v504 = vld [vmem:[%s357 + $0x80] sm:$0x3]
        %v532 = vunpack.c.l.b16 %v464
        %v533 = vunpack.c.l.b16 %v465
        %v534 = vunpack.c.l.b16 %v466
        %v535 = vunpack.c.l.b16 %v467
        %v536 = vunpack.c.l.b16 %v468
        %v537 = vunpack.c.l.b16 %v469
        %v538 = vunpack.c.l.b16 %v470
        %v539 = vunpack.c.l.b16 %v471
        %v540 = vunpack.c.l.b16 %v472
        %v541 = vunpack.c.l.b16 %v473
        %v542 = vunpack.c.l.b16 %v474
        %v543 = vunpack.c.l.b16 %v475
        %v544 = vunpack.c.l.b16 %v476
        %v545 = vunpack.c.l.b16 %v477
        %v546 = vunpack.c.l.b16 %v478
        %v547 = vunpack.c.l.b16 %v479
        %v548 = vunpack.c.l.b16 %v480
        %v549 = vunpack.c.l.b16 %v481
        %v550 = vunpack.c.l.b16 %v482
        %v551 = vunpack.c.l.b16 %v483
        %v552 = vunpack.c.l.b16 %v484
        %v553 = vunpack.c.l.b16 %v485
        %v554 = vunpack.c.l.b16 %v486
        %v555 = vunpack.c.l.b16 %v487
        %v556 = vunpack.c.l.b16 %v488
        %v557 = vunpack.c.l.b16 %v489
        %v558 = vunpack.c.l.b16 %v490
        %v559 = vpack.c.b16 %v533, %v532
        %v560 = vpack.c.b16 %v535, %v534
        %v561 = vpack.c.b16 %v537, %v536
        %v562 = vpack.c.b16 %v539, %v538
        %v563 = vpack.c.b16 %v541, %v540
        %v564 = vpack.c.b16 %v543, %v542
        %v565 = vpack.c.b16 %v545, %v544
        %v566 = vpack.c.b16 %v547, %v546
        %v567 = vpack.c.b16 %v549, %v548
        %v568 = vpack.c.b16 %v551, %v550
        %v569 = vpack.c.b16 %v553, %v552
        %v570 = vpack.c.b16 %v555, %v554
        %v571 = vpack.c.b16 %v557, %v556
        %v572 = vpack.c.b16 %v558, %v558
        %v574 = vunpack.c.l.b16 %v491
        %v575 = vpack.c.b16 %v574, %v558
        %vm576 = vsmask.f32 7424
        %v578 = vshrl.u32 %v559, 16
        %v580 = vshll.u32 %v559, 16
        %v582 = vrot.slane %v580, 1
        %v583 = vor.u32 %v578, %v582
        %v585 = vshll.u32 %v560, 16
        %v587 = vrot.slane %v585, 1
        %v588 = vsel %vm576, %v583, %v587
        %v589 = vshrl.u32 %v560, 16
        %v591 = vor.u32 %v589, %v587
        %v593 = vshll.u32 %v561, 16
        %v595 = vrot.slane %v593, 1
        %v596 = vsel %vm576, %v591, %v595
        %v597 = vshrl.u32 %v561, 16
        %v599 = vor.u32 %v597, %v595
        %v601 = vshll.u32 %v562, 16
        %v603 = vrot.slane %v601, 1
        %v604 = vsel %vm576, %v599, %v603
        %v605 = vshrl.u32 %v562, 16
        %v607 = vor.u32 %v605, %v603
        %v609 = vshll.u32 %v563, 16
        %v611 = vrot.slane %v609, 1
        %v612 = vsel %vm576, %v607, %v611
        %v613 = vshrl.u32 %v563, 16
        %v615 = vor.u32 %v613, %v611
        %v617 = vshll.u32 %v564, 16
        %v619 = vrot.slane %v617, 1
        %v620 = vsel %vm576, %v615, %v619
        %v621 = vshrl.u32 %v564, 16
        %v623 = vor.u32 %v621, %v619
        %v625 = vshll.u32 %v565, 16
        %v627 = vrot.slane %v625, 1
        %v628 = vsel %vm576, %v623, %v627
        %v629 = vshrl.u32 %v565, 16
        %v631 = vor.u32 %v629, %v627
        %v633 = vshll.u32 %v566, 16
        %v635 = vrot.slane %v633, 1
        %v636 = vsel %vm576, %v631, %v635
        %v637 = vshrl.u32 %v566, 16
        %v639 = vor.u32 %v637, %v635
        %v641 = vshll.u32 %v567, 16
        %v643 = vrot.slane %v641, 1
        %v644 = vsel %vm576, %v639, %v643
        %v645 = vshrl.u32 %v567, 16
        %v647 = vor.u32 %v645, %v643
        %v649 = vshll.u32 %v568, 16
        %v651 = vrot.slane %v649, 1
        %v652 = vsel %vm576, %v647, %v651
        %v653 = vshrl.u32 %v568, 16
        %v655 = vor.u32 %v653, %v651
        %v657 = vshll.u32 %v569, 16
        %v659 = vrot.slane %v657, 1
        %v660 = vsel %vm576, %v655, %v659
        %v661 = vshrl.u32 %v569, 16
        %v663 = vor.u32 %v661, %v659
        %v665 = vshll.u32 %v570, 16
        %v667 = vrot.slane %v665, 1
        %v668 = vsel %vm576, %v663, %v667
        %v669 = vshrl.u32 %v570, 16
        %v671 = vor.u32 %v669, %v667
        %v673 = vshll.u32 %v571, 16
        %v675 = vrot.slane %v673, 1
        %v676 = vsel %vm576, %v671, %v675
        %v677 = vshrl.u32 %v571, 16
        %v679 = vor.u32 %v677, %v675
        %v681 = vshll.u32 %v575, 16
        %v683 = vrot.slane %v681, 1
        %v684 = vsel %vm576, %v679, %v683
        %v685 = vshrl.u32 %v575, 16
        %v687 = vor.u32 %v685, %v683
        %688 = vrot.lane.b32.xlu0 %v588, 32
        %v689 = vpop.permute.xlu0 %688
        %690 = vrot.lane.b32.xlu0 %v596, 32
        %v691 = vpop.permute.xlu0 %690
        %692 = vrot.lane.b32.xlu0 %v604, 32
        %v693 = vpop.permute.xlu0 %692
        %694 = vrot.lane.b32.xlu0 %v612, 32
        %v695 = vpop.permute.xlu0 %694
        %696 = vrot.lane.b32.xlu0 %v620, 32
        %v697 = vpop.permute.xlu0 %696
        %698 = vrot.lane.b32.xlu0 %v628, 32
        %v699 = vpop.permute.xlu0 %698
        %700 = vrot.lane.b32.xlu0 %v636, 32
        %v701 = vpop.permute.xlu0 %700
        %702 = vrot.lane.b32.xlu0 %v644, 32
        %v703 = vpop.permute.xlu0 %702
        %704 = vrot.lane.b32.xlu0 %v652, 32
        %v705 = vpop.permute.xlu0 %704
        %706 = vrot.lane.b32.xlu0 %v660, 32
        %v707 = vpop.permute.xlu0 %706
        %708 = vrot.lane.b32.xlu0 %v668, 32
        %v709 = vpop.permute.xlu0 %708
        %710 = vrot.lane.b32.xlu0 %v676, 32
        %v711 = vpop.permute.xlu0 %710
        %712 = vrot.lane.b32.xlu0 %v684, 32
        %v713 = vpop.permute.xlu0 %712
        %714 = vrot.lane.b32.xlu0 %v687, 32
        %v715 = vpop.permute.xlu0 %714
        %v718 = vunpack.c.l.b16 %v492
        %v719 = vunpack.c.l.b16 %v493
        %v720 = vpack.c.b16 %v533, %v718
        %v721 = vpack.c.b16 %v719, %v558
        %vm722 = vcmask 1044480
        %v723 = vrot.slane %v720, 3
        %v724 = vrot.slane %v560, 3
        %v725 = vsel %vm722, %v723, %v724
        %v726 = vrot.slane %v561, 3
        %v727 = vsel %vm722, %v724, %v726
        %v728 = vrot.slane %v562, 3
        %v729 = vsel %vm722, %v726, %v728
        %v730 = vrot.slane %v563, 3
        %v731 = vsel %vm722, %v728, %v730
        %v732 = vrot.slane %v564, 3
        %v733 = vsel %vm722, %v730, %v732
        %v734 = vrot.slane %v565, 3
        %v735 = vsel %vm722, %v732, %v734
        %v736 = vrot.slane %v566, 3
        %v737 = vsel %vm722, %v734, %v736
        %v738 = vrot.slane %v567, 3
        %v739 = vsel %vm722, %v736, %v738
        %v740 = vrot.slane %v568, 3
        %v741 = vsel %vm722, %v738, %v740
        %v742 = vrot.slane %v569, 3
        %v743 = vsel %vm722, %v740, %v742
        %v744 = vrot.slane %v570, 3
        %v745 = vsel %vm722, %v742, %v744
        %v746 = vrot.slane %v571, 3
        %v747 = vsel %vm722, %v744, %v746
        %v748 = vrot.slane %v721, 3
        %v749 = vsel %vm722, %v746, %v748
        %750 = vrot.lane.b32.xlu0 %v725, 64
        %v751 = vpop.permute.xlu0 %750
        %752 = vrot.lane.b32.xlu0 %v727, 64
        %v753 = vpop.permute.xlu0 %752
        %754 = vrot.lane.b32.xlu0 %v729, 64
        %v755 = vpop.permute.xlu0 %754
        %756 = vrot.lane.b32.xlu0 %v731, 64
        %v757 = vpop.permute.xlu0 %756
        %758 = vrot.lane.b32.xlu0 %v733, 64
        %v759 = vpop.permute.xlu0 %758
        %760 = vrot.lane.b32.xlu0 %v735, 64
        %v761 = vpop.permute.xlu0 %760
        %762 = vrot.lane.b32.xlu0 %v737, 64
        %v763 = vpop.permute.xlu0 %762
        %764 = vrot.lane.b32.xlu0 %v739, 64
        %v765 = vpop.permute.xlu0 %764
        %766 = vrot.lane.b32.xlu0 %v741, 64
        %v767 = vpop.permute.xlu0 %766
        %768 = vrot.lane.b32.xlu0 %v743, 64
        %v769 = vpop.permute.xlu0 %768
        %770 = vrot.lane.b32.xlu0 %v745, 64
        %v771 = vpop.permute.xlu0 %770
        %772 = vrot.lane.b32.xlu0 %v747, 64
        %v773 = vpop.permute.xlu0 %772
        %774 = vrot.lane.b32.xlu0 %v749, 64
        %v775 = vpop.permute.xlu0 %774
        %776 = vrot.lane.b32.xlu0 %v748, 64
        %v777 = vpop.permute.xlu0 %776
        %v779 = vunpack.c.l.b16 %v494
        %v780 = vpack.c.b16 %v779, %v558
        %vm781 = vsmask.f32 4352
        %v783 = vshrl.u32 %v720, 16
        %v785 = vrot.slane %v783, 3
        %v786 = vshll.u32 %v720, 16
        %v788 = vrot.slane %v786, 4
        %v789 = vor.u32 %v785, %v788
        %v790 = vrot.slane %v589, 3
        %v791 = vrot.slane %v585, 4
        %v792 = vor.u32 %v790, %v791
        %v793 = vsel %vm781, %v789, %v792
        %v794 = vrot.slane %v597, 3
        %v795 = vrot.slane %v593, 4
        %v796 = vor.u32 %v794, %v795
        %v797 = vsel %vm781, %v792, %v796
        %v798 = vrot.slane %v605, 3
        %v799 = vrot.slane %v601, 4
        %v800 = vor.u32 %v798, %v799
        %v801 = vsel %vm781, %v796, %v800
        %v802 = vrot.slane %v613, 3
        %v803 = vrot.slane %v609, 4
        %v804 = vor.u32 %v802, %v803
        %v805 = vsel %vm781, %v800, %v804
        %v806 = vrot.slane %v621, 3
        %v807 = vrot.slane %v617, 4
        %v808 = vor.u32 %v806, %v807
        %v809 = vsel %vm781, %v804, %v808
        %v810 = vrot.slane %v629, 3
        %v811 = vrot.slane %v625, 4
        %v812 = vor.u32 %v810, %v811
        %v813 = vsel %vm781, %v808, %v812
        %v814 = vrot.slane %v637, 3
        %v815 = vrot.slane %v633, 4
        %v816 = vor.u32 %v814, %v815
        %v817 = vsel %vm781, %v812, %v816
        %v818 = vrot.slane %v645, 3
        %v819 = vrot.slane %v641, 4
        %v820 = vor.u32 %v818, %v819
        %v821 = vsel %vm781, %v816, %v820
        %v822 = vrot.slane %v653, 3
        %v823 = vrot.slane %v649, 4
        %v824 = vor.u32 %v822, %v823
        %v825 = vsel %vm781, %v820, %v824
        %v826 = vrot.slane %v661, 3
        %v827 = vrot.slane %v657, 4
        %v828 = vor.u32 %v826, %v827
        %v829 = vsel %vm781, %v824, %v828
        %v830 = vrot.slane %v669, 3
        %v831 = vrot.slane %v665, 4
        %v832 = vor.u32 %v830, %v831
        %v833 = vsel %vm781, %v828, %v832
        %v834 = vrot.slane %v677, 3
        %v835 = vrot.slane %v673, 4
        %v836 = vor.u32 %v834, %v835
        %v837 = vsel %vm781, %v832, %v836
        %v839 = vshrl.u32 %v780, 16
        %v841 = vrot.slane %v839, 3
        %v842 = vshll.u32 %v780, 16
        %v844 = vrot.slane %v842, 4
        %v845 = vor.u32 %v841, %v844
        %v846 = vsel %vm781, %v836, %v845
        %847 = vrot.lane.b32.xlu0 %v793, 96
        %v848 = vpop.permute.xlu0 %847
        %849 = vrot.lane.b32.xlu0 %v797, 96
        %v850 = vpop.permute.xlu0 %849
        %851 = vrot.lane.b32.xlu0 %v801, 96
        %v852 = vpop.permute.xlu0 %851
        %853 = vrot.lane.b32.xlu0 %v805, 96
        %v854 = vpop.permute.xlu0 %853
        %855 = vrot.lane.b32.xlu0 %v809, 96
        %v856 = vpop.permute.xlu0 %855
        %857 = vrot.lane.b32.xlu0 %v813, 96
        %v858 = vpop.permute.xlu0 %857
        %859 = vrot.lane.b32.xlu0 %v817, 96
        %v860 = vpop.permute.xlu0 %859
        %861 = vrot.lane.b32.xlu0 %v821, 96
        %v862 = vpop.permute.xlu0 %861
        %863 = vrot.lane.b32.xlu0 %v825, 96
        %v864 = vpop.permute.xlu0 %863
        %865 = vrot.lane.b32.xlu0 %v829, 96
        %v866 = vpop.permute.xlu0 %865
        %867 = vrot.lane.b32.xlu0 %v833, 96
        %v868 = vpop.permute.xlu0 %867
        %869 = vrot.lane.b32.xlu0 %v837, 96
        %v870 = vpop.permute.xlu0 %869
        %871 = vrot.lane.b32.xlu0 %v846, 96
        %v872 = vpop.permute.xlu0 %871
        %873 = vrot.lane.b32.xlu0 %v845, 96
        %v874 = vpop.permute.xlu0 %873
        %v880 = vunpack.c.l.b16 %v495
        %v881 = vunpack.c.l.b16 %v496
        %v882 = vunpack.c.l.b16 %v497
        %v883 = vunpack.c.l.b16 %v498
        %v884 = vunpack.c.l.b16 %v499
        %v885 = vpack.c.b16 %v537, %v880
        %v886 = vpack.c.b16 %v882, %v881
        %v887 = vpack.c.b16 %v884, %v883
        %vm888 = vcmask 1045504
        %v889 = vrot.slane %v885, 2
        %v890 = vrot.slane %v562, 2
        %v891 = vsel %vm888, %v889, %v890
        %v892 = vrot.slane %v563, 2
        %v893 = vsel %vm888, %v890, %v892
        %v894 = vrot.slane %v564, 2
        %v895 = vsel %vm888, %v892, %v894
        %v896 = vrot.slane %v565, 2
        %v897 = vsel %vm888, %v894, %v896
        %v898 = vrot.slane %v566, 2
        %v899 = vsel %vm888, %v896, %v898
        %v900 = vrot.slane %v567, 2
        %v901 = vsel %vm888, %v898, %v900
        %v902 = vrot.slane %v568, 2
        %v903 = vsel %vm888, %v900, %v902
        %v904 = vrot.slane %v569, 2
        %v905 = vsel %vm888, %v902, %v904
        %v906 = vrot.slane %v570, 2
        %v907 = vsel %vm888, %v904, %v906
        %v908 = vrot.slane %v571, 2
        %v909 = vsel %vm888, %v906, %v908
        %v910 = vrot.slane %v780, 2
        %v911 = vsel %vm888, %v908, %v910
        %v912 = vrot.slane %v886, 2
        %v913 = vsel %vm888, %v910, %v912
        %v914 = vrot.slane %v887, 2
        %v915 = vsel %vm888, %v912, %v914
        %v917 = vunpack.c.l.b16 %v500
        %v918 = vpack.c.b16 %v917, %v883
        %vm919 = vsmask.f32 5376
        %v921 = vshrl.u32 %v885, 16
        %v923 = vrot.slane %v921, 2
        %v924 = vshll.u32 %v885, 16
        %v926 = vrot.slane %v924, 3
        %v927 = vor.u32 %v923, %v926
        %v928 = vrot.slane %v605, 2
        %v929 = vrot.slane %v601, 3
        %v930 = vor.u32 %v928, %v929
        %v931 = vsel %vm919, %v927, %v930
        %v932 = vrot.slane %v613, 2
        %v933 = vrot.slane %v609, 3
        %v934 = vor.u32 %v932, %v933
        %v935 = vsel %vm919, %v930, %v934
        %v936 = vrot.slane %v621, 2
        %v937 = vrot.slane %v617, 3
        %v938 = vor.u32 %v936, %v937
        %v939 = vsel %vm919, %v934, %v938
        %v940 = vrot.slane %v629, 2
        %v941 = vrot.slane %v625, 3
        %v942 = vor.u32 %v940, %v941
        %v943 = vsel %vm919, %v938, %v942
        %v944 = vrot.slane %v637, 2
        %v945 = vrot.slane %v633, 3
        %v946 = vor.u32 %v944, %v945
        %v947 = vsel %vm919, %v942, %v946
        %v948 = vrot.slane %v645, 2
        %v949 = vrot.slane %v641, 3
        %v950 = vor.u32 %v948, %v949
        %v951 = vsel %vm919, %v946, %v950
        %v952 = vrot.slane %v653, 2
        %v953 = vrot.slane %v649, 3
        %v954 = vor.u32 %v952, %v953
        %v955 = vsel %vm919, %v950, %v954
        %v956 = vrot.slane %v661, 2
        %v957 = vrot.slane %v657, 3
        %v958 = vor.u32 %v956, %v957
        %v959 = vsel %vm919, %v954, %v958
        %v960 = vrot.slane %v669, 2
        %v961 = vrot.slane %v665, 3
        %v962 = vor.u32 %v960, %v961
        %v963 = vsel %vm919, %v958, %v962
        %v964 = vrot.slane %v677, 2
        %v965 = vrot.slane %v673, 3
        %v966 = vor.u32 %v964, %v965
        %v967 = vsel %vm919, %v962, %v966
        %v968 = vrot.slane %v839, 2
        %v969 = vrot.slane %v842, 3
        %v970 = vor.u32 %v968, %v969
        %v971 = vsel %vm919, %v966, %v970
        %v973 = vshrl.u32 %v886, 16
        %v975 = vrot.slane %v973, 2
        %v976 = vshll.u32 %v886, 16
        %v978 = vrot.slane %v976, 3
        %v979 = vor.u32 %v975, %v978
        %v980 = vsel %vm919, %v970, %v979
        %v982 = vshrl.u32 %v918, 16
        %v984 = vrot.slane %v982, 2
        %v985 = vshll.u32 %v918, 16
        %v987 = vrot.slane %v985, 3
        %v988 = vor.u32 %v984, %v987
        %v989 = vsel %vm919, %v979, %v988
        %990 = vrot.lane.b32.xlu0 %v931, 32
        %v991 = vpop.permute.xlu0 %990
        %992 = vrot.lane.b32.xlu0 %v935, 32
        %v993 = vpop.permute.xlu0 %992
        %994 = vrot.lane.b32.xlu0 %v939, 32
        %v995 = vpop.permute.xlu0 %994
        %996 = vrot.lane.b32.xlu0 %v943, 32
        %v997 = vpop.permute.xlu0 %996
        %998 = vrot.lane.b32.xlu0 %v947, 32
        %v999 = vpop.permute.xlu0 %998
        %1000 = vrot.lane.b32.xlu0 %v951, 32
        %v1001 = vpop.permute.xlu0 %1000
        %1002 = vrot.lane.b32.xlu0 %v955, 32
        %v1003 = vpop.permute.xlu0 %1002
        %1004 = vrot.lane.b32.xlu0 %v959, 32
        %v1005 = vpop.permute.xlu0 %1004
        %1006 = vrot.lane.b32.xlu0 %v963, 32
        %v1007 = vpop.permute.xlu0 %1006
        %1008 = vrot.lane.b32.xlu0 %v967, 32
        %v1009 = vpop.permute.xlu0 %1008
        %1010 = vrot.lane.b32.xlu0 %v971, 32
        %v1011 = vpop.permute.xlu0 %1010
        %1012 = vrot.lane.b32.xlu0 %v980, 32
        %v1013 = vpop.permute.xlu0 %1012
        %1014 = vrot.lane.b32.xlu0 %v989, 32
        %v1015 = vpop.permute.xlu0 %1014
        %1016 = vrot.lane.b32.xlu0 %v988, 32
        %v1017 = vpop.permute.xlu0 %1016
        %v1021 = vunpack.c.l.b16 %v501
        %v1022 = vunpack.c.l.b16 %v502
        %v1023 = vunpack.c.l.b16 %v503
        %v1024 = vpack.c.b16 %v538, %v1021
        %v1025 = vpack.c.b16 %v540, %v539
        %v1026 = vpack.c.b16 %v542, %v541
        %v1027 = vpack.c.b16 %v544, %v543
        %v1028 = vpack.c.b16 %v546, %v545
        %v1029 = vpack.c.b16 %v548, %v547
        %v1030 = vpack.c.b16 %v550, %v549
        %v1031 = vpack.c.b16 %v552, %v551
        %v1032 = vpack.c.b16 %v554, %v553
        %v1033 = vpack.c.b16 %v556, %v555
        %v1034 = vpack.c.b16 %v558, %v557
        %v1035 = vpack.c.b16 %v881, %v779
        %v1036 = vpack.c.b16 %v883, %v882
        %v1037 = vpack.c.b16 %v1023, %v1022
        %vm1038 = vcmask 1046528
        %v1039 = vrot.slane %v1024, 1
        %v1040 = vrot.slane %v1025, 1
        %v1041 = vsel %vm1038, %v1039, %v1040
        %v1042 = vrot.slane %v1026, 1
        %v1043 = vsel %vm1038, %v1040, %v1042
        %v1044 = vrot.slane %v1027, 1
        %v1045 = vsel %vm1038, %v1042, %v1044
        %v1046 = vrot.slane %v1028, 1
        %v1047 = vsel %vm1038, %v1044, %v1046
        %v1048 = vrot.slane %v1029, 1
        %v1049 = vsel %vm1038, %v1046, %v1048
        %v1050 = vrot.slane %v1030, 1
        %v1051 = vsel %vm1038, %v1048, %v1050
        %v1052 = vrot.slane %v1031, 1
        %v1053 = vsel %vm1038, %v1050, %v1052
        %v1054 = vrot.slane %v1032, 1
        %v1055 = vsel %vm1038, %v1052, %v1054
        %v1056 = vrot.slane %v1033, 1
        %v1057 = vsel %vm1038, %v1054, %v1056
        %v1058 = vrot.slane %v1034, 1
        %v1059 = vsel %vm1038, %v1056, %v1058
        %v1060 = vrot.slane %v1035, 1
        %v1061 = vsel %vm1038, %v1058, %v1060
        %v1062 = vrot.slane %v1036, 1
        %v1063 = vsel %vm1038, %v1060, %v1062
        %v1064 = vrot.slane %v1037, 1
        %v1065 = vsel %vm1038, %v1062, %v1064
        %1066 = vrot.lane.b32.xlu0 %v1041, 64
        %v1067 = vpop.permute.xlu0 %1066
        %1068 = vrot.lane.b32.xlu0 %v1043, 64
        %v1069 = vpop.permute.xlu0 %1068
        %1070 = vrot.lane.b32.xlu0 %v1045, 64
        %v1071 = vpop.permute.xlu0 %1070
        %1072 = vrot.lane.b32.xlu0 %v1047, 64
        %v1073 = vpop.permute.xlu0 %1072
        %1074 = vrot.lane.b32.xlu0 %v1049, 64
        %v1075 = vpop.permute.xlu0 %1074
        %1076 = vrot.lane.b32.xlu0 %v1051, 64
        %v1077 = vpop.permute.xlu0 %1076
        %1078 = vrot.lane.b32.xlu0 %v1053, 64
        %v1079 = vpop.permute.xlu0 %1078
        %1080 = vrot.lane.b32.xlu0 %v1055, 64
        %v1081 = vpop.permute.xlu0 %1080
        %1082 = vrot.lane.b32.xlu0 %v1057, 64
        %v1083 = vpop.permute.xlu0 %1082
        %1084 = vrot.lane.b32.xlu0 %v1059, 64
        %v1085 = vpop.permute.xlu0 %1084
        %1086 = vrot.lane.b32.xlu0 %v1061, 64
        %v1087 = vpop.permute.xlu0 %1086
        %1088 = vrot.lane.b32.xlu0 %v1063, 64
        %v1089 = vpop.permute.xlu0 %1088
        %1090 = vrot.lane.b32.xlu0 %v1065, 64
        %v1091 = vpop.permute.xlu0 %1090
        %1092 = vrot.lane.b32.xlu0 %v1064, 64
        %v1093 = vpop.permute.xlu0 %1092
        %v1095 = vunpack.c.l.b16 %v504
        %v1096 = vpack.c.b16 %v1095, %v1022
        %vm1097 = vsmask.f32 6400
        %v1099 = vshrl.u32 %v1024, 16
        %v1101 = vrot.slane %v1099, 1
        %v1102 = vshll.u32 %v1024, 16
        %v1104 = vrot.slane %v1102, 2
        %v1105 = vor.u32 %v1101, %v1104
        %v1107 = vshrl.u32 %v1025, 16
        %v1109 = vrot.slane %v1107, 1
        %v1110 = vshll.u32 %v1025, 16
        %v1112 = vrot.slane %v1110, 2
        %v1113 = vor.u32 %v1109, %v1112
        %v1114 = vsel %vm1097, %v1105, %v1113
        %v1116 = vshrl.u32 %v1026, 16
        %v1118 = vrot.slane %v1116, 1
        %v1119 = vshll.u32 %v1026, 16
        %v1121 = vrot.slane %v1119, 2
        %v1122 = vor.u32 %v1118, %v1121
        %v1123 = vsel %vm1097, %v1113, %v1122
        %v1125 = vshrl.u32 %v1027, 16
        %v1127 = vrot.slane %v1125, 1
        %v1128 = vshll.u32 %v1027, 16
        %v1130 = vrot.slane %v1128, 2
        %v1131 = vor.u32 %v1127, %v1130
        %v1132 = vsel %vm1097, %v1122, %v1131
        %v1134 = vshrl.u32 %v1028, 16
        %v1136 = vrot.slane %v1134, 1
        %v1137 = vshll.u32 %v1028, 16
        %v1139 = vrot.slane %v1137, 2
        %v1140 = vor.u32 %v1136, %v1139
        %v1141 = vsel %vm1097, %v1131, %v1140
        %v1143 = vshrl.u32 %v1029, 16
        %v1145 = vrot.slane %v1143, 1
        %v1146 = vshll.u32 %v1029, 16
        %v1148 = vrot.slane %v1146, 2
        %v1149 = vor.u32 %v1145, %v1148
        %v1150 = vsel %vm1097, %v1140, %v1149
        %v1152 = vshrl.u32 %v1030, 16
        %v1154 = vrot.slane %v1152, 1
        %v1155 = vshll.u32 %v1030, 16
        %v1157 = vrot.slane %v1155, 2
        %v1158 = vor.u32 %v1154, %v1157
        %v1159 = vsel %vm1097, %v1149, %v1158
        %v1161 = vshrl.u32 %v1031, 16
        %v1163 = vrot.slane %v1161, 1
        %v1164 = vshll.u32 %v1031, 16
        %v1166 = vrot.slane %v1164, 2
        %v1167 = vor.u32 %v1163, %v1166
        %v1168 = vsel %vm1097, %v1158, %v1167
        %v1170 = vshrl.u32 %v1032, 16
        %v1172 = vrot.slane %v1170, 1
        %v1173 = vshll.u32 %v1032, 16
        %v1175 = vrot.slane %v1173, 2
        %v1176 = vor.u32 %v1172, %v1175
        %v1177 = vsel %vm1097, %v1167, %v1176
        %v1179 = vshrl.u32 %v1033, 16
        %v1181 = vrot.slane %v1179, 1
        %v1182 = vshll.u32 %v1033, 16
        %v1184 = vrot.slane %v1182, 2
        %v1185 = vor.u32 %v1181, %v1184
        %v1186 = vsel %vm1097, %v1176, %v1185
        %v1188 = vshrl.u32 %v1034, 16
        %v1190 = vrot.slane %v1188, 1
        %v1191 = vshll.u32 %v1034, 16
        %v1193 = vrot.slane %v1191, 2
        %v1194 = vor.u32 %v1190, %v1193
        %v1195 = vsel %vm1097, %v1185, %v1194
        %v1197 = vshrl.u32 %v1035, 16
        %v1199 = vrot.slane %v1197, 1
        %v1200 = vshll.u32 %v1035, 16
        %v1202 = vrot.slane %v1200, 2
        %v1203 = vor.u32 %v1199, %v1202
        %v1204 = vsel %vm1097, %v1194, %v1203
        %v1206 = vshrl.u32 %v1036, 16
        %v1208 = vrot.slane %v1206, 1
        %v1209 = vshll.u32 %v1036, 16
        %v1211 = vrot.slane %v1209, 2
        %v1212 = vor.u32 %v1208, %v1211
        %v1213 = vsel %vm1097, %v1203, %v1212
        %v1215 = vshrl.u32 %v1096, 16
        %v1217 = vrot.slane %v1215, 1
        %v1218 = vshll.u32 %v1096, 16
        %v1220 = vrot.slane %v1218, 2
        %v1221 = vor.u32 %v1217, %v1220
        %v1222 = vsel %vm1097, %v1212, %v1221
        %1223 = vrot.lane.b32.xlu0 %v1114, 96
        %v1224 = vpop.permute.xlu0 %1223
        %1225 = vrot.lane.b32.xlu0 %v1123, 96
        %v1226 = vpop.permute.xlu0 %1225
        %1227 = vrot.lane.b32.xlu0 %v1132, 96
        %v1228 = vpop.permute.xlu0 %1227
        %1229 = vrot.lane.b32.xlu0 %v1141, 96
        %v1230 = vpop.permute.xlu0 %1229
        %1231 = vrot.lane.b32.xlu0 %v1150, 96
        %v1232 = vpop.permute.xlu0 %1231
        %1233 = vrot.lane.b32.xlu0 %v1159, 96
        %v1234 = vpop.permute.xlu0 %1233
        %1235 = vrot.lane.b32.xlu0 %v1168, 96
        %v1236 = vpop.permute.xlu0 %1235
        %1237 = vrot.lane.b32.xlu0 %v1177, 96
        %v1238 = vpop.permute.xlu0 %1237
        %1239 = vrot.lane.b32.xlu0 %v1186, 96
        %v1240 = vpop.permute.xlu0 %1239
        %1241 = vrot.lane.b32.xlu0 %v1195, 96
        %v1242 = vpop.permute.xlu0 %1241
        %1243 = vrot.lane.b32.xlu0 %v1204, 96
        %v1244 = vpop.permute.xlu0 %1243
        %1245 = vrot.lane.b32.xlu0 %v1213, 96
        %v1246 = vpop.permute.xlu0 %1245
        %1247 = vrot.lane.b32.xlu0 %v1222, 96
        %v1248 = vpop.permute.xlu0 %1247
        %1249 = vrot.lane.b32.xlu0 %v1221, 96
        %v1250 = vpop.permute.xlu0 %1249
        %vm1251 = vcmask 261120
        %v1253 = vsel %vm1251, %v559, %v689
        %v1255 = vsel %vm1251, %v560, %v691
        %v1257 = vsel %vm1251, %v561, %v693
        %v1259 = vsel %vm1251, %v562, %v695
        %v1261 = vsel %vm1251, %v563, %v697
        %v1263 = vsel %vm1251, %v564, %v699
        %v1265 = vsel %vm1251, %v565, %v701
        %v1267 = vsel %vm1251, %v566, %v703
        %v1269 = vsel %vm1251, %v567, %v705
        %v1271 = vsel %vm1251, %v568, %v707
        %v1273 = vsel %vm1251, %v569, %v709
        %v1275 = vsel %vm1251, %v570, %v711
        %v1277 = vsel %vm1251, %v571, %v713
        %v1280 = vsel %vm1251, %v572, %v715
        %vm1281 = vcmask 523264
        %v1283 = vsel %vm1281, %v1253, %v751
        %v1285 = vsel %vm1281, %v1255, %v753
        %v1287 = vsel %vm1281, %v1257, %v755
        %v1289 = vsel %vm1281, %v1259, %v757
        %v1291 = vsel %vm1281, %v1261, %v759
        %v1293 = vsel %vm1281, %v1263, %v761
        %v1295 = vsel %vm1281, %v1265, %v763
        %v1297 = vsel %vm1281, %v1267, %v765
        %v1299 = vsel %vm1281, %v1269, %v767
        %v1301 = vsel %vm1281, %v1271, %v769
        %v1303 = vsel %vm1281, %v1273, %v771
        %v1305 = vsel %vm1281, %v1275, %v773
        %v1307 = vsel %vm1281, %v1277, %v775
        %v1309 = vsel %vm1281, %v1280, %v777
        %vm1310 = vcmask 785408
        %v1312 = vsel %vm1310, %v1283, %v848
        %v1315 = vsel %vm1310, %v1285, %v850
        %v1318 = vsel %vm1310, %v1287, %v852
        %v1321 = vsel %vm1310, %v1289, %v854
        %v1324 = vsel %vm1310, %v1291, %v856
        %v1327 = vsel %vm1310, %v1293, %v858
        %v1330 = vsel %vm1310, %v1295, %v860
        %v1333 = vsel %vm1310, %v1297, %v862
        %v1336 = vsel %vm1310, %v1299, %v864
        %v1339 = vsel %vm1310, %v1301, %v866
        %v1342 = vsel %vm1310, %v1303, %v868
        %v1345 = vsel %vm1310, %v1305, %v870
        %v1348 = vsel %vm1310, %v1307, %v872
        %v1351 = vsel %vm1310, %v1309, %v874
        %v1355 = vsel %vm1251, %v891, %v991
        %v1358 = vsel %vm1251, %v893, %v993
        %v1361 = vsel %vm1251, %v895, %v995
        %v1364 = vsel %vm1251, %v897, %v997
        %v1367 = vsel %vm1251, %v899, %v999
        %v1370 = vsel %vm1251, %v901, %v1001
        %v1373 = vsel %vm1251, %v903, %v1003
        %v1376 = vsel %vm1251, %v905, %v1005
        %v1379 = vsel %vm1251, %v907, %v1007
        %v1382 = vsel %vm1251, %v909, %v1009
        %v1385 = vsel %vm1251, %v911, %v1011
        %v1388 = vsel %vm1251, %v913, %v1013
        %v1391 = vsel %vm1251, %v915, %v1015
        %v1394 = vsel %vm1251, %v914, %v1017
        %v1396 = vsel %vm1281, %v1355, %v1067
        %v1398 = vsel %vm1281, %v1358, %v1069
        %v1400 = vsel %vm1281, %v1361, %v1071
        %v1402 = vsel %vm1281, %v1364, %v1073
        %v1404 = vsel %vm1281, %v1367, %v1075
        %v1406 = vsel %vm1281, %v1370, %v1077
        %v1408 = vsel %vm1281, %v1373, %v1079
        %v1410 = vsel %vm1281, %v1376, %v1081
        %v1412 = vsel %vm1281, %v1379, %v1083
        %v1414 = vsel %vm1281, %v1382, %v1085
        %v1416 = vsel %vm1281, %v1385, %v1087
        %v1418 = vsel %vm1281, %v1388, %v1089
        %v1420 = vsel %vm1281, %v1391, %v1091
        %v1422 = vsel %vm1281, %v1394, %v1093
        %v1424 = vsel %vm1310, %v1396, %v1224
        %v1427 = vsel %vm1310, %v1398, %v1226
        %v1430 = vsel %vm1310, %v1400, %v1228
        %v1433 = vsel %vm1310, %v1402, %v1230
        %v1436 = vsel %vm1310, %v1404, %v1232
        %v1439 = vsel %vm1310, %v1406, %v1234
        %v1442 = vsel %vm1310, %v1408, %v1236
        %v1445 = vsel %vm1310, %v1410, %v1238
        %v1448 = vsel %vm1310, %v1412, %v1240
        %v1451 = vsel %vm1310, %v1414, %v1242
        %v1454 = vsel %vm1310, %v1416, %v1244
        %v1457 = vsel %vm1310, %v1418, %v1246
        %v1460 = vsel %vm1310, %v1420, %v1248
        %v1463 = vsel %vm1310, %v1422, %v1250
        %v1465 = vld [vmem:[%s1] sm:$0xf]
        %v1466 = vld [vmem:[%s1 + $0x4] sm:$0xf]
        %v1467 = vld [vmem:[%s1 + $0x8] sm:$0xf]
        %v1468 = vld [vmem:[%s1 + $0xc] sm:$0xf]
        %v1469 = vld [vmem:[%s1 + $0x10] sm:$0xf]
        %v1470 = vld [vmem:[%s1 + $0x14] sm:$0xf]
        %v1471 = vld [vmem:[%s1 + $0x18] sm:$0xf]
        %v1472 = vld [vmem:[%s1 + $0x1c] sm:$0xf]
        %v1473 = vld [vmem:[%s1 + $0x20] sm:$0xf]
        %v1474 = vld [vmem:[%s1 + $0x24] sm:$0xf]
        %v1475 = vld [vmem:[%s1 + $0x28] sm:$0xf]
        %v1476 = vld [vmem:[%s1 + $0x2c] sm:$0xf]
        %v1477 = vld [vmem:[%s1 + $0x30] sm:$0xf]
        %v1478 = vld [vmem:[%s1 + $0x34] sm:$0xf]
        %v1479 = vld [vmem:[%s1 + $0x38] sm:$0xf]
        %v1480 = vld [vmem:[%s1 + $0x3c] sm:$0xf]
        %v1481 = vld [vmem:[%s1 + $0x40] sm:$0xf]
        %v1482 = vld [vmem:[%s1 + $0x44] sm:$0xf]
        %v1483 = vld [vmem:[%s1 + $0x48] sm:$0xf]
        %v1484 = vld [vmem:[%s1 + $0x4c] sm:$0xf]
        %v1485 = vld [vmem:[%s1 + $0x50] sm:$0xf]
        %v1486 = vld [vmem:[%s1 + $0x54] sm:$0xf]
        %v1487 = vld [vmem:[%s1 + $0x58] sm:$0xf]
        %v1488 = vld [vmem:[%s1 + $0x5c] sm:$0xf]
        %v1489 = vld [vmem:[%s1 + $0x60] sm:$0xf]
        %v1490 = vld [vmem:[%s1 + $0x64] sm:$0xf]
        %v1491 = vld [vmem:[%s1 + $0x68] sm:$0xf]
        %v1492 = vld [vmem:[%s1 + $0x6c] sm:$0xf]
        %v1493 = vld [vmem:[%s1 + $0x70] sm:$0xf]
        %v1494 = vld [vmem:[%s1 + $0x74] sm:$0xf]
        %v1495 = vld [vmem:[%s1 + $0x78] sm:$0xf]
        %v1496 = vld [vmem:[%s1 + $0x7c] sm:$0xf]
        %v1497 = vld [vmem:[%s2] sm:$0x1]
        %v1499 = vlaneseq
        %v1500 = vshrl.u32 %v1499, 7
        %v1501 = vsub.s32 0, %v1500
        %v1502 = vrot.slane %v1497, %v1501
        %v1536 = vunpack.c.l.b16 %v1465
        %v1537 = vunpack.c.l.b16 %v1466
        %v1538 = vunpack.c.l.b16 %v1467
        %v1539 = vunpack.c.l.b16 %v1468
        %v1540 = vunpack.c.l.b16 %v1469
        %v1541 = vunpack.c.l.b16 %v1470
        %v1542 = vunpack.c.l.b16 %v1471
        %v1543 = vunpack.c.l.b16 %v1472
        %v1544 = vunpack.c.l.b16 %v1473
        %v1545 = vunpack.c.l.b16 %v1474
        %v1546 = vunpack.c.l.b16 %v1475
        %v1547 = vunpack.c.l.b16 %v1476
        %v1548 = vunpack.c.l.b16 %v1477
        %v1549 = vunpack.c.l.b16 %v1478
        %v1550 = vunpack.c.l.b16 %v1479
        %v1551 = vunpack.c.l.b16 %v1480
        %v1552 = vunpack.c.l.b16 %v1481
        %v1553 = vunpack.c.l.b16 %v1482
        %v1554 = vunpack.c.l.b16 %v1483
        %v1555 = vunpack.c.l.b16 %v1484
        %v1556 = vunpack.c.l.b16 %v1485
        %v1557 = vunpack.c.l.b16 %v1486
        %v1558 = vunpack.c.l.b16 %v1487
        %v1559 = vunpack.c.l.b16 %v1488
        %v1560 = vunpack.c.l.b16 %v1489
        %v1561 = vunpack.c.l.b16 %v1490
        %v1562 = vunpack.c.l.b16 %v1491
        %v1563 = vunpack.c.l.b16 %v1492
        %v1564 = vunpack.c.l.b16 %v1493
        %v1565 = vunpack.c.l.b16 %v1494
        %v1566 = vunpack.c.l.b16 %v1495
        %v1567 = vunpack.c.l.b16 %v1496
        %v1568 = vpack.c.b16 %v1537, %v1536
        %v1569 = vpack.c.b16 %v1539, %v1538
        %v1570 = vpack.c.b16 %v1541, %v1540
        %v1571 = vpack.c.b16 %v1543, %v1542
        %v1572 = vpack.c.b16 %v1545, %v1544
        %v1573 = vpack.c.b16 %v1547, %v1546
        %v1574 = vpack.c.b16 %v1549, %v1548
        %v1575 = vpack.c.b16 %v1551, %v1550
        %v1576 = vpack.c.b16 %v1553, %v1552
        %v1577 = vpack.c.b16 %v1555, %v1554
        %v1578 = vpack.c.b16 %v1557, %v1556
        %v1579 = vpack.c.b16 %v1559, %v1558
        %v1580 = vpack.c.b16 %v1561, %v1560
        %v1581 = vpack.c.b16 %v1563, %v1562
        %v1582 = vpack.c.b16 %v1565, %v1564
        %v1583 = vpack.c.b16 %v1567, %v1566
        %1600 = vmatprep.subr.bf16.mxu0 0
        %1601 = vmatpush1.bf16.msra.mxu0 %v1568
        %1602 = vmatprep.subr.bf16.mxu0 0
        %1603 = vmatpush1.bf16.msra.mxu0 %v1569
        %1604 = vmatprep.subr.bf16.mxu0 0
        %1605 = vmatpush1.bf16.msra.mxu0 %v1570
        %1606 = vmatprep.subr.bf16.mxu0 0
        %1607 = vmatpush1.bf16.msra.mxu0 %v1571
        %1608 = vmatprep.subr.bf16.mxu0 0
        %1609 = vmatpush1.bf16.msra.mxu0 %v1572
        %1610 = vmatprep.subr.bf16.mxu0 0
        %1611 = vmatpush1.bf16.msra.mxu0 %v1573
        %1612 = vmatprep.subr.bf16.mxu0 0
        %1613 = vmatpush1.bf16.msra.mxu0 %v1574
        %1614 = vmatprep.subr.bf16.mxu0 0
        %1615 = vmatpush1.bf16.msra.mxu0 %v1575
        %1616 = vmatprep.subr.bf16.mxu0 0
        %1617 = vmatpush1.bf16.msra.mxu0 %v1576
        %1618 = vmatprep.subr.bf16.mxu0 0
        %1619 = vmatpush1.bf16.msra.mxu0 %v1577
        %1620 = vmatprep.subr.bf16.mxu0 0
        %1621 = vmatpush1.bf16.msra.mxu0 %v1578
        %1622 = vmatprep.subr.bf16.mxu0 0
        %1623 = vmatpush1.bf16.msra.mxu0 %v1579
        %1624 = vmatprep.subr.bf16.mxu0 0
        %1625 = vmatpush1.bf16.msra.mxu0 %v1580
        %1626 = vmatprep.subr.bf16.mxu0 0
        %1627 = vmatpush1.bf16.msra.mxu0 %v1581
        %1628 = vmatprep.subr.bf16.mxu0 0
        %1629 = vmatpush1.bf16.msra.mxu0 %v1582
        %1630 = vmatprep.subr.bf16.mxu0 0
        %1631 = vmatpush1.bf16.msra.mxu0 %v1583
        %1632 = vmatprep.mubr.bf16.mxu0 %v1424
        %1633 = vmatmul.mubr.bf16.gmra.mrb[0].mxu0 %v1312
        %v1634 = vpop.f32.mrb[0].mxu0
        %v1635 = vadd.f32 %v1502, %v1634
        %v1636 = vpop.f32.mrb[0].mxu0
        %v1637 = vpop.f32.mrb[0].mxu0
        %v1638 = vadd.f32 %v1502, %v1637
        %v1639 = vpop.f32.mrb[0].mxu0
        %1640 = vmatprep.mubr.bf16.mxu0 %v1427
        %1641 = vmatmul.mubr.bf16.gmra.mrb[0].mxu0 %v1315
        %v1642 = vpop.f32.mrb[0].mxu0
        %v1643 = vadd.f32 %v1502, %v1642
        %v1644 = vpop.f32.mrb[0].mxu0
        %v1645 = vpop.f32.mrb[0].mxu0
        %v1646 = vadd.f32 %v1502, %v1645
        %v1647 = vpop.f32.mrb[0].mxu0
        %1648 = vmatprep.mubr.bf16.mxu0 %v1430
        %1649 = vmatmul.mubr.bf16.gmra.mrb[0].mxu0 %v1318
        %v1650 = vpop.f32.mrb[0].mxu0
        %v1651 = vadd.f32 %v1502, %v1650
        %v1652 = vpop.f32.mrb[0].mxu0
        %v1653 = vpop.f32.mrb[0].mxu0
        %v1654 = vadd.f32 %v1502, %v1653
        %v1655 = vpop.f32.mrb[0].mxu0
        %1656 = vmatprep.mubr.bf16.mxu0 %v1433
        %1657 = vmatmul.mubr.bf16.gmra.mrb[0].mxu0 %v1321
        %v1658 = vpop.f32.mrb[0].mxu0
        %v1659 = vadd.f32 %v1502, %v1658
        %v1660 = vpop.f32.mrb[0].mxu0
        %v1661 = vpop.f32.mrb[0].mxu0
        %v1662 = vadd.f32 %v1502, %v1661
        %v1663 = vpop.f32.mrb[0].mxu0
        %1664 = vmatprep.mubr.bf16.mxu0 %v1436
        %1665 = vmatmul.mubr.bf16.gmra.mrb[0].mxu0 %v1324
        %v1666 = vpop.f32.mrb[0].mxu0
        %v1667 = vadd.f32 %v1502, %v1666
        %v1668 = vpop.f32.mrb[0].mxu0
        %v1669 = vpop.f32.mrb[0].mxu0
        %v1670 = vadd.f32 %v1502, %v1669
        %v1671 = vpop.f32.mrb[0].mxu0
        %1672 = vmatprep.mubr.bf16.mxu0 %v1439
        %1673 = vmatmul.mubr.bf16.gmra.mrb[0].mxu0 %v1327
        %v1674 = vpop.f32.mrb[0].mxu0
        %v1675 = vadd.f32 %v1502, %v1674
        %v1676 = vpop.f32.mrb[0].mxu0
        %v1677 = vpop.f32.mrb[0].mxu0
        %v1678 = vadd.f32 %v1502, %v1677
        %v1679 = vpop.f32.mrb[0].mxu0
        %1680 = vmatprep.mubr.bf16.mxu0 %v1442
        %1681 = vmatmul.mubr.bf16.gmra.mrb[0].mxu0 %v1330
        %v1682 = vpop.f32.mrb[0].mxu0
        %v1683 = vadd.f32 %v1502, %v1682
        %v1684 = vpop.f32.mrb[0].mxu0
        %v1685 = vpop.f32.mrb[0].mxu0
        %v1686 = vadd.f32 %v1502, %v1685
        %v1687 = vpop.f32.mrb[0].mxu0
        %1688 = vmatprep.mubr.bf16.mxu0 %v1445
        %1689 = vmatmul.mubr.bf16.gmra.mrb[0].mxu0 %v1333
        %v1690 = vpop.f32.mrb[0].mxu0
        %v1691 = vadd.f32 %v1502, %v1690
        %v1692 = vpop.f32.mrb[0].mxu0
        %v1693 = vpop.f32.mrb[0].mxu0
        %v1694 = vadd.f32 %v1502, %v1693
        %v1695 = vpop.f32.mrb[0].mxu0
        %1696 = vmatprep.mubr.bf16.mxu0 %v1448
        %1697 = vmatmul.mubr.bf16.gmra.mrb[0].mxu0 %v1336
        %v1698 = vpop.f32.mrb[0].mxu0
        %v1699 = vadd.f32 %v1502, %v1698
        %v1700 = vpop.f32.mrb[0].mxu0
        %v1701 = vpop.f32.mrb[0].mxu0
        %v1702 = vadd.f32 %v1502, %v1701
        %v1703 = vpop.f32.mrb[0].mxu0
        %1704 = vmatprep.mubr.bf16.mxu0 %v1451
        %1705 = vmatmul.mubr.bf16.gmra.mrb[0].mxu0 %v1339
        %v1706 = vpop.f32.mrb[0].mxu0
        %v1707 = vadd.f32 %v1502, %v1706
        %v1708 = vpop.f32.mrb[0].mxu0
        %v1709 = vpop.f32.mrb[0].mxu0
        %v1710 = vadd.f32 %v1502, %v1709
        %v1711 = vpop.f32.mrb[0].mxu0
        %1712 = vmatprep.mubr.bf16.mxu0 %v1454
        %1713 = vmatmul.mubr.bf16.gmra.mrb[0].mxu0 %v1342
        %v1714 = vpop.f32.mrb[0].mxu0
        %v1715 = vadd.f32 %v1502, %v1714
        %v1716 = vpop.f32.mrb[0].mxu0
        %v1717 = vpop.f32.mrb[0].mxu0
        %v1718 = vadd.f32 %v1502, %v1717
        %v1719 = vpop.f32.mrb[0].mxu0
        %1720 = vmatprep.mubr.bf16.mxu0 %v1457
        %1721 = vmatmul.mubr.bf16.gmra.mrb[0].mxu0 %v1345
        %v1722 = vpop.f32.mrb[0].mxu0
        %v1723 = vadd.f32 %v1502, %v1722
        %v1724 = vpop.f32.mrb[0].mxu0
        %v1725 = vpop.f32.mrb[0].mxu0
        %v1726 = vadd.f32 %v1502, %v1725
        %v1727 = vpop.f32.mrb[0].mxu0
        %1728 = vmatprep.mubr.bf16.mxu0 %v1460
        %1729 = vmatmul.mubr.bf16.gmra.mrb[0].mxu0 %v1348
        %v1730 = vpop.f32.mrb[0].mxu0
        %v1731 = vadd.f32 %v1502, %v1730
        %v1732 = vpop.f32.mrb[0].mxu0
        %v1733 = vpop.f32.mrb[0].mxu0
        %v1734 = vadd.f32 %v1502, %v1733
        %v1735 = vpop.f32.mrb[0].mxu0
        %1736 = vmatprep.mubr.bf16.mxu0 %v1463
        %1737 = vmatmul.mubr.bf16.gmra.mrb[0].mxu0 %v1351
        %v1738 = vpop.f32.mrb[0].mxu0
        %v1739 = vadd.f32 %v1502, %v1738
        %v1740 = vpop.f32.mrb[0].mxu0
        %v1741 = vpop.f32.mrb[0].mxu0
        %v1742 = vpop.f32.mrb[0].mxu0
        %1743 = vdwg.mxu0
        %v1744 = vmax.f32 %v1635, 0.0
        %v1745 = vmax.f32 %v1638, 0.0
        %v1746 = vmax.f32 %v1643, 0.0
        %v1747 = vmax.f32 %v1646, 0.0
        %v1748 = vmax.f32 %v1651, 0.0
        %v1749 = vmax.f32 %v1654, 0.0
        %v1750 = vmax.f32 %v1659, 0.0
        %v1751 = vmax.f32 %v1662, 0.0
        %v1752 = vmax.f32 %v1667, 0.0
        %v1753 = vmax.f32 %v1670, 0.0
        %v1754 = vmax.f32 %v1675, 0.0
        %v1755 = vmax.f32 %v1678, 0.0
        %v1756 = vmax.f32 %v1683, 0.0
        %v1757 = vmax.f32 %v1686, 0.0
        %v1758 = vmax.f32 %v1691, 0.0
        %v1759 = vmax.f32 %v1694, 0.0
        %v1760 = vmax.f32 %v1699, 0.0
        %v1761 = vmax.f32 %v1702, 0.0
        %v1762 = vmax.f32 %v1707, 0.0
        %v1763 = vmax.f32 %v1710, 0.0
        %v1764 = vmax.f32 %v1715, 0.0
        %v1765 = vmax.f32 %v1718, 0.0
        %v1766 = vmax.f32 %v1723, 0.0
        %v1767 = vmax.f32 %v1726, 0.0
        %v1768 = vmax.f32 %v1731, 0.0
        %v1769 = vmax.f32 %v1734, 0.0
        %v1770 = vmax.f32 %v1739, 0.0
        %1772 = vset.pattern.permute.xlu0 0
        %1773 = vperm.xlu0 %1772, %v359
        %v1774 = vpop.permute.xlu0 %1773
        %1777 = vset.pattern.permute.xlu0 0
        %1778 = vperm.xlu0 %1777, %v360
        %v1779 = vpop.permute.xlu0 %1778
        %1782 = vset.pattern.permute.xlu0 0
        %1783 = vperm.xlu0 %1782, %v361
        %v1784 = vpop.permute.xlu0 %1783
        %1787 = vset.pattern.permute.xlu0 0
        %1788 = vperm.xlu0 %1787, %v362
        %v1789 = vpop.permute.xlu0 %1788
        %1792 = vset.pattern.permute.xlu0 0
        %1793 = vperm.xlu0 %1792, %v363
        %v1794 = vpop.permute.xlu0 %1793
        %1797 = vset.pattern.permute.xlu0 0
        %1798 = vperm.xlu0 %1797, %v364
        %v1799 = vpop.permute.xlu0 %1798
        %1802 = vset.pattern.permute.xlu0 0
        %1803 = vperm.xlu0 %1802, %v365
        %v1804 = vpop.permute.xlu0 %1803
        %1807 = vset.pattern.permute.xlu0 0
        %1808 = vperm.xlu0 %1807, %v366
        %v1809 = vpop.permute.xlu0 %1808
        %1812 = vset.pattern.permute.xlu0 0
        %1813 = vperm.xlu0 %1812, %v367
        %v1814 = vpop.permute.xlu0 %1813
        %1817 = vset.pattern.permute.xlu0 0
        %1818 = vperm.xlu0 %1817, %v368
        %v1819 = vpop.permute.xlu0 %1818
        %1822 = vset.pattern.permute.xlu0 0
        %1823 = vperm.xlu0 %1822, %v369
        %v1824 = vpop.permute.xlu0 %1823
        %1827 = vset.pattern.permute.xlu0 0
        %1828 = vperm.xlu0 %1827, %v370
        %v1829 = vpop.permute.xlu0 %1828
        %1832 = vset.pattern.permute.xlu0 0
        %1833 = vperm.xlu0 %1832, %v371
        %v1834 = vpop.permute.xlu0 %1833
        %1837 = vset.pattern.permute.xlu0 0
        %1838 = vperm.xlu0 %1837, %v372
        %v1839 = vpop.permute.xlu0 %1838
        %1842 = vset.pattern.permute.xlu0 0
        %1843 = vperm.xlu0 %1842, %v373
        %v1844 = vpop.permute.xlu0 %1843
        %1847 = vset.pattern.permute.xlu0 0
        %1848 = vperm.xlu0 %1847, %v374
        %v1849 = vpop.permute.xlu0 %1848
        %1852 = vset.pattern.permute.xlu0 0
        %1853 = vperm.xlu0 %1852, %v375
        %v1854 = vpop.permute.xlu0 %1853
        %1857 = vset.pattern.permute.xlu0 0
        %1858 = vperm.xlu0 %1857, %v376
        %v1859 = vpop.permute.xlu0 %1858
        %1862 = vset.pattern.permute.xlu0 0
        %1863 = vperm.xlu0 %1862, %v377
        %v1864 = vpop.permute.xlu0 %1863
        %1867 = vset.pattern.permute.xlu0 0
        %1868 = vperm.xlu0 %1867, %v378
        %v1869 = vpop.permute.xlu0 %1868
        %1872 = vset.pattern.permute.xlu0 0
        %1873 = vperm.xlu0 %1872, %v379
        %v1874 = vpop.permute.xlu0 %1873
        %1877 = vset.pattern.permute.xlu0 0
        %1878 = vperm.xlu0 %1877, %v380
        %v1879 = vpop.permute.xlu0 %1878
        %1882 = vset.pattern.permute.xlu0 0
        %1883 = vperm.xlu0 %1882, %v381
        %v1884 = vpop.permute.xlu0 %1883
        %1887 = vset.pattern.permute.xlu0 0
        %1888 = vperm.xlu0 %1887, %v382
        %v1889 = vpop.permute.xlu0 %1888
        %1892 = vset.pattern.permute.xlu0 0
        %1893 = vperm.xlu0 %1892, %v383
        %v1894 = vpop.permute.xlu0 %1893
        %1897 = vset.pattern.permute.xlu0 0
        %1898 = vperm.xlu0 %1897, %v384
        %v1899 = vpop.permute.xlu0 %1898
        %1902 = vset.pattern.permute.xlu0 0
        %1903 = vperm.xlu0 %1902, %v385
        %v1904 = vpop.permute.xlu0 %1903
        %v1906 = vmul.f32 %v1744, %v1774
        %v1907 = vmul.f32 %v1745, %v1779
        %v1908 = vmul.f32 %v1746, %v1784
        %v1909 = vmul.f32 %v1747, %v1789
        %v1910 = vmul.f32 %v1748, %v1794
        %v1911 = vmul.f32 %v1749, %v1799
        %v1912 = vmul.f32 %v1750, %v1804
        %v1913 = vmul.f32 %v1751, %v1809
        %v1914 = vmul.f32 %v1752, %v1814
        %v1915 = vmul.f32 %v1753, %v1819
        %v1916 = vmul.f32 %v1754, %v1824
        %v1917 = vmul.f32 %v1755, %v1829
        %v1918 = vmul.f32 %v1756, %v1834
        %v1919 = vmul.f32 %v1757, %v1839
        %v1920 = vmul.f32 %v1758, %v1844
        %v1921 = vmul.f32 %v1759, %v1849
        %v1922 = vmul.f32 %v1760, %v1854
        %v1923 = vmul.f32 %v1761, %v1859
        %v1924 = vmul.f32 %v1762, %v1864
        %v1925 = vmul.f32 %v1763, %v1869
        %v1926 = vmul.f32 %v1764, %v1874
        %v1927 = vmul.f32 %v1765, %v1879
        %v1928 = vmul.f32 %v1766, %v1884
        %v1929 = vmul.f32 %v1767, %v1889
        %v1930 = vmul.f32 %v1768, %v1894
        %v1931 = vmul.f32 %v1769, %v1899
        %v1932 = vmul.f32 %v1770, %v1904
        %v1933 = vpack.c.bf16 %v1907, %v1906
        %v1934 = vpack.c.bf16 %v1909, %v1908
        %v1935 = vpack.c.bf16 %v1911, %v1910
        %v1936 = vpack.c.bf16 %v1913, %v1912
        %v1937 = vpack.c.bf16 %v1915, %v1914
        %v1938 = vpack.c.bf16 %v1917, %v1916
        %v1939 = vpack.c.bf16 %v1919, %v1918
        %v1940 = vpack.c.bf16 %v1921, %v1920
        %v1941 = vpack.c.bf16 %v1923, %v1922
        %v1942 = vpack.c.bf16 %v1925, %v1924
        %v1943 = vpack.c.bf16 %v1927, %v1926
        %v1944 = vpack.c.bf16 %v1929, %v1928
        %v1945 = vpack.c.bf16 %v1931, %v1930
        %v1946 = vpack.c.bf16 %v1932, %v1932
        %v1961 = vunpack.c.l.b16 %v1933
        %v1962 = vunpack.c.h.b16 %v1933
        %v1963 = vunpack.c.l.b16 %v1934
        %v1964 = vunpack.c.h.b16 %v1934
        %v1965 = vunpack.c.l.b16 %v1935
        %v1966 = vunpack.c.h.b16 %v1935
        %v1967 = vunpack.c.l.b16 %v1936
        %v1968 = vunpack.c.h.b16 %v1936
        %v1969 = vunpack.c.l.b16 %v1937
        %v1970 = vunpack.c.h.b16 %v1937
        %v1971 = vunpack.c.l.b16 %v1938
        %v1972 = vunpack.c.h.b16 %v1938
        %v1973 = vunpack.c.l.b16 %v1939
        %v1974 = vunpack.c.h.b16 %v1939
        %v1975 = vunpack.c.l.b16 %v1940
        %v1976 = vunpack.c.h.b16 %v1940
        %v1977 = vunpack.c.l.b16 %v1941
        %v1978 = vunpack.c.h.b16 %v1941
        %v1979 = vunpack.c.l.b16 %v1942
        %v1980 = vunpack.c.h.b16 %v1942
        %v1981 = vunpack.c.l.b16 %v1943
        %v1982 = vunpack.c.h.b16 %v1943
        %v1983 = vunpack.c.l.b16 %v1944
        %v1984 = vunpack.c.h.b16 %v1944
        %v1985 = vunpack.c.l.b16 %v1945
        %v1986 = vunpack.c.h.b16 %v1945
        %v1987 = vunpack.c.l.b16 %v1946
        %v1988 = vpack.c.b16 %v1961, %v1961
        %v1989 = vpack.c.b16 %v1962, %v1962
        %v1990 = vpack.c.b16 %v1963, %v1963
        %v1991 = vpack.c.b16 %v1964, %v1964
        %v1992 = vpack.c.b16 %v1965, %v1965
        %v1993 = vpack.c.b16 %v1966, %v1966
        %v1994 = vpack.c.b16 %v1967, %v1967
        %v1995 = vpack.c.b16 %v1968, %v1968
        %v1996 = vpack.c.b16 %v1969, %v1969
        %v1997 = vpack.c.b16 %v1970, %v1970
        %v1998 = vpack.c.b16 %v1971, %v1971
        %v1999 = vpack.c.b16 %v1972, %v1972
        %v2000 = vpack.c.b16 %v1973, %v1973
        %v2001 = vpack.c.b16 %v1974, %v1974
        %v2002 = vpack.c.b16 %v1975, %v1975
        %v2003 = vpack.c.b16 %v1976, %v1976
        %v2004 = vpack.c.b16 %v1977, %v1977
        %v2005 = vpack.c.b16 %v1978, %v1978
        %v2006 = vpack.c.b16 %v1979, %v1979
        %v2007 = vpack.c.b16 %v1980, %v1980
        %v2008 = vpack.c.b16 %v1981, %v1981
        %v2009 = vpack.c.b16 %v1982, %v1982
        %v2010 = vpack.c.b16 %v1983, %v1983
        %v2011 = vpack.c.b16 %v1984, %v1984
        %v2012 = vpack.c.b16 %v1985, %v1985
        %v2013 = vpack.c.b16 %v1986, %v1986
        %v2014 = vpack.c.b16 %v1987, %v1987
        %vm2015 = vsmask.f32 1280
        %vm2016 = vsmask.f32 5392
        %vm2017 = vmor %vm2015, %vm2016
        %v2019 = vshrl.u32 %v1988, 16
        %v2021 = vrot.slane %v2019, 6
        %v2022 = vshll.u32 %v1988, 16
        %v2024 = vrot.slane %v2022, 7
        %v2025 = vor.u32 %v2021, %v2024
        %v2026 = vrot.slane %v2025, 4
        %v2028 = vshrl.u32 %v1989, 16
        %v2030 = vrot.slane %v2028, 6
        %v2031 = vshll.u32 %v1989, 16
        %v2033 = vrot.slane %v2031, 7
        %v2034 = vor.u32 %v2030, %v2033
        %v2035 = vsel %vm2017, %v2026, %v2034
        %v2036 = vrot.slane %v2034, 4
        %v2038 = vshrl.u32 %v1990, 16
        %v2040 = vrot.slane %v2038, 6
        %v2041 = vshll.u32 %v1990, 16
        %v2043 = vrot.slane %v2041, 7
        %v2044 = vor.u32 %v2040, %v2043
        %v2045 = vsel %vm2017, %v2036, %v2044
        %v2046 = vrot.slane %v2044, 4
        %v2048 = vshrl.u32 %v1991, 16
        %v2050 = vrot.slane %v2048, 6
        %v2051 = vshll.u32 %v1991, 16
        %v2053 = vrot.slane %v2051, 7
        %v2054 = vor.u32 %v2050, %v2053
        %v2055 = vsel %vm2017, %v2046, %v2054
        %v2056 = vrot.slane %v2054, 4
        %v2058 = vshrl.u32 %v1992, 16
        %v2060 = vrot.slane %v2058, 6
        %v2061 = vshll.u32 %v1992, 16
        %v2063 = vrot.slane %v2061, 7
        %v2064 = vor.u32 %v2060, %v2063
        %v2065 = vsel %vm2017, %v2056, %v2064
        %v2066 = vrot.slane %v2064, 4
        %v2068 = vshrl.u32 %v1993, 16
        %v2070 = vrot.slane %v2068, 6
        %v2071 = vshll.u32 %v1993, 16
        %v2073 = vrot.slane %v2071, 7
        %v2074 = vor.u32 %v2070, %v2073
        %v2075 = vsel %vm2017, %v2066, %v2074
        %v2076 = vrot.slane %v2074, 4
        %v2078 = vshrl.u32 %v1994, 16
        %v2080 = vrot.slane %v2078, 6
        %v2081 = vshll.u32 %v1994, 16
        %v2083 = vrot.slane %v2081, 7
        %v2084 = vor.u32 %v2080, %v2083
        %v2085 = vsel %vm2017, %v2076, %v2084
        %v2086 = vrot.slane %v2084, 4
        %v2088 = vshrl.u32 %v1995, 16
        %v2090 = vrot.slane %v2088, 6
        %v2091 = vshll.u32 %v1995, 16
        %v2093 = vrot.slane %v2091, 7
        %v2094 = vor.u32 %v2090, %v2093
        %v2095 = vsel %vm2017, %v2086, %v2094
        %v2096 = vrot.slane %v2094, 4
        %v2098 = vshrl.u32 %v1996, 16
        %v2100 = vrot.slane %v2098, 6
        %v2101 = vshll.u32 %v1996, 16
        %v2103 = vrot.slane %v2101, 7
        %v2104 = vor.u32 %v2100, %v2103
        %v2105 = vsel %vm2017, %v2096, %v2104
        %v2106 = vrot.slane %v2104, 4
        %v2108 = vshrl.u32 %v1997, 16
        %v2110 = vrot.slane %v2108, 6
        %v2111 = vshll.u32 %v1997, 16
        %v2113 = vrot.slane %v2111, 7
        %v2114 = vor.u32 %v2110, %v2113
        %v2115 = vsel %vm2017, %v2106, %v2114
        %v2116 = vrot.slane %v2114, 4
        %v2118 = vshrl.u32 %v1998, 16
        %v2120 = vrot.slane %v2118, 6
        %v2121 = vshll.u32 %v1998, 16
        %v2123 = vrot.slane %v2121, 7
        %v2124 = vor.u32 %v2120, %v2123
        %v2125 = vsel %vm2017, %v2116, %v2124
        %v2126 = vrot.slane %v2124, 4
        %v2128 = vshrl.u32 %v1999, 16
        %v2130 = vrot.slane %v2128, 6
        %v2131 = vshll.u32 %v1999, 16
        %v2133 = vrot.slane %v2131, 7
        %v2134 = vor.u32 %v2130, %v2133
        %v2135 = vsel %vm2017, %v2126, %v2134
        %v2136 = vrot.slane %v2134, 4
        %v2138 = vshrl.u32 %v2000, 16
        %v2140 = vrot.slane %v2138, 6
        %v2141 = vshll.u32 %v2000, 16
        %v2143 = vrot.slane %v2141, 7
        %v2144 = vor.u32 %v2140, %v2143
        %v2145 = vsel %vm2017, %v2136, %v2144
        %v2146 = vrot.slane %v2144, 4
        %v2148 = vshrl.u32 %v2001, 16
        %v2150 = vrot.slane %v2148, 6
        %v2151 = vshll.u32 %v2001, 16
        %v2153 = vrot.slane %v2151, 7
        %v2154 = vor.u32 %v2150, %v2153
        %v2155 = vsel %vm2017, %v2146, %v2154
        %v2156 = vrot.slane %v2154, 4
        %v2158 = vshrl.u32 %v2002, 16
        %v2160 = vrot.slane %v2158, 6
        %v2161 = vshll.u32 %v2002, 16
        %v2163 = vrot.slane %v2161, 7
        %v2164 = vor.u32 %v2160, %v2163
        %v2165 = vsel %vm2017, %v2156, %v2164
        %v2166 = vrot.slane %v2164, 4
        %v2168 = vshrl.u32 %v2003, 16
        %v2170 = vrot.slane %v2168, 6
        %v2171 = vshll.u32 %v2003, 16
        %v2173 = vrot.slane %v2171, 7
        %v2174 = vor.u32 %v2170, %v2173
        %v2175 = vsel %vm2017, %v2166, %v2174
        %v2176 = vrot.slane %v2174, 4
        %v2178 = vshrl.u32 %v2004, 16
        %v2180 = vrot.slane %v2178, 6
        %v2181 = vshll.u32 %v2004, 16
        %v2183 = vrot.slane %v2181, 7
        %v2184 = vor.u32 %v2180, %v2183
        %v2185 = vsel %vm2017, %v2176, %v2184
        %v2186 = vrot.slane %v2184, 4
        %v2188 = vshrl.u32 %v2005, 16
        %v2190 = vrot.slane %v2188, 6
        %v2191 = vshll.u32 %v2005, 16
        %v2193 = vrot.slane %v2191, 7
        %v2194 = vor.u32 %v2190, %v2193
        %v2195 = vsel %vm2017, %v2186, %v2194
        %v2196 = vrot.slane %v2194, 4
        %v2198 = vshrl.u32 %v2006, 16
        %v2200 = vrot.slane %v2198, 6
        %v2201 = vshll.u32 %v2006, 16
        %v2203 = vrot.slane %v2201, 7
        %v2204 = vor.u32 %v2200, %v2203
        %v2205 = vsel %vm2017, %v2196, %v2204
        %v2206 = vrot.slane %v2204, 4
        %v2208 = vshrl.u32 %v2007, 16
        %v2210 = vrot.slane %v2208, 6
        %v2211 = vshll.u32 %v2007, 16
        %v2213 = vrot.slane %v2211, 7
        %v2214 = vor.u32 %v2210, %v2213
        %v2215 = vsel %vm2017, %v2206, %v2214
        %v2216 = vrot.slane %v2214, 4
        %v2218 = vshrl.u32 %v2008, 16
        %v2220 = vrot.slane %v2218, 6
        %v2221 = vshll.u32 %v2008, 16
        %v2223 = vrot.slane %v2221, 7
        %v2224 = vor.u32 %v2220, %v2223
        %v2225 = vsel %vm2017, %v2216, %v2224
        %v2226 = vrot.slane %v2224, 4
        %v2228 = vshrl.u32 %v2009, 16
        %v2230 = vrot.slane %v2228, 6
        %v2231 = vshll.u32 %v2009, 16
        %v2233 = vrot.slane %v2231, 7
        %v2234 = vor.u32 %v2230, %v2233
        %v2235 = vsel %vm2017, %v2226, %v2234
        %v2236 = vrot.slane %v2234, 4
        %v2238 = vshrl.u32 %v2010, 16
        %v2240 = vrot.slane %v2238, 6
        %v2241 = vshll.u32 %v2010, 16
        %v2243 = vrot.slane %v2241, 7
        %v2244 = vor.u32 %v2240, %v2243
        %v2245 = vsel %vm2017, %v2236, %v2244
        %v2246 = vrot.slane %v2244, 4
        %v2248 = vshrl.u32 %v2011, 16
        %v2250 = vrot.slane %v2248, 6
        %v2251 = vshll.u32 %v2011, 16
        %v2253 = vrot.slane %v2251, 7
        %v2254 = vor.u32 %v2250, %v2253
        %v2255 = vsel %vm2017, %v2246, %v2254
        %v2256 = vrot.slane %v2254, 4
        %v2258 = vshrl.u32 %v2012, 16
        %v2260 = vrot.slane %v2258, 6
        %v2261 = vshll.u32 %v2012, 16
        %v2263 = vrot.slane %v2261, 7
        %v2264 = vor.u32 %v2260, %v2263
        %v2265 = vsel %vm2017, %v2256, %v2264
        %v2266 = vrot.slane %v2264, 4
        %v2268 = vshrl.u32 %v2013, 16
        %v2270 = vrot.slane %v2268, 6
        %v2271 = vshll.u32 %v2013, 16
        %v2273 = vrot.slane %v2271, 7
        %v2274 = vor.u32 %v2270, %v2273
        %v2275 = vsel %vm2017, %v2266, %v2274
        %v2276 = vrot.slane %v2274, 4
        %v2278 = vshrl.u32 %v2014, 16
        %v2280 = vrot.slane %v2278, 6
        %v2281 = vshll.u32 %v2014, 16
        %v2283 = vrot.slane %v2281, 7
        %v2284 = vor.u32 %v2280, %v2283
        %v2285 = vsel %vm2017, %v2276, %v2284
        %v2286 = vrot.slane %v2284, 4
        %vm2315 = vcmask 125953
        %vm2316 = vsmask.f32 7942
        %vm2317 = vmand %vm2315, %vm2316
        %v2318 = vld [vmem:[#allocation2 + $0x14] sm:$0xe]
        %v2319 = vsel %vm2317, %v2025, %v2318
        %2320 = vst [vmem:[#allocation2 + $0x14] sm:$0xe] %v2319
        %2321 = vst.msk [vmem:[#allocation2 + $0x18] sm:$0xf] %vm386, %v2035
        %2322 = vst.msk [vmem:[#allocation2 + $0x1c] sm:$0xf] %vm386, %v2045
        %2323 = vst.msk [vmem:[#allocation2 + $0x20] sm:$0xf] %vm386, %v2055
        %2324 = vst.msk [vmem:[#allocation2 + $0x24] sm:$0xf] %vm386, %v2065
        %2325 = vst.msk [vmem:[#allocation2 + $0x28] sm:$0xf] %vm386, %v2075
        %2326 = vst.msk [vmem:[#allocation2 + $0x2c] sm:$0xf] %vm386, %v2085
        %2327 = vst.msk [vmem:[#allocation2 + $0x30] sm:$0xf] %vm386, %v2095
        %2328 = vst.msk [vmem:[#allocation2 + $0x34] sm:$0xf] %vm386, %v2105
        %2329 = vst.msk [vmem:[#allocation2 + $0x38] sm:$0xf] %vm386, %v2115
        %2330 = vst.msk [vmem:[#allocation2 + $0x3c] sm:$0xf] %vm386, %v2125
        %2331 = vst.msk [vmem:[#allocation2 + $0x40] sm:$0xf] %vm386, %v2135
        %2332 = vst.msk [vmem:[#allocation2 + $0x44] sm:$0xf] %vm386, %v2145
        %2333 = vst.msk [vmem:[#allocation2 + $0x48] sm:$0xf] %vm386, %v2155
        %2334 = vst.msk [vmem:[#allocation2 + $0x4c] sm:$0xf] %vm386, %v2165
        %2335 = vst.msk [vmem:[#allocation2 + $0x50] sm:$0xf] %vm386, %v2175
        %2336 = vst.msk [vmem:[#allocation2 + $0x54] sm:$0xf] %vm386, %v2185
        %2337 = vst.msk [vmem:[#allocation2 + $0x58] sm:$0xf] %vm386, %v2195
        %2338 = vst.msk [vmem:[#allocation2 + $0x5c] sm:$0xf] %vm386, %v2205
        %2339 = vst.msk [vmem:[#allocation2 + $0x60] sm:$0xf] %vm386, %v2215
        %2340 = vst.msk [vmem:[#allocation2 + $0x64] sm:$0xf] %vm386, %v2225
        %2341 = vst.msk [vmem:[#allocation2 + $0x68] sm:$0xf] %vm386, %v2235
        %2342 = vst.msk [vmem:[#allocation2 + $0x6c] sm:$0xf] %vm386, %v2245
        %2343 = vst.msk [vmem:[#allocation2 + $0x70] sm:$0xf] %vm386, %v2255
        %2344 = vst.msk [vmem:[#allocation2 + $0x74] sm:$0xf] %vm386, %v2265
        %2345 = vst.msk [vmem:[#allocation2 + $0x78] sm:$0xf] %vm386, %v2275
        %2346 = vst.msk [vmem:[#allocation2 + $0x7c] sm:$0xf] %vm386, %v2285
        %vm2347 = vcmask 123904
        %vm2348 = vmand %vm2347, %vm2015
        %v2349 = vld [vmem:[#allocation2 + $0x80] sm:$0x3]
        %v2350 = vsel %vm2348, %v2286, %v2349
        %2351 = vst [vmem:[#allocation2 + $0x80] sm:$0x3] %v2350
        %v2352 = vld [vmem:[#allocation2] sm:$0xf]
        %v2353 = vld [vmem:[#allocation2 + $0x4] sm:$0xf]
        %v2354 = vld [vmem:[#allocation2 + $0x8] sm:$0xf]
        %v2355 = vld [vmem:[#allocation2 + $0xc] sm:$0xf]
        %v2356 = vld [vmem:[#allocation2 + $0x10] sm:$0xf]
        %v2357 = vld [vmem:[#allocation2 + $0x14] sm:$0xf]
        %v2358 = vld [vmem:[#allocation2 + $0x18] sm:$0xf]
        %v2359 = vld [vmem:[#allocation2 + $0x1c] sm:$0xf]
        %v2360 = vld [vmem:[#allocation2 + $0x20] sm:$0xf]
        %v2361 = vld [vmem:[#allocation2 + $0x24] sm:$0xf]
        %v2362 = vld [vmem:[#allocation2 + $0x28] sm:$0xf]
        %v2363 = vld [vmem:[#allocation2 + $0x2c] sm:$0xf]
        %v2364 = vld [vmem:[#allocation2 + $0x30] sm:$0xf]
        %v2365 = vld [vmem:[#allocation2 + $0x34] sm:$0xf]
        %v2366 = vld [vmem:[#allocation2 + $0x38] sm:$0xf]
        %v2367 = vld [vmem:[#allocation2 + $0x3c] sm:$0xf]
        %v2368 = vld [vmem:[#allocation2 + $0x40] sm:$0xf]
        %v2369 = vld [vmem:[#allocation2 + $0x44] sm:$0xf]
        %v2370 = vld [vmem:[#allocation2 + $0x48] sm:$0xf]
        %v2371 = vld [vmem:[#allocation2 + $0x4c] sm:$0xf]
        %v2372 = vld [vmem:[#allocation2 + $0x50] sm:$0xf]
        %v2373 = vld [vmem:[#allocation2 + $0x54] sm:$0xf]
        %v2374 = vld [vmem:[#allocation2 + $0x58] sm:$0xf]
        %v2375 = vld [vmem:[#allocation2 + $0x5c] sm:$0xf]
        %v2376 = vld [vmem:[#allocation2 + $0x60] sm:$0xf]
        %v2377 = vld [vmem:[#allocation2 + $0x64] sm:$0xf]
        %v2378 = vld [vmem:[#allocation2 + $0x68] sm:$0xf]
        %v2379 = vld [vmem:[#allocation2 + $0x6c] sm:$0x1]
        %v2380 = vld [vmem:[#allocation2] sm:$0xe]
        %v2381 = vld [vmem:[#allocation2] sm:$0x8]
        %v2382 = vld [vmem:[#allocation2 + $0x6c] sm:$0x7]
        %v2383 = vld [vmem:[#allocation2 + $0x6c] sm:$0xf]
        %v2384 = vld [vmem:[#allocation2 + $0x4] sm:$0xc]
        %v2385 = vld [vmem:[#allocation2 + $0x70] sm:$0x3]
        %v2386 = vld [vmem:[#allocation2 + $0x70] sm:$0x7]
        %v2387 = vld [vmem:[#allocation2 + $0x4] sm:$0x8]
        %v2388 = vld [vmem:[#allocation2 + $0x10] sm:$0xc]
        %v2389 = vld [vmem:[#allocation2 + $0x70] sm:$0xf]
        %v2390 = vld [vmem:[#allocation2 + $0x74] sm:$0xf]
        %v2391 = vld [vmem:[#allocation2 + $0x78] sm:$0xf]
        %v2392 = vld [vmem:[#allocation2 + $0x7c] sm:$0x3]
        %v2393 = vld [vmem:[#allocation2 + $0x7c] sm:$0x7]
        %v2394 = vld [vmem:[#allocation2 + $0x10] sm:$0x8]
        %v2395 = vld [vmem:[#allocation2 + $0x14] sm:$0xe]
        %v2396 = vld [vmem:[#allocation2 + $0x7c] sm:$0xf]
        %v2397 = vld [vmem:[#allocation2 + $0x80] sm:$0x1]
        %v2398 = vld [vmem:[#allocation2 + $0x80] sm:$0x3]
        %v2399 = vld [vmem:[#allocation2 + $0x14] sm:$0xc]
        %v2400 = vld [vmem:[#allocation2 + $0x80] sm:$0xf]
        %v2401 = vld [vmem:[#allocation2 + $0x84] sm:$0x1]
        %v2402 = vld [vmem:[#allocation2 + $0x18] sm:$0xe]
        %v2403 = vld [vmem:[#allocation2 + $0x84] sm:$0xf]
        %v2404 = vld [vmem:[#allocation2 + $0x88] sm:$0xf]
        %v2405 = vld [vmem:[#allocation2 + $0x8c] sm:$0xf]
        %v2406 = vld [vmem:[#allocation2 + $0x90] sm:$0x1]
        %v2407 = vld [vmem:[#allocation2 + $0x24] sm:$0xe]
        %v2408 = vld [vmem:[#allocation2 + $0x24] sm:$0x8]
        %v2409 = vld [vmem:[#allocation2 + $0x90] sm:$0x7]
        %v2410 = vld [vmem:[#allocation2 + $0x90] sm:$0xf]
        %v2411 = vld [vmem:[#allocation2 + $0x28] sm:$0xc]
        %v2412 = vld [vmem:[#allocation2 + $0x94] sm:$0x3]
        %v2413 = vld [vmem:[#allocation2 + $0x94] sm:$0x7]
        %v2414 = vld [vmem:[#allocation2 + $0x28] sm:$0x8]
        %v2442 = vunpack.c.l.b16 %v2352
        %v2443 = vunpack.c.l.b16 %v2353
        %v2444 = vunpack.c.l.b16 %v2354
        %v2445 = vunpack.c.l.b16 %v2355
        %v2446 = vunpack.c.l.b16 %v2356
        %v2447 = vunpack.c.l.b16 %v2357
        %v2448 = vunpack.c.l.b16 %v2358
        %v2449 = vunpack.c.l.b16 %v2359
        %v2450 = vunpack.c.l.b16 %v2360
        %v2451 = vunpack.c.l.b16 %v2361
        %v2452 = vunpack.c.l.b16 %v2362
        %v2453 = vunpack.c.l.b16 %v2363
        %v2454 = vunpack.c.l.b16 %v2364
        %v2455 = vunpack.c.l.b16 %v2365
        %v2456 = vunpack.c.l.b16 %v2366
        %v2457 = vunpack.c.l.b16 %v2367
        %v2458 = vunpack.c.l.b16 %v2368
        %v2459 = vunpack.c.l.b16 %v2369
        %v2460 = vunpack.c.l.b16 %v2370
        %v2461 = vunpack.c.l.b16 %v2371
        %v2462 = vunpack.c.l.b16 %v2372
        %v2463 = vunpack.c.l.b16 %v2373
        %v2464 = vunpack.c.l.b16 %v2374
        %v2465 = vunpack.c.l.b16 %v2375
        %v2466 = vunpack.c.l.b16 %v2376
        %v2467 = vunpack.c.l.b16 %v2377
        %v2468 = vunpack.c.l.b16 %v2378
        %v2469 = vpack.c.b16 %v2443, %v2442
        %v2470 = vpack.c.b16 %v2445, %v2444
        %v2471 = vpack.c.b16 %v2447, %v2446
        %v2472 = vpack.c.b16 %v2449, %v2448
        %v2473 = vpack.c.b16 %v2451, %v2450
        %v2474 = vpack.c.b16 %v2453, %v2452
        %v2475 = vpack.c.b16 %v2455, %v2454
        %v2476 = vpack.c.b16 %v2457, %v2456
        %v2477 = vpack.c.b16 %v2459, %v2458
        %v2478 = vpack.c.b16 %v2461, %v2460
        %v2479 = vpack.c.b16 %v2463, %v2462
        %v2480 = vpack.c.b16 %v2465, %v2464
        %v2481 = vpack.c.b16 %v2467, %v2466
        %v2482 = vpack.c.b16 %v2468, %v2468
        %v2484 = vunpack.c.l.b16 %v2379
        %v2485 = vpack.c.b16 %v2484, %v2468
        %v2487 = vshrl.u32 %v2469, 16
        %v2489 = vshll.u32 %v2469, 16
        %v2491 = vrot.slane %v2489, 1
        %v2492 = vor.u32 %v2487, %v2491
        %v2494 = vshll.u32 %v2470, 16
        %v2496 = vrot.slane %v2494, 1
        %v2497 = vsel %vm576, %v2492, %v2496
        %v2498 = vshrl.u32 %v2470, 16
        %v2500 = vor.u32 %v2498, %v2496
        %v2502 = vshll.u32 %v2471, 16
        %v2504 = vrot.slane %v2502, 1
        %v2505 = vsel %vm576, %v2500, %v2504
        %v2506 = vshrl.u32 %v2471, 16
        %v2508 = vor.u32 %v2506, %v2504
        %v2510 = vshll.u32 %v2472, 16
        %v2512 = vrot.slane %v2510, 1
        %v2513 = vsel %vm576, %v2508, %v2512
        %v2514 = vshrl.u32 %v2472, 16
        %v2516 = vor.u32 %v2514, %v2512
        %v2518 = vshll.u32 %v2473, 16
        %v2520 = vrot.slane %v2518, 1
        %v2521 = vsel %vm576, %v2516, %v2520
        %v2522 = vshrl.u32 %v2473, 16
        %v2524 = vor.u32 %v2522, %v2520
        %v2526 = vshll.u32 %v2474, 16
        %v2528 = vrot.slane %v2526, 1
        %v2529 = vsel %vm576, %v2524, %v2528
        %v2530 = vshrl.u32 %v2474, 16
        %v2532 = vor.u32 %v2530, %v2528
        %v2534 = vshll.u32 %v2475, 16
        %v2536 = vrot.slane %v2534, 1
        %v2537 = vsel %vm576, %v2532, %v2536
        %v2538 = vshrl.u32 %v2475, 16
        %v2540 = vor.u32 %v2538, %v2536
        %v2542 = vshll.u32 %v2476, 16
        %v2544 = vrot.slane %v2542, 1
        %v2545 = vsel %vm576, %v2540, %v2544
        %v2546 = vshrl.u32 %v2476, 16
        %v2548 = vor.u32 %v2546, %v2544
        %v2550 = vshll.u32 %v2477, 16
        %v2552 = vrot.slane %v2550, 1
        %v2553 = vsel %vm576, %v2548, %v2552
        %v2554 = vshrl.u32 %v2477, 16
        %v2556 = vor.u32 %v2554, %v2552
        %v2558 = vshll.u32 %v2478, 16
        %v2560 = vrot.slane %v2558, 1
        %v2561 = vsel %vm576, %v2556, %v2560
        %v2562 = vshrl.u32 %v2478, 16
        %v2564 = vor.u32 %v2562, %v2560
        %v2566 = vshll.u32 %v2479, 16
        %v2568 = vrot.slane %v2566, 1
        %v2569 = vsel %vm576, %v2564, %v2568
        %v2570 = vshrl.u32 %v2479, 16
        %v2572 = vor.u32 %v2570, %v2568
        %v2574 = vshll.u32 %v2480, 16
        %v2576 = vrot.slane %v2574, 1
        %v2577 = vsel %vm576, %v2572, %v2576
        %v2578 = vshrl.u32 %v2480, 16
        %v2580 = vor.u32 %v2578, %v2576
        %v2582 = vshll.u32 %v2481, 16
        %v2584 = vrot.slane %v2582, 1
        %v2585 = vsel %vm576, %v2580, %v2584
        %v2586 = vshrl.u32 %v2481, 16
        %v2588 = vor.u32 %v2586, %v2584
        %v2590 = vshll.u32 %v2485, 16
        %v2592 = vrot.slane %v2590, 1
        %v2593 = vsel %vm576, %v2588, %v2592
        %v2594 = vshrl.u32 %v2485, 16
        %v2596 = vor.u32 %v2594, %v2592
        %2597 = vrot.lane.b32.xlu0 %v2497, 16
        %v2598 = vpop.permute.xlu0 %2597
        %2599 = vrot.lane.b32.xlu0 %v2505, 16
        %v2600 = vpop.permute.xlu0 %2599
        %2601 = vrot.lane.b32.xlu0 %v2513, 16
        %v2602 = vpop.permute.xlu0 %2601
        %2603 = vrot.lane.b32.xlu0 %v2521, 16
        %v2604 = vpop.permute.xlu0 %2603
        %2605 = vrot.lane.b32.xlu0 %v2529, 16
        %v2606 = vpop.permute.xlu0 %2605
        %2607 = vrot.lane.b32.xlu0 %v2537, 16
        %v2608 = vpop.permute.xlu0 %2607
        %2609 = vrot.lane.b32.xlu0 %v2545, 16
        %v2610 = vpop.permute.xlu0 %2609
        %2611 = vrot.lane.b32.xlu0 %v2553, 16
        %v2612 = vpop.permute.xlu0 %2611
        %2613 = vrot.lane.b32.xlu0 %v2561, 16
        %v2614 = vpop.permute.xlu0 %2613
        %2615 = vrot.lane.b32.xlu0 %v2569, 16
        %v2616 = vpop.permute.xlu0 %2615
        %2617 = vrot.lane.b32.xlu0 %v2577, 16
        %v2618 = vpop.permute.xlu0 %2617
        %2619 = vrot.lane.b32.xlu0 %v2585, 16
        %v2620 = vpop.permute.xlu0 %2619
        %2621 = vrot.lane.b32.xlu0 %v2593, 16
        %v2622 = vpop.permute.xlu0 %2621
        %2623 = vrot.lane.b32.xlu0 %v2596, 16
        %v2624 = vpop.permute.xlu0 %2623
        %v2626 = vunpack.c.l.b16 %v2380
        %v2627 = vpack.c.b16 %v2443, %v2626
        %v2628 = vrot.slane %v2627, 1
        %v2629 = vrot.slane %v2470, 1
        %v2630 = vsel %vm1038, %v2628, %v2629
        %v2631 = vrot.slane %v2471, 1
        %v2632 = vsel %vm1038, %v2629, %v2631
        %v2633 = vrot.slane %v2472, 1
        %v2634 = vsel %vm1038, %v2631, %v2633
        %v2635 = vrot.slane %v2473, 1
        %v2636 = vsel %vm1038, %v2633, %v2635
        %v2637 = vrot.slane %v2474, 1
        %v2638 = vsel %vm1038, %v2635, %v2637
        %v2639 = vrot.slane %v2475, 1
        %v2640 = vsel %vm1038, %v2637, %v2639
        %v2641 = vrot.slane %v2476, 1
        %v2642 = vsel %vm1038, %v2639, %v2641
        %v2643 = vrot.slane %v2477, 1
        %v2644 = vsel %vm1038, %v2641, %v2643
        %v2645 = vrot.slane %v2478, 1
        %v2646 = vsel %vm1038, %v2643, %v2645
        %v2647 = vrot.slane %v2479, 1
        %v2648 = vsel %vm1038, %v2645, %v2647
        %v2649 = vrot.slane %v2480, 1
        %v2650 = vsel %vm1038, %v2647, %v2649
        %v2651 = vrot.slane %v2481, 1
        %v2652 = vsel %vm1038, %v2649, %v2651
        %v2653 = vrot.slane %v2485, 1
        %v2654 = vsel %vm1038, %v2651, %v2653
        %2655 = vrot.lane.b32.xlu0 %v2630, 32
        %v2656 = vpop.permute.xlu0 %2655
        %2657 = vrot.lane.b32.xlu0 %v2632, 32
        %v2658 = vpop.permute.xlu0 %2657
        %2659 = vrot.lane.b32.xlu0 %v2634, 32
        %v2660 = vpop.permute.xlu0 %2659
        %2661 = vrot.lane.b32.xlu0 %v2636, 32
        %v2662 = vpop.permute.xlu0 %2661
        %2663 = vrot.lane.b32.xlu0 %v2638, 32
        %v2664 = vpop.permute.xlu0 %2663
        %2665 = vrot.lane.b32.xlu0 %v2640, 32
        %v2666 = vpop.permute.xlu0 %2665
        %2667 = vrot.lane.b32.xlu0 %v2642, 32
        %v2668 = vpop.permute.xlu0 %2667
        %2669 = vrot.lane.b32.xlu0 %v2644, 32
        %v2670 = vpop.permute.xlu0 %2669
        %2671 = vrot.lane.b32.xlu0 %v2646, 32
        %v2672 = vpop.permute.xlu0 %2671
        %2673 = vrot.lane.b32.xlu0 %v2648, 32
        %v2674 = vpop.permute.xlu0 %2673
        %2675 = vrot.lane.b32.xlu0 %v2650, 32
        %v2676 = vpop.permute.xlu0 %2675
        %2677 = vrot.lane.b32.xlu0 %v2652, 32
        %v2678 = vpop.permute.xlu0 %2677
        %2679 = vrot.lane.b32.xlu0 %v2654, 32
        %v2680 = vpop.permute.xlu0 %2679
        %2681 = vrot.lane.b32.xlu0 %v2653, 32
        %v2682 = vpop.permute.xlu0 %2681
        %v2685 = vunpack.c.l.b16 %v2381
        %v2686 = vunpack.c.l.b16 %v2382
        %v2687 = vpack.c.b16 %v2443, %v2685
        %v2688 = vpack.c.b16 %v2686, %v2468
        %v2689 = vrot.slane %v2687, 3
        %v2690 = vrot.slane %v2470, 3
        %v2691 = vsel %vm722, %v2689, %v2690
        %v2692 = vrot.slane %v2471, 3
        %v2693 = vsel %vm722, %v2690, %v2692
        %v2694 = vrot.slane %v2472, 3
        %v2695 = vsel %vm722, %v2692, %v2694
        %v2696 = vrot.slane %v2473, 3
        %v2697 = vsel %vm722, %v2694, %v2696
        %v2698 = vrot.slane %v2474, 3
        %v2699 = vsel %vm722, %v2696, %v2698
        %v2700 = vrot.slane %v2475, 3
        %v2701 = vsel %vm722, %v2698, %v2700
        %v2702 = vrot.slane %v2476, 3
        %v2703 = vsel %vm722, %v2700, %v2702
        %v2704 = vrot.slane %v2477, 3
        %v2705 = vsel %vm722, %v2702, %v2704
        %v2706 = vrot.slane %v2478, 3
        %v2707 = vsel %vm722, %v2704, %v2706
        %v2708 = vrot.slane %v2479, 3
        %v2709 = vsel %vm722, %v2706, %v2708
        %v2710 = vrot.slane %v2480, 3
        %v2711 = vsel %vm722, %v2708, %v2710
        %v2712 = vrot.slane %v2481, 3
        %v2713 = vsel %vm722, %v2710, %v2712
        %v2714 = vrot.slane %v2688, 3
        %v2715 = vsel %vm722, %v2712, %v2714
        %2716 = vrot.lane.b32.xlu0 %v2691, 48
        %v2717 = vpop.permute.xlu0 %2716
        %2718 = vrot.lane.b32.xlu0 %v2693, 48
        %v2719 = vpop.permute.xlu0 %2718
        %2720 = vrot.lane.b32.xlu0 %v2695, 48
        %v2721 = vpop.permute.xlu0 %2720
        %2722 = vrot.lane.b32.xlu0 %v2697, 48
        %v2723 = vpop.permute.xlu0 %2722
        %2724 = vrot.lane.b32.xlu0 %v2699, 48
        %v2725 = vpop.permute.xlu0 %2724
        %2726 = vrot.lane.b32.xlu0 %v2701, 48
        %v2727 = vpop.permute.xlu0 %2726
        %2728 = vrot.lane.b32.xlu0 %v2703, 48
        %v2729 = vpop.permute.xlu0 %2728
        %2730 = vrot.lane.b32.xlu0 %v2705, 48
        %v2731 = vpop.permute.xlu0 %2730
        %2732 = vrot.lane.b32.xlu0 %v2707, 48
        %v2733 = vpop.permute.xlu0 %2732
        %2734 = vrot.lane.b32.xlu0 %v2709, 48
        %v2735 = vpop.permute.xlu0 %2734
        %2736 = vrot.lane.b32.xlu0 %v2711, 48
        %v2737 = vpop.permute.xlu0 %2736
        %2738 = vrot.lane.b32.xlu0 %v2713, 48
        %v2739 = vpop.permute.xlu0 %2738
        %2740 = vrot.lane.b32.xlu0 %v2715, 48
        %v2741 = vpop.permute.xlu0 %2740
        %2742 = vrot.lane.b32.xlu0 %v2714, 48
        %v2743 = vpop.permute.xlu0 %2742
        %v2745 = vunpack.c.l.b16 %v2383
        %v2746 = vpack.c.b16 %v2745, %v2468
        %v2748 = vshrl.u32 %v2687, 16
        %v2750 = vrot.slane %v2748, 3
        %v2751 = vshll.u32 %v2687, 16
        %v2753 = vrot.slane %v2751, 4
        %v2754 = vor.u32 %v2750, %v2753
        %v2755 = vrot.slane %v2498, 3
        %v2756 = vrot.slane %v2494, 4
        %v2757 = vor.u32 %v2755, %v2756
        %v2758 = vsel %vm781, %v2754, %v2757
        %v2759 = vrot.slane %v2506, 3
        %v2760 = vrot.slane %v2502, 4
        %v2761 = vor.u32 %v2759, %v2760
        %v2762 = vsel %vm781, %v2757, %v2761
        %v2763 = vrot.slane %v2514, 3
        %v2764 = vrot.slane %v2510, 4
        %v2765 = vor.u32 %v2763, %v2764
        %v2766 = vsel %vm781, %v2761, %v2765
        %v2767 = vrot.slane %v2522, 3
        %v2768 = vrot.slane %v2518, 4
        %v2769 = vor.u32 %v2767, %v2768
        %v2770 = vsel %vm781, %v2765, %v2769
        %v2771 = vrot.slane %v2530, 3
        %v2772 = vrot.slane %v2526, 4
        %v2773 = vor.u32 %v2771, %v2772
        %v2774 = vsel %vm781, %v2769, %v2773
        %v2775 = vrot.slane %v2538, 3
        %v2776 = vrot.slane %v2534, 4
        %v2777 = vor.u32 %v2775, %v2776
        %v2778 = vsel %vm781, %v2773, %v2777
        %v2779 = vrot.slane %v2546, 3
        %v2780 = vrot.slane %v2542, 4
        %v2781 = vor.u32 %v2779, %v2780
        %v2782 = vsel %vm781, %v2777, %v2781
        %v2783 = vrot.slane %v2554, 3
        %v2784 = vrot.slane %v2550, 4
        %v2785 = vor.u32 %v2783, %v2784
        %v2786 = vsel %vm781, %v2781, %v2785
        %v2787 = vrot.slane %v2562, 3
        %v2788 = vrot.slane %v2558, 4
        %v2789 = vor.u32 %v2787, %v2788
        %v2790 = vsel %vm781, %v2785, %v2789
        %v2791 = vrot.slane %v2570, 3
        %v2792 = vrot.slane %v2566, 4
        %v2793 = vor.u32 %v2791, %v2792
        %v2794 = vsel %vm781, %v2789, %v2793
        %v2795 = vrot.slane %v2578, 3
        %v2796 = vrot.slane %v2574, 4
        %v2797 = vor.u32 %v2795, %v2796
        %v2798 = vsel %vm781, %v2793, %v2797
        %v2799 = vrot.slane %v2586, 3
        %v2800 = vrot.slane %v2582, 4
        %v2801 = vor.u32 %v2799, %v2800
        %v2802 = vsel %vm781, %v2797, %v2801
        %v2804 = vshrl.u32 %v2746, 16
        %v2806 = vrot.slane %v2804, 3
        %v2807 = vshll.u32 %v2746, 16
        %v2809 = vrot.slane %v2807, 4
        %v2810 = vor.u32 %v2806, %v2809
        %v2811 = vsel %vm781, %v2801, %v2810
        %2812 = vrot.lane.b32.xlu0 %v2758, 64
        %v2813 = vpop.permute.xlu0 %2812
        %2814 = vrot.lane.b32.xlu0 %v2762, 64
        %v2815 = vpop.permute.xlu0 %2814
        %2816 = vrot.lane.b32.xlu0 %v2766, 64
        %v2817 = vpop.permute.xlu0 %2816
        %2818 = vrot.lane.b32.xlu0 %v2770, 64
        %v2819 = vpop.permute.xlu0 %2818
        %2820 = vrot.lane.b32.xlu0 %v2774, 64
        %v2821 = vpop.permute.xlu0 %2820
        %2822 = vrot.lane.b32.xlu0 %v2778, 64
        %v2823 = vpop.permute.xlu0 %2822
        %2824 = vrot.lane.b32.xlu0 %v2782, 64
        %v2825 = vpop.permute.xlu0 %2824
        %2826 = vrot.lane.b32.xlu0 %v2786, 64
        %v2827 = vpop.permute.xlu0 %2826
        %2828 = vrot.lane.b32.xlu0 %v2790, 64
        %v2829 = vpop.permute.xlu0 %2828
        %2830 = vrot.lane.b32.xlu0 %v2794, 64
        %v2831 = vpop.permute.xlu0 %2830
        %2832 = vrot.lane.b32.xlu0 %v2798, 64
        %v2833 = vpop.permute.xlu0 %2832
        %2834 = vrot.lane.b32.xlu0 %v2802, 64
        %v2835 = vpop.permute.xlu0 %2834
        %2836 = vrot.lane.b32.xlu0 %v2811, 64
        %v2837 = vpop.permute.xlu0 %2836
        %2838 = vrot.lane.b32.xlu0 %v2810, 64
        %v2839 = vpop.permute.xlu0 %2838
        %v2840 = vpack.c.b16 %v2444, %v2443
        %v2841 = vpack.c.b16 %v2446, %v2445
        %v2842 = vpack.c.b16 %v2448, %v2447
        %v2843 = vpack.c.b16 %v2450, %v2449
        %v2844 = vpack.c.b16 %v2452, %v2451
        %v2845 = vpack.c.b16 %v2454, %v2453
        %v2846 = vpack.c.b16 %v2456, %v2455
        %v2847 = vpack.c.b16 %v2458, %v2457
        %v2848 = vpack.c.b16 %v2460, %v2459
        %v2849 = vpack.c.b16 %v2462, %v2461
        %v2850 = vpack.c.b16 %v2464, %v2463
        %v2851 = vpack.c.b16 %v2466, %v2465
        %v2852 = vpack.c.b16 %v2468, %v2467
        %v2853 = vpack.c.b16 %v2745, %v2745
        %2854 = vrot.lane.b32.xlu0 %v2840, 80
        %v2855 = vpop.permute.xlu0 %2854
        %2856 = vrot.lane.b32.xlu0 %v2841, 80
        %v2857 = vpop.permute.xlu0 %2856
        %2858 = vrot.lane.b32.xlu0 %v2842, 80
        %v2859 = vpop.permute.xlu0 %2858
        %2860 = vrot.lane.b32.xlu0 %v2843, 80
        %v2861 = vpop.permute.xlu0 %2860
        %2862 = vrot.lane.b32.xlu0 %v2844, 80
        %v2863 = vpop.permute.xlu0 %2862
        %2864 = vrot.lane.b32.xlu0 %v2845, 80
        %v2865 = vpop.permute.xlu0 %2864
        %2866 = vrot.lane.b32.xlu0 %v2846, 80
        %v2867 = vpop.permute.xlu0 %2866
        %2868 = vrot.lane.b32.xlu0 %v2847, 80
        %v2869 = vpop.permute.xlu0 %2868
        %2870 = vrot.lane.b32.xlu0 %v2848, 80
        %v2871 = vpop.permute.xlu0 %2870
        %2872 = vrot.lane.b32.xlu0 %v2849, 80
        %v2873 = vpop.permute.xlu0 %2872
        %2874 = vrot.lane.b32.xlu0 %v2850, 80
        %v2875 = vpop.permute.xlu0 %2874
        %2876 = vrot.lane.b32.xlu0 %v2851, 80
        %v2877 = vpop.permute.xlu0 %2876
        %2878 = vrot.lane.b32.xlu0 %v2852, 80
        %v2879 = vpop.permute.xlu0 %2878
        %2880 = vrot.lane.b32.xlu0 %v2853, 80
        %v2881 = vpop.permute.xlu0 %2880
        %v2884 = vunpack.c.l.b16 %v2384
        %v2885 = vunpack.c.l.b16 %v2385
        %v2886 = vpack.c.b16 %v2444, %v2884
        %v2887 = vpack.c.b16 %v2885, %v2745
        %v2888 = vrot.slane %v2886, 2
        %v2889 = vrot.slane %v2841, 2
        %v2890 = vsel %vm888, %v2888, %v2889
        %v2891 = vrot.slane %v2842, 2
        %v2892 = vsel %vm888, %v2889, %v2891
        %v2893 = vrot.slane %v2843, 2
        %v2894 = vsel %vm888, %v2891, %v2893
        %v2895 = vrot.slane %v2844, 2
        %v2896 = vsel %vm888, %v2893, %v2895
        %v2897 = vrot.slane %v2845, 2
        %v2898 = vsel %vm888, %v2895, %v2897
        %v2899 = vrot.slane %v2846, 2
        %v2900 = vsel %vm888, %v2897, %v2899
        %v2901 = vrot.slane %v2847, 2
        %v2902 = vsel %vm888, %v2899, %v2901
        %v2903 = vrot.slane %v2848, 2
        %v2904 = vsel %vm888, %v2901, %v2903
        %v2905 = vrot.slane %v2849, 2
        %v2906 = vsel %vm888, %v2903, %v2905
        %v2907 = vrot.slane %v2850, 2
        %v2908 = vsel %vm888, %v2905, %v2907
        %v2909 = vrot.slane %v2851, 2
        %v2910 = vsel %vm888, %v2907, %v2909
        %v2911 = vrot.slane %v2852, 2
        %v2912 = vsel %vm888, %v2909, %v2911
        %v2913 = vrot.slane %v2887, 2
        %v2914 = vsel %vm888, %v2911, %v2913
        %2915 = vrot.lane.b32.xlu0 %v2890, 96
        %v2916 = vpop.permute.xlu0 %2915
        %2917 = vrot.lane.b32.xlu0 %v2892, 96
        %v2918 = vpop.permute.xlu0 %2917
        %2919 = vrot.lane.b32.xlu0 %v2894, 96
        %v2920 = vpop.permute.xlu0 %2919
        %2921 = vrot.lane.b32.xlu0 %v2896, 96
        %v2922 = vpop.permute.xlu0 %2921
        %2923 = vrot.lane.b32.xlu0 %v2898, 96
        %v2924 = vpop.permute.xlu0 %2923
        %2925 = vrot.lane.b32.xlu0 %v2900, 96
        %v2926 = vpop.permute.xlu0 %2925
        %2927 = vrot.lane.b32.xlu0 %v2902, 96
        %v2928 = vpop.permute.xlu0 %2927
        %2929 = vrot.lane.b32.xlu0 %v2904, 96
        %v2930 = vpop.permute.xlu0 %2929
        %2931 = vrot.lane.b32.xlu0 %v2906, 96
        %v2932 = vpop.permute.xlu0 %2931
        %2933 = vrot.lane.b32.xlu0 %v2908, 96
        %v2934 = vpop.permute.xlu0 %2933
        %2935 = vrot.lane.b32.xlu0 %v2910, 96
        %v2936 = vpop.permute.xlu0 %2935
        %2937 = vrot.lane.b32.xlu0 %v2912, 96
        %v2938 = vpop.permute.xlu0 %2937
        %2939 = vrot.lane.b32.xlu0 %v2914, 96
        %v2940 = vpop.permute.xlu0 %2939
        %2941 = vrot.lane.b32.xlu0 %v2913, 96
        %v2942 = vpop.permute.xlu0 %2941
        %v2944 = vunpack.c.l.b16 %v2386
        %v2945 = vpack.c.b16 %v2944, %v2745
        %v2947 = vshrl.u32 %v2886, 16
        %v2949 = vrot.slane %v2947, 2
        %v2950 = vshll.u32 %v2886, 16
        %v2952 = vrot.slane %v2950, 3
        %v2953 = vor.u32 %v2949, %v2952
        %v2955 = vshrl.u32 %v2841, 16
        %v2957 = vrot.slane %v2955, 2
        %v2958 = vshll.u32 %v2841, 16
        %v2960 = vrot.slane %v2958, 3
        %v2961 = vor.u32 %v2957, %v2960
        %v2962 = vsel %vm919, %v2953, %v2961
        %v2964 = vshrl.u32 %v2842, 16
        %v2966 = vrot.slane %v2964, 2
        %v2967 = vshll.u32 %v2842, 16
        %v2969 = vrot.slane %v2967, 3
        %v2970 = vor.u32 %v2966, %v2969
        %v2971 = vsel %vm919, %v2961, %v2970
        %v2973 = vshrl.u32 %v2843, 16
        %v2975 = vrot.slane %v2973, 2
        %v2976 = vshll.u32 %v2843, 16
        %v2978 = vrot.slane %v2976, 3
        %v2979 = vor.u32 %v2975, %v2978
        %v2980 = vsel %vm919, %v2970, %v2979
        %v2982 = vshrl.u32 %v2844, 16
        %v2984 = vrot.slane %v2982, 2
        %v2985 = vshll.u32 %v2844, 16
        %v2987 = vrot.slane %v2985, 3
        %v2988 = vor.u32 %v2984, %v2987
        %v2989 = vsel %vm919, %v2979, %v2988
        %v2991 = vshrl.u32 %v2845, 16
        %v2993 = vrot.slane %v2991, 2
        %v2994 = vshll.u32 %v2845, 16
        %v2996 = vrot.slane %v2994, 3
        %v2997 = vor.u32 %v2993, %v2996
        %v2998 = vsel %vm919, %v2988, %v2997
        %v3000 = vshrl.u32 %v2846, 16
        %v3002 = vrot.slane %v3000, 2
        %v3003 = vshll.u32 %v2846, 16
        %v3005 = vrot.slane %v3003, 3
        %v3006 = vor.u32 %v3002, %v3005
        %v3007 = vsel %vm919, %v2997, %v3006
        %v3009 = vshrl.u32 %v2847, 16
        %v3011 = vrot.slane %v3009, 2
        %v3012 = vshll.u32 %v2847, 16
        %v3014 = vrot.slane %v3012, 3
        %v3015 = vor.u32 %v3011, %v3014
        %v3016 = vsel %vm919, %v3006, %v3015
        %v3018 = vshrl.u32 %v2848, 16
        %v3020 = vrot.slane %v3018, 2
        %v3021 = vshll.u32 %v2848, 16
        %v3023 = vrot.slane %v3021, 3
        %v3024 = vor.u32 %v3020, %v3023
        %v3025 = vsel %vm919, %v3015, %v3024
        %v3027 = vshrl.u32 %v2849, 16
        %v3029 = vrot.slane %v3027, 2
        %v3030 = vshll.u32 %v2849, 16
        %v3032 = vrot.slane %v3030, 3
        %v3033 = vor.u32 %v3029, %v3032
        %v3034 = vsel %vm919, %v3024, %v3033
        %v3036 = vshrl.u32 %v2850, 16
        %v3038 = vrot.slane %v3036, 2
        %v3039 = vshll.u32 %v2850, 16
        %v3041 = vrot.slane %v3039, 3
        %v3042 = vor.u32 %v3038, %v3041
        %v3043 = vsel %vm919, %v3033, %v3042
        %v3045 = vshrl.u32 %v2851, 16
        %v3047 = vrot.slane %v3045, 2
        %v3048 = vshll.u32 %v2851, 16
        %v3050 = vrot.slane %v3048, 3
        %v3051 = vor.u32 %v3047, %v3050
        %v3052 = vsel %vm919, %v3042, %v3051
        %v3054 = vshrl.u32 %v2852, 16
        %v3056 = vrot.slane %v3054, 2
        %v3057 = vshll.u32 %v2852, 16
        %v3059 = vrot.slane %v3057, 3
        %v3060 = vor.u32 %v3056, %v3059
        %v3061 = vsel %vm919, %v3051, %v3060
        %v3063 = vshrl.u32 %v2945, 16
        %v3065 = vrot.slane %v3063, 2
        %v3066 = vshll.u32 %v2945, 16
        %v3068 = vrot.slane %v3066, 3
        %v3069 = vor.u32 %v3065, %v3068
        %v3070 = vsel %vm919, %v3060, %v3069
        %3071 = vrot.lane.b32.xlu0 %v2962, 112
        %v3072 = vpop.permute.xlu0 %3071
        %3073 = vrot.lane.b32.xlu0 %v2971, 112
        %v3074 = vpop.permute.xlu0 %3073
        %3075 = vrot.lane.b32.xlu0 %v2980, 112
        %v3076 = vpop.permute.xlu0 %3075
        %3077 = vrot.lane.b32.xlu0 %v2989, 112
        %v3078 = vpop.permute.xlu0 %3077
        %3079 = vrot.lane.b32.xlu0 %v2998, 112
        %v3080 = vpop.permute.xlu0 %3079
        %3081 = vrot.lane.b32.xlu0 %v3007, 112
        %v3082 = vpop.permute.xlu0 %3081
        %3083 = vrot.lane.b32.xlu0 %v3016, 112
        %v3084 = vpop.permute.xlu0 %3083
        %3085 = vrot.lane.b32.xlu0 %v3025, 112
        %v3086 = vpop.permute.xlu0 %3085
        %3087 = vrot.lane.b32.xlu0 %v3034, 112
        %v3088 = vpop.permute.xlu0 %3087
        %3089 = vrot.lane.b32.xlu0 %v3043, 112
        %v3090 = vpop.permute.xlu0 %3089
        %3091 = vrot.lane.b32.xlu0 %v3052, 112
        %v3092 = vpop.permute.xlu0 %3091
        %3093 = vrot.lane.b32.xlu0 %v3061, 112
        %v3094 = vpop.permute.xlu0 %3093
        %3095 = vrot.lane.b32.xlu0 %v3070, 112
        %v3096 = vpop.permute.xlu0 %3095
        %3097 = vrot.lane.b32.xlu0 %v3069, 112
        %v3098 = vpop.permute.xlu0 %3097
        %v3100 = vunpack.c.l.b16 %v2387
        %v3101 = vpack.c.b16 %v2444, %v3100
        %v3102 = vrot.slane %v3101, 3
        %v3103 = vrot.slane %v2841, 3
        %v3104 = vsel %vm722, %v3102, %v3103
        %v3105 = vrot.slane %v2842, 3
        %v3106 = vsel %vm722, %v3103, %v3105
        %v3107 = vrot.slane %v2843, 3
        %v3108 = vsel %vm722, %v3105, %v3107
        %v3109 = vrot.slane %v2844, 3
        %v3110 = vsel %vm722, %v3107, %v3109
        %v3111 = vrot.slane %v2845, 3
        %v3112 = vsel %vm722, %v3109, %v3111
        %v3113 = vrot.slane %v2846, 3
        %v3114 = vsel %vm722, %v3111, %v3113
        %v3115 = vrot.slane %v2847, 3
        %v3116 = vsel %vm722, %v3113, %v3115
        %v3117 = vrot.slane %v2848, 3
        %v3118 = vsel %vm722, %v3115, %v3117
        %v3119 = vrot.slane %v2849, 3
        %v3120 = vsel %vm722, %v3117, %v3119
        %v3121 = vrot.slane %v2850, 3
        %v3122 = vsel %vm722, %v3119, %v3121
        %v3123 = vrot.slane %v2851, 3
        %v3124 = vsel %vm722, %v3121, %v3123
        %v3125 = vrot.slane %v2852, 3
        %v3126 = vsel %vm722, %v3123, %v3125
        %v3127 = vrot.slane %v2945, 3
        %v3128 = vsel %vm722, %v3125, %v3127
        %v3134 = vunpack.c.l.b16 %v2388
        %v3135 = vunpack.c.l.b16 %v2389
        %v3136 = vunpack.c.l.b16 %v2390
        %v3137 = vunpack.c.l.b16 %v2391
        %v3138 = vunpack.c.l.b16 %v2392
        %v3139 = vpack.c.b16 %v2447, %v3134
        %v3140 = vpack.c.b16 %v3136, %v3135
        %v3141 = vpack.c.b16 %v3138, %v3137
        %v3142 = vrot.slane %v3139, 2
        %v3143 = vrot.slane %v2472, 2
        %v3144 = vsel %vm888, %v3142, %v3143
        %v3145 = vrot.slane %v2473, 2
        %v3146 = vsel %vm888, %v3143, %v3145
        %v3147 = vrot.slane %v2474, 2
        %v3148 = vsel %vm888, %v3145, %v3147
        %v3149 = vrot.slane %v2475, 2
        %v3150 = vsel %vm888, %v3147, %v3149
        %v3151 = vrot.slane %v2476, 2
        %v3152 = vsel %vm888, %v3149, %v3151
        %v3153 = vrot.slane %v2477, 2
        %v3154 = vsel %vm888, %v3151, %v3153
        %v3155 = vrot.slane %v2478, 2
        %v3156 = vsel %vm888, %v3153, %v3155
        %v3157 = vrot.slane %v2479, 2
        %v3158 = vsel %vm888, %v3155, %v3157
        %v3159 = vrot.slane %v2480, 2
        %v3160 = vsel %vm888, %v3157, %v3159
        %v3161 = vrot.slane %v2481, 2
        %v3162 = vsel %vm888, %v3159, %v3161
        %v3163 = vrot.slane %v2746, 2
        %v3164 = vsel %vm888, %v3161, %v3163
        %v3165 = vrot.slane %v3140, 2
        %v3166 = vsel %vm888, %v3163, %v3165
        %v3167 = vrot.slane %v3141, 2
        %v3168 = vsel %vm888, %v3165, %v3167
        %3169 = vrot.lane.b32.xlu0 %v3144, 16
        %v3170 = vpop.permute.xlu0 %3169
        %3171 = vrot.lane.b32.xlu0 %v3146, 16
        %v3172 = vpop.permute.xlu0 %3171
        %3173 = vrot.lane.b32.xlu0 %v3148, 16
        %v3174 = vpop.permute.xlu0 %3173
        %3175 = vrot.lane.b32.xlu0 %v3150, 16
        %v3176 = vpop.permute.xlu0 %3175
        %3177 = vrot.lane.b32.xlu0 %v3152, 16
        %v3178 = vpop.permute.xlu0 %3177
        %3179 = vrot.lane.b32.xlu0 %v3154, 16
        %v3180 = vpop.permute.xlu0 %3179
        %3181 = vrot.lane.b32.xlu0 %v3156, 16
        %v3182 = vpop.permute.xlu0 %3181
        %3183 = vrot.lane.b32.xlu0 %v3158, 16
        %v3184 = vpop.permute.xlu0 %3183
        %3185 = vrot.lane.b32.xlu0 %v3160, 16
        %v3186 = vpop.permute.xlu0 %3185
        %3187 = vrot.lane.b32.xlu0 %v3162, 16
        %v3188 = vpop.permute.xlu0 %3187
        %3189 = vrot.lane.b32.xlu0 %v3164, 16
        %v3190 = vpop.permute.xlu0 %3189
        %3191 = vrot.lane.b32.xlu0 %v3166, 16
        %v3192 = vpop.permute.xlu0 %3191
        %3193 = vrot.lane.b32.xlu0 %v3168, 16
        %v3194 = vpop.permute.xlu0 %3193
        %3195 = vrot.lane.b32.xlu0 %v3167, 16
        %v3196 = vpop.permute.xlu0 %3195
        %v3198 = vunpack.c.l.b16 %v2393
        %v3199 = vpack.c.b16 %v3198, %v3137
        %v3201 = vshrl.u32 %v3139, 16
        %v3203 = vrot.slane %v3201, 2
        %v3204 = vshll.u32 %v3139, 16
        %v3206 = vrot.slane %v3204, 3
        %v3207 = vor.u32 %v3203, %v3206
        %v3208 = vrot.slane %v2514, 2
        %v3209 = vrot.slane %v2510, 3
        %v3210 = vor.u32 %v3208, %v3209
        %v3211 = vsel %vm919, %v3207, %v3210
        %v3212 = vrot.slane %v2522, 2
        %v3213 = vrot.slane %v2518, 3
        %v3214 = vor.u32 %v3212, %v3213
        %v3215 = vsel %vm919, %v3210, %v3214
        %v3216 = vrot.slane %v2530, 2
        %v3217 = vrot.slane %v2526, 3
        %v3218 = vor.u32 %v3216, %v3217
        %v3219 = vsel %vm919, %v3214, %v3218
        %v3220 = vrot.slane %v2538, 2
        %v3221 = vrot.slane %v2534, 3
        %v3222 = vor.u32 %v3220, %v3221
        %v3223 = vsel %vm919, %v3218, %v3222
        %v3224 = vrot.slane %v2546, 2
        %v3225 = vrot.slane %v2542, 3
        %v3226 = vor.u32 %v3224, %v3225
        %v3227 = vsel %vm919, %v3222, %v3226
        %v3228 = vrot.slane %v2554, 2
        %v3229 = vrot.slane %v2550, 3
        %v3230 = vor.u32 %v3228, %v3229
        %v3231 = vsel %vm919, %v3226, %v3230
        %v3232 = vrot.slane %v2562, 2
        %v3233 = vrot.slane %v2558, 3
        %v3234 = vor.u32 %v3232, %v3233
        %v3235 = vsel %vm919, %v3230, %v3234
        %v3236 = vrot.slane %v2570, 2
        %v3237 = vrot.slane %v2566, 3
        %v3238 = vor.u32 %v3236, %v3237
        %v3239 = vsel %vm919, %v3234, %v3238
        %v3240 = vrot.slane %v2578, 2
        %v3241 = vrot.slane %v2574, 3
        %v3242 = vor.u32 %v3240, %v3241
        %v3243 = vsel %vm919, %v3238, %v3242
        %v3244 = vrot.slane %v2586, 2
        %v3245 = vrot.slane %v2582, 3
        %v3246 = vor.u32 %v3244, %v3245
        %v3247 = vsel %vm919, %v3242, %v3246
        %v3248 = vrot.slane %v2804, 2
        %v3249 = vrot.slane %v2807, 3
        %v3250 = vor.u32 %v3248, %v3249
        %v3251 = vsel %vm919, %v3246, %v3250
        %v3253 = vshrl.u32 %v3140, 16
        %v3255 = vrot.slane %v3253, 2
        %v3256 = vshll.u32 %v3140, 16
        %v3258 = vrot.slane %v3256, 3
        %v3259 = vor.u32 %v3255, %v3258
        %v3260 = vsel %vm919, %v3250, %v3259
        %v3262 = vshrl.u32 %v3199, 16
        %v3264 = vrot.slane %v3262, 2
        %v3265 = vshll.u32 %v3199, 16
        %v3267 = vrot.slane %v3265, 3
        %v3268 = vor.u32 %v3264, %v3267
        %v3269 = vsel %vm919, %v3259, %v3268
        %3270 = vrot.lane.b32.xlu0 %v3211, 32
        %v3271 = vpop.permute.xlu0 %3270
        %3272 = vrot.lane.b32.xlu0 %v3215, 32
        %v3273 = vpop.permute.xlu0 %3272
        %3274 = vrot.lane.b32.xlu0 %v3219, 32
        %v3275 = vpop.permute.xlu0 %3274
        %3276 = vrot.lane.b32.xlu0 %v3223, 32
        %v3277 = vpop.permute.xlu0 %3276
        %3278 = vrot.lane.b32.xlu0 %v3227, 32
        %v3279 = vpop.permute.xlu0 %3278
        %3280 = vrot.lane.b32.xlu0 %v3231, 32
        %v3281 = vpop.permute.xlu0 %3280
        %3282 = vrot.lane.b32.xlu0 %v3235, 32
        %v3283 = vpop.permute.xlu0 %3282
        %3284 = vrot.lane.b32.xlu0 %v3239, 32
        %v3285 = vpop.permute.xlu0 %3284
        %3286 = vrot.lane.b32.xlu0 %v3243, 32
        %v3287 = vpop.permute.xlu0 %3286
        %3288 = vrot.lane.b32.xlu0 %v3247, 32
        %v3289 = vpop.permute.xlu0 %3288
        %3290 = vrot.lane.b32.xlu0 %v3251, 32
        %v3291 = vpop.permute.xlu0 %3290
        %3292 = vrot.lane.b32.xlu0 %v3260, 32
        %v3293 = vpop.permute.xlu0 %3292
        %3294 = vrot.lane.b32.xlu0 %v3269, 32
        %v3295 = vpop.permute.xlu0 %3294
        %3296 = vrot.lane.b32.xlu0 %v3268, 32
        %v3297 = vpop.permute.xlu0 %3296
        %v3299 = vunpack.c.l.b16 %v2394
        %v3300 = vpack.c.b16 %v2447, %v3299
        %v3301 = vrot.slane %v3300, 3
        %v3302 = vsel %vm722, %v3301, %v2694
        %v3303 = vrot.slane %v2746, 3
        %v3304 = vsel %vm722, %v2712, %v3303
        %v3305 = vrot.slane %v3140, 3
        %v3306 = vsel %vm722, %v3303, %v3305
        %v3307 = vrot.slane %v3199, 3
        %v3308 = vsel %vm722, %v3305, %v3307
        %3309 = vrot.lane.b32.xlu0 %v3302, 48
        %v3310 = vpop.permute.xlu0 %3309
        %3311 = vrot.lane.b32.xlu0 %v3304, 48
        %v3312 = vpop.permute.xlu0 %3311
        %3313 = vrot.lane.b32.xlu0 %v3306, 48
        %v3314 = vpop.permute.xlu0 %3313
        %3315 = vrot.lane.b32.xlu0 %v3308, 48
        %v3316 = vpop.permute.xlu0 %3315
        %3317 = vrot.lane.b32.xlu0 %v3307, 48
        %v3318 = vpop.permute.xlu0 %3317
        %v3322 = vunpack.c.l.b16 %v2395
        %v3323 = vunpack.c.l.b16 %v2396
        %v3324 = vunpack.c.l.b16 %v2397
        %v3325 = vpack.c.b16 %v2448, %v3322
        %v3326 = vpack.c.b16 %v3135, %v2745
        %v3327 = vpack.c.b16 %v3137, %v3136
        %v3328 = vpack.c.b16 %v3324, %v3323
        %v3329 = vrot.slane %v3325, 1
        %v3330 = vrot.slane %v2843, 1
        %v3331 = vsel %vm1038, %v3329, %v3330
        %v3332 = vrot.slane %v2844, 1
        %v3333 = vsel %vm1038, %v3330, %v3332
        %v3334 = vrot.slane %v2845, 1
        %v3335 = vsel %vm1038, %v3332, %v3334
        %v3336 = vrot.slane %v2846, 1
        %v3337 = vsel %vm1038, %v3334, %v3336
        %v3338 = vrot.slane %v2847, 1
        %v3339 = vsel %vm1038, %v3336, %v3338
        %v3340 = vrot.slane %v2848, 1
        %v3341 = vsel %vm1038, %v3338, %v3340
        %v3342 = vrot.slane %v2849, 1
        %v3343 = vsel %vm1038, %v3340, %v3342
        %v3344 = vrot.slane %v2850, 1
        %v3345 = vsel %vm1038, %v3342, %v3344
        %v3346 = vrot.slane %v2851, 1
        %v3347 = vsel %vm1038, %v3344, %v3346
        %v3348 = vrot.slane %v2852, 1
        %v3349 = vsel %vm1038, %v3346, %v3348
        %v3350 = vrot.slane %v3326, 1
        %v3351 = vsel %vm1038, %v3348, %v3350
        %v3352 = vrot.slane %v3327, 1
        %v3353 = vsel %vm1038, %v3350, %v3352
        %v3354 = vrot.slane %v3328, 1
        %v3355 = vsel %vm1038, %v3352, %v3354
        %3356 = vrot.lane.b32.xlu0 %v3331, 64
        %v3357 = vpop.permute.xlu0 %3356
        %3358 = vrot.lane.b32.xlu0 %v3333, 64
        %v3359 = vpop.permute.xlu0 %3358
        %3360 = vrot.lane.b32.xlu0 %v3335, 64
        %v3361 = vpop.permute.xlu0 %3360
        %3362 = vrot.lane.b32.xlu0 %v3337, 64
        %v3363 = vpop.permute.xlu0 %3362
        %3364 = vrot.lane.b32.xlu0 %v3339, 64
        %v3365 = vpop.permute.xlu0 %3364
        %3366 = vrot.lane.b32.xlu0 %v3341, 64
        %v3367 = vpop.permute.xlu0 %3366
        %3368 = vrot.lane.b32.xlu0 %v3343, 64
        %v3369 = vpop.permute.xlu0 %3368
        %3370 = vrot.lane.b32.xlu0 %v3345, 64
        %v3371 = vpop.permute.xlu0 %3370
        %3372 = vrot.lane.b32.xlu0 %v3347, 64
        %v3373 = vpop.permute.xlu0 %3372
        %3374 = vrot.lane.b32.xlu0 %v3349, 64
        %v3375 = vpop.permute.xlu0 %3374
        %3376 = vrot.lane.b32.xlu0 %v3351, 64
        %v3377 = vpop.permute.xlu0 %3376
        %3378 = vrot.lane.b32.xlu0 %v3353, 64
        %v3379 = vpop.permute.xlu0 %3378
        %3380 = vrot.lane.b32.xlu0 %v3355, 64
        %v3381 = vpop.permute.xlu0 %3380
        %3382 = vrot.lane.b32.xlu0 %v3354, 64
        %v3383 = vpop.permute.xlu0 %3382
        %v3385 = vunpack.c.l.b16 %v2398
        %v3386 = vpack.c.b16 %v3385, %v3323
        %v3388 = vshrl.u32 %v3325, 16
        %v3390 = vrot.slane %v3388, 1
        %v3391 = vshll.u32 %v3325, 16
        %v3393 = vrot.slane %v3391, 2
        %v3394 = vor.u32 %v3390, %v3393
        %v3395 = vrot.slane %v2973, 1
        %v3396 = vrot.slane %v2976, 2
        %v3397 = vor.u32 %v3395, %v3396
        %v3398 = vsel %vm1097, %v3394, %v3397
        %v3399 = vrot.slane %v2982, 1
        %v3400 = vrot.slane %v2985, 2
        %v3401 = vor.u32 %v3399, %v3400
        %v3402 = vsel %vm1097, %v3397, %v3401
        %v3403 = vrot.slane %v2991, 1
        %v3404 = vrot.slane %v2994, 2
        %v3405 = vor.u32 %v3403, %v3404
        %v3406 = vsel %vm1097, %v3401, %v3405
        %v3407 = vrot.slane %v3000, 1
        %v3408 = vrot.slane %v3003, 2
        %v3409 = vor.u32 %v3407, %v3408
        %v3410 = vsel %vm1097, %v3405, %v3409
        %v3411 = vrot.slane %v3009, 1
        %v3412 = vrot.slane %v3012, 2
        %v3413 = vor.u32 %v3411, %v3412
        %v3414 = vsel %vm1097, %v3409, %v3413
        %v3415 = vrot.slane %v3018, 1
        %v3416 = vrot.slane %v3021, 2
        %v3417 = vor.u32 %v3415, %v3416
        %v3418 = vsel %vm1097, %v3413, %v3417
        %v3419 = vrot.slane %v3027, 1
        %v3420 = vrot.slane %v3030, 2
        %v3421 = vor.u32 %v3419, %v3420
        %v3422 = vsel %vm1097, %v3417, %v3421
        %v3423 = vrot.slane %v3036, 1
        %v3424 = vrot.slane %v3039, 2
        %v3425 = vor.u32 %v3423, %v3424
        %v3426 = vsel %vm1097, %v3421, %v3425
        %v3427 = vrot.slane %v3045, 1
        %v3428 = vrot.slane %v3048, 2
        %v3429 = vor.u32 %v3427, %v3428
        %v3430 = vsel %vm1097, %v3425, %v3429
        %v3431 = vrot.slane %v3054, 1
        %v3432 = vrot.slane %v3057, 2
        %v3433 = vor.u32 %v3431, %v3432
        %v3434 = vsel %vm1097, %v3429, %v3433
        %v3436 = vshrl.u32 %v3326, 16
        %v3438 = vrot.slane %v3436, 1
        %v3439 = vshll.u32 %v3326, 16
        %v3441 = vrot.slane %v3439, 2
        %v3442 = vor.u32 %v3438, %v3441
        %v3443 = vsel %vm1097, %v3433, %v3442
        %v3445 = vshrl.u32 %v3327, 16
        %v3447 = vrot.slane %v3445, 1
        %v3448 = vshll.u32 %v3327, 16
        %v3450 = vrot.slane %v3448, 2
        %v3451 = vor.u32 %v3447, %v3450
        %v3452 = vsel %vm1097, %v3442, %v3451
        %v3454 = vshrl.u32 %v3386, 16
        %v3456 = vrot.slane %v3454, 1
        %v3457 = vshll.u32 %v3386, 16
        %v3459 = vrot.slane %v3457, 2
        %v3460 = vor.u32 %v3456, %v3459
        %v3461 = vsel %vm1097, %v3451, %v3460
        %3462 = vrot.lane.b32.xlu0 %v3398, 80
        %v3463 = vpop.permute.xlu0 %3462
        %3464 = vrot.lane.b32.xlu0 %v3402, 80
        %v3465 = vpop.permute.xlu0 %3464
        %3466 = vrot.lane.b32.xlu0 %v3406, 80
        %v3467 = vpop.permute.xlu0 %3466
        %3468 = vrot.lane.b32.xlu0 %v3410, 80
        %v3469 = vpop.permute.xlu0 %3468
        %3470 = vrot.lane.b32.xlu0 %v3414, 80
        %v3471 = vpop.permute.xlu0 %3470
        %3472 = vrot.lane.b32.xlu0 %v3418, 80
        %v3473 = vpop.permute.xlu0 %3472
        %3474 = vrot.lane.b32.xlu0 %v3422, 80
        %v3475 = vpop.permute.xlu0 %3474
        %3476 = vrot.lane.b32.xlu0 %v3426, 80
        %v3477 = vpop.permute.xlu0 %3476
        %3478 = vrot.lane.b32.xlu0 %v3430, 80
        %v3479 = vpop.permute.xlu0 %3478
        %3480 = vrot.lane.b32.xlu0 %v3434, 80
        %v3481 = vpop.permute.xlu0 %3480
        %3482 = vrot.lane.b32.xlu0 %v3443, 80
        %v3483 = vpop.permute.xlu0 %3482
        %3484 = vrot.lane.b32.xlu0 %v3452, 80
        %v3485 = vpop.permute.xlu0 %3484
        %3486 = vrot.lane.b32.xlu0 %v3461, 80
        %v3487 = vpop.permute.xlu0 %3486
        %3488 = vrot.lane.b32.xlu0 %v3460, 80
        %v3489 = vpop.permute.xlu0 %3488
        %v3491 = vunpack.c.l.b16 %v2399
        %v3492 = vpack.c.b16 %v2448, %v3491
        %v3493 = vrot.slane %v3492, 2
        %v3494 = vsel %vm888, %v3493, %v2893
        %v3495 = vrot.slane %v3326, 2
        %v3496 = vsel %vm888, %v2911, %v3495
        %v3497 = vrot.slane %v3327, 2
        %v3498 = vsel %vm888, %v3495, %v3497
        %v3499 = vrot.slane %v3386, 2
        %v3500 = vsel %vm888, %v3497, %v3499
        %3501 = vrot.lane.b32.xlu0 %v3494, 96
        %v3502 = vpop.permute.xlu0 %3501
        %3503 = vrot.lane.b32.xlu0 %v3496, 96
        %v3504 = vpop.permute.xlu0 %3503
        %3505 = vrot.lane.b32.xlu0 %v3498, 96
        %v3506 = vpop.permute.xlu0 %3505
        %3507 = vrot.lane.b32.xlu0 %v3500, 96
        %v3508 = vpop.permute.xlu0 %3507
        %3509 = vrot.lane.b32.xlu0 %v3499, 96
        %v3510 = vpop.permute.xlu0 %3509
        %v3512 = vunpack.c.l.b16 %v2400
        %v3513 = vpack.c.b16 %v3323, %v3137
        %v3514 = vpack.c.b16 %v3512, %v3512
        %3515 = vrot.lane.b32.xlu0 %v2472, 112
        %v3516 = vpop.permute.xlu0 %3515
        %3517 = vrot.lane.b32.xlu0 %v2473, 112
        %v3518 = vpop.permute.xlu0 %3517
        %3519 = vrot.lane.b32.xlu0 %v2474, 112
        %v3520 = vpop.permute.xlu0 %3519
        %3521 = vrot.lane.b32.xlu0 %v2475, 112
        %v3522 = vpop.permute.xlu0 %3521
        %3523 = vrot.lane.b32.xlu0 %v2476, 112
        %v3524 = vpop.permute.xlu0 %3523
        %3525 = vrot.lane.b32.xlu0 %v2477, 112
        %v3526 = vpop.permute.xlu0 %3525
        %3527 = vrot.lane.b32.xlu0 %v2478, 112
        %v3528 = vpop.permute.xlu0 %3527
        %3529 = vrot.lane.b32.xlu0 %v2479, 112
        %v3530 = vpop.permute.xlu0 %3529
        %3531 = vrot.lane.b32.xlu0 %v2480, 112
        %v3532 = vpop.permute.xlu0 %3531
        %3533 = vrot.lane.b32.xlu0 %v2481, 112
        %v3534 = vpop.permute.xlu0 %3533
        %3535 = vrot.lane.b32.xlu0 %v2746, 112
        %v3536 = vpop.permute.xlu0 %3535
        %3537 = vrot.lane.b32.xlu0 %v3140, 112
        %v3538 = vpop.permute.xlu0 %3537
        %3539 = vrot.lane.b32.xlu0 %v3513, 112
        %v3540 = vpop.permute.xlu0 %3539
        %3541 = vrot.lane.b32.xlu0 %v3514, 112
        %v3542 = vpop.permute.xlu0 %3541
        %vm3543 = vcmask 130048
        %v3545 = vsel %vm3543, %v2469, %v2598
        %v3547 = vsel %vm3543, %v2470, %v2600
        %v3549 = vsel %vm3543, %v2471, %v2602
        %v3551 = vsel %vm3543, %v2472, %v2604
        %v3553 = vsel %vm3543, %v2473, %v2606
        %v3555 = vsel %vm3543, %v2474, %v2608
        %v3557 = vsel %vm3543, %v2475, %v2610
        %v3559 = vsel %vm3543, %v2476, %v2612
        %v3561 = vsel %vm3543, %v2477, %v2614
        %v3563 = vsel %vm3543, %v2478, %v2616
        %v3565 = vsel %vm3543, %v2479, %v2618
        %v3567 = vsel %vm3543, %v2480, %v2620
        %v3569 = vsel %vm3543, %v2481, %v2622
        %v3572 = vsel %vm3543, %v2482, %v2624
        %v3574 = vsel %vm1251, %v3545, %v2656
        %v3576 = vsel %vm1251, %v3547, %v2658
        %v3578 = vsel %vm1251, %v3549, %v2660
        %v3580 = vsel %vm1251, %v3551, %v2662
        %v3582 = vsel %vm1251, %v3553, %v2664
        %v3584 = vsel %vm1251, %v3555, %v2666
        %v3586 = vsel %vm1251, %v3557, %v2668
        %v3588 = vsel %vm1251, %v3559, %v2670
        %v3590 = vsel %vm1251, %v3561, %v2672
        %v3592 = vsel %vm1251, %v3563, %v2674
        %v3594 = vsel %vm1251, %v3565, %v2676
        %v3596 = vsel %vm1251, %v3567, %v2678
        %v3598 = vsel %vm1251, %v3569, %v2680
        %v3600 = vsel %vm1251, %v3572, %v2682
        %vm3601 = vcmask 392192
        %v3603 = vsel %vm3601, %v3574, %v2717
        %v3605 = vsel %vm3601, %v3576, %v2719
        %v3607 = vsel %vm3601, %v3578, %v2721
        %v3609 = vsel %vm3601, %v3580, %v2723
        %v3611 = vsel %vm3601, %v3582, %v2725
        %v3613 = vsel %vm3601, %v3584, %v2727
        %v3615 = vsel %vm3601, %v3586, %v2729
        %v3617 = vsel %vm3601, %v3588, %v2731
        %v3619 = vsel %vm3601, %v3590, %v2733
        %v3621 = vsel %vm3601, %v3592, %v2735
        %v3623 = vsel %vm3601, %v3594, %v2737
        %v3625 = vsel %vm3601, %v3596, %v2739
        %v3627 = vsel %vm3601, %v3598, %v2741
        %v3629 = vsel %vm3601, %v3600, %v2743
        %v3631 = vsel %vm1281, %v3603, %v2813
        %v3633 = vsel %vm1281, %v3605, %v2815
        %v3635 = vsel %vm1281, %v3607, %v2817
        %v3637 = vsel %vm1281, %v3609, %v2819
        %v3639 = vsel %vm1281, %v3611, %v2821
        %v3641 = vsel %vm1281, %v3613, %v2823
        %v3643 = vsel %vm1281, %v3615, %v2825
        %v3645 = vsel %vm1281, %v3617, %v2827
        %v3647 = vsel %vm1281, %v3619, %v2829
        %v3649 = vsel %vm1281, %v3621, %v2831
        %v3651 = vsel %vm1281, %v3623, %v2833
        %v3653 = vsel %vm1281, %v3625, %v2835
        %v3655 = vsel %vm1281, %v3627, %v2837
        %v3657 = vsel %vm1281, %v3629, %v2839
        %vm3658 = vcmask 654336
        %v3660 = vsel %vm3658, %v3631, %v2855
        %v3662 = vsel %vm3658, %v3633, %v2857
        %v3664 = vsel %vm3658, %v3635, %v2859
        %v3666 = vsel %vm3658, %v3637, %v2861
        %v3668 = vsel %vm3658, %v3639, %v2863
        %v3670 = vsel %vm3658, %v3641, %v2865
        %v3672 = vsel %vm3658, %v3643, %v2867
        %v3674 = vsel %vm3658, %v3645, %v2869
        %v3676 = vsel %vm3658, %v3647, %v2871
        %v3678 = vsel %vm3658, %v3649, %v2873
        %v3680 = vsel %vm3658, %v3651, %v2875
        %v3682 = vsel %vm3658, %v3653, %v2877
        %v3684 = vsel %vm3658, %v3655, %v2879
        %v3686 = vsel %vm3658, %v3657, %v2881
        %v3688 = vsel %vm1310, %v3660, %v2916
        %v3690 = vsel %vm1310, %v3662, %v2918
        %v3692 = vsel %vm1310, %v3664, %v2920
        %v3694 = vsel %vm1310, %v3666, %v2922
        %v3696 = vsel %vm1310, %v3668, %v2924
        %v3698 = vsel %vm1310, %v3670, %v2926
        %v3700 = vsel %vm1310, %v3672, %v2928
        %v3702 = vsel %vm1310, %v3674, %v2930
        %v3704 = vsel %vm1310, %v3676, %v2932
        %v3706 = vsel %vm1310, %v3678, %v2934
        %v3708 = vsel %vm1310, %v3680, %v2936
        %v3710 = vsel %vm1310, %v3682, %v2938
        %v3712 = vsel %vm1310, %v3684, %v2940
        %v3714 = vsel %vm1310, %v3686, %v2942
        %vm3715 = vcmask 916480
        %v3717 = vsel %vm3715, %v3688, %v3072
        %v3720 = vsel %vm3715, %v3690, %v3074
        %v3723 = vsel %vm3715, %v3692, %v3076
        %v3726 = vsel %vm3715, %v3694, %v3078
        %v3729 = vsel %vm3715, %v3696, %v3080
        %v3732 = vsel %vm3715, %v3698, %v3082
        %v3735 = vsel %vm3715, %v3700, %v3084
        %v3738 = vsel %vm3715, %v3702, %v3086
        %v3741 = vsel %vm3715, %v3704, %v3088
        %v3744 = vsel %vm3715, %v3706, %v3090
        %v3747 = vsel %vm3715, %v3708, %v3092
        %v3750 = vsel %vm3715, %v3710, %v3094
        %v3753 = vsel %vm3715, %v3712, %v3096
        %v3756 = vsel %vm3715, %v3714, %v3098
        %v3760 = vsel %vm3543, %v3104, %v3170
        %v3763 = vsel %vm3543, %v3106, %v3172
        %v3766 = vsel %vm3543, %v3108, %v3174
        %v3769 = vsel %vm3543, %v3110, %v3176
        %v3772 = vsel %vm3543, %v3112, %v3178
        %v3775 = vsel %vm3543, %v3114, %v3180
        %v3778 = vsel %vm3543, %v3116, %v3182
        %v3781 = vsel %vm3543, %v3118, %v3184
        %v3784 = vsel %vm3543, %v3120, %v3186
        %v3787 = vsel %vm3543, %v3122, %v3188
        %v3790 = vsel %vm3543, %v3124, %v3190
        %v3793 = vsel %vm3543, %v3126, %v3192
        %v3796 = vsel %vm3543, %v3128, %v3194
        %v3799 = vsel %vm3543, %v3127, %v3196
        %v3801 = vsel %vm1251, %v3760, %v3271
        %v3803 = vsel %vm1251, %v3763, %v3273
        %v3805 = vsel %vm1251, %v3766, %v3275
        %v3807 = vsel %vm1251, %v3769, %v3277
        %v3809 = vsel %vm1251, %v3772, %v3279
        %v3811 = vsel %vm1251, %v3775, %v3281
        %v3813 = vsel %vm1251, %v3778, %v3283
        %v3815 = vsel %vm1251, %v3781, %v3285
        %v3817 = vsel %vm1251, %v3784, %v3287
        %v3819 = vsel %vm1251, %v3787, %v3289
        %v3821 = vsel %vm1251, %v3790, %v3291
        %v3823 = vsel %vm1251, %v3793, %v3293
        %v3825 = vsel %vm1251, %v3796, %v3295
        %v3827 = vsel %vm1251, %v3799, %v3297
        %v3829 = vsel %vm3601, %v3801, %v3310
        %v3830 = vsel %vm3601, %v3803, %v2723
        %v3831 = vsel %vm3601, %v3805, %v2725
        %v3832 = vsel %vm3601, %v3807, %v2727
        %v3833 = vsel %vm3601, %v3809, %v2729
        %v3834 = vsel %vm3601, %v3811, %v2731
        %v3835 = vsel %vm3601, %v3813, %v2733
        %v3836 = vsel %vm3601, %v3815, %v2735
        %v3837 = vsel %vm3601, %v3817, %v2737
        %v3838 = vsel %vm3601, %v3819, %v2739
        %v3840 = vsel %vm3601, %v3821, %v3312
        %v3842 = vsel %vm3601, %v3823, %v3314
        %v3844 = vsel %vm3601, %v3825, %v3316
        %v3846 = vsel %vm3601, %v3827, %v3318
        %v3848 = vsel %vm1281, %v3829, %v3357
        %v3850 = vsel %vm1281, %v3830, %v3359
        %v3852 = vsel %vm1281, %v3831, %v3361
        %v3854 = vsel %vm1281, %v3832, %v3363
        %v3856 = vsel %vm1281, %v3833, %v3365
        %v3858 = vsel %vm1281, %v3834, %v3367
        %v3860 = vsel %vm1281, %v3835, %v3369
        %v3862 = vsel %vm1281, %v3836, %v3371
        %v3864 = vsel %vm1281, %v3837, %v3373
        %v3866 = vsel %vm1281, %v3838, %v3375
        %v3868 = vsel %vm1281, %v3840, %v3377
        %v3870 = vsel %vm1281, %v3842, %v3379
        %v3872 = vsel %vm1281, %v3844, %v3381
        %v3874 = vsel %vm1281, %v3846, %v3383
        %v3876 = vsel %vm3658, %v3848, %v3463
        %v3878 = vsel %vm3658, %v3850, %v3465
        %v3880 = vsel %vm3658, %v3852, %v3467
        %v3882 = vsel %vm3658, %v3854, %v3469
        %v3884 = vsel %vm3658, %v3856, %v3471
        %v3886 = vsel %vm3658, %v3858, %v3473
        %v3888 = vsel %vm3658, %v3860, %v3475
        %v3890 = vsel %vm3658, %v3862, %v3477
        %v3892 = vsel %vm3658, %v3864, %v3479
        %v3894 = vsel %vm3658, %v3866, %v3481
        %v3896 = vsel %vm3658, %v3868, %v3483
        %v3898 = vsel %vm3658, %v3870, %v3485
        %v3900 = vsel %vm3658, %v3872, %v3487
        %v3902 = vsel %vm3658, %v3874, %v3489
        %v3904 = vsel %vm1310, %v3876, %v3502
        %v3905 = vsel %vm1310, %v3878, %v2922
        %v3906 = vsel %vm1310, %v3880, %v2924
        %v3907 = vsel %vm1310, %v3882, %v2926
        %v3908 = vsel %vm1310, %v3884, %v2928
        %v3909 = vsel %vm1310, %v3886, %v2930
        %v3910 = vsel %vm1310, %v3888, %v2932
        %v3911 = vsel %vm1310, %v3890, %v2934
        %v3912 = vsel %vm1310, %v3892, %v2936
        %v3913 = vsel %vm1310, %v3894, %v2938
        %v3915 = vsel %vm1310, %v3896, %v3504
        %v3917 = vsel %vm1310, %v3898, %v3506
        %v3919 = vsel %vm1310, %v3900, %v3508
        %v3921 = vsel %vm1310, %v3902, %v3510
        %v3923 = vsel %vm3715, %v3904, %v3516
        %v3926 = vsel %vm3715, %v3905, %v3518
        %v3929 = vsel %vm3715, %v3906, %v3520
        %v3932 = vsel %vm3715, %v3907, %v3522
        %v3935 = vsel %vm3715, %v3908, %v3524
        %v3938 = vsel %vm3715, %v3909, %v3526
        %v3941 = vsel %vm3715, %v3910, %v3528
        %v3944 = vsel %vm3715, %v3911, %v3530
        %v3947 = vsel %vm3715, %v3912, %v3532
        %v3950 = vsel %vm3715, %v3913, %v3534
        %v3953 = vsel %vm3715, %v3915, %v3536
        %v3956 = vsel %vm3715, %v3917, %v3538
        %v3959 = vsel %vm3715, %v3919, %v3540
        %v3962 = vsel %vm3715, %v3921, %v3542
        %v3965 = vunpack.c.l.b16 %v2401
        %v3966 = vpack.c.b16 %v3965, %v3512
        %v3968 = vunpack.c.l.b16 %v2402
        %v3969 = vpack.c.b16 %v2449, %v3968
        %v3971 = vshrl.u32 %v3969, 16
        %v3973 = vshll.u32 %v3969, 16
        %v3975 = vrot.slane %v3973, 1
        %v3976 = vor.u32 %v3971, %v3975
        %v3977 = vsel %vm576, %v3976, %v2520
        %v3978 = vrot.slane %v2807, 1
        %v3979 = vsel %vm576, %v2588, %v3978
        %v3980 = vor.u32 %v2804, %v3978
        %v3981 = vrot.slane %v3256, 1
        %v3982 = vsel %vm576, %v3980, %v3981
        %v3983 = vor.u32 %v3253, %v3981
        %v3985 = vshll.u32 %v3513, 16
        %v3987 = vrot.slane %v3985, 1
        %v3988 = vsel %vm576, %v3983, %v3987
        %v3989 = vshrl.u32 %v3513, 16
        %v3991 = vor.u32 %v3989, %v3987
        %v3993 = vshll.u32 %v3966, 16
        %v3995 = vrot.slane %v3993, 1
        %v3996 = vsel %vm576, %v3991, %v3995
        %v3997 = vshrl.u32 %v3966, 16
        %v3999 = vor.u32 %v3997, %v3995
        %4000 = vrot.lane.b32.xlu0 %v3977, 16
        %v4001 = vpop.permute.xlu0 %4000
        %4002 = vrot.lane.b32.xlu0 %v3979, 16
        %v4003 = vpop.permute.xlu0 %4002
        %4004 = vrot.lane.b32.xlu0 %v3982, 16
        %v4005 = vpop.permute.xlu0 %4004
        %4006 = vrot.lane.b32.xlu0 %v3988, 16
        %v4007 = vpop.permute.xlu0 %4006
        %4008 = vrot.lane.b32.xlu0 %v3996, 16
        %v4009 = vpop.permute.xlu0 %4008
        %4010 = vrot.lane.b32.xlu0 %v3999, 16
        %v4011 = vpop.permute.xlu0 %4010
        %v4015 = vunpack.c.l.b16 %v2403
        %v4016 = vunpack.c.l.b16 %v2404
        %v4017 = vunpack.c.l.b16 %v2405
        %v4018 = vpack.c.b16 %v3512, %v3323
        %v4019 = vpack.c.b16 %v4016, %v4015
        %v4020 = vpack.c.b16 %v4017, %v4017
        %vm4021 = vsmask.f32 256
        %v4022 = vrot.slane %v2982, 7
        %v4023 = vor.u32 %v4022, %v2985
        %v4024 = vrot.slane %v2991, 7
        %v4025 = vor.u32 %v4024, %v2994
        %v4026 = vsel %vm4021, %v4022, %v4025
        %v4027 = vrot.slane %v3000, 7
        %v4028 = vor.u32 %v4027, %v3003
        %v4029 = vsel %vm4021, %v4024, %v4028
        %v4030 = vrot.slane %v3009, 7
        %v4031 = vor.u32 %v4030, %v3012
        %v4032 = vsel %vm4021, %v4027, %v4031
        %v4033 = vrot.slane %v3018, 7
        %v4034 = vor.u32 %v4033, %v3021
        %v4035 = vsel %vm4021, %v4030, %v4034
        %v4036 = vrot.slane %v3027, 7
        %v4037 = vor.u32 %v4036, %v3030
        %v4038 = vsel %vm4021, %v4033, %v4037
        %v4039 = vrot.slane %v3036, 7
        %v4040 = vor.u32 %v4039, %v3039
        %v4041 = vsel %vm4021, %v4036, %v4040
        %v4042 = vrot.slane %v3045, 7
        %v4043 = vor.u32 %v4042, %v3048
        %v4044 = vsel %vm4021, %v4039, %v4043
        %v4045 = vrot.slane %v3054, 7
        %v4046 = vor.u32 %v4045, %v3057
        %v4047 = vsel %vm4021, %v4042, %v4046
        %v4048 = vrot.slane %v3436, 7
        %v4049 = vor.u32 %v4048, %v3439
        %v4050 = vsel %vm4021, %v4045, %v4049
        %v4051 = vrot.slane %v3445, 7
        %v4052 = vor.u32 %v4051, %v3448
        %v4053 = vsel %vm4021, %v4048, %v4052
        %v4055 = vshrl.u32 %v4018, 16
        %v4057 = vrot.slane %v4055, 7
        %v4058 = vshll.u32 %v4018, 16
        %v4060 = vor.u32 %v4057, %v4058
        %v4061 = vsel %vm4021, %v4051, %v4060
        %v4063 = vshrl.u32 %v4019, 16
        %v4065 = vrot.slane %v4063, 7
        %v4066 = vshll.u32 %v4019, 16
        %v4068 = vor.u32 %v4065, %v4066
        %v4069 = vsel %vm4021, %v4057, %v4068
        %v4071 = vshrl.u32 %v4020, 16
        %v4073 = vrot.slane %v4071, 7
        %v4074 = vshll.u32 %v4020, 16
        %v4076 = vor.u32 %v4073, %v4074
        %v4077 = vsel %vm4021, %v4065, %v4076
        %4078 = vrot.lane.b32.xlu0 %v4023, 32
        %v4079 = vpop.permute.xlu0 %4078
        %4080 = vrot.lane.b32.xlu0 %v4026, 32
        %v4081 = vpop.permute.xlu0 %4080
        %4082 = vrot.lane.b32.xlu0 %v4029, 32
        %v4083 = vpop.permute.xlu0 %4082
        %4084 = vrot.lane.b32.xlu0 %v4032, 32
        %v4085 = vpop.permute.xlu0 %4084
        %4086 = vrot.lane.b32.xlu0 %v4035, 32
        %v4087 = vpop.permute.xlu0 %4086
        %4088 = vrot.lane.b32.xlu0 %v4038, 32
        %v4089 = vpop.permute.xlu0 %4088
        %4090 = vrot.lane.b32.xlu0 %v4041, 32
        %v4091 = vpop.permute.xlu0 %4090
        %4092 = vrot.lane.b32.xlu0 %v4044, 32
        %v4093 = vpop.permute.xlu0 %4092
        %4094 = vrot.lane.b32.xlu0 %v4047, 32
        %v4095 = vpop.permute.xlu0 %4094
        %4096 = vrot.lane.b32.xlu0 %v4050, 32
        %v4097 = vpop.permute.xlu0 %4096
        %4098 = vrot.lane.b32.xlu0 %v4053, 32
        %v4099 = vpop.permute.xlu0 %4098
        %4100 = vrot.lane.b32.xlu0 %v4061, 32
        %v4101 = vpop.permute.xlu0 %4100
        %4102 = vrot.lane.b32.xlu0 %v4069, 32
        %v4103 = vpop.permute.xlu0 %4102
        %4104 = vrot.lane.b32.xlu0 %v4077, 32
        %v4105 = vpop.permute.xlu0 %4104
        %v4107 = vunpack.c.l.b16 %v2406
        %v4108 = vpack.c.b16 %v4107, %v4017
        %4109 = vrot.lane.b32.xlu0 %v2844, 48
        %v4110 = vpop.permute.xlu0 %4109
        %4111 = vrot.lane.b32.xlu0 %v2845, 48
        %v4112 = vpop.permute.xlu0 %4111
        %4113 = vrot.lane.b32.xlu0 %v2846, 48
        %v4114 = vpop.permute.xlu0 %4113
        %4115 = vrot.lane.b32.xlu0 %v2847, 48
        %v4116 = vpop.permute.xlu0 %4115
        %4117 = vrot.lane.b32.xlu0 %v2848, 48
        %v4118 = vpop.permute.xlu0 %4117
        %4119 = vrot.lane.b32.xlu0 %v2849, 48
        %v4120 = vpop.permute.xlu0 %4119
        %4121 = vrot.lane.b32.xlu0 %v2850, 48
        %v4122 = vpop.permute.xlu0 %4121
        %4123 = vrot.lane.b32.xlu0 %v2851, 48
        %v4124 = vpop.permute.xlu0 %4123
        %4125 = vrot.lane.b32.xlu0 %v2852, 48
        %v4126 = vpop.permute.xlu0 %4125
        %4127 = vrot.lane.b32.xlu0 %v3326, 48
        %v4128 = vpop.permute.xlu0 %4127
        %4129 = vrot.lane.b32.xlu0 %v3327, 48
        %v4130 = vpop.permute.xlu0 %4129
        %4131 = vrot.lane.b32.xlu0 %v4018, 48
        %v4132 = vpop.permute.xlu0 %4131
        %4133 = vrot.lane.b32.xlu0 %v4019, 48
        %v4134 = vpop.permute.xlu0 %4133
        %4135 = vrot.lane.b32.xlu0 %v4108, 48
        %v4136 = vpop.permute.xlu0 %4135
        %v4138 = vunpack.c.l.b16 %v2407
        %v4139 = vpack.c.b16 %v2452, %v4138
        %v4141 = vshrl.u32 %v4139, 16
        %v4143 = vshll.u32 %v4139, 16
        %v4145 = vrot.slane %v4143, 1
        %v4146 = vor.u32 %v4141, %v4145
        %v4147 = vrot.slane %v2994, 1
        %v4148 = vsel %vm576, %v4146, %v4147
        %v4149 = vor.u32 %v2991, %v4147
        %v4150 = vrot.slane %v3003, 1
        %v4151 = vsel %vm576, %v4149, %v4150
        %v4152 = vor.u32 %v3000, %v4150
        %v4153 = vrot.slane %v3012, 1
        %v4154 = vsel %vm576, %v4152, %v4153
        %v4155 = vor.u32 %v3009, %v4153
        %v4156 = vrot.slane %v3021, 1
        %v4157 = vsel %vm576, %v4155, %v4156
        %v4158 = vor.u32 %v3018, %v4156
        %v4159 = vrot.slane %v3030, 1
        %v4160 = vsel %vm576, %v4158, %v4159
        %v4161 = vor.u32 %v3027, %v4159
        %v4162 = vrot.slane %v3039, 1
        %v4163 = vsel %vm576, %v4161, %v4162
        %v4164 = vor.u32 %v3036, %v4162
        %v4165 = vrot.slane %v3048, 1
        %v4166 = vsel %vm576, %v4164, %v4165
        %v4167 = vor.u32 %v3045, %v4165
        %v4168 = vrot.slane %v3057, 1
        %v4169 = vsel %vm576, %v4167, %v4168
        %v4170 = vor.u32 %v3054, %v4168
        %v4171 = vrot.slane %v3439, 1
        %v4172 = vsel %vm576, %v4170, %v4171
        %v4173 = vor.u32 %v3436, %v4171
        %v4174 = vrot.slane %v3448, 1
        %v4175 = vsel %vm576, %v4173, %v4174
        %v4176 = vor.u32 %v3445, %v4174
        %v4177 = vrot.slane %v4058, 1
        %v4178 = vsel %vm576, %v4176, %v4177
        %v4179 = vor.u32 %v4055, %v4177
        %v4180 = vrot.slane %v4066, 1
        %v4181 = vsel %vm576, %v4179, %v4180
        %v4182 = vor.u32 %v4063, %v4180
        %v4184 = vshll.u32 %v4108, 16
        %v4186 = vrot.slane %v4184, 1
        %v4187 = vsel %vm576, %v4182, %v4186
        %v4188 = vshrl.u32 %v4108, 16
        %v4190 = vor.u32 %v4188, %v4186
        %4191 = vrot.lane.b32.xlu0 %v4148, 64
        %v4192 = vpop.permute.xlu0 %4191
        %4193 = vrot.lane.b32.xlu0 %v4151, 64
        %v4194 = vpop.permute.xlu0 %4193
        %4195 = vrot.lane.b32.xlu0 %v4154, 64
        %v4196 = vpop.permute.xlu0 %4195
        %4197 = vrot.lane.b32.xlu0 %v4157, 64
        %v4198 = vpop.permute.xlu0 %4197
        %4199 = vrot.lane.b32.xlu0 %v4160, 64
        %v4200 = vpop.permute.xlu0 %4199
        %4201 = vrot.lane.b32.xlu0 %v4163, 64
        %v4202 = vpop.permute.xlu0 %4201
        %4203 = vrot.lane.b32.xlu0 %v4166, 64
        %v4204 = vpop.permute.xlu0 %4203
        %4205 = vrot.lane.b32.xlu0 %v4169, 64
        %v4206 = vpop.permute.xlu0 %4205
        %4207 = vrot.lane.b32.xlu0 %v4172, 64
        %v4208 = vpop.permute.xlu0 %4207
        %4209 = vrot.lane.b32.xlu0 %v4175, 64
        %v4210 = vpop.permute.xlu0 %4209
        %4211 = vrot.lane.b32.xlu0 %v4178, 64
        %v4212 = vpop.permute.xlu0 %4211
        %4213 = vrot.lane.b32.xlu0 %v4181, 64
        %v4214 = vpop.permute.xlu0 %4213
        %4215 = vrot.lane.b32.xlu0 %v4187, 64
        %v4216 = vpop.permute.xlu0 %4215
        %4217 = vrot.lane.b32.xlu0 %v4190, 64
        %v4218 = vpop.permute.xlu0 %4217
        %v4221 = vunpack.c.l.b16 %v2408
        %v4222 = vunpack.c.l.b16 %v2409
        %v4223 = vpack.c.b16 %v2452, %v4221
        %v4224 = vpack.c.b16 %v4222, %v4017
        %v4226 = vshrl.u32 %v4223, 16
        %v4228 = vrot.slane %v4226, 2
        %v4229 = vshll.u32 %v4223, 16
        %v4231 = vrot.slane %v4229, 3
        %v4232 = vor.u32 %v4228, %v4231
        %v4233 = vsel %vm919, %v4232, %v2997
        %v4234 = vrot.slane %v3436, 2
        %v4235 = vrot.slane %v3439, 3
        %v4236 = vor.u32 %v4234, %v4235
        %v4237 = vsel %vm919, %v3060, %v4236
        %v4238 = vrot.slane %v3445, 2
        %v4239 = vrot.slane %v3448, 3
        %v4240 = vor.u32 %v4238, %v4239
        %v4241 = vsel %vm919, %v4236, %v4240
        %v4242 = vrot.slane %v4055, 2
        %v4243 = vrot.slane %v4058, 3
        %v4244 = vor.u32 %v4242, %v4243
        %v4245 = vsel %vm919, %v4240, %v4244
        %v4246 = vrot.slane %v4063, 2
        %v4247 = vrot.slane %v4066, 3
        %v4248 = vor.u32 %v4246, %v4247
        %v4249 = vsel %vm919, %v4244, %v4248
        %v4251 = vshrl.u32 %v4224, 16
        %v4253 = vrot.slane %v4251, 2
        %v4254 = vshll.u32 %v4224, 16
        %v4256 = vrot.slane %v4254, 3
        %v4257 = vor.u32 %v4253, %v4256
        %v4258 = vsel %vm919, %v4248, %v4257
        %4259 = vrot.lane.b32.xlu0 %v4233, 80
        %v4260 = vpop.permute.xlu0 %4259
        %4261 = vrot.lane.b32.xlu0 %v3007, 80
        %v4262 = vpop.permute.xlu0 %4261
        %4263 = vrot.lane.b32.xlu0 %v3016, 80
        %v4264 = vpop.permute.xlu0 %4263
        %4265 = vrot.lane.b32.xlu0 %v3025, 80
        %v4266 = vpop.permute.xlu0 %4265
        %4267 = vrot.lane.b32.xlu0 %v3034, 80
        %v4268 = vpop.permute.xlu0 %4267
        %4269 = vrot.lane.b32.xlu0 %v3043, 80
        %v4270 = vpop.permute.xlu0 %4269
        %4271 = vrot.lane.b32.xlu0 %v3052, 80
        %v4272 = vpop.permute.xlu0 %4271
        %4273 = vrot.lane.b32.xlu0 %v3061, 80
        %v4274 = vpop.permute.xlu0 %4273
        %4275 = vrot.lane.b32.xlu0 %v4237, 80
        %v4276 = vpop.permute.xlu0 %4275
        %4277 = vrot.lane.b32.xlu0 %v4241, 80
        %v4278 = vpop.permute.xlu0 %4277
        %4279 = vrot.lane.b32.xlu0 %v4245, 80
        %v4280 = vpop.permute.xlu0 %4279
        %4281 = vrot.lane.b32.xlu0 %v4249, 80
        %v4282 = vpop.permute.xlu0 %4281
        %4283 = vrot.lane.b32.xlu0 %v4258, 80
        %v4284 = vpop.permute.xlu0 %4283
        %4285 = vrot.lane.b32.xlu0 %v4257, 80
        %v4286 = vpop.permute.xlu0 %4285
        %v4288 = vunpack.c.l.b16 %v2410
        %v4289 = vpack.c.b16 %v4288, %v4017
        %v4290 = vrot.slane %v4223, 3
        %v4291 = vsel %vm722, %v4290, %v3111
        %v4292 = vrot.slane %v3326, 3
        %v4293 = vsel %vm722, %v3125, %v4292
        %v4294 = vrot.slane %v3327, 3
        %v4295 = vsel %vm722, %v4292, %v4294
        %v4296 = vrot.slane %v4018, 3
        %v4297 = vsel %vm722, %v4294, %v4296
        %v4298 = vrot.slane %v4019, 3
        %v4299 = vsel %vm722, %v4296, %v4298
        %v4300 = vrot.slane %v4289, 3
        %v4301 = vsel %vm722, %v4298, %v4300
        %4302 = vrot.lane.b32.xlu0 %v4291, 96
        %v4303 = vpop.permute.xlu0 %4302
        %4304 = vrot.lane.b32.xlu0 %v3114, 96
        %v4305 = vpop.permute.xlu0 %4304
        %4306 = vrot.lane.b32.xlu0 %v3116, 96
        %v4307 = vpop.permute.xlu0 %4306
        %4308 = vrot.lane.b32.xlu0 %v3118, 96
        %v4309 = vpop.permute.xlu0 %4308
        %4310 = vrot.lane.b32.xlu0 %v3120, 96
        %v4311 = vpop.permute.xlu0 %4310
        %4312 = vrot.lane.b32.xlu0 %v3122, 96
        %v4313 = vpop.permute.xlu0 %4312
        %4314 = vrot.lane.b32.xlu0 %v3124, 96
        %v4315 = vpop.permute.xlu0 %4314
        %4316 = vrot.lane.b32.xlu0 %v3126, 96
        %v4317 = vpop.permute.xlu0 %4316
        %4318 = vrot.lane.b32.xlu0 %v4293, 96
        %v4319 = vpop.permute.xlu0 %4318
        %4320 = vrot.lane.b32.xlu0 %v4295, 96
        %v4321 = vpop.permute.xlu0 %4320
        %4322 = vrot.lane.b32.xlu0 %v4297, 96
        %v4323 = vpop.permute.xlu0 %4322
        %4324 = vrot.lane.b32.xlu0 %v4299, 96
        %v4325 = vpop.permute.xlu0 %4324
        %4326 = vrot.lane.b32.xlu0 %v4301, 96
        %v4327 = vpop.permute.xlu0 %4326
        %4328 = vrot.lane.b32.xlu0 %v4300, 96
        %v4329 = vpop.permute.xlu0 %4328
        %v4330 = vpack.c.b16 %v4015, %v3512
        %v4331 = vpack.c.b16 %v4017, %v4016
        %v4332 = vpack.c.b16 %v4288, %v4288
        %v4333 = vrot.slane %v2530, 7
        %v4334 = vor.u32 %v4333, %v2526
        %v4335 = vrot.slane %v2538, 7
        %v4336 = vor.u32 %v4335, %v2534
        %v4337 = vsel %vm4021, %v4333, %v4336
        %v4338 = vrot.slane %v2546, 7
        %v4339 = vor.u32 %v4338, %v2542
        %v4340 = vsel %vm4021, %v4335, %v4339
        %v4341 = vrot.slane %v2554, 7
        %v4342 = vor.u32 %v4341, %v2550
        %v4343 = vsel %vm4021, %v4338, %v4342
        %v4344 = vrot.slane %v2562, 7
        %v4345 = vor.u32 %v4344, %v2558
        %v4346 = vsel %vm4021, %v4341, %v4345
        %v4347 = vrot.slane %v2570, 7
        %v4348 = vor.u32 %v4347, %v2566
        %v4349 = vsel %vm4021, %v4344, %v4348
        %v4350 = vrot.slane %v2578, 7
        %v4351 = vor.u32 %v4350, %v2574
        %v4352 = vsel %vm4021, %v4347, %v4351
        %v4353 = vrot.slane %v2586, 7
        %v4354 = vor.u32 %v4353, %v2582
        %v4355 = vsel %vm4021, %v4350, %v4354
        %v4356 = vrot.slane %v2804, 7
        %v4357 = vor.u32 %v4356, %v2807
        %v4358 = vsel %vm4021, %v4353, %v4357
        %v4359 = vrot.slane %v3253, 7
        %v4360 = vor.u32 %v4359, %v3256
        %v4361 = vsel %vm4021, %v4356, %v4360
        %v4362 = vrot.slane %v3989, 7
        %v4363 = vor.u32 %v4362, %v3985
        %v4364 = vsel %vm4021, %v4359, %v4363
        %v4366 = vshrl.u32 %v4330, 16
        %v4368 = vrot.slane %v4366, 7
        %v4369 = vshll.u32 %v4330, 16
        %v4371 = vor.u32 %v4368, %v4369
        %v4372 = vsel %vm4021, %v4362, %v4371
        %v4374 = vshrl.u32 %v4331, 16
        %v4376 = vrot.slane %v4374, 7
        %v4377 = vshll.u32 %v4331, 16
        %v4379 = vor.u32 %v4376, %v4377
        %v4380 = vsel %vm4021, %v4368, %v4379
        %v4382 = vshrl.u32 %v4332, 16
        %v4384 = vrot.slane %v4382, 7
        %v4385 = vshll.u32 %v4332, 16
        %v4387 = vor.u32 %v4384, %v4385
        %v4388 = vsel %vm4021, %v4376, %v4387
        %4389 = vrot.lane.b32.xlu0 %v4334, 112
        %v4390 = vpop.permute.xlu0 %4389
        %4391 = vrot.lane.b32.xlu0 %v4337, 112
        %v4392 = vpop.permute.xlu0 %4391
        %4393 = vrot.lane.b32.xlu0 %v4340, 112
        %v4394 = vpop.permute.xlu0 %4393
        %4395 = vrot.lane.b32.xlu0 %v4343, 112
        %v4396 = vpop.permute.xlu0 %4395
        %4397 = vrot.lane.b32.xlu0 %v4346, 112
        %v4398 = vpop.permute.xlu0 %4397
        %4399 = vrot.lane.b32.xlu0 %v4349, 112
        %v4400 = vpop.permute.xlu0 %4399
        %4401 = vrot.lane.b32.xlu0 %v4352, 112
        %v4402 = vpop.permute.xlu0 %4401
        %4403 = vrot.lane.b32.xlu0 %v4355, 112
        %v4404 = vpop.permute.xlu0 %4403
        %4405 = vrot.lane.b32.xlu0 %v4358, 112
        %v4406 = vpop.permute.xlu0 %4405
        %4407 = vrot.lane.b32.xlu0 %v4361, 112
        %v4408 = vpop.permute.xlu0 %4407
        %4409 = vrot.lane.b32.xlu0 %v4364, 112
        %v4410 = vpop.permute.xlu0 %4409
        %4411 = vrot.lane.b32.xlu0 %v4372, 112
        %v4412 = vpop.permute.xlu0 %4411
        %4413 = vrot.lane.b32.xlu0 %v4380, 112
        %v4414 = vpop.permute.xlu0 %4413
        %4415 = vrot.lane.b32.xlu0 %v4388, 112
        %v4416 = vpop.permute.xlu0 %4415
        %v4419 = vunpack.c.l.b16 %v2411
        %v4420 = vunpack.c.l.b16 %v2412
        %v4421 = vpack.c.b16 %v2453, %v4419
        %v4422 = vpack.c.b16 %v4420, %v4288
        %v4424 = vshrl.u32 %v4421, 16
        %v4426 = vrot.slane %v4424, 1
        %v4427 = vshll.u32 %v4421, 16
        %v4429 = vrot.slane %v4427, 2
        %v4430 = vor.u32 %v4426, %v4429
        %v4431 = vrot.slane %v2538, 1
        %v4432 = vrot.slane %v2534, 2
        %v4433 = vor.u32 %v4431, %v4432
        %v4434 = vsel %vm1097, %v4430, %v4433
        %v4435 = vrot.slane %v2546, 1
        %v4436 = vrot.slane %v2542, 2
        %v4437 = vor.u32 %v4435, %v4436
        %v4438 = vsel %vm1097, %v4433, %v4437
        %v4439 = vrot.slane %v2554, 1
        %v4440 = vrot.slane %v2550, 2
        %v4441 = vor.u32 %v4439, %v4440
        %v4442 = vsel %vm1097, %v4437, %v4441
        %v4443 = vrot.slane %v2562, 1
        %v4444 = vrot.slane %v2558, 2
        %v4445 = vor.u32 %v4443, %v4444
        %v4446 = vsel %vm1097, %v4441, %v4445
        %v4447 = vrot.slane %v2570, 1
        %v4448 = vrot.slane %v2566, 2
        %v4449 = vor.u32 %v4447, %v4448
        %v4450 = vsel %vm1097, %v4445, %v4449
        %v4451 = vrot.slane %v2578, 1
        %v4452 = vrot.slane %v2574, 2
        %v4453 = vor.u32 %v4451, %v4452
        %v4454 = vsel %vm1097, %v4449, %v4453
        %v4455 = vrot.slane %v2586, 1
        %v4456 = vrot.slane %v2582, 2
        %v4457 = vor.u32 %v4455, %v4456
        %v4458 = vsel %vm1097, %v4453, %v4457
        %v4459 = vrot.slane %v2804, 1
        %v4460 = vrot.slane %v2807, 2
        %v4461 = vor.u32 %v4459, %v4460
        %v4462 = vsel %vm1097, %v4457, %v4461
        %v4463 = vrot.slane %v3253, 1
        %v4464 = vrot.slane %v3256, 2
        %v4465 = vor.u32 %v4463, %v4464
        %v4466 = vsel %vm1097, %v4461, %v4465
        %v4467 = vrot.slane %v3989, 1
        %v4468 = vrot.slane %v3985, 2
        %v4469 = vor.u32 %v4467, %v4468
        %v4470 = vsel %vm1097, %v4465, %v4469
        %v4471 = vrot.slane %v4366, 1
        %v4472 = vrot.slane %v4369, 2
        %v4473 = vor.u32 %v4471, %v4472
        %v4474 = vsel %vm1097, %v4469, %v4473
        %v4475 = vrot.slane %v4374, 1
        %v4476 = vrot.slane %v4377, 2
        %v4477 = vor.u32 %v4475, %v4476
        %v4478 = vsel %vm1097, %v4473, %v4477
        %v4480 = vshrl.u32 %v4422, 16
        %v4482 = vrot.slane %v4480, 1
        %v4483 = vshll.u32 %v4422, 16
        %v4485 = vrot.slane %v4483, 2
        %v4486 = vor.u32 %v4482, %v4485
        %v4487 = vsel %vm1097, %v4477, %v4486
        %v4489 = vunpack.c.l.b16 %v2413
        %v4490 = vpack.c.b16 %v4489, %v4288
        %v4491 = vrot.slane %v4421, 2
        %v4492 = vsel %vm888, %v4491, %v3149
        %v4493 = vrot.slane %v3513, 2
        %v4494 = vsel %vm888, %v3165, %v4493
        %v4495 = vrot.slane %v4330, 2
        %v4496 = vsel %vm888, %v4493, %v4495
        %v4497 = vrot.slane %v4331, 2
        %v4498 = vsel %vm888, %v4495, %v4497
        %v4499 = vrot.slane %v4490, 2
        %v4500 = vsel %vm888, %v4497, %v4499
        %4501 = vrot.lane.b32.xlu0 %v4492, 16
        %v4502 = vpop.permute.xlu0 %4501
        %4503 = vrot.lane.b32.xlu0 %v4494, 16
        %v4504 = vpop.permute.xlu0 %4503
        %4505 = vrot.lane.b32.xlu0 %v4496, 16
        %v4506 = vpop.permute.xlu0 %4505
        %4507 = vrot.lane.b32.xlu0 %v4498, 16
        %v4508 = vpop.permute.xlu0 %4507
        %4509 = vrot.lane.b32.xlu0 %v4500, 16
        %v4510 = vpop.permute.xlu0 %4509
        %4511 = vrot.lane.b32.xlu0 %v4499, 16
        %v4512 = vpop.permute.xlu0 %4511
        %v4514 = vunpack.c.l.b16 %v2414
        %v4515 = vpack.c.b16 %v2453, %v4514
        %v4517 = vshrl.u32 %v4515, 16
        %v4519 = vrot.slane %v4517, 2
        %v4520 = vshll.u32 %v4515, 16
        %v4522 = vrot.slane %v4520, 3
        %v4523 = vor.u32 %v4519, %v4522
        %v4524 = vsel %vm919, %v4523, %v3222
        %v4525 = vrot.slane %v3989, 2
        %v4526 = vrot.slane %v3985, 3
        %v4527 = vor.u32 %v4525, %v4526
        %v4528 = vsel %vm919, %v3259, %v4527
        %v4529 = vrot.slane %v4366, 2
        %v4530 = vrot.slane %v4369, 3
        %v4531 = vor.u32 %v4529, %v4530
        %v4532 = vsel %vm919, %v4527, %v4531
        %v4533 = vrot.slane %v4374, 2
        %v4534 = vrot.slane %v4377, 3
        %v4535 = vor.u32 %v4533, %v4534
        %v4536 = vsel %vm919, %v4531, %v4535
        %v4538 = vshrl.u32 %v4490, 16
        %v4540 = vrot.slane %v4538, 2
        %v4541 = vshll.u32 %v4490, 16
        %v4543 = vrot.slane %v4541, 3
        %v4544 = vor.u32 %v4540, %v4543
        %v4545 = vsel %vm919, %v4535, %v4544
        %4546 = vrot.lane.b32.xlu0 %v4524, 32
        %v4547 = vpop.permute.xlu0 %4546
        %4548 = vrot.lane.b32.xlu0 %v4528, 32
        %v4549 = vpop.permute.xlu0 %4548
        %4550 = vrot.lane.b32.xlu0 %v4532, 32
        %v4551 = vpop.permute.xlu0 %4550
        %4552 = vrot.lane.b32.xlu0 %v4536, 32
        %v4553 = vpop.permute.xlu0 %4552
        %4554 = vrot.lane.b32.xlu0 %v4545, 32
        %v4555 = vpop.permute.xlu0 %4554
        %4556 = vrot.lane.b32.xlu0 %v4544, 32
        %v4557 = vpop.permute.xlu0 %4556
        %v4559 = vsel %vm3543, %v2472, %v4001
        %v4561 = vsel %vm3543, %v2481, %v4003
        %v4563 = vsel %vm3543, %v2746, %v4005
        %v4565 = vsel %vm3543, %v3140, %v4007
        %v4567 = vsel %vm3543, %v3513, %v4009
        %v4569 = vsel %vm3543, %v3966, %v4011
        %v4571 = vsel %vm1251, %v4559, %v4079
        %v4573 = vsel %vm1251, %v3553, %v4081
        %v4575 = vsel %vm1251, %v3555, %v4083
        %v4577 = vsel %vm1251, %v3557, %v4085
        %v4579 = vsel %vm1251, %v3559, %v4087
        %v4581 = vsel %vm1251, %v3561, %v4089
        %v4583 = vsel %vm1251, %v3563, %v4091
        %v4585 = vsel %vm1251, %v3565, %v4093
        %v4587 = vsel %vm1251, %v3567, %v4095
        %v4589 = vsel %vm1251, %v4561, %v4097
        %v4591 = vsel %vm1251, %v4563, %v4099
        %v4593 = vsel %vm1251, %v4565, %v4101
        %v4595 = vsel %vm1251, %v4567, %v4103
        %v4597 = vsel %vm1251, %v4569, %v4105
        %v4599 = vsel %vm3601, %v4571, %v4110
        %v4601 = vsel %vm3601, %v4573, %v4112
        %v4603 = vsel %vm3601, %v4575, %v4114
        %v4605 = vsel %vm3601, %v4577, %v4116
        %v4607 = vsel %vm3601, %v4579, %v4118
        %v4609 = vsel %vm3601, %v4581, %v4120
        %v4611 = vsel %vm3601, %v4583, %v4122
        %v4613 = vsel %vm3601, %v4585, %v4124
        %v4615 = vsel %vm3601, %v4587, %v4126
        %v4617 = vsel %vm3601, %v4589, %v4128
        %v4619 = vsel %vm3601, %v4591, %v4130
        %v4621 = vsel %vm3601, %v4593, %v4132
        %v4623 = vsel %vm3601, %v4595, %v4134
        %v4625 = vsel %vm3601, %v4597, %v4136
        %v4627 = vsel %vm1281, %v4599, %v4192
        %v4629 = vsel %vm1281, %v4601, %v4194
        %v4631 = vsel %vm1281, %v4603, %v4196
        %v4633 = vsel %vm1281, %v4605, %v4198
        %v4635 = vsel %vm1281, %v4607, %v4200
        %v4637 = vsel %vm1281, %v4609, %v4202
        %v4639 = vsel %vm1281, %v4611, %v4204
        %v4641 = vsel %vm1281, %v4613, %v4206
        %v4643 = vsel %vm1281, %v4615, %v4208
        %v4645 = vsel %vm1281, %v4617, %v4210
        %v4647 = vsel %vm1281, %v4619, %v4212
        %v4649 = vsel %vm1281, %v4621, %v4214
        %v4651 = vsel %vm1281, %v4623, %v4216
        %v4653 = vsel %vm1281, %v4625, %v4218
        %v4655 = vsel %vm3658, %v4627, %v4260
        %v4657 = vsel %vm3658, %v4629, %v4262
        %v4659 = vsel %vm3658, %v4631, %v4264
        %v4661 = vsel %vm3658, %v4633, %v4266
        %v4663 = vsel %vm3658, %v4635, %v4268
        %v4665 = vsel %vm3658, %v4637, %v4270
        %v4667 = vsel %vm3658, %v4639, %v4272
        %v4669 = vsel %vm3658, %v4641, %v4274
        %v4671 = vsel %vm3658, %v4643, %v4276
        %v4673 = vsel %vm3658, %v4645, %v4278
        %v4675 = vsel %vm3658, %v4647, %v4280
        %v4677 = vsel %vm3658, %v4649, %v4282
        %v4679 = vsel %vm3658, %v4651, %v4284
        %v4681 = vsel %vm3658, %v4653, %v4286
        %v4683 = vsel %vm1310, %v4655, %v4303
        %v4685 = vsel %vm1310, %v4657, %v4305
        %v4687 = vsel %vm1310, %v4659, %v4307
        %v4689 = vsel %vm1310, %v4661, %v4309
        %v4691 = vsel %vm1310, %v4663, %v4311
        %v4693 = vsel %vm1310, %v4665, %v4313
        %v4695 = vsel %vm1310, %v4667, %v4315
        %v4697 = vsel %vm1310, %v4669, %v4317
        %v4699 = vsel %vm1310, %v4671, %v4319
        %v4701 = vsel %vm1310, %v4673, %v4321
        %v4703 = vsel %vm1310, %v4675, %v4323
        %v4705 = vsel %vm1310, %v4677, %v4325
        %v4707 = vsel %vm1310, %v4679, %v4327
        %v4709 = vsel %vm1310, %v4681, %v4329
        %v4711 = vsel %vm3715, %v4683, %v4390
        %v4713 = vsel %vm3715, %v4685, %v4392
        %v4715 = vsel %vm3715, %v4687, %v4394
        %v4717 = vsel %vm3715, %v4689, %v4396
        %v4719 = vsel %vm3715, %v4691, %v4398
        %v4721 = vsel %vm3715, %v4693, %v4400
        %v4723 = vsel %vm3715, %v4695, %v4402
        %v4725 = vsel %vm3715, %v4697, %v4404
        %v4727 = vsel %vm3715, %v4699, %v4406
        %v4729 = vsel %vm3715, %v4701, %v4408
        %v4731 = vsel %vm3715, %v4703, %v4410
        %v4733 = vsel %vm3715, %v4705, %v4412
        %v4735 = vsel %vm3715, %v4707, %v4414
        %v4737 = vsel %vm3715, %v4709, %v4416
        %v4740 = vsel %vm3543, %v4434, %v4502
        %v4742 = vsel %vm3543, %v4438, %v3178
        %v4744 = vsel %vm3543, %v4442, %v3180
        %v4746 = vsel %vm3543, %v4446, %v3182
        %v4748 = vsel %vm3543, %v4450, %v3184
        %v4750 = vsel %vm3543, %v4454, %v3186
        %v4752 = vsel %vm3543, %v4458, %v3188
        %v4754 = vsel %vm3543, %v4462, %v3190
        %v4756 = vsel %vm3543, %v4466, %v3192
        %v4759 = vsel %vm3543, %v4470, %v4504
        %v4762 = vsel %vm3543, %v4474, %v4506
        %v4765 = vsel %vm3543, %v4478, %v4508
        %v4768 = vsel %vm3543, %v4487, %v4510
        %v4771 = vsel %vm3543, %v4486, %v4512
        %v4773 = vsel %vm1251, %v4740, %v4547
        %v4774 = vsel %vm1251, %v4742, %v3279
        %v4775 = vsel %vm1251, %v4744, %v3281
        %v4776 = vsel %vm1251, %v4746, %v3283
        %v4777 = vsel %vm1251, %v4748, %v3285
        %v4778 = vsel %vm1251, %v4750, %v3287
        %v4779 = vsel %vm1251, %v4752, %v3289
        %v4780 = vsel %vm1251, %v4754, %v3291
        %v4781 = vsel %vm1251, %v4756, %v3293
        %v4783 = vsel %vm1251, %v4759, %v4549
        %v4785 = vsel %vm1251, %v4762, %v4551
        %v4787 = vsel %vm1251, %v4765, %v4553
        %v4789 = vsel %vm1251, %v4768, %v4555
        %v4791 = vsel %vm1251, %v4771, %v4557
        %v4792 = vshrl.u32 %v4711, 16
        %v4794 = vshll.u32 %v4711, 16
        %v4796 = vrot.slane %v4794, 1
        %v4797 = vor.u32 %v4792, %v4796
        %v4798 = vshll.u32 %v4713, 16
        %v4800 = vrot.slane %v4798, 1
        %v4801 = vsel %vm576, %v4797, %v4800
        %v4802 = vshrl.u32 %v4773, 16
        %v4804 = vshll.u32 %v4773, 16
        %v4806 = vrot.slane %v4804, 1
        %v4807 = vor.u32 %v4802, %v4806
        %v4808 = vshll.u32 %v4774, 16
        %v4810 = vrot.slane %v4808, 1
        %v4811 = vsel %vm576, %v4807, %v4810
        %v4812 = vshrl.u32 %v4713, 16
        %v4814 = vor.u32 %v4812, %v4800
        %v4815 = vshll.u32 %v4715, 16
        %v4817 = vrot.slane %v4815, 1
        %v4818 = vsel %vm576, %v4814, %v4817
        %v4819 = vshrl.u32 %v4774, 16
        %v4821 = vor.u32 %v4819, %v4810
        %v4822 = vshll.u32 %v4775, 16
        %v4824 = vrot.slane %v4822, 1
        %v4825 = vsel %vm576, %v4821, %v4824
        %v4826 = vshrl.u32 %v4715, 16
        %v4828 = vor.u32 %v4826, %v4817
        %v4829 = vshll.u32 %v4717, 16
        %v4831 = vrot.slane %v4829, 1
        %v4832 = vsel %vm576, %v4828, %v4831
        %v4833 = vshrl.u32 %v4775, 16
        %v4835 = vor.u32 %v4833, %v4824
        %v4836 = vshll.u32 %v4776, 16
        %v4838 = vrot.slane %v4836, 1
        %v4839 = vsel %vm576, %v4835, %v4838
        %v4840 = vshrl.u32 %v4717, 16
        %v4842 = vor.u32 %v4840, %v4831
        %v4843 = vshll.u32 %v4719, 16
        %v4845 = vrot.slane %v4843, 1
        %v4846 = vsel %vm576, %v4842, %v4845
        %v4847 = vshrl.u32 %v4776, 16
        %v4849 = vor.u32 %v4847, %v4838
        %v4850 = vshll.u32 %v4777, 16
        %v4852 = vrot.slane %v4850, 1
        %v4853 = vsel %vm576, %v4849, %v4852
        %v4854 = vshrl.u32 %v4719, 16
        %v4856 = vor.u32 %v4854, %v4845
        %v4857 = vshll.u32 %v4721, 16
        %v4859 = vrot.slane %v4857, 1
        %v4860 = vsel %vm576, %v4856, %v4859
        %v4861 = vshrl.u32 %v4777, 16
        %v4863 = vor.u32 %v4861, %v4852
        %v4864 = vshll.u32 %v4778, 16
        %v4866 = vrot.slane %v4864, 1
        %v4867 = vsel %vm576, %v4863, %v4866
        %v4868 = vshrl.u32 %v4721, 16
        %v4870 = vor.u32 %v4868, %v4859
        %v4871 = vshll.u32 %v4723, 16
        %v4873 = vrot.slane %v4871, 1
        %v4874 = vsel %vm576, %v4870, %v4873
        %v4875 = vshrl.u32 %v4778, 16
        %v4877 = vor.u32 %v4875, %v4866
        %v4878 = vshll.u32 %v4779, 16
        %v4880 = vrot.slane %v4878, 1
        %v4881 = vsel %vm576, %v4877, %v4880
        %v4882 = vshrl.u32 %v4723, 16
        %v4884 = vor.u32 %v4882, %v4873
        %v4885 = vshll.u32 %v4725, 16
        %v4887 = vrot.slane %v4885, 1
        %v4888 = vsel %vm576, %v4884, %v4887
        %v4889 = vshrl.u32 %v4779, 16
        %v4891 = vor.u32 %v4889, %v4880
        %v4892 = vshll.u32 %v4780, 16
        %v4894 = vrot.slane %v4892, 1
        %v4895 = vsel %vm576, %v4891, %v4894
        %v4896 = vshrl.u32 %v4725, 16
        %v4898 = vor.u32 %v4896, %v4887
        %v4899 = vshll.u32 %v4727, 16
        %v4901 = vrot.slane %v4899, 1
        %v4902 = vsel %vm576, %v4898, %v4901
        %v4903 = vshrl.u32 %v4780, 16
        %v4905 = vor.u32 %v4903, %v4894
        %v4906 = vshll.u32 %v4781, 16
        %v4908 = vrot.slane %v4906, 1
        %v4909 = vsel %vm576, %v4905, %v4908
        %v4910 = vshrl.u32 %v4727, 16
        %v4912 = vor.u32 %v4910, %v4901
        %v4913 = vshll.u32 %v4729, 16
        %v4915 = vrot.slane %v4913, 1
        %v4916 = vsel %vm576, %v4912, %v4915
        %v4917 = vshrl.u32 %v4781, 16
        %v4919 = vor.u32 %v4917, %v4908
        %v4920 = vshll.u32 %v4783, 16
        %v4922 = vrot.slane %v4920, 1
        %v4923 = vsel %vm576, %v4919, %v4922
        %v4924 = vshrl.u32 %v4729, 16
        %v4926 = vor.u32 %v4924, %v4915
        %v4927 = vshll.u32 %v4731, 16
        %v4929 = vrot.slane %v4927, 1
        %v4930 = vsel %vm576, %v4926, %v4929
        %v4931 = vshrl.u32 %v4783, 16
        %v4933 = vor.u32 %v4931, %v4922
        %v4934 = vshll.u32 %v4785, 16
        %v4936 = vrot.slane %v4934, 1
        %v4937 = vsel %vm576, %v4933, %v4936
        %v4938 = vshrl.u32 %v4731, 16
        %v4940 = vor.u32 %v4938, %v4929
        %v4941 = vshll.u32 %v4733, 16
        %v4943 = vrot.slane %v4941, 1
        %v4944 = vsel %vm576, %v4940, %v4943
        %v4945 = vshrl.u32 %v4785, 16
        %v4947 = vor.u32 %v4945, %v4936
        %v4948 = vshll.u32 %v4787, 16
        %v4950 = vrot.slane %v4948, 1
        %v4951 = vsel %vm576, %v4947, %v4950
        %v4952 = vshrl.u32 %v4733, 16
        %v4954 = vor.u32 %v4952, %v4943
        %v4955 = vshll.u32 %v4735, 16
        %v4957 = vrot.slane %v4955, 1
        %v4958 = vsel %vm576, %v4954, %v4957
        %v4959 = vshrl.u32 %v4787, 16
        %v4961 = vor.u32 %v4959, %v4950
        %v4962 = vshll.u32 %v4789, 16
        %v4964 = vrot.slane %v4962, 1
        %v4965 = vsel %vm576, %v4961, %v4964
        %v4966 = vshrl.u32 %v4735, 16
        %v4968 = vor.u32 %v4966, %v4957
        %v4969 = vshll.u32 %v4737, 16
        %v4971 = vrot.slane %v4969, 1
        %v4972 = vsel %vm576, %v4968, %v4971
        %v4973 = vshrl.u32 %v4789, 16
        %v4975 = vor.u32 %v4973, %v4964
        %v4976 = vshll.u32 %v4791, 16
        %v4978 = vrot.slane %v4976, 1
        %v4979 = vsel %vm576, %v4975, %v4978
        %v4980 = vshrl.u32 %v4737, 16
        %v4982 = vor.u32 %v4980, %v4971
        %v4983 = vshrl.u32 %v4791, 16
        %v4985 = vor.u32 %v4983, %v4978
        %v5000 = vld [vmem:[%s3] sm:$0xf]
        %v5001 = vld [vmem:[%s3 + $0x4] sm:$0xf]
        %v5002 = vld [vmem:[%s3 + $0x8] sm:$0xf]
        %v5003 = vld [vmem:[%s3 + $0xc] sm:$0xf]
        %v5004 = vld [vmem:[%s3 + $0x10] sm:$0xf]
        %v5005 = vld [vmem:[%s3 + $0x14] sm:$0xf]
        %v5006 = vld [vmem:[%s3 + $0x18] sm:$0xf]
        %v5007 = vld [vmem:[%s3 + $0x1c] sm:$0xf]
        %v5008 = vld [vmem:[%s3 + $0x20] sm:$0xf]
        %v5009 = vld [vmem:[%s3 + $0x24] sm:$0xf]
        %v5010 = vld [vmem:[%s3 + $0x28] sm:$0xf]
        %v5011 = vld [vmem:[%s3 + $0x2c] sm:$0xf]
        %v5012 = vld [vmem:[%s3 + $0x30] sm:$0xf]
        %v5013 = vld [vmem:[%s3 + $0x34] sm:$0xf]
        %v5014 = vld [vmem:[%s3 + $0x38] sm:$0xf]
        %v5015 = vld [vmem:[%s3 + $0x3c] sm:$0xf]
        %v5016 = vld [vmem:[%s3 + $0x40] sm:$0xf]
        %v5017 = vld [vmem:[%s3 + $0x44] sm:$0xf]
        %v5018 = vld [vmem:[%s3 + $0x48] sm:$0xf]
        %v5019 = vld [vmem:[%s3 + $0x4c] sm:$0xf]
        %v5020 = vld [vmem:[%s3 + $0x50] sm:$0xf]
        %v5021 = vld [vmem:[%s3 + $0x54] sm:$0xf]
        %v5022 = vld [vmem:[%s3 + $0x58] sm:$0xf]
        %v5023 = vld [vmem:[%s3 + $0x5c] sm:$0xf]
        %v5024 = vld [vmem:[%s3 + $0x60] sm:$0xf]
        %v5025 = vld [vmem:[%s3 + $0x64] sm:$0xf]
        %v5026 = vld [vmem:[%s3 + $0x68] sm:$0xf]
        %v5027 = vld [vmem:[%s3 + $0x6c] sm:$0xf]
        %v5028 = vld [vmem:[%s3 + $0x70] sm:$0xf]
        %v5029 = vld [vmem:[%s3 + $0x74] sm:$0xf]
        %v5030 = vld [vmem:[%s3 + $0x78] sm:$0xf]
        %v5031 = vld [vmem:[%s3 + $0x7c] sm:$0xf]
        %v5032 = vld [vmem:[%s3 + $0x80] sm:$0xf]
        %v5033 = vld [vmem:[%s3 + $0x84] sm:$0xf]
        %v5034 = vld [vmem:[%s3 + $0x88] sm:$0xf]
        %v5035 = vld [vmem:[%s3 + $0x8c] sm:$0xf]
        %v5036 = vld [vmem:[%s3 + $0x90] sm:$0xf]
        %v5037 = vld [vmem:[%s3 + $0x94] sm:$0xf]
        %v5038 = vld [vmem:[%s3 + $0x98] sm:$0xf]
        %v5039 = vld [vmem:[%s3 + $0x9c] sm:$0xf]
        %v5040 = vld [vmem:[%s3 + $0xa0] sm:$0xf]
        %v5041 = vld [vmem:[%s3 + $0xa4] sm:$0xf]
        %v5042 = vld [vmem:[%s3 + $0xa8] sm:$0xf]
        %v5043 = vld [vmem:[%s3 + $0xac] sm:$0xf]
        %v5044 = vld [vmem:[%s3 + $0xb0] sm:$0xf]
        %v5045 = vld [vmem:[%s3 + $0xb4] sm:$0xf]
        %v5046 = vld [vmem:[%s3 + $0xb8] sm:$0xf]
        %v5047 = vld [vmem:[%s3 + $0xbc] sm:$0xf]
        %v5048 = vld [vmem:[%s3 + $0xc0] sm:$0xf]
        %v5049 = vld [vmem:[%s3 + $0xc4] sm:$0xf]
        %v5050 = vld [vmem:[%s3 + $0xc8] sm:$0xf]
        %v5051 = vld [vmem:[%s3 + $0xcc] sm:$0xf]
        %v5052 = vld [vmem:[%s3 + $0xd0] sm:$0xf]
        %v5053 = vld [vmem:[%s3 + $0xd4] sm:$0xf]
        %v5054 = vld [vmem:[%s4] sm:$0x1]
        %v5056 = vlaneseq
        %v5057 = vshrl.u32 %v5056, 7
        %v5058 = vsub.s32 0, %v5057
        %v5059 = vrot.slane %v5054, %v5058
        %v5115 = vunpack.c.l.b16 %v5000
        %v5116 = vunpack.c.l.b16 %v5001
        %v5117 = vunpack.c.l.b16 %v5002
        %v5118 = vunpack.c.l.b16 %v5003
        %v5119 = vunpack.c.l.b16 %v5004
        %v5120 = vunpack.c.l.b16 %v5005
        %v5121 = vunpack.c.l.b16 %v5006
        %v5122 = vunpack.c.l.b16 %v5007
        %v5123 = vunpack.c.l.b16 %v5008
        %v5124 = vunpack.c.l.b16 %v5009
        %v5125 = vunpack.c.l.b16 %v5010
        %v5126 = vunpack.c.l.b16 %v5011
        %v5127 = vunpack.c.l.b16 %v5012
        %v5128 = vunpack.c.l.b16 %v5013
        %v5129 = vunpack.c.l.b16 %v5014
        %v5130 = vunpack.c.l.b16 %v5015
        %v5131 = vunpack.c.l.b16 %v5016
        %v5132 = vunpack.c.l.b16 %v5017
        %v5133 = vunpack.c.l.b16 %v5018
        %v5134 = vunpack.c.l.b16 %v5019
        %v5135 = vunpack.c.l.b16 %v5020
        %v5136 = vunpack.c.l.b16 %v5021
        %v5137 = vunpack.c.l.b16 %v5022
        %v5138 = vunpack.c.l.b16 %v5023
        %v5139 = vunpack.c.l.b16 %v5024
        %v5140 = vunpack.c.l.b16 %v5025
        %v5141 = vunpack.c.l.b16 %v5026
        %v5142 = vunpack.c.l.b16 %v5027
        %v5143 = vunpack.c.l.b16 %v5028
        %v5144 = vunpack.c.l.b16 %v5029
        %v5145 = vunpack.c.l.b16 %v5030
        %v5146 = vunpack.c.l.b16 %v5031
        %v5147 = vunpack.c.l.b16 %v5032
        %v5148 = vunpack.c.l.b16 %v5033
        %v5149 = vunpack.c.l.b16 %v5034
        %v5150 = vunpack.c.l.b16 %v5035
        %v5151 = vunpack.c.l.b16 %v5036
        %v5152 = vunpack.c.l.b16 %v5037
        %v5153 = vunpack.c.l.b16 %v5038
        %v5154 = vunpack.c.l.b16 %v5039
        %v5155 = vunpack.c.l.b16 %v5040
        %v5156 = vunpack.c.l.b16 %v5041
        %v5157 = vunpack.c.l.b16 %v5042
        %v5158 = vunpack.c.l.b16 %v5043
        %v5159 = vunpack.c.l.b16 %v5044
        %v5160 = vunpack.c.l.b16 %v5045
        %v5161 = vunpack.c.l.b16 %v5046
        %v5162 = vunpack.c.l.b16 %v5047
        %v5163 = vunpack.c.l.b16 %v5048
        %v5164 = vunpack.c.l.b16 %v5049
        %v5165 = vunpack.c.l.b16 %v5050
        %v5166 = vunpack.c.l.b16 %v5051
        %v5167 = vunpack.c.l.b16 %v5052
        %v5168 = vunpack.c.l.b16 %v5053
        %v5169 = vpack.c.b16 %v5116, %v5115
        %v5170 = vpack.c.b16 %v5118, %v5117
        %v5171 = vpack.c.b16 %v5120, %v5119
        %v5172 = vpack.c.b16 %v5122, %v5121
        %v5173 = vpack.c.b16 %v5124, %v5123
        %v5174 = vpack.c.b16 %v5126, %v5125
        %v5175 = vpack.c.b16 %v5128, %v5127
        %v5176 = vpack.c.b16 %v5130, %v5129
        %v5177 = vpack.c.b16 %v5132, %v5131
        %v5178 = vpack.c.b16 %v5134, %v5133
        %v5179 = vpack.c.b16 %v5136, %v5135
        %v5180 = vpack.c.b16 %v5138, %v5137
        %v5181 = vpack.c.b16 %v5140, %v5139
        %v5182 = vpack.c.b16 %v5142, %v5141
        %v5183 = vpack.c.b16 %v5144, %v5143
        %v5184 = vpack.c.b16 %v5146, %v5145
        %v5185 = vpack.c.b16 %v5148, %v5147
        %v5186 = vpack.c.b16 %v5150, %v5149
        %v5187 = vpack.c.b16 %v5152, %v5151
        %v5188 = vpack.c.b16 %v5154, %v5153
        %v5189 = vpack.c.b16 %v5156, %v5155
        %v5190 = vpack.c.b16 %v5158, %v5157
        %v5191 = vpack.c.b16 %v5160, %v5159
        %v5192 = vpack.c.b16 %v5162, %v5161
        %v5193 = vpack.c.b16 %v5164, %v5163
        %v5194 = vpack.c.b16 %v5166, %v5165
        %v5195 = vpack.c.b16 %v5168, %v5167
        %v5224 = vsel %vm3601, %v4811, 0
        %v5227 = vsel %vm3601, %v4825, 0
        %v5230 = vsel %vm3601, %v4839, 0
        %v5233 = vsel %vm3601, %v4853, 0
        %v5236 = vsel %vm3601, %v4867, 0
        %v5239 = vsel %vm3601, %v4881, 0
        %v5242 = vsel %vm3601, %v4895, 0
        %v5245 = vsel %vm3601, %v4909, 0
        %v5248 = vsel %vm3601, %v4923, 0
        %v5251 = vsel %vm3601, %v4937, 0
        %v5254 = vsel %vm3601, %v4951, 0
        %v5257 = vsel %vm3601, %v4965, 0
        %v5260 = vsel %vm3601, %v4979, 0
        %v5263 = vsel %vm3601, %v4985, 0
        %5265 = vmatprep.subr.bf16.mxu0 0
        %5266 = vmatpush1.bf16.msra.mxu0 %v5169
        %5267 = vmatprep.subr.bf16.mxu0 0
        %5268 = vmatpush1.bf16.msra.mxu0 %v5170
        %5269 = vmatprep.subr.bf16.mxu0 0
        %5270 = vmatpush1.bf16.msra.mxu0 %v5171
        %5271 = vmatprep.subr.bf16.mxu0 0
        %5272 = vmatpush1.bf16.msra.mxu0 %v5172
        %5273 = vmatprep.subr.bf16.mxu0 0
        %5274 = vmatpush1.bf16.msra.mxu0 %v5173
        %5275 = vmatprep.subr.bf16.mxu0 0
        %5276 = vmatpush1.bf16.msra.mxu0 %v5174
        %5277 = vmatprep.subr.bf16.mxu0 0
        %5278 = vmatpush1.bf16.msra.mxu0 %v5175
        %5279 = vmatprep.subr.bf16.mxu0 0
        %5280 = vmatpush1.bf16.msra.mxu0 %v5176
        %5281 = vmatprep.subr.bf16.mxu0 0
        %5282 = vmatpush1.bf16.msra.mxu0 %v5177
        %5283 = vmatprep.subr.bf16.mxu0 0
        %5284 = vmatpush1.bf16.msra.mxu0 %v5178
        %5285 = vmatprep.subr.bf16.mxu0 0
        %5286 = vmatpush1.bf16.msra.mxu0 %v5179
        %5287 = vmatprep.subr.bf16.mxu0 0
        %5288 = vmatpush1.bf16.msra.mxu0 %v5180
        %5289 = vmatprep.subr.bf16.mxu0 0
        %5290 = vmatpush1.bf16.msra.mxu0 %v5181
        %5291 = vmatprep.subr.bf16.mxu0 0
        %5292 = vmatpush1.bf16.msra.mxu0 %v5182
        %5293 = vmatprep.subr.bf16.mxu0 0
        %5294 = vmatpush1.bf16.msra.mxu0 %v5183
        %5295 = vmatprep.subr.bf16.mxu0 0
        %5296 = vmatpush1.bf16.msra.mxu0 %v5184
        %5297 = vmatprep.mubr.bf16.mxu0 %v3923
        %5298 = vmatmul.mubr.bf16.gmra.mrb[0].mxu0 %v3717
        %v5299 = vpop.f32.mrb[0].mxu0
        %v5300 = vadd.f32 %v5059, %v5299
        %v5301 = vpop.f32.mrb[0].mxu0
        %v5302 = vpop.f32.mrb[0].mxu0
        %v5303 = vadd.f32 %v5059, %v5302
        %v5304 = vpop.f32.mrb[0].mxu0
        %5305 = vmatprep.mubr.bf16.mxu0 %v3926
        %5306 = vmatmul.mubr.bf16.gmra.mrb[0].mxu0 %v3720
        %v5307 = vpop.f32.mrb[0].mxu0
        %v5308 = vadd.f32 %v5059, %v5307
        %v5309 = vpop.f32.mrb[0].mxu0
        %v5310 = vpop.f32.mrb[0].mxu0
        %v5311 = vadd.f32 %v5059, %v5310
        %v5312 = vpop.f32.mrb[0].mxu0
        %5313 = vmatprep.mubr.bf16.mxu0 %v3929
        %5314 = vmatmul.mubr.bf16.gmra.mrb[0].mxu0 %v3723
        %v5315 = vpop.f32.mrb[0].mxu0
        %v5316 = vadd.f32 %v5059, %v5315
        %v5317 = vpop.f32.mrb[0].mxu0
        %v5318 = vpop.f32.mrb[0].mxu0
        %v5319 = vadd.f32 %v5059, %v5318
        %v5320 = vpop.f32.mrb[0].mxu0
        %5321 = vmatprep.mubr.bf16.mxu0 %v3932
        %5322 = vmatmul.mubr.bf16.gmra.mrb[0].mxu0 %v3726
        %v5323 = vpop.f32.mrb[0].mxu0
        %v5324 = vadd.f32 %v5059, %v5323
        %v5325 = vpop.f32.mrb[0].mxu0
        %v5326 = vpop.f32.mrb[0].mxu0
        %v5327 = vadd.f32 %v5059, %v5326
        %v5328 = vpop.f32.mrb[0].mxu0
        %5329 = vmatprep.mubr.bf16.mxu0 %v3935
        %5330 = vmatmul.mubr.bf16.gmra.mrb[0].mxu0 %v3729
        %v5331 = vpop.f32.mrb[0].mxu0
        %v5332 = vadd.f32 %v5059, %v5331
        %v5333 = vpop.f32.mrb[0].mxu0
        %v5334 = vpop.f32.mrb[0].mxu0
        %v5335 = vadd.f32 %v5059, %v5334
        %v5336 = vpop.f32.mrb[0].mxu0
        %5337 = vmatprep.mubr.bf16.mxu0 %v3938
        %5338 = vmatmul.mubr.bf16.gmra.mrb[0].mxu0 %v3732
        %v5339 = vpop.f32.mrb[0].mxu0
        %v5340 = vadd.f32 %v5059, %v5339
        %v5341 = vpop.f32.mrb[0].mxu0
        %v5342 = vpop.f32.mrb[0].mxu0
        %v5343 = vadd.f32 %v5059, %v5342
        %v5344 = vpop.f32.mrb[0].mxu0
        %5345 = vmatprep.mubr.bf16.mxu0 %v3941
        %5346 = vmatmul.mubr.bf16.gmra.mrb[0].mxu0 %v3735
        %v5347 = vpop.f32.mrb[0].mxu0
        %v5348 = vadd.f32 %v5059, %v5347
        %v5349 = vpop.f32.mrb[0].mxu0
        %v5350 = vpop.f32.mrb[0].mxu0
        %v5351 = vadd.f32 %v5059, %v5350
        %v5352 = vpop.f32.mrb[0].mxu0
        %5353 = vmatprep.mubr.bf16.mxu0 %v3944
        %5354 = vmatmul.mubr.bf16.gmra.mrb[0].mxu0 %v3738
        %v5355 = vpop.f32.mrb[0].mxu0
        %v5356 = vadd.f32 %v5059, %v5355
        %v5357 = vpop.f32.mrb[0].mxu0
        %v5358 = vpop.f32.mrb[0].mxu0
        %v5359 = vadd.f32 %v5059, %v5358
        %v5360 = vpop.f32.mrb[0].mxu0
        %5361 = vmatprep.mubr.bf16.mxu0 %v3947
        %5362 = vmatmul.mubr.bf16.gmra.mrb[0].mxu0 %v3741
        %v5363 = vpop.f32.mrb[0].mxu0
        %v5364 = vadd.f32 %v5059, %v5363
        %v5365 = vpop.f32.mrb[0].mxu0
        %v5366 = vpop.f32.mrb[0].mxu0
        %v5367 = vadd.f32 %v5059, %v5366
        %v5368 = vpop.f32.mrb[0].mxu0
        %5369 = vmatprep.mubr.bf16.mxu0 %v3950
        %5370 = vmatmul.mubr.bf16.gmra.mrb[0].mxu0 %v3744
        %v5371 = vpop.f32.mrb[0].mxu0
        %v5372 = vadd.f32 %v5059, %v5371
        %v5373 = vpop.f32.mrb[0].mxu0
        %v5374 = vpop.f32.mrb[0].mxu0
        %v5375 = vadd.f32 %v5059, %v5374
        %v5376 = vpop.f32.mrb[0].mxu0
        %5377 = vmatprep.mubr.bf16.mxu0 %v3953
        %5378 = vmatmul.mubr.bf16.gmra.mrb[0].mxu0 %v3747
        %v5379 = vpop.f32.mrb[0].mxu0
        %v5380 = vadd.f32 %v5059, %v5379
        %v5381 = vpop.f32.mrb[0].mxu0
        %v5382 = vpop.f32.mrb[0].mxu0
        %v5383 = vadd.f32 %v5059, %v5382
        %v5384 = vpop.f32.mrb[0].mxu0
        %5385 = vmatprep.mubr.bf16.mxu0 %v3956
        %5386 = vmatmul.mubr.bf16.gmra.mrb[0].mxu0 %v3750
        %v5387 = vpop.f32.mrb[0].mxu0
        %v5388 = vadd.f32 %v5059, %v5387
        %v5389 = vpop.f32.mrb[0].mxu0
        %v5390 = vpop.f32.mrb[0].mxu0
        %v5391 = vadd.f32 %v5059, %v5390
        %v5392 = vpop.f32.mrb[0].mxu0
        %5393 = vmatprep.mubr.bf16.mxu0 %v3959
        %5394 = vmatmul.mubr.bf16.gmra.mrb[0].mxu0 %v3753
        %v5395 = vpop.f32.mrb[0].mxu0
        %v5396 = vadd.f32 %v5059, %v5395
        %v5397 = vpop.f32.mrb[0].mxu0
        %v5398 = vpop.f32.mrb[0].mxu0
        %v5399 = vadd.f32 %v5059, %v5398
        %v5400 = vpop.f32.mrb[0].mxu0
        %5401 = vmatprep.mubr.bf16.mxu0 %v3962
        %5402 = vmatmul.mubr.bf16.gmra.mrb[0].mxu0 %v3756
        %v5403 = vpop.f32.mrb[0].mxu0
        %v5404 = vadd.f32 %v5059, %v5403
        %v5405 = vpop.f32.mrb[0].mxu0
        %v5406 = vpop.f32.mrb[0].mxu0
        %v5407 = vpop.f32.mrb[0].mxu0
        %5408 = vdwg.mxu0
        %5409 = vmatprep.subr.bf16.mxu0 0
        %5410 = vmatpush1.bf16.msra.mxu0 %v5185
        %5411 = vmatprep.subr.bf16.mxu0 0
        %5412 = vmatpush1.bf16.msra.mxu0 %v5186
        %5413 = vmatprep.subr.bf16.mxu0 0
        %5414 = vmatpush1.bf16.msra.mxu0 %v5187
        %5415 = vmatprep.subr.bf16.mxu0 0
        %5416 = vmatpush1.bf16.msra.mxu0 %v5188
        %5417 = vmatprep.subr.bf16.mxu0 0
        %5418 = vmatpush1.bf16.msra.mxu0 %v5189
        %5419 = vmatprep.subr.bf16.mxu0 0
        %5420 = vmatpush1.bf16.msra.mxu0 %v5190
        %5421 = vmatprep.subr.bf16.mxu0 0
        %5422 = vmatpush1.bf16.msra.mxu0 %v5191
        %5423 = vmatprep.subr.bf16.mxu0 0
        %5424 = vmatpush1.bf16.msra.mxu0 %v5192
        %5425 = vmatprep.subr.bf16.mxu0 0
        %5426 = vmatpush1.bf16.msra.mxu0 %v5193
        %5427 = vmatprep.subr.bf16.mxu0 0
        %5428 = vmatpush1.bf16.msra.mxu0 %v5194
        %5429 = vmatprep.subr.bf16.mxu0 0
        %5430 = vmatpush1.bf16.msra.mxu0 %v5195
        %5431 = vmatprep.subr.bf16.mxu0 0
        %5432 = vmatpush1.bf16.msra.mxu0 0
        %5433 = vmatprep.subr.bf16.mxu0 0
        %5434 = vmatpush1.bf16.msra.mxu0 0
        %5435 = vmatprep.subr.bf16.mxu0 0
        %5436 = vmatpush1.bf16.msra.mxu0 0
        %5437 = vmatprep.subr.bf16.mxu0 0
        %5438 = vmatpush1.bf16.msra.mxu0 0
        %5439 = vmatprep.subr.bf16.mxu0 0
        %5440 = vmatpush1.bf16.msra.mxu0 0
        %5441 = vmatprep.mubr.bf16.mxu0 %v5224
        %5442 = vmatmul.mubr.bf16.gmra.mrb[0].mxu0 %v4801
        %v5443 = vpop.f32.mrb[0].mxu0
        %v5444 = vadd.f32 %v5300, %v5443
        %v5445 = vpop.f32.mrb[0].mxu0
        %v5446 = vpop.f32.mrb[0].mxu0
        %v5447 = vadd.f32 %v5303, %v5446
        %v5448 = vpop.f32.mrb[0].mxu0
        %5449 = vmatprep.mubr.bf16.mxu0 %v5227
        %5450 = vmatmul.mubr.bf16.gmra.mrb[0].mxu0 %v4818
        %v5451 = vpop.f32.mrb[0].mxu0
        %v5452 = vadd.f32 %v5308, %v5451
        %v5453 = vpop.f32.mrb[0].mxu0
        %v5454 = vpop.f32.mrb[0].mxu0
        %v5455 = vadd.f32 %v5311, %v5454
        %v5456 = vpop.f32.mrb[0].mxu0
        %5457 = vmatprep.mubr.bf16.mxu0 %v5230
        %5458 = vmatmul.mubr.bf16.gmra.mrb[0].mxu0 %v4832
        %v5459 = vpop.f32.mrb[0].mxu0
        %v5460 = vadd.f32 %v5316, %v5459
        %v5461 = vpop.f32.mrb[0].mxu0
        %v5462 = vpop.f32.mrb[0].mxu0
        %v5463 = vadd.f32 %v5319, %v5462
        %v5464 = vpop.f32.mrb[0].mxu0
        %5465 = vmatprep.mubr.bf16.mxu0 %v5233
        %5466 = vmatmul.mubr.bf16.gmra.mrb[0].mxu0 %v4846
        %v5467 = vpop.f32.mrb[0].mxu0
        %v5468 = vadd.f32 %v5324, %v5467
        %v5469 = vpop.f32.mrb[0].mxu0
        %v5470 = vpop.f32.mrb[0].mxu0
        %v5471 = vadd.f32 %v5327, %v5470
        %v5472 = vpop.f32.mrb[0].mxu0
        %5473 = vmatprep.mubr.bf16.mxu0 %v5236
        %5474 = vmatmul.mubr.bf16.gmra.mrb[0].mxu0 %v4860
        %v5475 = vpop.f32.mrb[0].mxu0
        %v5476 = vadd.f32 %v5332, %v5475
        %v5477 = vpop.f32.mrb[0].mxu0
        %v5478 = vpop.f32.mrb[0].mxu0
        %v5479 = vadd.f32 %v5335, %v5478
        %v5480 = vpop.f32.mrb[0].mxu0
        %5481 = vmatprep.mubr.bf16.mxu0 %v5239
        %5482 = vmatmul.mubr.bf16.gmra.mrb[0].mxu0 %v4874
        %v5483 = vpop.f32.mrb[0].mxu0
        %v5484 = vadd.f32 %v5340, %v5483
        %v5485 = vpop.f32.mrb[0].mxu0
        %v5486 = vpop.f32.mrb[0].mxu0
        %v5487 = vadd.f32 %v5343, %v5486
        %v5488 = vpop.f32.mrb[0].mxu0
        %5489 = vmatprep.mubr.bf16.mxu0 %v5242
        %5490 = vmatmul.mubr.bf16.gmra.mrb[0].mxu0 %v4888
        %v5491 = vpop.f32.mrb[0].mxu0
        %v5492 = vadd.f32 %v5348, %v5491
        %v5493 = vpop.f32.mrb[0].mxu0
        %v5494 = vpop.f32.mrb[0].mxu0
        %v5495 = vadd.f32 %v5351, %v5494
        %v5496 = vpop.f32.mrb[0].mxu0
        %5497 = vmatprep.mubr.bf16.mxu0 %v5245
        %5498 = vmatmul.mubr.bf16.gmra.mrb[0].mxu0 %v4902
        %v5499 = vpop.f32.mrb[0].mxu0
        %v5500 = vadd.f32 %v5356, %v5499
        %v5501 = vpop.f32.mrb[0].mxu0
        %v5502 = vpop.f32.mrb[0].mxu0
        %v5503 = vadd.f32 %v5359, %v5502
        %v5504 = vpop.f32.mrb[0].mxu0
        %5505 = vmatprep.mubr.bf16.mxu0 %v5248
        %5506 = vmatmul.mubr.bf16.gmra.mrb[0].mxu0 %v4916
        %v5507 = vpop.f32.mrb[0].mxu0
        %v5508 = vadd.f32 %v5364, %v5507
        %v5509 = vpop.f32.mrb[0].mxu0
        %v5510 = vpop.f32.mrb[0].mxu0
        %v5511 = vadd.f32 %v5367, %v5510
        %v5512 = vpop.f32.mrb[0].mxu0
        %5513 = vmatprep.mubr.bf16.mxu0 %v5251
        %5514 = vmatmul.mubr.bf16.gmra.mrb[0].mxu0 %v4930
        %v5515 = vpop.f32.mrb[0].mxu0
        %v5516 = vadd.f32 %v5372, %v5515
        %v5517 = vpop.f32.mrb[0].mxu0
        %v5518 = vpop.f32.mrb[0].mxu0
        %v5519 = vadd.f32 %v5375, %v5518
        %v5520 = vpop.f32.mrb[0].mxu0
        %5521 = vmatprep.mubr.bf16.mxu0 %v5254
        %5522 = vmatmul.mubr.bf16.gmra.mrb[0].mxu0 %v4944
        %v5523 = vpop.f32.mrb[0].mxu0
        %v5524 = vadd.f32 %v5380, %v5523
        %v5525 = vpop.f32.mrb[0].mxu0
        %v5526 = vpop.f32.mrb[0].mxu0
        %v5527 = vadd.f32 %v5383, %v5526
        %v5528 = vpop.f32.mrb[0].mxu0
        %5529 = vmatprep.mubr.bf16.mxu0 %v5257
        %5530 = vmatmul.mubr.bf16.gmra.mrb[0].mxu0 %v4958
        %v5531 = vpop.f32.mrb[0].mxu0
        %v5532 = vadd.f32 %v5388, %v5531
        %v5533 = vpop.f32.mrb[0].mxu0
        %v5534 = vpop.f32.mrb[0].mxu0
        %v5535 = vadd.f32 %v5391, %v5534
        %v5536 = vpop.f32.mrb[0].mxu0
        %5537 = vmatprep.mubr.bf16.mxu0 %v5260
        %5538 = vmatmul.mubr.bf16.gmra.mrb[0].mxu0 %v4972
        %v5539 = vpop.f32.mrb[0].mxu0
        %v5540 = vadd.f32 %v5396, %v5539
        %v5541 = vpop.f32.mrb[0].mxu0
        %v5542 = vpop.f32.mrb[0].mxu0
        %v5543 = vadd.f32 %v5399, %v5542
        %v5544 = vpop.f32.mrb[0].mxu0
        %5545 = vmatprep.mubr.bf16.mxu0 %v5263
        %5546 = vmatmul.mubr.bf16.gmra.mrb[0].mxu0 %v4982
        %v5547 = vpop.f32.mrb[0].mxu0
        %v5548 = vadd.f32 %v5404, %v5547
        %v5549 = vpop.f32.mrb[0].mxu0
        %v5550 = vpop.f32.mrb[0].mxu0
        %v5551 = vpop.f32.mrb[0].mxu0
        %5552 = vdwg.mxu0
        %v5553 = vmax.f32 %v5444, 0.0
        %v5554 = vmax.f32 %v5447, 0.0
        %v5555 = vmax.f32 %v5452, 0.0
        %v5556 = vmax.f32 %v5455, 0.0
        %v5557 = vmax.f32 %v5460, 0.0
        %v5558 = vmax.f32 %v5463, 0.0
        %v5559 = vmax.f32 %v5468, 0.0
        %v5560 = vmax.f32 %v5471, 0.0
        %v5561 = vmax.f32 %v5476, 0.0
        %v5562 = vmax.f32 %v5479, 0.0
        %v5563 = vmax.f32 %v5484, 0.0
        %v5564 = vmax.f32 %v5487, 0.0
        %v5565 = vmax.f32 %v5492, 0.0
        %v5566 = vmax.f32 %v5495, 0.0
        %v5567 = vmax.f32 %v5500, 0.0
        %v5568 = vmax.f32 %v5503, 0.0
        %v5569 = vmax.f32 %v5508, 0.0
        %v5570 = vmax.f32 %v5511, 0.0
        %v5571 = vmax.f32 %v5516, 0.0
        %v5572 = vmax.f32 %v5519, 0.0
        %v5573 = vmax.f32 %v5524, 0.0
        %v5574 = vmax.f32 %v5527, 0.0
        %v5575 = vmax.f32 %v5532, 0.0
        %v5576 = vmax.f32 %v5535, 0.0
        %v5577 = vmax.f32 %v5540, 0.0
        %v5578 = vmax.f32 %v5543, 0.0
        %v5579 = vmax.f32 %v5548, 0.0
        %v5580 = vmul.f32 %v5553, %v1774
        %v5581 = vmul.f32 %v5554, %v1779
        %v5582 = vmul.f32 %v5555, %v1784
        %v5583 = vmul.f32 %v5556, %v1789
        %v5584 = vmul.f32 %v5557, %v1794
        %v5585 = vmul.f32 %v5558, %v1799
        %v5586 = vmul.f32 %v5559, %v1804
        %v5587 = vmul.f32 %v5560, %v1809
        %v5588 = vmul.f32 %v5561, %v1814
        %v5589 = vmul.f32 %v5562, %v1819
        %v5590 = vmul.f32 %v5563, %v1824
        %v5591 = vmul.f32 %v5564, %v1829
        %v5592 = vmul.f32 %v5565, %v1834
        %v5593 = vmul.f32 %v5566, %v1839
        %v5594 = vmul.f32 %v5567, %v1844
        %v5595 = vmul.f32 %v5568, %v1849
        %v5596 = vmul.f32 %v5569, %v1854
        %v5597 = vmul.f32 %v5570, %v1859
        %v5598 = vmul.f32 %v5571, %v1864
        %v5599 = vmul.f32 %v5572, %v1869
        %v5600 = vmul.f32 %v5573, %v1874
        %v5601 = vmul.f32 %v5574, %v1879
        %v5602 = vmul.f32 %v5575, %v1884
        %v5603 = vmul.f32 %v5576, %v1889
        %v5604 = vmul.f32 %v5577, %v1894
        %v5605 = vmul.f32 %v5578, %v1899
        %v5606 = vmul.f32 %v5579, %v1904
        %v5607 = vpack.c.bf16 %v5581, %v5580
        %v5608 = vpack.c.bf16 %v5583, %v5582
        %v5609 = vpack.c.bf16 %v5585, %v5584
        %v5610 = vpack.c.bf16 %v5587, %v5586
        %v5611 = vpack.c.bf16 %v5589, %v5588
        %v5612 = vpack.c.bf16 %v5591, %v5590
        %v5613 = vpack.c.bf16 %v5593, %v5592
        %v5614 = vpack.c.bf16 %v5595, %v5594
        %v5615 = vpack.c.bf16 %v5597, %v5596
        %v5616 = vpack.c.bf16 %v5599, %v5598
        %v5617 = vpack.c.bf16 %v5601, %v5600
        %v5618 = vpack.c.bf16 %v5603, %v5602
        %v5619 = vpack.c.bf16 %v5605, %v5604
        %v5620 = vpack.c.bf16 %v5606, %v5606
        %v5635 = vunpack.c.l.b16 %v5607
        %v5636 = vunpack.c.h.b16 %v5607
        %v5637 = vunpack.c.l.b16 %v5608
        %v5638 = vunpack.c.h.b16 %v5608
        %v5639 = vunpack.c.l.b16 %v5609
        %v5640 = vunpack.c.h.b16 %v5609
        %v5641 = vunpack.c.l.b16 %v5610
        %v5642 = vunpack.c.h.b16 %v5610
        %v5643 = vunpack.c.l.b16 %v5611
        %v5644 = vunpack.c.h.b16 %v5611
        %v5645 = vunpack.c.l.b16 %v5612
        %v5646 = vunpack.c.h.b16 %v5612
        %v5647 = vunpack.c.l.b16 %v5613
        %v5648 = vunpack.c.h.b16 %v5613
        %v5649 = vunpack.c.l.b16 %v5614
        %v5650 = vunpack.c.h.b16 %v5614
        %v5651 = vunpack.c.l.b16 %v5615
        %v5652 = vunpack.c.h.b16 %v5615
        %v5653 = vunpack.c.l.b16 %v5616
        %v5654 = vunpack.c.h.b16 %v5616
        %v5655 = vunpack.c.l.b16 %v5617
        %v5656 = vunpack.c.h.b16 %v5617
        %v5657 = vunpack.c.l.b16 %v5618
        %v5658 = vunpack.c.h.b16 %v5618
        %v5659 = vunpack.c.l.b16 %v5619
        %v5660 = vunpack.c.h.b16 %v5619
        %v5661 = vunpack.c.l.b16 %v5620
        %v5662 = vpack.c.b16 %v5635, %v5635
        %v5663 = vpack.c.b16 %v5636, %v5636
        %v5664 = vpack.c.b16 %v5637, %v5637
        %v5665 = vpack.c.b16 %v5638, %v5638
        %v5666 = vpack.c.b16 %v5639, %v5639
        %v5667 = vpack.c.b16 %v5640, %v5640
        %v5668 = vpack.c.b16 %v5641, %v5641
        %v5669 = vpack.c.b16 %v5642, %v5642
        %v5670 = vpack.c.b16 %v5643, %v5643
        %v5671 = vpack.c.b16 %v5644, %v5644
        %v5672 = vpack.c.b16 %v5645, %v5645
        %v5673 = vpack.c.b16 %v5646, %v5646
        %v5674 = vpack.c.b16 %v5647, %v5647
        %v5675 = vpack.c.b16 %v5648, %v5648
        %v5676 = vpack.c.b16 %v5649, %v5649
        %v5677 = vpack.c.b16 %v5650, %v5650
        %v5678 = vpack.c.b16 %v5651, %v5651
        %v5679 = vpack.c.b16 %v5652, %v5652
        %v5680 = vpack.c.b16 %v5653, %v5653
        %v5681 = vpack.c.b16 %v5654, %v5654
        %v5682 = vpack.c.b16 %v5655, %v5655
        %v5683 = vpack.c.b16 %v5656, %v5656
        %v5684 = vpack.c.b16 %v5657, %v5657
        %v5685 = vpack.c.b16 %v5658, %v5658
        %v5686 = vpack.c.b16 %v5659, %v5659
        %v5687 = vpack.c.b16 %v5660, %v5660
        %v5688 = vpack.c.b16 %v5661, %v5661
        %v5690 = vshrl.u32 %v5662, 16
        %v5692 = vrot.slane %v5690, 6
        %v5693 = vshll.u32 %v5662, 16
        %v5695 = vrot.slane %v5693, 7
        %v5696 = vor.u32 %v5692, %v5695
        %v5697 = vrot.slane %v5696, 4
        %v5699 = vshrl.u32 %v5663, 16
        %v5701 = vrot.slane %v5699, 6
        %v5702 = vshll.u32 %v5663, 16
        %v5704 = vrot.slane %v5702, 7
        %v5705 = vor.u32 %v5701, %v5704
        %v5706 = vsel %vm2017, %v5697, %v5705
        %v5707 = vrot.slane %v5705, 4
        %v5709 = vshrl.u32 %v5664, 16
        %v5711 = vrot.slane %v5709, 6
        %v5712 = vshll.u32 %v5664, 16
        %v5714 = vrot.slane %v5712, 7
        %v5715 = vor.u32 %v5711, %v5714
        %v5716 = vsel %vm2017, %v5707, %v5715
        %v5717 = vrot.slane %v5715, 4
        %v5719 = vshrl.u32 %v5665, 16
        %v5721 = vrot.slane %v5719, 6
        %v5722 = vshll.u32 %v5665, 16
        %v5724 = vrot.slane %v5722, 7
        %v5725 = vor.u32 %v5721, %v5724
        %v5726 = vsel %vm2017, %v5717, %v5725
        %v5727 = vrot.slane %v5725, 4
        %v5729 = vshrl.u32 %v5666, 16
        %v5731 = vrot.slane %v5729, 6
        %v5732 = vshll.u32 %v5666, 16
        %v5734 = vrot.slane %v5732, 7
        %v5735 = vor.u32 %v5731, %v5734
        %v5736 = vsel %vm2017, %v5727, %v5735
        %v5737 = vrot.slane %v5735, 4
        %v5739 = vshrl.u32 %v5667, 16
        %v5741 = vrot.slane %v5739, 6
        %v5742 = vshll.u32 %v5667, 16
        %v5744 = vrot.slane %v5742, 7
        %v5745 = vor.u32 %v5741, %v5744
        %v5746 = vsel %vm2017, %v5737, %v5745
        %v5747 = vrot.slane %v5745, 4
        %v5749 = vshrl.u32 %v5668, 16
        %v5751 = vrot.slane %v5749, 6
        %v5752 = vshll.u32 %v5668, 16
        %v5754 = vrot.slane %v5752, 7
        %v5755 = vor.u32 %v5751, %v5754
        %v5756 = vsel %vm2017, %v5747, %v5755
        %v5757 = vrot.slane %v5755, 4
        %v5759 = vshrl.u32 %v5669, 16
        %v5761 = vrot.slane %v5759, 6
        %v5762 = vshll.u32 %v5669, 16
        %v5764 = vrot.slane %v5762, 7
        %v5765 = vor.u32 %v5761, %v5764
        %v5766 = vsel %vm2017, %v5757, %v5765
        %v5767 = vrot.slane %v5765, 4
        %v5769 = vshrl.u32 %v5670, 16
        %v5771 = vrot.slane %v5769, 6
        %v5772 = vshll.u32 %v5670, 16
        %v5774 = vrot.slane %v5772, 7
        %v5775 = vor.u32 %v5771, %v5774
        %v5776 = vsel %vm2017, %v5767, %v5775
        %v5777 = vrot.slane %v5775, 4
        %v5779 = vshrl.u32 %v5671, 16
        %v5781 = vrot.slane %v5779, 6
        %v5782 = vshll.u32 %v5671, 16
        %v5784 = vrot.slane %v5782, 7
        %v5785 = vor.u32 %v5781, %v5784
        %v5786 = vsel %vm2017, %v5777, %v5785
        %v5787 = vrot.slane %v5785, 4
        %v5789 = vshrl.u32 %v5672, 16
        %v5791 = vrot.slane %v5789, 6
        %v5792 = vshll.u32 %v5672, 16
        %v5794 = vrot.slane %v5792, 7
        %v5795 = vor.u32 %v5791, %v5794
        %v5796 = vsel %vm2017, %v5787, %v5795
        %v5797 = vrot.slane %v5795, 4
        %v5799 = vshrl.u32 %v5673, 16
        %v5801 = vrot.slane %v5799, 6
        %v5802 = vshll.u32 %v5673, 16
        %v5804 = vrot.slane %v5802, 7
        %v5805 = vor.u32 %v5801, %v5804
        %v5806 = vsel %vm2017, %v5797, %v5805
        %v5807 = vrot.slane %v5805, 4
        %v5809 = vshrl.u32 %v5674, 16
        %v5811 = vrot.slane %v5809, 6
        %v5812 = vshll.u32 %v5674, 16
        %v5814 = vrot.slane %v5812, 7
        %v5815 = vor.u32 %v5811, %v5814
        %v5816 = vsel %vm2017, %v5807, %v5815
        %v5817 = vrot.slane %v5815, 4
        %v5819 = vshrl.u32 %v5675, 16
        %v5821 = vrot.slane %v5819, 6
        %v5822 = vshll.u32 %v5675, 16
        %v5824 = vrot.slane %v5822, 7
        %v5825 = vor.u32 %v5821, %v5824
        %v5826 = vsel %vm2017, %v5817, %v5825
        %v5827 = vrot.slane %v5825, 4
        %v5829 = vshrl.u32 %v5676, 16
        %v5831 = vrot.slane %v5829, 6
        %v5832 = vshll.u32 %v5676, 16
        %v5834 = vrot.slane %v5832, 7
        %v5835 = vor.u32 %v5831, %v5834
        %v5836 = vsel %vm2017, %v5827, %v5835
        %v5837 = vrot.slane %v5835, 4
        %v5839 = vshrl.u32 %v5677, 16
        %v5841 = vrot.slane %v5839, 6
        %v5842 = vshll.u32 %v5677, 16
        %v5844 = vrot.slane %v5842, 7
        %v5845 = vor.u32 %v5841, %v5844
        %v5846 = vsel %vm2017, %v5837, %v5845
        %v5847 = vrot.slane %v5845, 4
        %v5849 = vshrl.u32 %v5678, 16
        %v5851 = vrot.slane %v5849, 6
        %v5852 = vshll.u32 %v5678, 16
        %v5854 = vrot.slane %v5852, 7
        %v5855 = vor.u32 %v5851, %v5854
        %v5856 = vsel %vm2017, %v5847, %v5855
        %v5857 = vrot.slane %v5855, 4
        %v5859 = vshrl.u32 %v5679, 16
        %v5861 = vrot.slane %v5859, 6
        %v5862 = vshll.u32 %v5679, 16
        %v5864 = vrot.slane %v5862, 7
        %v5865 = vor.u32 %v5861, %v5864
        %v5866 = vsel %vm2017, %v5857, %v5865
        %v5867 = vrot.slane %v5865, 4
        %v5869 = vshrl.u32 %v5680, 16
        %v5871 = vrot.slane %v5869, 6
        %v5872 = vshll.u32 %v5680, 16
        %v5874 = vrot.slane %v5872, 7
        %v5875 = vor.u32 %v5871, %v5874
        %v5876 = vsel %vm2017, %v5867, %v5875
        %v5877 = vrot.slane %v5875, 4
        %v5879 = vshrl.u32 %v5681, 16
        %v5881 = vrot.slane %v5879, 6
        %v5882 = vshll.u32 %v5681, 16
        %v5884 = vrot.slane %v5882, 7
        %v5885 = vor.u32 %v5881, %v5884
        %v5886 = vsel %vm2017, %v5877, %v5885
        %v5887 = vrot.slane %v5885, 4
        %v5889 = vshrl.u32 %v5682, 16
        %v5891 = vrot.slane %v5889, 6
        %v5892 = vshll.u32 %v5682, 16
        %v5894 = vrot.slane %v5892, 7
        %v5895 = vor.u32 %v5891, %v5894
        %v5896 = vsel %vm2017, %v5887, %v5895
        %v5897 = vrot.slane %v5895, 4
        %v5899 = vshrl.u32 %v5683, 16
        %v5901 = vrot.slane %v5899, 6
        %v5902 = vshll.u32 %v5683, 16
        %v5904 = vrot.slane %v5902, 7
        %v5905 = vor.u32 %v5901, %v5904
        %v5906 = vsel %vm2017, %v5897, %v5905
        %v5907 = vrot.slane %v5905, 4
        %v5909 = vshrl.u32 %v5684, 16
        %v5911 = vrot.slane %v5909, 6
        %v5912 = vshll.u32 %v5684, 16
        %v5914 = vrot.slane %v5912, 7
        %v5915 = vor.u32 %v5911, %v5914
        %v5916 = vsel %vm2017, %v5907, %v5915
        %v5917 = vrot.slane %v5915, 4
        %v5919 = vshrl.u32 %v5685, 16
        %v5921 = vrot.slane %v5919, 6
        %v5922 = vshll.u32 %v5685, 16
        %v5924 = vrot.slane %v5922, 7
        %v5925 = vor.u32 %v5921, %v5924
        %v5926 = vsel %vm2017, %v5917, %v5925
        %v5927 = vrot.slane %v5925, 4
        %v5929 = vshrl.u32 %v5686, 16
        %v5931 = vrot.slane %v5929, 6
        %v5932 = vshll.u32 %v5686, 16
        %v5934 = vrot.slane %v5932, 7
        %v5935 = vor.u32 %v5931, %v5934
        %v5936 = vsel %vm2017, %v5927, %v5935
        %v5937 = vrot.slane %v5935, 4
        %v5939 = vshrl.u32 %v5687, 16
        %v5941 = vrot.slane %v5939, 6
        %v5942 = vshll.u32 %v5687, 16
        %v5944 = vrot.slane %v5942, 7
        %v5945 = vor.u32 %v5941, %v5944
        %v5946 = vsel %vm2017, %v5937, %v5945
        %v5947 = vrot.slane %v5945, 4
        %v5949 = vshrl.u32 %v5688, 16
        %v5951 = vrot.slane %v5949, 6
        %v5952 = vshll.u32 %v5688, 16
        %v5954 = vrot.slane %v5952, 7
        %v5955 = vor.u32 %v5951, %v5954
        %v5956 = vsel %vm2017, %v5947, %v5955
        %v5957 = vrot.slane %v5955, 4
        %v5986 = vld [vmem:[#allocation3 + $0x14] sm:$0xe]
        %v5987 = vsel %vm2317, %v5696, %v5986
        %5988 = vst [vmem:[#allocation3 + $0x14] sm:$0xe] %v5987
        %5989 = vst.msk [vmem:[#allocation3 + $0x18] sm:$0xf] %vm386, %v5706
        %5990 = vst.msk [vmem:[#allocation3 + $0x1c] sm:$0xf] %vm386, %v5716
        %5991 = vst.msk [vmem:[#allocation3 + $0x20] sm:$0xf] %vm386, %v5726
        %5992 = vst.msk [vmem:[#allocation3 + $0x24] sm:$0xf] %vm386, %v5736
        %5993 = vst.msk [vmem:[#allocation3 + $0x28] sm:$0xf] %vm386, %v5746
        %5994 = vst.msk [vmem:[#allocation3 + $0x2c] sm:$0xf] %vm386, %v5756
        %5995 = vst.msk [vmem:[#allocation3 + $0x30] sm:$0xf] %vm386, %v5766
        %5996 = vst.msk [vmem:[#allocation3 + $0x34] sm:$0xf] %vm386, %v5776
        %5997 = vst.msk [vmem:[#allocation3 + $0x38] sm:$0xf] %vm386, %v5786
        %5998 = vst.msk [vmem:[#allocation3 + $0x3c] sm:$0xf] %vm386, %v5796
        %5999 = vst.msk [vmem:[#allocation3 + $0x40] sm:$0xf] %vm386, %v5806
        %6000 = vst.msk [vmem:[#allocation3 + $0x44] sm:$0xf] %vm386, %v5816
        %6001 = vst.msk [vmem:[#allocation3 + $0x48] sm:$0xf] %vm386, %v5826
        %6002 = vst.msk [vmem:[#allocation3 + $0x4c] sm:$0xf] %vm386, %v5836
        %6003 = vst.msk [vmem:[#allocation3 + $0x50] sm:$0xf] %vm386, %v5846
        %6004 = vst.msk [vmem:[#allocation3 + $0x54] sm:$0xf] %vm386, %v5856
        %6005 = vst.msk [vmem:[#allocation3 + $0x58] sm:$0xf] %vm386, %v5866
        %6006 = vst.msk [vmem:[#allocation3 + $0x5c] sm:$0xf] %vm386, %v5876
        %6007 = vst.msk [vmem:[#allocation3 + $0x60] sm:$0xf] %vm386, %v5886
        %6008 = vst.msk [vmem:[#allocation3 + $0x64] sm:$0xf] %vm386, %v5896
        %6009 = vst.msk [vmem:[#allocation3 + $0x68] sm:$0xf] %vm386, %v5906
        %6010 = vst.msk [vmem:[#allocation3 + $0x6c] sm:$0xf] %vm386, %v5916
        %6011 = vst.msk [vmem:[#allocation3 + $0x70] sm:$0xf] %vm386, %v5926
        %6012 = vst.msk [vmem:[#allocation3 + $0x74] sm:$0xf] %vm386, %v5936
        %6013 = vst.msk [vmem:[#allocation3 + $0x78] sm:$0xf] %vm386, %v5946
        %6014 = vst.msk [vmem:[#allocation3 + $0x7c] sm:$0xf] %vm386, %v5956
        %v6015 = vld [vmem:[#allocation3 + $0x80] sm:$0x3]
        %v6016 = vsel %vm2348, %v5957, %v6015
        %6017 = vst [vmem:[#allocation3 + $0x80] sm:$0x3] %v6016
        %v6018 = vld [vmem:[#allocation3] sm:$0xf]
        %v6019 = vld [vmem:[#allocation3 + $0x4] sm:$0xf]
        %v6020 = vld [vmem:[#allocation3 + $0x8] sm:$0xf]
        %v6021 = vld [vmem:[#allocation3 + $0xc] sm:$0xf]
        %v6022 = vld [vmem:[#allocation3 + $0x10] sm:$0xf]
        %v6023 = vld [vmem:[#allocation3 + $0x14] sm:$0xf]
        %v6024 = vld [vmem:[#allocation3 + $0x18] sm:$0xf]
        %v6025 = vld [vmem:[#allocation3 + $0x1c] sm:$0xf]
        %v6026 = vld [vmem:[#allocation3 + $0x20] sm:$0xf]
        %v6027 = vld [vmem:[#allocation3 + $0x24] sm:$0xf]
        %v6028 = vld [vmem:[#allocation3 + $0x28] sm:$0xf]
        %v6029 = vld [vmem:[#allocation3 + $0x2c] sm:$0xf]
        %v6030 = vld [vmem:[#allocation3 + $0x30] sm:$0xf]
        %v6031 = vld [vmem:[#allocation3 + $0x34] sm:$0xf]
        %v6032 = vld [vmem:[#allocation3 + $0x38] sm:$0xf]
        %v6033 = vld [vmem:[#allocation3 + $0x3c] sm:$0xf]
        %v6034 = vld [vmem:[#allocation3 + $0x40] sm:$0xf]
        %v6035 = vld [vmem:[#allocation3 + $0x44] sm:$0xf]
        %v6036 = vld [vmem:[#allocation3 + $0x48] sm:$0xf]
        %v6037 = vld [vmem:[#allocation3 + $0x4c] sm:$0xf]
        %v6038 = vld [vmem:[#allocation3 + $0x50] sm:$0xf]
        %v6039 = vld [vmem:[#allocation3 + $0x54] sm:$0xf]
        %v6040 = vld [vmem:[#allocation3 + $0x58] sm:$0xf]
        %v6041 = vld [vmem:[#allocation3 + $0x5c] sm:$0xf]
        %v6042 = vld [vmem:[#allocation3 + $0x60] sm:$0xf]
        %v6043 = vld [vmem:[#allocation3 + $0x64] sm:$0xf]
        %v6044 = vld [vmem:[#allocation3 + $0x68] sm:$0xf]
        %v6045 = vld [vmem:[#allocation3 + $0x6c] sm:$0x1]
        %v6046 = vld [vmem:[#allocation3] sm:$0xe]
        %v6047 = vld [vmem:[#allocation3] sm:$0x8]
        %v6048 = vld [vmem:[#allocation3 + $0x6c] sm:$0x7]
        %v6049 = vld [vmem:[#allocation3 + $0x6c] sm:$0xf]
        %v6050 = vld [vmem:[#allocation3 + $0x4] sm:$0xc]
        %v6051 = vld [vmem:[#allocation3 + $0x70] sm:$0x3]
        %v6052 = vld [vmem:[#allocation3 + $0x70] sm:$0x7]
        %v6053 = vld [vmem:[#allocation3 + $0x4] sm:$0x8]
        %v6054 = vld [vmem:[#allocation3 + $0x10] sm:$0xc]
        %v6055 = vld [vmem:[#allocation3 + $0x70] sm:$0xf]
        %v6056 = vld [vmem:[#allocation3 + $0x74] sm:$0xf]
        %v6057 = vld [vmem:[#allocation3 + $0x78] sm:$0xf]
        %v6058 = vld [vmem:[#allocation3 + $0x7c] sm:$0x3]
        %v6059 = vld [vmem:[#allocation3 + $0x7c] sm:$0x7]
        %v6060 = vld [vmem:[#allocation3 + $0x10] sm:$0x8]
        %v6061 = vld [vmem:[#allocation3 + $0x14] sm:$0xe]
        %v6062 = vld [vmem:[#allocation3 + $0x7c] sm:$0xf]
        %v6063 = vld [vmem:[#allocation3 + $0x80] sm:$0x1]
        %v6064 = vld [vmem:[#allocation3 + $0x80] sm:$0x3]
        %v6065 = vld [vmem:[#allocation3 + $0x14] sm:$0xc]
        %v6066 = vld [vmem:[#allocation3 + $0x80] sm:$0xf]
        %v6067 = vld [vmem:[#allocation3 + $0x84] sm:$0x1]
        %v6068 = vld [vmem:[#allocation3 + $0x18] sm:$0xe]
        %v6069 = vld [vmem:[#allocation3 + $0x84] sm:$0xf]
        %v6070 = vld [vmem:[#allocation3 + $0x88] sm:$0xf]
        %v6071 = vld [vmem:[#allocation3 + $0x8c] sm:$0xf]
        %v6072 = vld [vmem:[#allocation3 + $0x90] sm:$0x1]
        %v6073 = vld [vmem:[#allocation3 + $0x24] sm:$0xe]
        %v6074 = vld [vmem:[#allocation3 + $0x24] sm:$0x8]
        %v6075 = vld [vmem:[#allocation3 + $0x90] sm:$0x7]
        %v6076 = vld [vmem:[#allocation3 + $0x90] sm:$0xf]
        %v6077 = vld [vmem:[#allocation3 + $0x28] sm:$0xc]
        %v6078 = vld [vmem:[#allocation3 + $0x94] sm:$0x3]
        %v6079 = vld [vmem:[#allocation3 + $0x94] sm:$0x7]
        %v6080 = vld [vmem:[#allocation3 + $0x28] sm:$0x8]
        %v6108 = vunpack.c.l.b16 %v6018
        %v6109 = vunpack.c.l.b16 %v6019
        %v6110 = vunpack.c.l.b16 %v6020
        %v6111 = vunpack.c.l.b16 %v6021
        %v6112 = vunpack.c.l.b16 %v6022
        %v6113 = vunpack.c.l.b16 %v6023
        %v6114 = vunpack.c.l.b16 %v6024
        %v6115 = vunpack.c.l.b16 %v6025
        %v6116 = vunpack.c.l.b16 %v6026
        %v6117 = vunpack.c.l.b16 %v6027
        %v6118 = vunpack.c.l.b16 %v6028
        %v6119 = vunpack.c.l.b16 %v6029
        %v6120 = vunpack.c.l.b16 %v6030
        %v6121 = vunpack.c.l.b16 %v6031
        %v6122 = vunpack.c.l.b16 %v6032
        %v6123 = vunpack.c.l.b16 %v6033
        %v6124 = vunpack.c.l.b16 %v6034
        %v6125 = vunpack.c.l.b16 %v6035
        %v6126 = vunpack.c.l.b16 %v6036
        %v6127 = vunpack.c.l.b16 %v6037
        %v6128 = vunpack.c.l.b16 %v6038
        %v6129 = vunpack.c.l.b16 %v6039
        %v6130 = vunpack.c.l.b16 %v6040
        %v6131 = vunpack.c.l.b16 %v6041
        %v6132 = vunpack.c.l.b16 %v6042
        %v6133 = vunpack.c.l.b16 %v6043
        %v6134 = vunpack.c.l.b16 %v6044
        %v6135 = vpack.c.b16 %v6109, %v6108
        %v6136 = vpack.c.b16 %v6111, %v6110
        %v6137 = vpack.c.b16 %v6113, %v6112
        %v6138 = vpack.c.b16 %v6115, %v6114
        %v6139 = vpack.c.b16 %v6117, %v6116
        %v6140 = vpack.c.b16 %v6119, %v6118
        %v6141 = vpack.c.b16 %v6121, %v6120
        %v6142 = vpack.c.b16 %v6123, %v6122
        %v6143 = vpack.c.b16 %v6125, %v6124
        %v6144 = vpack.c.b16 %v6127, %v6126
        %v6145 = vpack.c.b16 %v6129, %v6128
        %v6146 = vpack.c.b16 %v6131, %v6130
        %v6147 = vpack.c.b16 %v6133, %v6132
        %v6148 = vpack.c.b16 %v6134, %v6134
        %v6150 = vunpack.c.l.b16 %v6045
        %v6151 = vpack.c.b16 %v6150, %v6134
        %v6153 = vshrl.u32 %v6135, 16
        %v6155 = vshll.u32 %v6135, 16
        %v6157 = vrot.slane %v6155, 1
        %v6158 = vor.u32 %v6153, %v6157
        %v6160 = vshll.u32 %v6136, 16
        %v6162 = vrot.slane %v6160, 1
        %v6163 = vsel %vm576, %v6158, %v6162
        %v6164 = vshrl.u32 %v6136, 16
        %v6166 = vor.u32 %v6164, %v6162
        %v6168 = vshll.u32 %v6137, 16
        %v6170 = vrot.slane %v6168, 1
        %v6171 = vsel %vm576, %v6166, %v6170
        %v6172 = vshrl.u32 %v6137, 16
        %v6174 = vor.u32 %v6172, %v6170
        %v6176 = vshll.u32 %v6138, 16
        %v6178 = vrot.slane %v6176, 1
        %v6179 = vsel %vm576, %v6174, %v6178
        %v6180 = vshrl.u32 %v6138, 16
        %v6182 = vor.u32 %v6180, %v6178
        %v6184 = vshll.u32 %v6139, 16
        %v6186 = vrot.slane %v6184, 1
        %v6187 = vsel %vm576, %v6182, %v6186
        %v6188 = vshrl.u32 %v6139, 16
        %v6190 = vor.u32 %v6188, %v6186
        %v6192 = vshll.u32 %v6140, 16
        %v6194 = vrot.slane %v6192, 1
        %v6195 = vsel %vm576, %v6190, %v6194
        %v6196 = vshrl.u32 %v6140, 16
        %v6198 = vor.u32 %v6196, %v6194
        %v6200 = vshll.u32 %v6141, 16
        %v6202 = vrot.slane %v6200, 1
        %v6203 = vsel %vm576, %v6198, %v6202
        %v6204 = vshrl.u32 %v6141, 16
        %v6206 = vor.u32 %v6204, %v6202
        %v6208 = vshll.u32 %v6142, 16
        %v6210 = vrot.slane %v6208, 1
        %v6211 = vsel %vm576, %v6206, %v6210
        %v6212 = vshrl.u32 %v6142, 16
        %v6214 = vor.u32 %v6212, %v6210
        %v6216 = vshll.u32 %v6143, 16
        %v6218 = vrot.slane %v6216, 1
        %v6219 = vsel %vm576, %v6214, %v6218
        %v6220 = vshrl.u32 %v6143, 16
        %v6222 = vor.u32 %v6220, %v6218
        %v6224 = vshll.u32 %v6144, 16
        %v6226 = vrot.slane %v6224, 1
        %v6227 = vsel %vm576, %v6222, %v6226
        %v6228 = vshrl.u32 %v6144, 16
        %v6230 = vor.u32 %v6228, %v6226
        %v6232 = vshll.u32 %v6145, 16
        %v6234 = vrot.slane %v6232, 1
        %v6235 = vsel %vm576, %v6230, %v6234
        %v6236 = vshrl.u32 %v6145, 16
        %v6238 = vor.u32 %v6236, %v6234
        %v6240 = vshll.u32 %v6146, 16
        %v6242 = vrot.slane %v6240, 1
        %v6243 = vsel %vm576, %v6238, %v6242
        %v6244 = vshrl.u32 %v6146, 16
        %v6246 = vor.u32 %v6244, %v6242
        %v6248 = vshll.u32 %v6147, 16
        %v6250 = vrot.slane %v6248, 1
        %v6251 = vsel %vm576, %v6246, %v6250
        %v6252 = vshrl.u32 %v6147, 16
        %v6254 = vor.u32 %v6252, %v6250
        %v6256 = vshll.u32 %v6151, 16
        %v6258 = vrot.slane %v6256, 1
        %v6259 = vsel %vm576, %v6254, %v6258
        %v6260 = vshrl.u32 %v6151, 16
        %v6262 = vor.u32 %v6260, %v6258
        %6263 = vrot.lane.b32.xlu0 %v6163, 16
        %v6264 = vpop.permute.xlu0 %6263
        %6265 = vrot.lane.b32.xlu0 %v6171, 16
        %v6266 = vpop.permute.xlu0 %6265
        %6267 = vrot.lane.b32.xlu0 %v6179, 16
        %v6268 = vpop.permute.xlu0 %6267
        %6269 = vrot.lane.b32.xlu0 %v6187, 16
        %v6270 = vpop.permute.xlu0 %6269
        %6271 = vrot.lane.b32.xlu0 %v6195, 16
        %v6272 = vpop.permute.xlu0 %6271
        %6273 = vrot.lane.b32.xlu0 %v6203, 16
        %v6274 = vpop.permute.xlu0 %6273
        %6275 = vrot.lane.b32.xlu0 %v6211, 16
        %v6276 = vpop.permute.xlu0 %6275
        %6277 = vrot.lane.b32.xlu0 %v6219, 16
        %v6278 = vpop.permute.xlu0 %6277
        %6279 = vrot.lane.b32.xlu0 %v6227, 16
        %v6280 = vpop.permute.xlu0 %6279
        %6281 = vrot.lane.b32.xlu0 %v6235, 16
        %v6282 = vpop.permute.xlu0 %6281
        %6283 = vrot.lane.b32.xlu0 %v6243, 16
        %v6284 = vpop.permute.xlu0 %6283
        %6285 = vrot.lane.b32.xlu0 %v6251, 16
        %v6286 = vpop.permute.xlu0 %6285
        %6287 = vrot.lane.b32.xlu0 %v6259, 16
        %v6288 = vpop.permute.xlu0 %6287
        %6289 = vrot.lane.b32.xlu0 %v6262, 16
        %v6290 = vpop.permute.xlu0 %6289
        %v6292 = vunpack.c.l.b16 %v6046
        %v6293 = vpack.c.b16 %v6109, %v6292
        %v6294 = vrot.slane %v6293, 1
        %v6295 = vrot.slane %v6136, 1
        %v6296 = vsel %vm1038, %v6294, %v6295
        %v6297 = vrot.slane %v6137, 1
        %v6298 = vsel %vm1038, %v6295, %v6297
        %v6299 = vrot.slane %v6138, 1
        %v6300 = vsel %vm1038, %v6297, %v6299
        %v6301 = vrot.slane %v6139, 1
        %v6302 = vsel %vm1038, %v6299, %v6301
        %v6303 = vrot.slane %v6140, 1
        %v6304 = vsel %vm1038, %v6301, %v6303
        %v6305 = vrot.slane %v6141, 1
        %v6306 = vsel %vm1038, %v6303, %v6305
        %v6307 = vrot.slane %v6142, 1
        %v6308 = vsel %vm1038, %v6305, %v6307
        %v6309 = vrot.slane %v6143, 1
        %v6310 = vsel %vm1038, %v6307, %v6309
        %v6311 = vrot.slane %v6144, 1
        %v6312 = vsel %vm1038, %v6309, %v6311
        %v6313 = vrot.slane %v6145, 1
        %v6314 = vsel %vm1038, %v6311, %v6313
        %v6315 = vrot.slane %v6146, 1
        %v6316 = vsel %vm1038, %v6313, %v6315
        %v6317 = vrot.slane %v6147, 1
        %v6318 = vsel %vm1038, %v6315, %v6317
        %v6319 = vrot.slane %v6151, 1
        %v6320 = vsel %vm1038, %v6317, %v6319
        %6321 = vrot.lane.b32.xlu0 %v6296, 32
        %v6322 = vpop.permute.xlu0 %6321
        %6323 = vrot.lane.b32.xlu0 %v6298, 32
        %v6324 = vpop.permute.xlu0 %6323
        %6325 = vrot.lane.b32.xlu0 %v6300, 32
        %v6326 = vpop.permute.xlu0 %6325
        %6327 = vrot.lane.b32.xlu0 %v6302, 32
        %v6328 = vpop.permute.xlu0 %6327
        %6329 = vrot.lane.b32.xlu0 %v6304, 32
        %v6330 = vpop.permute.xlu0 %6329
        %6331 = vrot.lane.b32.xlu0 %v6306, 32
        %v6332 = vpop.permute.xlu0 %6331
        %6333 = vrot.lane.b32.xlu0 %v6308, 32
        %v6334 = vpop.permute.xlu0 %6333
        %6335 = vrot.lane.b32.xlu0 %v6310, 32
        %v6336 = vpop.permute.xlu0 %6335
        %6337 = vrot.lane.b32.xlu0 %v6312, 32
        %v6338 = vpop.permute.xlu0 %6337
        %6339 = vrot.lane.b32.xlu0 %v6314, 32
        %v6340 = vpop.permute.xlu0 %6339
        %6341 = vrot.lane.b32.xlu0 %v6316, 32
        %v6342 = vpop.permute.xlu0 %6341
        %6343 = vrot.lane.b32.xlu0 %v6318, 32
        %v6344 = vpop.permute.xlu0 %6343
        %6345 = vrot.lane.b32.xlu0 %v6320, 32
        %v6346 = vpop.permute.xlu0 %6345
        %6347 = vrot.lane.b32.xlu0 %v6319, 32
        %v6348 = vpop.permute.xlu0 %6347
        %v6351 = vunpack.c.l.b16 %v6047
        %v6352 = vunpack.c.l.b16 %v6048
        %v6353 = vpack.c.b16 %v6109, %v6351
        %v6354 = vpack.c.b16 %v6352, %v6134
        %v6355 = vrot.slane %v6353, 3
        %v6356 = vrot.slane %v6136, 3
        %v6357 = vsel %vm722, %v6355, %v6356
        %v6358 = vrot.slane %v6137, 3
        %v6359 = vsel %vm722, %v6356, %v6358
        %v6360 = vrot.slane %v6138, 3
        %v6361 = vsel %vm722, %v6358, %v6360
        %v6362 = vrot.slane %v6139, 3
        %v6363 = vsel %vm722, %v6360, %v6362
        %v6364 = vrot.slane %v6140, 3
        %v6365 = vsel %vm722, %v6362, %v6364
        %v6366 = vrot.slane %v6141, 3
        %v6367 = vsel %vm722, %v6364, %v6366
        %v6368 = vrot.slane %v6142, 3
        %v6369 = vsel %vm722, %v6366, %v6368
        %v6370 = vrot.slane %v6143, 3
        %v6371 = vsel %vm722, %v6368, %v6370
        %v6372 = vrot.slane %v6144, 3
        %v6373 = vsel %vm722, %v6370, %v6372
        %v6374 = vrot.slane %v6145, 3
        %v6375 = vsel %vm722, %v6372, %v6374
        %v6376 = vrot.slane %v6146, 3
        %v6377 = vsel %vm722, %v6374, %v6376
        %v6378 = vrot.slane %v6147, 3
        %v6379 = vsel %vm722, %v6376, %v6378
        %v6380 = vrot.slane %v6354, 3
        %v6381 = vsel %vm722, %v6378, %v6380
        %6382 = vrot.lane.b32.xlu0 %v6357, 48
        %v6383 = vpop.permute.xlu0 %6382
        %6384 = vrot.lane.b32.xlu0 %v6359, 48
        %v6385 = vpop.permute.xlu0 %6384
        %6386 = vrot.lane.b32.xlu0 %v6361, 48
        %v6387 = vpop.permute.xlu0 %6386
        %6388 = vrot.lane.b32.xlu0 %v6363, 48
        %v6389 = vpop.permute.xlu0 %6388
        %6390 = vrot.lane.b32.xlu0 %v6365, 48
        %v6391 = vpop.permute.xlu0 %6390
        %6392 = vrot.lane.b32.xlu0 %v6367, 48
        %v6393 = vpop.permute.xlu0 %6392
        %6394 = vrot.lane.b32.xlu0 %v6369, 48
        %v6395 = vpop.permute.xlu0 %6394
        %6396 = vrot.lane.b32.xlu0 %v6371, 48
        %v6397 = vpop.permute.xlu0 %6396
        %6398 = vrot.lane.b32.xlu0 %v6373, 48
        %v6399 = vpop.permute.xlu0 %6398
        %6400 = vrot.lane.b32.xlu0 %v6375, 48
        %v6401 = vpop.permute.xlu0 %6400
        %6402 = vrot.lane.b32.xlu0 %v6377, 48
        %v6403 = vpop.permute.xlu0 %6402
        %6404 = vrot.lane.b32.xlu0 %v6379, 48
        %v6405 = vpop.permute.xlu0 %6404
        %6406 = vrot.lane.b32.xlu0 %v6381, 48
        %v6407 = vpop.permute.xlu0 %6406
        %6408 = vrot.lane.b32.xlu0 %v6380, 48
        %v6409 = vpop.permute.xlu0 %6408
        %v6411 = vunpack.c.l.b16 %v6049
        %v6412 = vpack.c.b16 %v6411, %v6134
        %v6414 = vshrl.u32 %v6353, 16
        %v6416 = vrot.slane %v6414, 3
        %v6417 = vshll.u32 %v6353, 16
        %v6419 = vrot.slane %v6417, 4
        %v6420 = vor.u32 %v6416, %v6419
        %v6421 = vrot.slane %v6164, 3
        %v6422 = vrot.slane %v6160, 4
        %v6423 = vor.u32 %v6421, %v6422
        %v6424 = vsel %vm781, %v6420, %v6423
        %v6425 = vrot.slane %v6172, 3
        %v6426 = vrot.slane %v6168, 4
        %v6427 = vor.u32 %v6425, %v6426
        %v6428 = vsel %vm781, %v6423, %v6427
        %v6429 = vrot.slane %v6180, 3
        %v6430 = vrot.slane %v6176, 4
        %v6431 = vor.u32 %v6429, %v6430
        %v6432 = vsel %vm781, %v6427, %v6431
        %v6433 = vrot.slane %v6188, 3
        %v6434 = vrot.slane %v6184, 4
        %v6435 = vor.u32 %v6433, %v6434
        %v6436 = vsel %vm781, %v6431, %v6435
        %v6437 = vrot.slane %v6196, 3
        %v6438 = vrot.slane %v6192, 4
        %v6439 = vor.u32 %v6437, %v6438
        %v6440 = vsel %vm781, %v6435, %v6439
        %v6441 = vrot.slane %v6204, 3
        %v6442 = vrot.slane %v6200, 4
        %v6443 = vor.u32 %v6441, %v6442
        %v6444 = vsel %vm781, %v6439, %v6443
        %v6445 = vrot.slane %v6212, 3
        %v6446 = vrot.slane %v6208, 4
        %v6447 = vor.u32 %v6445, %v6446
        %v6448 = vsel %vm781, %v6443, %v6447
        %v6449 = vrot.slane %v6220, 3
        %v6450 = vrot.slane %v6216, 4
        %v6451 = vor.u32 %v6449, %v6450
        %v6452 = vsel %vm781, %v6447, %v6451
        %v6453 = vrot.slane %v6228, 3
        %v6454 = vrot.slane %v6224, 4
        %v6455 = vor.u32 %v6453, %v6454
        %v6456 = vsel %vm781, %v6451, %v6455
        %v6457 = vrot.slane %v6236, 3
        %v6458 = vrot.slane %v6232, 4
        %v6459 = vor.u32 %v6457, %v6458
        %v6460 = vsel %vm781, %v6455, %v6459
        %v6461 = vrot.slane %v6244, 3
        %v6462 = vrot.slane %v6240, 4
        %v6463 = vor.u32 %v6461, %v6462
        %v6464 = vsel %vm781, %v6459, %v6463
        %v6465 = vrot.slane %v6252, 3
        %v6466 = vrot.slane %v6248, 4
        %v6467 = vor.u32 %v6465, %v6466
        %v6468 = vsel %vm781, %v6463, %v6467
        %v6470 = vshrl.u32 %v6412, 16
        %v6472 = vrot.slane %v6470, 3
        %v6473 = vshll.u32 %v6412, 16
        %v6475 = vrot.slane %v6473, 4
        %v6476 = vor.u32 %v6472, %v6475
        %v6477 = vsel %vm781, %v6467, %v6476
        %6478 = vrot.lane.b32.xlu0 %v6424, 64
        %v6479 = vpop.permute.xlu0 %6478
        %6480 = vrot.lane.b32.xlu0 %v6428, 64
        %v6481 = vpop.permute.xlu0 %6480
        %6482 = vrot.lane.b32.xlu0 %v6432, 64
        %v6483 = vpop.permute.xlu0 %6482
        %6484 = vrot.lane.b32.xlu0 %v6436, 64
        %v6485 = vpop.permute.xlu0 %6484
        %6486 = vrot.lane.b32.xlu0 %v6440, 64
        %v6487 = vpop.permute.xlu0 %6486
        %6488 = vrot.lane.b32.xlu0 %v6444, 64
        %v6489 = vpop.permute.xlu0 %6488
        %6490 = vrot.lane.b32.xlu0 %v6448, 64
        %v6491 = vpop.permute.xlu0 %6490
        %6492 = vrot.lane.b32.xlu0 %v6452, 64
        %v6493 = vpop.permute.xlu0 %6492
        %6494 = vrot.lane.b32.xlu0 %v6456, 64
        %v6495 = vpop.permute.xlu0 %6494
        %6496 = vrot.lane.b32.xlu0 %v6460, 64
        %v6497 = vpop.permute.xlu0 %6496
        %6498 = vrot.lane.b32.xlu0 %v6464, 64
        %v6499 = vpop.permute.xlu0 %6498
        %6500 = vrot.lane.b32.xlu0 %v6468, 64
        %v6501 = vpop.permute.xlu0 %6500
        %6502 = vrot.lane.b32.xlu0 %v6477, 64
        %v6503 = vpop.permute.xlu0 %6502
        %6504 = vrot.lane.b32.xlu0 %v6476, 64
        %v6505 = vpop.permute.xlu0 %6504
        %v6506 = vpack.c.b16 %v6110, %v6109
        %v6507 = vpack.c.b16 %v6112, %v6111
        %v6508 = vpack.c.b16 %v6114, %v6113
        %v6509 = vpack.c.b16 %v6116, %v6115
        %v6510 = vpack.c.b16 %v6118, %v6117
        %v6511 = vpack.c.b16 %v6120, %v6119
        %v6512 = vpack.c.b16 %v6122, %v6121
        %v6513 = vpack.c.b16 %v6124, %v6123
        %v6514 = vpack.c.b16 %v6126, %v6125
        %v6515 = vpack.c.b16 %v6128, %v6127
        %v6516 = vpack.c.b16 %v6130, %v6129
        %v6517 = vpack.c.b16 %v6132, %v6131
        %v6518 = vpack.c.b16 %v6134, %v6133
        %v6519 = vpack.c.b16 %v6411, %v6411
        %6520 = vrot.lane.b32.xlu0 %v6506, 80
        %v6521 = vpop.permute.xlu0 %6520
        %6522 = vrot.lane.b32.xlu0 %v6507, 80
        %v6523 = vpop.permute.xlu0 %6522
        %6524 = vrot.lane.b32.xlu0 %v6508, 80
        %v6525 = vpop.permute.xlu0 %6524
        %6526 = vrot.lane.b32.xlu0 %v6509, 80
        %v6527 = vpop.permute.xlu0 %6526
        %6528 = vrot.lane.b32.xlu0 %v6510, 80
        %v6529 = vpop.permute.xlu0 %6528
        %6530 = vrot.lane.b32.xlu0 %v6511, 80
        %v6531 = vpop.permute.xlu0 %6530
        %6532 = vrot.lane.b32.xlu0 %v6512, 80
        %v6533 = vpop.permute.xlu0 %6532
        %6534 = vrot.lane.b32.xlu0 %v6513, 80
        %v6535 = vpop.permute.xlu0 %6534
        %6536 = vrot.lane.b32.xlu0 %v6514, 80
        %v6537 = vpop.permute.xlu0 %6536
        %6538 = vrot.lane.b32.xlu0 %v6515, 80
        %v6539 = vpop.permute.xlu0 %6538
        %6540 = vrot.lane.b32.xlu0 %v6516, 80
        %v6541 = vpop.permute.xlu0 %6540
        %6542 = vrot.lane.b32.xlu0 %v6517, 80
        %v6543 = vpop.permute.xlu0 %6542
        %6544 = vrot.lane.b32.xlu0 %v6518, 80
        %v6545 = vpop.permute.xlu0 %6544
        %6546 = vrot.lane.b32.xlu0 %v6519, 80
        %v6547 = vpop.permute.xlu0 %6546
        %v6550 = vunpack.c.l.b16 %v6050
        %v6551 = vunpack.c.l.b16 %v6051
        %v6552 = vpack.c.b16 %v6110, %v6550
        %v6553 = vpack.c.b16 %v6551, %v6411
        %v6554 = vrot.slane %v6552, 2
        %v6555 = vrot.slane %v6507, 2
        %v6556 = vsel %vm888, %v6554, %v6555
        %v6557 = vrot.slane %v6508, 2
        %v6558 = vsel %vm888, %v6555, %v6557
        %v6559 = vrot.slane %v6509, 2
        %v6560 = vsel %vm888, %v6557, %v6559
        %v6561 = vrot.slane %v6510, 2
        %v6562 = vsel %vm888, %v6559, %v6561
        %v6563 = vrot.slane %v6511, 2
        %v6564 = vsel %vm888, %v6561, %v6563
        %v6565 = vrot.slane %v6512, 2
        %v6566 = vsel %vm888, %v6563, %v6565
        %v6567 = vrot.slane %v6513, 2
        %v6568 = vsel %vm888, %v6565, %v6567
        %v6569 = vrot.slane %v6514, 2
        %v6570 = vsel %vm888, %v6567, %v6569
        %v6571 = vrot.slane %v6515, 2
        %v6572 = vsel %vm888, %v6569, %v6571
        %v6573 = vrot.slane %v6516, 2
        %v6574 = vsel %vm888, %v6571, %v6573
        %v6575 = vrot.slane %v6517, 2
        %v6576 = vsel %vm888, %v6573, %v6575
        %v6577 = vrot.slane %v6518, 2
        %v6578 = vsel %vm888, %v6575, %v6577
        %v6579 = vrot.slane %v6553, 2
        %v6580 = vsel %vm888, %v6577, %v6579
        %6581 = vrot.lane.b32.xlu0 %v6556, 96
        %v6582 = vpop.permute.xlu0 %6581
        %6583 = vrot.lane.b32.xlu0 %v6558, 96
        %v6584 = vpop.permute.xlu0 %6583
        %6585 = vrot.lane.b32.xlu0 %v6560, 96
        %v6586 = vpop.permute.xlu0 %6585
        %6587 = vrot.lane.b32.xlu0 %v6562, 96
        %v6588 = vpop.permute.xlu0 %6587
        %6589 = vrot.lane.b32.xlu0 %v6564, 96
        %v6590 = vpop.permute.xlu0 %6589
        %6591 = vrot.lane.b32.xlu0 %v6566, 96
        %v6592 = vpop.permute.xlu0 %6591
        %6593 = vrot.lane.b32.xlu0 %v6568, 96
        %v6594 = vpop.permute.xlu0 %6593
        %6595 = vrot.lane.b32.xlu0 %v6570, 96
        %v6596 = vpop.permute.xlu0 %6595
        %6597 = vrot.lane.b32.xlu0 %v6572, 96
        %v6598 = vpop.permute.xlu0 %6597
        %6599 = vrot.lane.b32.xlu0 %v6574, 96
        %v6600 = vpop.permute.xlu0 %6599
        %6601 = vrot.lane.b32.xlu0 %v6576, 96
        %v6602 = vpop.permute.xlu0 %6601
        %6603 = vrot.lane.b32.xlu0 %v6578, 96
        %v6604 = vpop.permute.xlu0 %6603
        %6605 = vrot.lane.b32.xlu0 %v6580, 96
        %v6606 = vpop.permute.xlu0 %6605
        %6607 = vrot.lane.b32.xlu0 %v6579, 96
        %v6608 = vpop.permute.xlu0 %6607
        %v6610 = vunpack.c.l.b16 %v6052
        %v6611 = vpack.c.b16 %v6610, %v6411
        %v6613 = vshrl.u32 %v6552, 16
        %v6615 = vrot.slane %v6613, 2
        %v6616 = vshll.u32 %v6552, 16
        %v6618 = vrot.slane %v6616, 3
        %v6619 = vor.u32 %v6615, %v6618
        %v6621 = vshrl.u32 %v6507, 16
        %v6623 = vrot.slane %v6621, 2
        %v6624 = vshll.u32 %v6507, 16
        %v6626 = vrot.slane %v6624, 3
        %v6627 = vor.u32 %v6623, %v6626
        %v6628 = vsel %vm919, %v6619, %v6627
        %v6630 = vshrl.u32 %v6508, 16
        %v6632 = vrot.slane %v6630, 2
        %v6633 = vshll.u32 %v6508, 16
        %v6635 = vrot.slane %v6633, 3
        %v6636 = vor.u32 %v6632, %v6635
        %v6637 = vsel %vm919, %v6627, %v6636
        %v6639 = vshrl.u32 %v6509, 16
        %v6641 = vrot.slane %v6639, 2
        %v6642 = vshll.u32 %v6509, 16
        %v6644 = vrot.slane %v6642, 3
        %v6645 = vor.u32 %v6641, %v6644
        %v6646 = vsel %vm919, %v6636, %v6645
        %v6648 = vshrl.u32 %v6510, 16
        %v6650 = vrot.slane %v6648, 2
        %v6651 = vshll.u32 %v6510, 16
        %v6653 = vrot.slane %v6651, 3
        %v6654 = vor.u32 %v6650, %v6653
        %v6655 = vsel %vm919, %v6645, %v6654
        %v6657 = vshrl.u32 %v6511, 16
        %v6659 = vrot.slane %v6657, 2
        %v6660 = vshll.u32 %v6511, 16
        %v6662 = vrot.slane %v6660, 3
        %v6663 = vor.u32 %v6659, %v6662
        %v6664 = vsel %vm919, %v6654, %v6663
        %v6666 = vshrl.u32 %v6512, 16
        %v6668 = vrot.slane %v6666, 2
        %v6669 = vshll.u32 %v6512, 16
        %v6671 = vrot.slane %v6669, 3
        %v6672 = vor.u32 %v6668, %v6671
        %v6673 = vsel %vm919, %v6663, %v6672
        %v6675 = vshrl.u32 %v6513, 16
        %v6677 = vrot.slane %v6675, 2
        %v6678 = vshll.u32 %v6513, 16
        %v6680 = vrot.slane %v6678, 3
        %v6681 = vor.u32 %v6677, %v6680
        %v6682 = vsel %vm919, %v6672, %v6681
        %v6684 = vshrl.u32 %v6514, 16
        %v6686 = vrot.slane %v6684, 2
        %v6687 = vshll.u32 %v6514, 16
        %v6689 = vrot.slane %v6687, 3
        %v6690 = vor.u32 %v6686, %v6689
        %v6691 = vsel %vm919, %v6681, %v6690
        %v6693 = vshrl.u32 %v6515, 16
        %v6695 = vrot.slane %v6693, 2
        %v6696 = vshll.u32 %v6515, 16
        %v6698 = vrot.slane %v6696, 3
        %v6699 = vor.u32 %v6695, %v6698
        %v6700 = vsel %vm919, %v6690, %v6699
        %v6702 = vshrl.u32 %v6516, 16
        %v6704 = vrot.slane %v6702, 2
        %v6705 = vshll.u32 %v6516, 16
        %v6707 = vrot.slane %v6705, 3
        %v6708 = vor.u32 %v6704, %v6707
        %v6709 = vsel %vm919, %v6699, %v6708
        %v6711 = vshrl.u32 %v6517, 16
        %v6713 = vrot.slane %v6711, 2
        %v6714 = vshll.u32 %v6517, 16
        %v6716 = vrot.slane %v6714, 3
        %v6717 = vor.u32 %v6713, %v6716
        %v6718 = vsel %vm919, %v6708, %v6717
        %v6720 = vshrl.u32 %v6518, 16
        %v6722 = vrot.slane %v6720, 2
        %v6723 = vshll.u32 %v6518, 16
        %v6725 = vrot.slane %v6723, 3
        %v6726 = vor.u32 %v6722, %v6725
        %v6727 = vsel %vm919, %v6717, %v6726
        %v6729 = vshrl.u32 %v6611, 16
        %v6731 = vrot.slane %v6729, 2
        %v6732 = vshll.u32 %v6611, 16
        %v6734 = vrot.slane %v6732, 3
        %v6735 = vor.u32 %v6731, %v6734
        %v6736 = vsel %vm919, %v6726, %v6735
        %6737 = vrot.lane.b32.xlu0 %v6628, 112
        %v6738 = vpop.permute.xlu0 %6737
        %6739 = vrot.lane.b32.xlu0 %v6637, 112
        %v6740 = vpop.permute.xlu0 %6739
        %6741 = vrot.lane.b32.xlu0 %v6646, 112
        %v6742 = vpop.permute.xlu0 %6741
        %6743 = vrot.lane.b32.xlu0 %v6655, 112
        %v6744 = vpop.permute.xlu0 %6743
        %6745 = vrot.lane.b32.xlu0 %v6664, 112
        %v6746 = vpop.permute.xlu0 %6745
        %6747 = vrot.lane.b32.xlu0 %v6673, 112
        %v6748 = vpop.permute.xlu0 %6747
        %6749 = vrot.lane.b32.xlu0 %v6682, 112
        %v6750 = vpop.permute.xlu0 %6749
        %6751 = vrot.lane.b32.xlu0 %v6691, 112
        %v6752 = vpop.permute.xlu0 %6751
        %6753 = vrot.lane.b32.xlu0 %v6700, 112
        %v6754 = vpop.permute.xlu0 %6753
        %6755 = vrot.lane.b32.xlu0 %v6709, 112
        %v6756 = vpop.permute.xlu0 %6755
        %6757 = vrot.lane.b32.xlu0 %v6718, 112
        %v6758 = vpop.permute.xlu0 %6757
        %6759 = vrot.lane.b32.xlu0 %v6727, 112
        %v6760 = vpop.permute.xlu0 %6759
        %6761 = vrot.lane.b32.xlu0 %v6736, 112
        %v6762 = vpop.permute.xlu0 %6761
        %6763 = vrot.lane.b32.xlu0 %v6735, 112
        %v6764 = vpop.permute.xlu0 %6763
        %v6766 = vunpack.c.l.b16 %v6053
        %v6767 = vpack.c.b16 %v6110, %v6766
        %v6768 = vrot.slane %v6767, 3
        %v6769 = vrot.slane %v6507, 3
        %v6770 = vsel %vm722, %v6768, %v6769
        %v6771 = vrot.slane %v6508, 3
        %v6772 = vsel %vm722, %v6769, %v6771
        %v6773 = vrot.slane %v6509, 3
        %v6774 = vsel %vm722, %v6771, %v6773
        %v6775 = vrot.slane %v6510, 3
        %v6776 = vsel %vm722, %v6773, %v6775
        %v6777 = vrot.slane %v6511, 3
        %v6778 = vsel %vm722, %v6775, %v6777
        %v6779 = vrot.slane %v6512, 3
        %v6780 = vsel %vm722, %v6777, %v6779
        %v6781 = vrot.slane %v6513, 3
        %v6782 = vsel %vm722, %v6779, %v6781
        %v6783 = vrot.slane %v6514, 3
        %v6784 = vsel %vm722, %v6781, %v6783
        %v6785 = vrot.slane %v6515, 3
        %v6786 = vsel %vm722, %v6783, %v6785
        %v6787 = vrot.slane %v6516, 3
        %v6788 = vsel %vm722, %v6785, %v6787
        %v6789 = vrot.slane %v6517, 3
        %v6790 = vsel %vm722, %v6787, %v6789
        %v6791 = vrot.slane %v6518, 3
        %v6792 = vsel %vm722, %v6789, %v6791
        %v6793 = vrot.slane %v6611, 3
        %v6794 = vsel %vm722, %v6791, %v6793
        %v6800 = vunpack.c.l.b16 %v6054
        %v6801 = vunpack.c.l.b16 %v6055
        %v6802 = vunpack.c.l.b16 %v6056
        %v6803 = vunpack.c.l.b16 %v6057
        %v6804 = vunpack.c.l.b16 %v6058
        %v6805 = vpack.c.b16 %v6113, %v6800
        %v6806 = vpack.c.b16 %v6802, %v6801
        %v6807 = vpack.c.b16 %v6804, %v6803
        %v6808 = vrot.slane %v6805, 2
        %v6809 = vrot.slane %v6138, 2
        %v6810 = vsel %vm888, %v6808, %v6809
        %v6811 = vrot.slane %v6139, 2
        %v6812 = vsel %vm888, %v6809, %v6811
        %v6813 = vrot.slane %v6140, 2
        %v6814 = vsel %vm888, %v6811, %v6813
        %v6815 = vrot.slane %v6141, 2
        %v6816 = vsel %vm888, %v6813, %v6815
        %v6817 = vrot.slane %v6142, 2
        %v6818 = vsel %vm888, %v6815, %v6817
        %v6819 = vrot.slane %v6143, 2
        %v6820 = vsel %vm888, %v6817, %v6819
        %v6821 = vrot.slane %v6144, 2
        %v6822 = vsel %vm888, %v6819, %v6821
        %v6823 = vrot.slane %v6145, 2
        %v6824 = vsel %vm888, %v6821, %v6823
        %v6825 = vrot.slane %v6146, 2
        %v6826 = vsel %vm888, %v6823, %v6825
        %v6827 = vrot.slane %v6147, 2
        %v6828 = vsel %vm888, %v6825, %v6827
        %v6829 = vrot.slane %v6412, 2
        %v6830 = vsel %vm888, %v6827, %v6829
        %v6831 = vrot.slane %v6806, 2
        %v6832 = vsel %vm888, %v6829, %v6831
        %v6833 = vrot.slane %v6807, 2
        %v6834 = vsel %vm888, %v6831, %v6833
        %6835 = vrot.lane.b32.xlu0 %v6810, 16
        %v6836 = vpop.permute.xlu0 %6835
        %6837 = vrot.lane.b32.xlu0 %v6812, 16
        %v6838 = vpop.permute.xlu0 %6837
        %6839 = vrot.lane.b32.xlu0 %v6814, 16
        %v6840 = vpop.permute.xlu0 %6839
        %6841 = vrot.lane.b32.xlu0 %v6816, 16
        %v6842 = vpop.permute.xlu0 %6841
        %6843 = vrot.lane.b32.xlu0 %v6818, 16
        %v6844 = vpop.permute.xlu0 %6843
        %6845 = vrot.lane.b32.xlu0 %v6820, 16
        %v6846 = vpop.permute.xlu0 %6845
        %6847 = vrot.lane.b32.xlu0 %v6822, 16
        %v6848 = vpop.permute.xlu0 %6847
        %6849 = vrot.lane.b32.xlu0 %v6824, 16
        %v6850 = vpop.permute.xlu0 %6849
        %6851 = vrot.lane.b32.xlu0 %v6826, 16
        %v6852 = vpop.permute.xlu0 %6851
        %6853 = vrot.lane.b32.xlu0 %v6828, 16
        %v6854 = vpop.permute.xlu0 %6853
        %6855 = vrot.lane.b32.xlu0 %v6830, 16
        %v6856 = vpop.permute.xlu0 %6855
        %6857 = vrot.lane.b32.xlu0 %v6832, 16
        %v6858 = vpop.permute.xlu0 %6857
        %6859 = vrot.lane.b32.xlu0 %v6834, 16
        %v6860 = vpop.permute.xlu0 %6859
        %6861 = vrot.lane.b32.xlu0 %v6833, 16
        %v6862 = vpop.permute.xlu0 %6861
        %v6864 = vunpack.c.l.b16 %v6059
        %v6865 = vpack.c.b16 %v6864, %v6803
        %v6867 = vshrl.u32 %v6805, 16
        %v6869 = vrot.slane %v6867, 2
        %v6870 = vshll.u32 %v6805, 16
        %v6872 = vrot.slane %v6870, 3
        %v6873 = vor.u32 %v6869, %v6872
        %v6874 = vrot.slane %v6180, 2
        %v6875 = vrot.slane %v6176, 3
        %v6876 = vor.u32 %v6874, %v6875
        %v6877 = vsel %vm919, %v6873, %v6876
        %v6878 = vrot.slane %v6188, 2
        %v6879 = vrot.slane %v6184, 3
        %v6880 = vor.u32 %v6878, %v6879
        %v6881 = vsel %vm919, %v6876, %v6880
        %v6882 = vrot.slane %v6196, 2
        %v6883 = vrot.slane %v6192, 3
        %v6884 = vor.u32 %v6882, %v6883
        %v6885 = vsel %vm919, %v6880, %v6884
        %v6886 = vrot.slane %v6204, 2
        %v6887 = vrot.slane %v6200, 3
        %v6888 = vor.u32 %v6886, %v6887
        %v6889 = vsel %vm919, %v6884, %v6888
        %v6890 = vrot.slane %v6212, 2
        %v6891 = vrot.slane %v6208, 3
        %v6892 = vor.u32 %v6890, %v6891
        %v6893 = vsel %vm919, %v6888, %v6892
        %v6894 = vrot.slane %v6220, 2
        %v6895 = vrot.slane %v6216, 3
        %v6896 = vor.u32 %v6894, %v6895
        %v6897 = vsel %vm919, %v6892, %v6896
        %v6898 = vrot.slane %v6228, 2
        %v6899 = vrot.slane %v6224, 3
        %v6900 = vor.u32 %v6898, %v6899
        %v6901 = vsel %vm919, %v6896, %v6900
        %v6902 = vrot.slane %v6236, 2
        %v6903 = vrot.slane %v6232, 3
        %v6904 = vor.u32 %v6902, %v6903
        %v6905 = vsel %vm919, %v6900, %v6904
        %v6906 = vrot.slane %v6244, 2
        %v6907 = vrot.slane %v6240, 3
        %v6908 = vor.u32 %v6906, %v6907
        %v6909 = vsel %vm919, %v6904, %v6908
        %v6910 = vrot.slane %v6252, 2
        %v6911 = vrot.slane %v6248, 3
        %v6912 = vor.u32 %v6910, %v6911
        %v6913 = vsel %vm919, %v6908, %v6912
        %v6914 = vrot.slane %v6470, 2
        %v6915 = vrot.slane %v6473, 3
        %v6916 = vor.u32 %v6914, %v6915
        %v6917 = vsel %vm919, %v6912, %v6916
        %v6919 = vshrl.u32 %v6806, 16
        %v6921 = vrot.slane %v6919, 2
        %v6922 = vshll.u32 %v6806, 16
        %v6924 = vrot.slane %v6922, 3
        %v6925 = vor.u32 %v6921, %v6924
        %v6926 = vsel %vm919, %v6916, %v6925
        %v6928 = vshrl.u32 %v6865, 16
        %v6930 = vrot.slane %v6928, 2
        %v6931 = vshll.u32 %v6865, 16
        %v6933 = vrot.slane %v6931, 3
        %v6934 = vor.u32 %v6930, %v6933
        %v6935 = vsel %vm919, %v6925, %v6934
        %6936 = vrot.lane.b32.xlu0 %v6877, 32
        %v6937 = vpop.permute.xlu0 %6936
        %6938 = vrot.lane.b32.xlu0 %v6881, 32
        %v6939 = vpop.permute.xlu0 %6938
        %6940 = vrot.lane.b32.xlu0 %v6885, 32
        %v6941 = vpop.permute.xlu0 %6940
        %6942 = vrot.lane.b32.xlu0 %v6889, 32
        %v6943 = vpop.permute.xlu0 %6942
        %6944 = vrot.lane.b32.xlu0 %v6893, 32
        %v6945 = vpop.permute.xlu0 %6944
        %6946 = vrot.lane.b32.xlu0 %v6897, 32
        %v6947 = vpop.permute.xlu0 %6946
        %6948 = vrot.lane.b32.xlu0 %v6901, 32
        %v6949 = vpop.permute.xlu0 %6948
        %6950 = vrot.lane.b32.xlu0 %v6905, 32
        %v6951 = vpop.permute.xlu0 %6950
        %6952 = vrot.lane.b32.xlu0 %v6909, 32
        %v6953 = vpop.permute.xlu0 %6952
        %6954 = vrot.lane.b32.xlu0 %v6913, 32
        %v6955 = vpop.permute.xlu0 %6954
        %6956 = vrot.lane.b32.xlu0 %v6917, 32
        %v6957 = vpop.permute.xlu0 %6956
        %6958 = vrot.lane.b32.xlu0 %v6926, 32
        %v6959 = vpop.permute.xlu0 %6958
        %6960 = vrot.lane.b32.xlu0 %v6935, 32
        %v6961 = vpop.permute.xlu0 %6960
        %6962 = vrot.lane.b32.xlu0 %v6934, 32
        %v6963 = vpop.permute.xlu0 %6962
        %v6965 = vunpack.c.l.b16 %v6060
        %v6966 = vpack.c.b16 %v6113, %v6965
        %v6967 = vrot.slane %v6966, 3
        %v6968 = vsel %vm722, %v6967, %v6360
        %v6969 = vrot.slane %v6412, 3
        %v6970 = vsel %vm722, %v6378, %v6969
        %v6971 = vrot.slane %v6806, 3
        %v6972 = vsel %vm722, %v6969, %v6971
        %v6973 = vrot.slane %v6865, 3
        %v6974 = vsel %vm722, %v6971, %v6973
        %6975 = vrot.lane.b32.xlu0 %v6968, 48
        %v6976 = vpop.permute.xlu0 %6975
        %6977 = vrot.lane.b32.xlu0 %v6970, 48
        %v6978 = vpop.permute.xlu0 %6977
        %6979 = vrot.lane.b32.xlu0 %v6972, 48
        %v6980 = vpop.permute.xlu0 %6979
        %6981 = vrot.lane.b32.xlu0 %v6974, 48
        %v6982 = vpop.permute.xlu0 %6981
        %6983 = vrot.lane.b32.xlu0 %v6973, 48
        %v6984 = vpop.permute.xlu0 %6983
        %v6988 = vunpack.c.l.b16 %v6061
        %v6989 = vunpack.c.l.b16 %v6062
        %v6990 = vunpack.c.l.b16 %v6063
        %v6991 = vpack.c.b16 %v6114, %v6988
        %v6992 = vpack.c.b16 %v6801, %v6411
        %v6993 = vpack.c.b16 %v6803, %v6802
        %v6994 = vpack.c.b16 %v6990, %v6989
        %v6995 = vrot.slane %v6991, 1
        %v6996 = vrot.slane %v6509, 1
        %v6997 = vsel %vm1038, %v6995, %v6996
        %v6998 = vrot.slane %v6510, 1
        %v6999 = vsel %vm1038, %v6996, %v6998
        %v7000 = vrot.slane %v6511, 1
        %v7001 = vsel %vm1038, %v6998, %v7000
        %v7002 = vrot.slane %v6512, 1
        %v7003 = vsel %vm1038, %v7000, %v7002
        %v7004 = vrot.slane %v6513, 1
        %v7005 = vsel %vm1038, %v7002, %v7004
        %v7006 = vrot.slane %v6514, 1
        %v7007 = vsel %vm1038, %v7004, %v7006
        %v7008 = vrot.slane %v6515, 1
        %v7009 = vsel %vm1038, %v7006, %v7008
        %v7010 = vrot.slane %v6516, 1
        %v7011 = vsel %vm1038, %v7008, %v7010
        %v7012 = vrot.slane %v6517, 1
        %v7013 = vsel %vm1038, %v7010, %v7012
        %v7014 = vrot.slane %v6518, 1
        %v7015 = vsel %vm1038, %v7012, %v7014
        %v7016 = vrot.slane %v6992, 1
        %v7017 = vsel %vm1038, %v7014, %v7016
        %v7018 = vrot.slane %v6993, 1
        %v7019 = vsel %vm1038, %v7016, %v7018
        %v7020 = vrot.slane %v6994, 1
        %v7021 = vsel %vm1038, %v7018, %v7020
        %7022 = vrot.lane.b32.xlu0 %v6997, 64
        %v7023 = vpop.permute.xlu0 %7022
        %7024 = vrot.lane.b32.xlu0 %v6999, 64
        %v7025 = vpop.permute.xlu0 %7024
        %7026 = vrot.lane.b32.xlu0 %v7001, 64
        %v7027 = vpop.permute.xlu0 %7026
        %7028 = vrot.lane.b32.xlu0 %v7003, 64
        %v7029 = vpop.permute.xlu0 %7028
        %7030 = vrot.lane.b32.xlu0 %v7005, 64
        %v7031 = vpop.permute.xlu0 %7030
        %7032 = vrot.lane.b32.xlu0 %v7007, 64
        %v7033 = vpop.permute.xlu0 %7032
        %7034 = vrot.lane.b32.xlu0 %v7009, 64
        %v7035 = vpop.permute.xlu0 %7034
        %7036 = vrot.lane.b32.xlu0 %v7011, 64
        %v7037 = vpop.permute.xlu0 %7036
        %7038 = vrot.lane.b32.xlu0 %v7013, 64
        %v7039 = vpop.permute.xlu0 %7038
        %7040 = vrot.lane.b32.xlu0 %v7015, 64
        %v7041 = vpop.permute.xlu0 %7040
        %7042 = vrot.lane.b32.xlu0 %v7017, 64
        %v7043 = vpop.permute.xlu0 %7042
        %7044 = vrot.lane.b32.xlu0 %v7019, 64
        %v7045 = vpop.permute.xlu0 %7044
        %7046 = vrot.lane.b32.xlu0 %v7021, 64
        %v7047 = vpop.permute.xlu0 %7046
        %7048 = vrot.lane.b32.xlu0 %v7020, 64
        %v7049 = vpop.permute.xlu0 %7048
        %v7051 = vunpack.c.l.b16 %v6064
        %v7052 = vpack.c.b16 %v7051, %v6989
        %v7054 = vshrl.u32 %v6991, 16
        %v7056 = vrot.slane %v7054, 1
        %v7057 = vshll.u32 %v6991, 16
        %v7059 = vrot.slane %v7057, 2
        %v7060 = vor.u32 %v7056, %v7059
        %v7061 = vrot.slane %v6639, 1
        %v7062 = vrot.slane %v6642, 2
        %v7063 = vor.u32 %v7061, %v7062
        %v7064 = vsel %vm1097, %v7060, %v7063
        %v7065 = vrot.slane %v6648, 1
        %v7066 = vrot.slane %v6651, 2
        %v7067 = vor.u32 %v7065, %v7066
        %v7068 = vsel %vm1097, %v7063, %v7067
        %v7069 = vrot.slane %v6657, 1
        %v7070 = vrot.slane %v6660, 2
        %v7071 = vor.u32 %v7069, %v7070
        %v7072 = vsel %vm1097, %v7067, %v7071
        %v7073 = vrot.slane %v6666, 1
        %v7074 = vrot.slane %v6669, 2
        %v7075 = vor.u32 %v7073, %v7074
        %v7076 = vsel %vm1097, %v7071, %v7075
        %v7077 = vrot.slane %v6675, 1
        %v7078 = vrot.slane %v6678, 2
        %v7079 = vor.u32 %v7077, %v7078
        %v7080 = vsel %vm1097, %v7075, %v7079
        %v7081 = vrot.slane %v6684, 1
        %v7082 = vrot.slane %v6687, 2
        %v7083 = vor.u32 %v7081, %v7082
        %v7084 = vsel %vm1097, %v7079, %v7083
        %v7085 = vrot.slane %v6693, 1
        %v7086 = vrot.slane %v6696, 2
        %v7087 = vor.u32 %v7085, %v7086
        %v7088 = vsel %vm1097, %v7083, %v7087
        %v7089 = vrot.slane %v6702, 1
        %v7090 = vrot.slane %v6705, 2
        %v7091 = vor.u32 %v7089, %v7090
        %v7092 = vsel %vm1097, %v7087, %v7091
        %v7093 = vrot.slane %v6711, 1
        %v7094 = vrot.slane %v6714, 2
        %v7095 = vor.u32 %v7093, %v7094
        %v7096 = vsel %vm1097, %v7091, %v7095
        %v7097 = vrot.slane %v6720, 1
        %v7098 = vrot.slane %v6723, 2
        %v7099 = vor.u32 %v7097, %v7098
        %v7100 = vsel %vm1097, %v7095, %v7099
        %v7102 = vshrl.u32 %v6992, 16
        %v7104 = vrot.slane %v7102, 1
        %v7105 = vshll.u32 %v6992, 16
        %v7107 = vrot.slane %v7105, 2
        %v7108 = vor.u32 %v7104, %v7107
        %v7109 = vsel %vm1097, %v7099, %v7108
        %v7111 = vshrl.u32 %v6993, 16
        %v7113 = vrot.slane %v7111, 1
        %v7114 = vshll.u32 %v6993, 16
        %v7116 = vrot.slane %v7114, 2
        %v7117 = vor.u32 %v7113, %v7116
        %v7118 = vsel %vm1097, %v7108, %v7117
        %v7120 = vshrl.u32 %v7052, 16
        %v7122 = vrot.slane %v7120, 1
        %v7123 = vshll.u32 %v7052, 16
        %v7125 = vrot.slane %v7123, 2
        %v7126 = vor.u32 %v7122, %v7125
        %v7127 = vsel %vm1097, %v7117, %v7126
        %7128 = vrot.lane.b32.xlu0 %v7064, 80
        %v7129 = vpop.permute.xlu0 %7128
        %7130 = vrot.lane.b32.xlu0 %v7068, 80
        %v7131 = vpop.permute.xlu0 %7130
        %7132 = vrot.lane.b32.xlu0 %v7072, 80
        %v7133 = vpop.permute.xlu0 %7132
        %7134 = vrot.lane.b32.xlu0 %v7076, 80
        %v7135 = vpop.permute.xlu0 %7134
        %7136 = vrot.lane.b32.xlu0 %v7080, 80
        %v7137 = vpop.permute.xlu0 %7136
        %7138 = vrot.lane.b32.xlu0 %v7084, 80
        %v7139 = vpop.permute.xlu0 %7138
        %7140 = vrot.lane.b32.xlu0 %v7088, 80
        %v7141 = vpop.permute.xlu0 %7140
        %7142 = vrot.lane.b32.xlu0 %v7092, 80
        %v7143 = vpop.permute.xlu0 %7142
        %7144 = vrot.lane.b32.xlu0 %v7096, 80
        %v7145 = vpop.permute.xlu0 %7144
        %7146 = vrot.lane.b32.xlu0 %v7100, 80
        %v7147 = vpop.permute.xlu0 %7146
        %7148 = vrot.lane.b32.xlu0 %v7109, 80
        %v7149 = vpop.permute.xlu0 %7148
        %7150 = vrot.lane.b32.xlu0 %v7118, 80
        %v7151 = vpop.permute.xlu0 %7150
        %7152 = vrot.lane.b32.xlu0 %v7127, 80
        %v7153 = vpop.permute.xlu0 %7152
        %7154 = vrot.lane.b32.xlu0 %v7126, 80
        %v7155 = vpop.permute.xlu0 %7154
        %v7157 = vunpack.c.l.b16 %v6065
        %v7158 = vpack.c.b16 %v6114, %v7157
        %v7159 = vrot.slane %v7158, 2
        %v7160 = vsel %vm888, %v7159, %v6559
        %v7161 = vrot.slane %v6992, 2
        %v7162 = vsel %vm888, %v6577, %v7161
        %v7163 = vrot.slane %v6993, 2
        %v7164 = vsel %vm888, %v7161, %v7163
        %v7165 = vrot.slane %v7052, 2
        %v7166 = vsel %vm888, %v7163, %v7165
        %7167 = vrot.lane.b32.xlu0 %v7160, 96
        %v7168 = vpop.permute.xlu0 %7167
        %7169 = vrot.lane.b32.xlu0 %v7162, 96
        %v7170 = vpop.permute.xlu0 %7169
        %7171 = vrot.lane.b32.xlu0 %v7164, 96
        %v7172 = vpop.permute.xlu0 %7171
        %7173 = vrot.lane.b32.xlu0 %v7166, 96
        %v7174 = vpop.permute.xlu0 %7173
        %7175 = vrot.lane.b32.xlu0 %v7165, 96
        %v7176 = vpop.permute.xlu0 %7175
        %v7178 = vunpack.c.l.b16 %v6066
        %v7179 = vpack.c.b16 %v6989, %v6803
        %v7180 = vpack.c.b16 %v7178, %v7178
        %7181 = vrot.lane.b32.xlu0 %v6138, 112
        %v7182 = vpop.permute.xlu0 %7181
        %7183 = vrot.lane.b32.xlu0 %v6139, 112
        %v7184 = vpop.permute.xlu0 %7183
        %7185 = vrot.lane.b32.xlu0 %v6140, 112
        %v7186 = vpop.permute.xlu0 %7185
        %7187 = vrot.lane.b32.xlu0 %v6141, 112
        %v7188 = vpop.permute.xlu0 %7187
        %7189 = vrot.lane.b32.xlu0 %v6142, 112
        %v7190 = vpop.permute.xlu0 %7189
        %7191 = vrot.lane.b32.xlu0 %v6143, 112
        %v7192 = vpop.permute.xlu0 %7191
        %7193 = vrot.lane.b32.xlu0 %v6144, 112
        %v7194 = vpop.permute.xlu0 %7193
        %7195 = vrot.lane.b32.xlu0 %v6145, 112
        %v7196 = vpop.permute.xlu0 %7195
        %7197 = vrot.lane.b32.xlu0 %v6146, 112
        %v7198 = vpop.permute.xlu0 %7197
        %7199 = vrot.lane.b32.xlu0 %v6147, 112
        %v7200 = vpop.permute.xlu0 %7199
        %7201 = vrot.lane.b32.xlu0 %v6412, 112
        %v7202 = vpop.permute.xlu0 %7201
        %7203 = vrot.lane.b32.xlu0 %v6806, 112
        %v7204 = vpop.permute.xlu0 %7203
        %7205 = vrot.lane.b32.xlu0 %v7179, 112
        %v7206 = vpop.permute.xlu0 %7205
        %7207 = vrot.lane.b32.xlu0 %v7180, 112
        %v7208 = vpop.permute.xlu0 %7207
        %v7210 = vsel %vm3543, %v6135, %v6264
        %v7212 = vsel %vm3543, %v6136, %v6266
        %v7214 = vsel %vm3543, %v6137, %v6268
        %v7216 = vsel %vm3543, %v6138, %v6270
        %v7218 = vsel %vm3543, %v6139, %v6272
        %v7220 = vsel %vm3543, %v6140, %v6274
        %v7222 = vsel %vm3543, %v6141, %v6276
        %v7224 = vsel %vm3543, %v6142, %v6278
        %v7226 = vsel %vm3543, %v6143, %v6280
        %v7228 = vsel %vm3543, %v6144, %v6282
        %v7230 = vsel %vm3543, %v6145, %v6284
        %v7232 = vsel %vm3543, %v6146, %v6286
        %v7234 = vsel %vm3543, %v6147, %v6288
        %v7237 = vsel %vm3543, %v6148, %v6290
        %v7239 = vsel %vm1251, %v7210, %v6322
        %v7241 = vsel %vm1251, %v7212, %v6324
        %v7243 = vsel %vm1251, %v7214, %v6326
        %v7245 = vsel %vm1251, %v7216, %v6328
        %v7247 = vsel %vm1251, %v7218, %v6330
        %v7249 = vsel %vm1251, %v7220, %v6332
        %v7251 = vsel %vm1251, %v7222, %v6334
        %v7253 = vsel %vm1251, %v7224, %v6336
        %v7255 = vsel %vm1251, %v7226, %v6338
        %v7257 = vsel %vm1251, %v7228, %v6340
        %v7259 = vsel %vm1251, %v7230, %v6342
        %v7261 = vsel %vm1251, %v7232, %v6344
        %v7263 = vsel %vm1251, %v7234, %v6346
        %v7265 = vsel %vm1251, %v7237, %v6348
        %v7267 = vsel %vm3601, %v7239, %v6383
        %v7269 = vsel %vm3601, %v7241, %v6385
        %v7271 = vsel %vm3601, %v7243, %v6387
        %v7273 = vsel %vm3601, %v7245, %v6389
        %v7275 = vsel %vm3601, %v7247, %v6391
        %v7277 = vsel %vm3601, %v7249, %v6393
        %v7279 = vsel %vm3601, %v7251, %v6395
        %v7281 = vsel %vm3601, %v7253, %v6397
        %v7283 = vsel %vm3601, %v7255, %v6399
        %v7285 = vsel %vm3601, %v7257, %v6401
        %v7287 = vsel %vm3601, %v7259, %v6403
        %v7289 = vsel %vm3601, %v7261, %v6405
        %v7291 = vsel %vm3601, %v7263, %v6407
        %v7293 = vsel %vm3601, %v7265, %v6409
        %v7295 = vsel %vm1281, %v7267, %v6479
        %v7297 = vsel %vm1281, %v7269, %v6481
        %v7299 = vsel %vm1281, %v7271, %v6483
        %v7301 = vsel %vm1281, %v7273, %v6485
        %v7303 = vsel %vm1281, %v7275, %v6487
        %v7305 = vsel %vm1281, %v7277, %v6489
        %v7307 = vsel %vm1281, %v7279, %v6491
        %v7309 = vsel %vm1281, %v7281, %v6493
        %v7311 = vsel %vm1281, %v7283, %v6495
        %v7313 = vsel %vm1281, %v7285, %v6497
        %v7315 = vsel %vm1281, %v7287, %v6499
        %v7317 = vsel %vm1281, %v7289, %v6501
        %v7319 = vsel %vm1281, %v7291, %v6503
        %v7321 = vsel %vm1281, %v7293, %v6505
        %v7323 = vsel %vm3658, %v7295, %v6521
        %v7325 = vsel %vm3658, %v7297, %v6523
        %v7327 = vsel %vm3658, %v7299, %v6525
        %v7329 = vsel %vm3658, %v7301, %v6527
        %v7331 = vsel %vm3658, %v7303, %v6529
        %v7333 = vsel %vm3658, %v7305, %v6531
        %v7335 = vsel %vm3658, %v7307, %v6533
        %v7337 = vsel %vm3658, %v7309, %v6535
        %v7339 = vsel %vm3658, %v7311, %v6537
        %v7341 = vsel %vm3658, %v7313, %v6539
        %v7343 = vsel %vm3658, %v7315, %v6541
        %v7345 = vsel %vm3658, %v7317, %v6543
        %v7347 = vsel %vm3658, %v7319, %v6545
        %v7349 = vsel %vm3658, %v7321, %v6547
        %v7351 = vsel %vm1310, %v7323, %v6582
        %v7353 = vsel %vm1310, %v7325, %v6584
        %v7355 = vsel %vm1310, %v7327, %v6586
        %v7357 = vsel %vm1310, %v7329, %v6588
        %v7359 = vsel %vm1310, %v7331, %v6590
        %v7361 = vsel %vm1310, %v7333, %v6592
        %v7363 = vsel %vm1310, %v7335, %v6594
        %v7365 = vsel %vm1310, %v7337, %v6596
        %v7367 = vsel %vm1310, %v7339, %v6598
        %v7369 = vsel %vm1310, %v7341, %v6600
        %v7371 = vsel %vm1310, %v7343, %v6602
        %v7373 = vsel %vm1310, %v7345, %v6604
        %v7375 = vsel %vm1310, %v7347, %v6606
        %v7377 = vsel %vm1310, %v7349, %v6608
        %v7379 = vsel %vm3715, %v7351, %v6738
        %v7382 = vsel %vm3715, %v7353, %v6740
        %v7385 = vsel %vm3715, %v7355, %v6742
        %v7388 = vsel %vm3715, %v7357, %v6744
        %v7391 = vsel %vm3715, %v7359, %v6746
        %v7394 = vsel %vm3715, %v7361, %v6748
        %v7397 = vsel %vm3715, %v7363, %v6750
        %v7400 = vsel %vm3715, %v7365, %v6752
        %v7403 = vsel %vm3715, %v7367, %v6754
        %v7406 = vsel %vm3715, %v7369, %v6756
        %v7409 = vsel %vm3715, %v7371, %v6758
        %v7412 = vsel %vm3715, %v7373, %v6760
        %v7415 = vsel %vm3715, %v7375, %v6762
        %v7418 = vsel %vm3715, %v7377, %v6764
        %v7422 = vsel %vm3543, %v6770, %v6836
        %v7425 = vsel %vm3543, %v6772, %v6838
        %v7428 = vsel %vm3543, %v6774, %v6840
        %v7431 = vsel %vm3543, %v6776, %v6842
        %v7434 = vsel %vm3543, %v6778, %v6844
        %v7437 = vsel %vm3543, %v6780, %v6846
        %v7440 = vsel %vm3543, %v6782, %v6848
        %v7443 = vsel %vm3543, %v6784, %v6850
        %v7446 = vsel %vm3543, %v6786, %v6852
        %v7449 = vsel %vm3543, %v6788, %v6854
        %v7452 = vsel %vm3543, %v6790, %v6856
        %v7455 = vsel %vm3543, %v6792, %v6858
        %v7458 = vsel %vm3543, %v6794, %v6860
        %v7461 = vsel %vm3543, %v6793, %v6862
        %v7463 = vsel %vm1251, %v7422, %v6937
        %v7465 = vsel %vm1251, %v7425, %v6939
        %v7467 = vsel %vm1251, %v7428, %v6941
        %v7469 = vsel %vm1251, %v7431, %v6943
        %v7471 = vsel %vm1251, %v7434, %v6945
        %v7473 = vsel %vm1251, %v7437, %v6947
        %v7475 = vsel %vm1251, %v7440, %v6949
        %v7477 = vsel %vm1251, %v7443, %v6951
        %v7479 = vsel %vm1251, %v7446, %v6953
        %v7481 = vsel %vm1251, %v7449, %v6955
        %v7483 = vsel %vm1251, %v7452, %v6957
        %v7485 = vsel %vm1251, %v7455, %v6959
        %v7487 = vsel %vm1251, %v7458, %v6961
        %v7489 = vsel %vm1251, %v7461, %v6963
        %v7491 = vsel %vm3601, %v7463, %v6976
        %v7492 = vsel %vm3601, %v7465, %v6389
        %v7493 = vsel %vm3601, %v7467, %v6391
        %v7494 = vsel %vm3601, %v7469, %v6393
        %v7495 = vsel %vm3601, %v7471, %v6395
        %v7496 = vsel %vm3601, %v7473, %v6397
        %v7497 = vsel %vm3601, %v7475, %v6399
        %v7498 = vsel %vm3601, %v7477, %v6401
        %v7499 = vsel %vm3601, %v7479, %v6403
        %v7500 = vsel %vm3601, %v7481, %v6405
        %v7502 = vsel %vm3601, %v7483, %v6978
        %v7504 = vsel %vm3601, %v7485, %v6980
        %v7506 = vsel %vm3601, %v7487, %v6982
        %v7508 = vsel %vm3601, %v7489, %v6984
        %v7510 = vsel %vm1281, %v7491, %v7023
        %v7512 = vsel %vm1281, %v7492, %v7025
        %v7514 = vsel %vm1281, %v7493, %v7027
        %v7516 = vsel %vm1281, %v7494, %v7029
        %v7518 = vsel %vm1281, %v7495, %v7031
        %v7520 = vsel %vm1281, %v7496, %v7033
        %v7522 = vsel %vm1281, %v7497, %v7035
        %v7524 = vsel %vm1281, %v7498, %v7037
        %v7526 = vsel %vm1281, %v7499, %v7039
        %v7528 = vsel %vm1281, %v7500, %v7041
        %v7530 = vsel %vm1281, %v7502, %v7043
        %v7532 = vsel %vm1281, %v7504, %v7045
        %v7534 = vsel %vm1281, %v7506, %v7047
        %v7536 = vsel %vm1281, %v7508, %v7049
        %v7538 = vsel %vm3658, %v7510, %v7129
        %v7540 = vsel %vm3658, %v7512, %v7131
        %v7542 = vsel %vm3658, %v7514, %v7133
        %v7544 = vsel %vm3658, %v7516, %v7135
        %v7546 = vsel %vm3658, %v7518, %v7137
        %v7548 = vsel %vm3658, %v7520, %v7139
        %v7550 = vsel %vm3658, %v7522, %v7141
        %v7552 = vsel %vm3658, %v7524, %v7143
        %v7554 = vsel %vm3658, %v7526, %v7145
        %v7556 = vsel %vm3658, %v7528, %v7147
        %v7558 = vsel %vm3658, %v7530, %v7149
        %v7560 = vsel %vm3658, %v7532, %v7151
        %v7562 = vsel %vm3658, %v7534, %v7153
        %v7564 = vsel %vm3658, %v7536, %v7155
        %v7566 = vsel %vm1310, %v7538, %v7168
        %v7567 = vsel %vm1310, %v7540, %v6588
        %v7568 = vsel %vm1310, %v7542, %v6590
        %v7569 = vsel %vm1310, %v7544, %v6592
        %v7570 = vsel %vm1310, %v7546, %v6594
        %v7571 = vsel %vm1310, %v7548, %v6596
        %v7572 = vsel %vm1310, %v7550, %v6598
        %v7573 = vsel %vm1310, %v7552, %v6600
        %v7574 = vsel %vm1310, %v7554, %v6602
        %v7575 = vsel %vm1310, %v7556, %v6604
        %v7577 = vsel %vm1310, %v7558, %v7170
        %v7579 = vsel %vm1310, %v7560, %v7172
        %v7581 = vsel %vm1310, %v7562, %v7174
        %v7583 = vsel %vm1310, %v7564, %v7176
        %v7585 = vsel %vm3715, %v7566, %v7182
        %v7588 = vsel %vm3715, %v7567, %v7184
        %v7591 = vsel %vm3715, %v7568, %v7186
        %v7594 = vsel %vm3715, %v7569, %v7188
        %v7597 = vsel %vm3715, %v7570, %v7190
        %v7600 = vsel %vm3715, %v7571, %v7192
        %v7603 = vsel %vm3715, %v7572, %v7194
        %v7606 = vsel %vm3715, %v7573, %v7196
        %v7609 = vsel %vm3715, %v7574, %v7198
        %v7612 = vsel %vm3715, %v7575, %v7200
        %v7615 = vsel %vm3715, %v7577, %v7202
        %v7618 = vsel %vm3715, %v7579, %v7204
        %v7621 = vsel %vm3715, %v7581, %v7206
        %v7624 = vsel %vm3715, %v7583, %v7208
        %v7627 = vunpack.c.l.b16 %v6067
        %v7628 = vpack.c.b16 %v7627, %v7178
        %v7630 = vunpack.c.l.b16 %v6068
        %v7631 = vpack.c.b16 %v6115, %v7630
        %v7633 = vshrl.u32 %v7631, 16
        %v7635 = vshll.u32 %v7631, 16
        %v7637 = vrot.slane %v7635, 1
        %v7638 = vor.u32 %v7633, %v7637
        %v7639 = vsel %vm576, %v7638, %v6186
        %v7640 = vrot.slane %v6473, 1
        %v7641 = vsel %vm576, %v6254, %v7640
        %v7642 = vor.u32 %v6470, %v7640
        %v7643 = vrot.slane %v6922, 1
        %v7644 = vsel %vm576, %v7642, %v7643
        %v7645 = vor.u32 %v6919, %v7643
        %v7647 = vshll.u32 %v7179, 16
        %v7649 = vrot.slane %v7647, 1
        %v7650 = vsel %vm576, %v7645, %v7649
        %v7651 = vshrl.u32 %v7179, 16
        %v7653 = vor.u32 %v7651, %v7649
        %v7655 = vshll.u32 %v7628, 16
        %v7657 = vrot.slane %v7655, 1
        %v7658 = vsel %vm576, %v7653, %v7657
        %v7659 = vshrl.u32 %v7628, 16
        %v7661 = vor.u32 %v7659, %v7657
        %7662 = vrot.lane.b32.xlu0 %v7639, 16
        %v7663 = vpop.permute.xlu0 %7662
        %7664 = vrot.lane.b32.xlu0 %v7641, 16
        %v7665 = vpop.permute.xlu0 %7664
        %7666 = vrot.lane.b32.xlu0 %v7644, 16
        %v7667 = vpop.permute.xlu0 %7666
        %7668 = vrot.lane.b32.xlu0 %v7650, 16
        %v7669 = vpop.permute.xlu0 %7668
        %7670 = vrot.lane.b32.xlu0 %v7658, 16
        %v7671 = vpop.permute.xlu0 %7670
        %7672 = vrot.lane.b32.xlu0 %v7661, 16
        %v7673 = vpop.permute.xlu0 %7672
        %v7677 = vunpack.c.l.b16 %v6069
        %v7678 = vunpack.c.l.b16 %v6070
        %v7679 = vunpack.c.l.b16 %v6071
        %v7680 = vpack.c.b16 %v7178, %v6989
        %v7681 = vpack.c.b16 %v7678, %v7677
        %v7682 = vpack.c.b16 %v7679, %v7679
        %v7683 = vrot.slane %v6648, 7
        %v7684 = vor.u32 %v7683, %v6651
        %v7685 = vrot.slane %v6657, 7
        %v7686 = vor.u32 %v7685, %v6660
        %v7687 = vsel %vm4021, %v7683, %v7686
        %v7688 = vrot.slane %v6666, 7
        %v7689 = vor.u32 %v7688, %v6669
        %v7690 = vsel %vm4021, %v7685, %v7689
        %v7691 = vrot.slane %v6675, 7
        %v7692 = vor.u32 %v7691, %v6678
        %v7693 = vsel %vm4021, %v7688, %v7692
        %v7694 = vrot.slane %v6684, 7
        %v7695 = vor.u32 %v7694, %v6687
        %v7696 = vsel %vm4021, %v7691, %v7695
        %v7697 = vrot.slane %v6693, 7
        %v7698 = vor.u32 %v7697, %v6696
        %v7699 = vsel %vm4021, %v7694, %v7698
        %v7700 = vrot.slane %v6702, 7
        %v7701 = vor.u32 %v7700, %v6705
        %v7702 = vsel %vm4021, %v7697, %v7701
        %v7703 = vrot.slane %v6711, 7
        %v7704 = vor.u32 %v7703, %v6714
        %v7705 = vsel %vm4021, %v7700, %v7704
        %v7706 = vrot.slane %v6720, 7
        %v7707 = vor.u32 %v7706, %v6723
        %v7708 = vsel %vm4021, %v7703, %v7707
        %v7709 = vrot.slane %v7102, 7
        %v7710 = vor.u32 %v7709, %v7105
        %v7711 = vsel %vm4021, %v7706, %v7710
        %v7712 = vrot.slane %v7111, 7
        %v7713 = vor.u32 %v7712, %v7114
        %v7714 = vsel %vm4021, %v7709, %v7713
        %v7716 = vshrl.u32 %v7680, 16
        %v7718 = vrot.slane %v7716, 7
        %v7719 = vshll.u32 %v7680, 16
        %v7721 = vor.u32 %v7718, %v7719
        %v7722 = vsel %vm4021, %v7712, %v7721
        %v7724 = vshrl.u32 %v7681, 16
        %v7726 = vrot.slane %v7724, 7
        %v7727 = vshll.u32 %v7681, 16
        %v7729 = vor.u32 %v7726, %v7727
        %v7730 = vsel %vm4021, %v7718, %v7729
        %v7732 = vshrl.u32 %v7682, 16
        %v7734 = vrot.slane %v7732, 7
        %v7735 = vshll.u32 %v7682, 16
        %v7737 = vor.u32 %v7734, %v7735
        %v7738 = vsel %vm4021, %v7726, %v7737
        %7739 = vrot.lane.b32.xlu0 %v7684, 32
        %v7740 = vpop.permute.xlu0 %7739
        %7741 = vrot.lane.b32.xlu0 %v7687, 32
        %v7742 = vpop.permute.xlu0 %7741
        %7743 = vrot.lane.b32.xlu0 %v7690, 32
        %v7744 = vpop.permute.xlu0 %7743
        %7745 = vrot.lane.b32.xlu0 %v7693, 32
        %v7746 = vpop.permute.xlu0 %7745
        %7747 = vrot.lane.b32.xlu0 %v7696, 32
        %v7748 = vpop.permute.xlu0 %7747
        %7749 = vrot.lane.b32.xlu0 %v7699, 32
        %v7750 = vpop.permute.xlu0 %7749
        %7751 = vrot.lane.b32.xlu0 %v7702, 32
        %v7752 = vpop.permute.xlu0 %7751
        %7753 = vrot.lane.b32.xlu0 %v7705, 32
        %v7754 = vpop.permute.xlu0 %7753
        %7755 = vrot.lane.b32.xlu0 %v7708, 32
        %v7756 = vpop.permute.xlu0 %7755
        %7757 = vrot.lane.b32.xlu0 %v7711, 32
        %v7758 = vpop.permute.xlu0 %7757
        %7759 = vrot.lane.b32.xlu0 %v7714, 32
        %v7760 = vpop.permute.xlu0 %7759
        %7761 = vrot.lane.b32.xlu0 %v7722, 32
        %v7762 = vpop.permute.xlu0 %7761
        %7763 = vrot.lane.b32.xlu0 %v7730, 32
        %v7764 = vpop.permute.xlu0 %7763
        %7765 = vrot.lane.b32.xlu0 %v7738, 32
        %v7766 = vpop.permute.xlu0 %7765
        %v7768 = vunpack.c.l.b16 %v6072
        %v7769 = vpack.c.b16 %v7768, %v7679
        %7770 = vrot.lane.b32.xlu0 %v6510, 48
        %v7771 = vpop.permute.xlu0 %7770
        %7772 = vrot.lane.b32.xlu0 %v6511, 48
        %v7773 = vpop.permute.xlu0 %7772
        %7774 = vrot.lane.b32.xlu0 %v6512, 48
        %v7775 = vpop.permute.xlu0 %7774
        %7776 = vrot.lane.b32.xlu0 %v6513, 48
        %v7777 = vpop.permute.xlu0 %7776
        %7778 = vrot.lane.b32.xlu0 %v6514, 48
        %v7779 = vpop.permute.xlu0 %7778
        %7780 = vrot.lane.b32.xlu0 %v6515, 48
        %v7781 = vpop.permute.xlu0 %7780
        %7782 = vrot.lane.b32.xlu0 %v6516, 48
        %v7783 = vpop.permute.xlu0 %7782
        %7784 = vrot.lane.b32.xlu0 %v6517, 48
        %v7785 = vpop.permute.xlu0 %7784
        %7786 = vrot.lane.b32.xlu0 %v6518, 48
        %v7787 = vpop.permute.xlu0 %7786
        %7788 = vrot.lane.b32.xlu0 %v6992, 48
        %v7789 = vpop.permute.xlu0 %7788
        %7790 = vrot.lane.b32.xlu0 %v6993, 48
        %v7791 = vpop.permute.xlu0 %7790
        %7792 = vrot.lane.b32.xlu0 %v7680, 48
        %v7793 = vpop.permute.xlu0 %7792
        %7794 = vrot.lane.b32.xlu0 %v7681, 48
        %v7795 = vpop.permute.xlu0 %7794
        %7796 = vrot.lane.b32.xlu0 %v7769, 48
        %v7797 = vpop.permute.xlu0 %7796
        %v7799 = vunpack.c.l.b16 %v6073
        %v7800 = vpack.c.b16 %v6118, %v7799
        %v7802 = vshrl.u32 %v7800, 16
        %v7804 = vshll.u32 %v7800, 16
        %v7806 = vrot.slane %v7804, 1
        %v7807 = vor.u32 %v7802, %v7806
        %v7808 = vrot.slane %v6660, 1
        %v7809 = vsel %vm576, %v7807, %v7808
        %v7810 = vor.u32 %v6657, %v7808
        %v7811 = vrot.slane %v6669, 1
        %v7812 = vsel %vm576, %v7810, %v7811
        %v7813 = vor.u32 %v6666, %v7811
        %v7814 = vrot.slane %v6678, 1
        %v7815 = vsel %vm576, %v7813, %v7814
        %v7816 = vor.u32 %v6675, %v7814
        %v7817 = vrot.slane %v6687, 1
        %v7818 = vsel %vm576, %v7816, %v7817
        %v7819 = vor.u32 %v6684, %v7817
        %v7820 = vrot.slane %v6696, 1
        %v7821 = vsel %vm576, %v7819, %v7820
        %v7822 = vor.u32 %v6693, %v7820
        %v7823 = vrot.slane %v6705, 1
        %v7824 = vsel %vm576, %v7822, %v7823
        %v7825 = vor.u32 %v6702, %v7823
        %v7826 = vrot.slane %v6714, 1
        %v7827 = vsel %vm576, %v7825, %v7826
        %v7828 = vor.u32 %v6711, %v7826
        %v7829 = vrot.slane %v6723, 1
        %v7830 = vsel %vm576, %v7828, %v7829
        %v7831 = vor.u32 %v6720, %v7829
        %v7832 = vrot.slane %v7105, 1
        %v7833 = vsel %vm576, %v7831, %v7832
        %v7834 = vor.u32 %v7102, %v7832
        %v7835 = vrot.slane %v7114, 1
        %v7836 = vsel %vm576, %v7834, %v7835
        %v7837 = vor.u32 %v7111, %v7835
        %v7838 = vrot.slane %v7719, 1
        %v7839 = vsel %vm576, %v7837, %v7838
        %v7840 = vor.u32 %v7716, %v7838
        %v7841 = vrot.slane %v7727, 1
        %v7842 = vsel %vm576, %v7840, %v7841
        %v7843 = vor.u32 %v7724, %v7841
        %v7845 = vshll.u32 %v7769, 16
        %v7847 = vrot.slane %v7845, 1
        %v7848 = vsel %vm576, %v7843, %v7847
        %v7849 = vshrl.u32 %v7769, 16
        %v7851 = vor.u32 %v7849, %v7847
        %7852 = vrot.lane.b32.xlu0 %v7809, 64
        %v7853 = vpop.permute.xlu0 %7852
        %7854 = vrot.lane.b32.xlu0 %v7812, 64
        %v7855 = vpop.permute.xlu0 %7854
        %7856 = vrot.lane.b32.xlu0 %v7815, 64
        %v7857 = vpop.permute.xlu0 %7856
        %7858 = vrot.lane.b32.xlu0 %v7818, 64
        %v7859 = vpop.permute.xlu0 %7858
        %7860 = vrot.lane.b32.xlu0 %v7821, 64
        %v7861 = vpop.permute.xlu0 %7860
        %7862 = vrot.lane.b32.xlu0 %v7824, 64
        %v7863 = vpop.permute.xlu0 %7862
        %7864 = vrot.lane.b32.xlu0 %v7827, 64
        %v7865 = vpop.permute.xlu0 %7864
        %7866 = vrot.lane.b32.xlu0 %v7830, 64
        %v7867 = vpop.permute.xlu0 %7866
        %7868 = vrot.lane.b32.xlu0 %v7833, 64
        %v7869 = vpop.permute.xlu0 %7868
        %7870 = vrot.lane.b32.xlu0 %v7836, 64
        %v7871 = vpop.permute.xlu0 %7870
        %7872 = vrot.lane.b32.xlu0 %v7839, 64
        %v7873 = vpop.permute.xlu0 %7872
        %7874 = vrot.lane.b32.xlu0 %v7842, 64
        %v7875 = vpop.permute.xlu0 %7874
        %7876 = vrot.lane.b32.xlu0 %v7848, 64
        %v7877 = vpop.permute.xlu0 %7876
        %7878 = vrot.lane.b32.xlu0 %v7851, 64
        %v7879 = vpop.permute.xlu0 %7878
        %v7882 = vunpack.c.l.b16 %v6074
        %v7883 = vunpack.c.l.b16 %v6075
        %v7884 = vpack.c.b16 %v6118, %v7882
        %v7885 = vpack.c.b16 %v7883, %v7679
        %v7887 = vshrl.u32 %v7884, 16
        %v7889 = vrot.slane %v7887, 2
        %v7890 = vshll.u32 %v7884, 16
        %v7892 = vrot.slane %v7890, 3
        %v7893 = vor.u32 %v7889, %v7892
        %v7894 = vsel %vm919, %v7893, %v6663
        %v7895 = vrot.slane %v7102, 2
        %v7896 = vrot.slane %v7105, 3
        %v7897 = vor.u32 %v7895, %v7896
        %v7898 = vsel %vm919, %v6726, %v7897
        %v7899 = vrot.slane %v7111, 2
        %v7900 = vrot.slane %v7114, 3
        %v7901 = vor.u32 %v7899, %v7900
        %v7902 = vsel %vm919, %v7897, %v7901
        %v7903 = vrot.slane %v7716, 2
        %v7904 = vrot.slane %v7719, 3
        %v7905 = vor.u32 %v7903, %v7904
        %v7906 = vsel %vm919, %v7901, %v7905
        %v7907 = vrot.slane %v7724, 2
        %v7908 = vrot.slane %v7727, 3
        %v7909 = vor.u32 %v7907, %v7908
        %v7910 = vsel %vm919, %v7905, %v7909
        %v7912 = vshrl.u32 %v7885, 16
        %v7914 = vrot.slane %v7912, 2
        %v7915 = vshll.u32 %v7885, 16
        %v7917 = vrot.slane %v7915, 3
        %v7918 = vor.u32 %v7914, %v7917
        %v7919 = vsel %vm919, %v7909, %v7918
        %7920 = vrot.lane.b32.xlu0 %v7894, 80
        %v7921 = vpop.permute.xlu0 %7920
        %7922 = vrot.lane.b32.xlu0 %v6673, 80
        %v7923 = vpop.permute.xlu0 %7922
        %7924 = vrot.lane.b32.xlu0 %v6682, 80
        %v7925 = vpop.permute.xlu0 %7924
        %7926 = vrot.lane.b32.xlu0 %v6691, 80
        %v7927 = vpop.permute.xlu0 %7926
        %7928 = vrot.lane.b32.xlu0 %v6700, 80
        %v7929 = vpop.permute.xlu0 %7928
        %7930 = vrot.lane.b32.xlu0 %v6709, 80
        %v7931 = vpop.permute.xlu0 %7930
        %7932 = vrot.lane.b32.xlu0 %v6718, 80
        %v7933 = vpop.permute.xlu0 %7932
        %7934 = vrot.lane.b32.xlu0 %v6727, 80
        %v7935 = vpop.permute.xlu0 %7934
        %7936 = vrot.lane.b32.xlu0 %v7898, 80
        %v7937 = vpop.permute.xlu0 %7936
        %7938 = vrot.lane.b32.xlu0 %v7902, 80
        %v7939 = vpop.permute.xlu0 %7938
        %7940 = vrot.lane.b32.xlu0 %v7906, 80
        %v7941 = vpop.permute.xlu0 %7940
        %7942 = vrot.lane.b32.xlu0 %v7910, 80
        %v7943 = vpop.permute.xlu0 %7942
        %7944 = vrot.lane.b32.xlu0 %v7919, 80
        %v7945 = vpop.permute.xlu0 %7944
        %7946 = vrot.lane.b32.xlu0 %v7918, 80
        %v7947 = vpop.permute.xlu0 %7946
        %v7949 = vunpack.c.l.b16 %v6076
        %v7950 = vpack.c.b16 %v7949, %v7679
        %v7951 = vrot.slane %v7884, 3
        %v7952 = vsel %vm722, %v7951, %v6777
        %v7953 = vrot.slane %v6992, 3
        %v7954 = vsel %vm722, %v6791, %v7953
        %v7955 = vrot.slane %v6993, 3
        %v7956 = vsel %vm722, %v7953, %v7955
        %v7957 = vrot.slane %v7680, 3
        %v7958 = vsel %vm722, %v7955, %v7957
        %v7959 = vrot.slane %v7681, 3
        %v7960 = vsel %vm722, %v7957, %v7959
        %v7961 = vrot.slane %v7950, 3
        %v7962 = vsel %vm722, %v7959, %v7961
        %7963 = vrot.lane.b32.xlu0 %v7952, 96
        %v7964 = vpop.permute.xlu0 %7963
        %7965 = vrot.lane.b32.xlu0 %v6780, 96
        %v7966 = vpop.permute.xlu0 %7965
        %7967 = vrot.lane.b32.xlu0 %v6782, 96
        %v7968 = vpop.permute.xlu0 %7967
        %7969 = vrot.lane.b32.xlu0 %v6784, 96
        %v7970 = vpop.permute.xlu0 %7969
        %7971 = vrot.lane.b32.xlu0 %v6786, 96
        %v7972 = vpop.permute.xlu0 %7971
        %7973 = vrot.lane.b32.xlu0 %v6788, 96
        %v7974 = vpop.permute.xlu0 %7973
        %7975 = vrot.lane.b32.xlu0 %v6790, 96
        %v7976 = vpop.permute.xlu0 %7975
        %7977 = vrot.lane.b32.xlu0 %v6792, 96
        %v7978 = vpop.permute.xlu0 %7977
        %7979 = vrot.lane.b32.xlu0 %v7954, 96
        %v7980 = vpop.permute.xlu0 %7979
        %7981 = vrot.lane.b32.xlu0 %v7956, 96
        %v7982 = vpop.permute.xlu0 %7981
        %7983 = vrot.lane.b32.xlu0 %v7958, 96
        %v7984 = vpop.permute.xlu0 %7983
        %7985 = vrot.lane.b32.xlu0 %v7960, 96
        %v7986 = vpop.permute.xlu0 %7985
        %7987 = vrot.lane.b32.xlu0 %v7962, 96
        %v7988 = vpop.permute.xlu0 %7987
        %7989 = vrot.lane.b32.xlu0 %v7961, 96
        %v7990 = vpop.permute.xlu0 %7989
        %v7991 = vpack.c.b16 %v7677, %v7178
        %v7992 = vpack.c.b16 %v7679, %v7678
        %v7993 = vpack.c.b16 %v7949, %v7949
        %v7994 = vrot.slane %v6196, 7
        %v7995 = vor.u32 %v7994, %v6192
        %v7996 = vrot.slane %v6204, 7
        %v7997 = vor.u32 %v7996, %v6200
        %v7998 = vsel %vm4021, %v7994, %v7997
        %v7999 = vrot.slane %v6212, 7
        %v8000 = vor.u32 %v7999, %v6208
        %v8001 = vsel %vm4021, %v7996, %v8000
        %v8002 = vrot.slane %v6220, 7
        %v8003 = vor.u32 %v8002, %v6216
        %v8004 = vsel %vm4021, %v7999, %v8003
        %v8005 = vrot.slane %v6228, 7
        %v8006 = vor.u32 %v8005, %v6224
        %v8007 = vsel %vm4021, %v8002, %v8006
        %v8008 = vrot.slane %v6236, 7
        %v8009 = vor.u32 %v8008, %v6232
        %v8010 = vsel %vm4021, %v8005, %v8009
        %v8011 = vrot.slane %v6244, 7
        %v8012 = vor.u32 %v8011, %v6240
        %v8013 = vsel %vm4021, %v8008, %v8012
        %v8014 = vrot.slane %v6252, 7
        %v8015 = vor.u32 %v8014, %v6248
        %v8016 = vsel %vm4021, %v8011, %v8015
        %v8017 = vrot.slane %v6470, 7
        %v8018 = vor.u32 %v8017, %v6473
        %v8019 = vsel %vm4021, %v8014, %v8018
        %v8020 = vrot.slane %v6919, 7
        %v8021 = vor.u32 %v8020, %v6922
        %v8022 = vsel %vm4021, %v8017, %v8021
        %v8023 = vrot.slane %v7651, 7
        %v8024 = vor.u32 %v8023, %v7647
        %v8025 = vsel %vm4021, %v8020, %v8024
        %v8027 = vshrl.u32 %v7991, 16
        %v8029 = vrot.slane %v8027, 7
        %v8030 = vshll.u32 %v7991, 16
        %v8032 = vor.u32 %v8029, %v8030
        %v8033 = vsel %vm4021, %v8023, %v8032
        %v8035 = vshrl.u32 %v7992, 16
        %v8037 = vrot.slane %v8035, 7
        %v8038 = vshll.u32 %v7992, 16
        %v8040 = vor.u32 %v8037, %v8038
        %v8041 = vsel %vm4021, %v8029, %v8040
        %v8043 = vshrl.u32 %v7993, 16
        %v8045 = vrot.slane %v8043, 7
        %v8046 = vshll.u32 %v7993, 16
        %v8048 = vor.u32 %v8045, %v8046
        %v8049 = vsel %vm4021, %v8037, %v8048
        %8050 = vrot.lane.b32.xlu0 %v7995, 112
        %v8051 = vpop.permute.xlu0 %8050
        %8052 = vrot.lane.b32.xlu0 %v7998, 112
        %v8053 = vpop.permute.xlu0 %8052
        %8054 = vrot.lane.b32.xlu0 %v8001, 112
        %v8055 = vpop.permute.xlu0 %8054
        %8056 = vrot.lane.b32.xlu0 %v8004, 112
        %v8057 = vpop.permute.xlu0 %8056
        %8058 = vrot.lane.b32.xlu0 %v8007, 112
        %v8059 = vpop.permute.xlu0 %8058
        %8060 = vrot.lane.b32.xlu0 %v8010, 112
        %v8061 = vpop.permute.xlu0 %8060
        %8062 = vrot.lane.b32.xlu0 %v8013, 112
        %v8063 = vpop.permute.xlu0 %8062
        %8064 = vrot.lane.b32.xlu0 %v8016, 112
        %v8065 = vpop.permute.xlu0 %8064
        %8066 = vrot.lane.b32.xlu0 %v8019, 112
        %v8067 = vpop.permute.xlu0 %8066
        %8068 = vrot.lane.b32.xlu0 %v8022, 112
        %v8069 = vpop.permute.xlu0 %8068
        %8070 = vrot.lane.b32.xlu0 %v8025, 112
        %v8071 = vpop.permute.xlu0 %8070
        %8072 = vrot.lane.b32.xlu0 %v8033, 112
        %v8073 = vpop.permute.xlu0 %8072
        %8074 = vrot.lane.b32.xlu0 %v8041, 112
        %v8075 = vpop.permute.xlu0 %8074
        %8076 = vrot.lane.b32.xlu0 %v8049, 112
        %v8077 = vpop.permute.xlu0 %8076
        %v8080 = vunpack.c.l.b16 %v6077
        %v8081 = vunpack.c.l.b16 %v6078
        %v8082 = vpack.c.b16 %v6119, %v8080
        %v8083 = vpack.c.b16 %v8081, %v7949
        %v8085 = vshrl.u32 %v8082, 16
        %v8087 = vrot.slane %v8085, 1
        %v8088 = vshll.u32 %v8082, 16
        %v8090 = vrot.slane %v8088, 2
        %v8091 = vor.u32 %v8087, %v8090
        %v8092 = vrot.slane %v6204, 1
        %v8093 = vrot.slane %v6200, 2
        %v8094 = vor.u32 %v8092, %v8093
        %v8095 = vsel %vm1097, %v8091, %v8094
        %v8096 = vrot.slane %v6212, 1
        %v8097 = vrot.slane %v6208, 2
        %v8098 = vor.u32 %v8096, %v8097
        %v8099 = vsel %vm1097, %v8094, %v8098
        %v8100 = vrot.slane %v6220, 1
        %v8101 = vrot.slane %v6216, 2
        %v8102 = vor.u32 %v8100, %v8101
        %v8103 = vsel %vm1097, %v8098, %v8102
        %v8104 = vrot.slane %v6228, 1
        %v8105 = vrot.slane %v6224, 2
        %v8106 = vor.u32 %v8104, %v8105
        %v8107 = vsel %vm1097, %v8102, %v8106
        %v8108 = vrot.slane %v6236, 1
        %v8109 = vrot.slane %v6232, 2
        %v8110 = vor.u32 %v8108, %v8109
        %v8111 = vsel %vm1097, %v8106, %v8110
        %v8112 = vrot.slane %v6244, 1
        %v8113 = vrot.slane %v6240, 2
        %v8114 = vor.u32 %v8112, %v8113
        %v8115 = vsel %vm1097, %v8110, %v8114
        %v8116 = vrot.slane %v6252, 1
        %v8117 = vrot.slane %v6248, 2
        %v8118 = vor.u32 %v8116, %v8117
        %v8119 = vsel %vm1097, %v8114, %v8118
        %v8120 = vrot.slane %v6470, 1
        %v8121 = vrot.slane %v6473, 2
        %v8122 = vor.u32 %v8120, %v8121
        %v8123 = vsel %vm1097, %v8118, %v8122
        %v8124 = vrot.slane %v6919, 1
        %v8125 = vrot.slane %v6922, 2
        %v8126 = vor.u32 %v8124, %v8125
        %v8127 = vsel %vm1097, %v8122, %v8126
        %v8128 = vrot.slane %v7651, 1
        %v8129 = vrot.slane %v7647, 2
        %v8130 = vor.u32 %v8128, %v8129
        %v8131 = vsel %vm1097, %v8126, %v8130
        %v8132 = vrot.slane %v8027, 1
        %v8133 = vrot.slane %v8030, 2
        %v8134 = vor.u32 %v8132, %v8133
        %v8135 = vsel %vm1097, %v8130, %v8134
        %v8136 = vrot.slane %v8035, 1
        %v8137 = vrot.slane %v8038, 2
        %v8138 = vor.u32 %v8136, %v8137
        %v8139 = vsel %vm1097, %v8134, %v8138
        %v8141 = vshrl.u32 %v8083, 16
        %v8143 = vrot.slane %v8141, 1
        %v8144 = vshll.u32 %v8083, 16
        %v8146 = vrot.slane %v8144, 2
        %v8147 = vor.u32 %v8143, %v8146
        %v8148 = vsel %vm1097, %v8138, %v8147
        %v8150 = vunpack.c.l.b16 %v6079
        %v8151 = vpack.c.b16 %v8150, %v7949
        %v8152 = vrot.slane %v8082, 2
        %v8153 = vsel %vm888, %v8152, %v6815
        %v8154 = vrot.slane %v7179, 2
        %v8155 = vsel %vm888, %v6831, %v8154
        %v8156 = vrot.slane %v7991, 2
        %v8157 = vsel %vm888, %v8154, %v8156
        %v8158 = vrot.slane %v7992, 2
        %v8159 = vsel %vm888, %v8156, %v8158
        %v8160 = vrot.slane %v8151, 2
        %v8161 = vsel %vm888, %v8158, %v8160
        %8162 = vrot.lane.b32.xlu0 %v8153, 16
        %v8163 = vpop.permute.xlu0 %8162
        %8164 = vrot.lane.b32.xlu0 %v8155, 16
        %v8165 = vpop.permute.xlu0 %8164
        %8166 = vrot.lane.b32.xlu0 %v8157, 16
        %v8167 = vpop.permute.xlu0 %8166
        %8168 = vrot.lane.b32.xlu0 %v8159, 16
        %v8169 = vpop.permute.xlu0 %8168
        %8170 = vrot.lane.b32.xlu0 %v8161, 16
        %v8171 = vpop.permute.xlu0 %8170
        %8172 = vrot.lane.b32.xlu0 %v8160, 16
        %v8173 = vpop.permute.xlu0 %8172
        %v8175 = vunpack.c.l.b16 %v6080
        %v8176 = vpack.c.b16 %v6119, %v8175
        %v8178 = vshrl.u32 %v8176, 16
        %v8180 = vrot.slane %v8178, 2
        %v8181 = vshll.u32 %v8176, 16
        %v8183 = vrot.slane %v8181, 3
        %v8184 = vor.u32 %v8180, %v8183
        %v8185 = vsel %vm919, %v8184, %v6888
        %v8186 = vrot.slane %v7651, 2
        %v8187 = vrot.slane %v7647, 3
        %v8188 = vor.u32 %v8186, %v8187
        %v8189 = vsel %vm919, %v6925, %v8188
        %v8190 = vrot.slane %v8027, 2
        %v8191 = vrot.slane %v8030, 3
        %v8192 = vor.u32 %v8190, %v8191
        %v8193 = vsel %vm919, %v8188, %v8192
        %v8194 = vrot.slane %v8035, 2
        %v8195 = vrot.slane %v8038, 3
        %v8196 = vor.u32 %v8194, %v8195
        %v8197 = vsel %vm919, %v8192, %v8196
        %v8199 = vshrl.u32 %v8151, 16
        %v8201 = vrot.slane %v8199, 2
        %v8202 = vshll.u32 %v8151, 16
        %v8204 = vrot.slane %v8202, 3
        %v8205 = vor.u32 %v8201, %v8204
        %v8206 = vsel %vm919, %v8196, %v8205
        %8207 = vrot.lane.b32.xlu0 %v8185, 32
        %v8208 = vpop.permute.xlu0 %8207
        %8209 = vrot.lane.b32.xlu0 %v8189, 32
        %v8210 = vpop.permute.xlu0 %8209
        %8211 = vrot.lane.b32.xlu0 %v8193, 32
        %v8212 = vpop.permute.xlu0 %8211
        %8213 = vrot.lane.b32.xlu0 %v8197, 32
        %v8214 = vpop.permute.xlu0 %8213
        %8215 = vrot.lane.b32.xlu0 %v8206, 32
        %v8216 = vpop.permute.xlu0 %8215
        %8217 = vrot.lane.b32.xlu0 %v8205, 32
        %v8218 = vpop.permute.xlu0 %8217
        %v8220 = vsel %vm3543, %v6138, %v7663
        %v8222 = vsel %vm3543, %v6147, %v7665
        %v8224 = vsel %vm3543, %v6412, %v7667
        %v8226 = vsel %vm3543, %v6806, %v7669
        %v8228 = vsel %vm3543, %v7179, %v7671
        %v8230 = vsel %vm3543, %v7628, %v7673
        %v8232 = vsel %vm1251, %v8220, %v7740
        %v8234 = vsel %vm1251, %v7218, %v7742
        %v8236 = vsel %vm1251, %v7220, %v7744
        %v8238 = vsel %vm1251, %v7222, %v7746
        %v8240 = vsel %vm1251, %v7224, %v7748
        %v8242 = vsel %vm1251, %v7226, %v7750
        %v8244 = vsel %vm1251, %v7228, %v7752
        %v8246 = vsel %vm1251, %v7230, %v7754
        %v8248 = vsel %vm1251, %v7232, %v7756
        %v8250 = vsel %vm1251, %v8222, %v7758
        %v8252 = vsel %vm1251, %v8224, %v7760
        %v8254 = vsel %vm1251, %v8226, %v7762
        %v8256 = vsel %vm1251, %v8228, %v7764
        %v8258 = vsel %vm1251, %v8230, %v7766
        %v8260 = vsel %vm3601, %v8232, %v7771
        %v8262 = vsel %vm3601, %v8234, %v7773
        %v8264 = vsel %vm3601, %v8236, %v7775
        %v8266 = vsel %vm3601, %v8238, %v7777
        %v8268 = vsel %vm3601, %v8240, %v7779
        %v8270 = vsel %vm3601, %v8242, %v7781
        %v8272 = vsel %vm3601, %v8244, %v7783
        %v8274 = vsel %vm3601, %v8246, %v7785
        %v8276 = vsel %vm3601, %v8248, %v7787
        %v8278 = vsel %vm3601, %v8250, %v7789
        %v8280 = vsel %vm3601, %v8252, %v7791
        %v8282 = vsel %vm3601, %v8254, %v7793
        %v8284 = vsel %vm3601, %v8256, %v7795
        %v8286 = vsel %vm3601, %v8258, %v7797
        %v8288 = vsel %vm1281, %v8260, %v7853
        %v8290 = vsel %vm1281, %v8262, %v7855
        %v8292 = vsel %vm1281, %v8264, %v7857
        %v8294 = vsel %vm1281, %v8266, %v7859
        %v8296 = vsel %vm1281, %v8268, %v7861
        %v8298 = vsel %vm1281, %v8270, %v7863
        %v8300 = vsel %vm1281, %v8272, %v7865
        %v8302 = vsel %vm1281, %v8274, %v7867
        %v8304 = vsel %vm1281, %v8276, %v7869
        %v8306 = vsel %vm1281, %v8278, %v7871
        %v8308 = vsel %vm1281, %v8280, %v7873
        %v8310 = vsel %vm1281, %v8282, %v7875
        %v8312 = vsel %vm1281, %v8284, %v7877
        %v8314 = vsel %vm1281, %v8286, %v7879
        %v8316 = vsel %vm3658, %v8288, %v7921
        %v8318 = vsel %vm3658, %v8290, %v7923
        %v8320 = vsel %vm3658, %v8292, %v7925
        %v8322 = vsel %vm3658, %v8294, %v7927
        %v8324 = vsel %vm3658, %v8296, %v7929
        %v8326 = vsel %vm3658, %v8298, %v7931
        %v8328 = vsel %vm3658, %v8300, %v7933
        %v8330 = vsel %vm3658, %v8302, %v7935
        %v8332 = vsel %vm3658, %v8304, %v7937
        %v8334 = vsel %vm3658, %v8306, %v7939
        %v8336 = vsel %vm3658, %v8308, %v7941
        %v8338 = vsel %vm3658, %v8310, %v7943
        %v8340 = vsel %vm3658, %v8312, %v7945
        %v8342 = vsel %vm3658, %v8314, %v7947
        %v8344 = vsel %vm1310, %v8316, %v7964
        %v8346 = vsel %vm1310, %v8318, %v7966
        %v8348 = vsel %vm1310, %v8320, %v7968
        %v8350 = vsel %vm1310, %v8322, %v7970
        %v8352 = vsel %vm1310, %v8324, %v7972
        %v8354 = vsel %vm1310, %v8326, %v7974
        %v8356 = vsel %vm1310, %v8328, %v7976
        %v8358 = vsel %vm1310, %v8330, %v7978
        %v8360 = vsel %vm1310, %v8332, %v7980
        %v8362 = vsel %vm1310, %v8334, %v7982
        %v8364 = vsel %vm1310, %v8336, %v7984
        %v8366 = vsel %vm1310, %v8338, %v7986
        %v8368 = vsel %vm1310, %v8340, %v7988
        %v8370 = vsel %vm1310, %v8342, %v7990
        %v8372 = vsel %vm3715, %v8344, %v8051
        %v8374 = vsel %vm3715, %v8346, %v8053
        %v8376 = vsel %vm3715, %v8348, %v8055
        %v8378 = vsel %vm3715, %v8350, %v8057
        %v8380 = vsel %vm3715, %v8352, %v8059
        %v8382 = vsel %vm3715, %v8354, %v8061
        %v8384 = vsel %vm3715, %v8356, %v8063
        %v8386 = vsel %vm3715, %v8358, %v8065
        %v8388 = vsel %vm3715, %v8360, %v8067
        %v8390 = vsel %vm3715, %v8362, %v8069
        %v8392 = vsel %vm3715, %v8364, %v8071
        %v8394 = vsel %vm3715, %v8366, %v8073
        %v8396 = vsel %vm3715, %v8368, %v8075
        %v8398 = vsel %vm3715, %v8370, %v8077
        %v8401 = vsel %vm3543, %v8095, %v8163
        %v8403 = vsel %vm3543, %v8099, %v6844
        %v8405 = vsel %vm3543, %v8103, %v6846
        %v8407 = vsel %vm3543, %v8107, %v6848
        %v8409 = vsel %vm3543, %v8111, %v6850
        %v8411 = vsel %vm3543, %v8115, %v6852
        %v8413 = vsel %vm3543, %v8119, %v6854
        %v8415 = vsel %vm3543, %v8123, %v6856
        %v8417 = vsel %vm3543, %v8127, %v6858
        %v8420 = vsel %vm3543, %v8131, %v8165
        %v8423 = vsel %vm3543, %v8135, %v8167
        %v8426 = vsel %vm3543, %v8139, %v8169
        %v8429 = vsel %vm3543, %v8148, %v8171
        %v8432 = vsel %vm3543, %v8147, %v8173
        %v8434 = vsel %vm1251, %v8401, %v8208
        %v8435 = vsel %vm1251, %v8403, %v6945
        %v8436 = vsel %vm1251, %v8405, %v6947
        %v8437 = vsel %vm1251, %v8407, %v6949
        %v8438 = vsel %vm1251, %v8409, %v6951
        %v8439 = vsel %vm1251, %v8411, %v6953
        %v8440 = vsel %vm1251, %v8413, %v6955
        %v8441 = vsel %vm1251, %v8415, %v6957
        %v8442 = vsel %vm1251, %v8417, %v6959
        %v8444 = vsel %vm1251, %v8420, %v8210
        %v8446 = vsel %vm1251, %v8423, %v8212
        %v8448 = vsel %vm1251, %v8426, %v8214
        %v8450 = vsel %vm1251, %v8429, %v8216
        %v8452 = vsel %vm1251, %v8432, %v8218
        %v8453 = vshrl.u32 %v8372, 16
        %v8455 = vshll.u32 %v8372, 16
        %v8457 = vrot.slane %v8455, 1
        %v8458 = vor.u32 %v8453, %v8457
        %v8459 = vshll.u32 %v8374, 16
        %v8461 = vrot.slane %v8459, 1
        %v8462 = vsel %vm576, %v8458, %v8461
        %v8463 = vshrl.u32 %v8434, 16
        %v8465 = vshll.u32 %v8434, 16
        %v8467 = vrot.slane %v8465, 1
        %v8468 = vor.u32 %v8463, %v8467
        %v8469 = vshll.u32 %v8435, 16
        %v8471 = vrot.slane %v8469, 1
        %v8472 = vsel %vm576, %v8468, %v8471
        %v8473 = vshrl.u32 %v8374, 16
        %v8475 = vor.u32 %v8473, %v8461
        %v8476 = vshll.u32 %v8376, 16
        %v8478 = vrot.slane %v8476, 1
        %v8479 = vsel %vm576, %v8475, %v8478
        %v8480 = vshrl.u32 %v8435, 16
        %v8482 = vor.u32 %v8480, %v8471
        %v8483 = vshll.u32 %v8436, 16
        %v8485 = vrot.slane %v8483, 1
        %v8486 = vsel %vm576, %v8482, %v8485
        %v8487 = vshrl.u32 %v8376, 16
        %v8489 = vor.u32 %v8487, %v8478
        %v8490 = vshll.u32 %v8378, 16
        %v8492 = vrot.slane %v8490, 1
        %v8493 = vsel %vm576, %v8489, %v8492
        %v8494 = vshrl.u32 %v8436, 16
        %v8496 = vor.u32 %v8494, %v8485
        %v8497 = vshll.u32 %v8437, 16
        %v8499 = vrot.slane %v8497, 1
        %v8500 = vsel %vm576, %v8496, %v8499
        %v8501 = vshrl.u32 %v8378, 16
        %v8503 = vor.u32 %v8501, %v8492
        %v8504 = vshll.u32 %v8380, 16
        %v8506 = vrot.slane %v8504, 1
        %v8507 = vsel %vm576, %v8503, %v8506
        %v8508 = vshrl.u32 %v8437, 16
        %v8510 = vor.u32 %v8508, %v8499
        %v8511 = vshll.u32 %v8438, 16
        %v8513 = vrot.slane %v8511, 1
        %v8514 = vsel %vm576, %v8510, %v8513
        %v8515 = vshrl.u32 %v8380, 16
        %v8517 = vor.u32 %v8515, %v8506
        %v8518 = vshll.u32 %v8382, 16
        %v8520 = vrot.slane %v8518, 1
        %v8521 = vsel %vm576, %v8517, %v8520
        %v8522 = vshrl.u32 %v8438, 16
        %v8524 = vor.u32 %v8522, %v8513
        %v8525 = vshll.u32 %v8439, 16
        %v8527 = vrot.slane %v8525, 1
        %v8528 = vsel %vm576, %v8524, %v8527
        %v8529 = vshrl.u32 %v8382, 16
        %v8531 = vor.u32 %v8529, %v8520
        %v8532 = vshll.u32 %v8384, 16
        %v8534 = vrot.slane %v8532, 1
        %v8535 = vsel %vm576, %v8531, %v8534
        %v8536 = vshrl.u32 %v8439, 16
        %v8538 = vor.u32 %v8536, %v8527
        %v8539 = vshll.u32 %v8440, 16
        %v8541 = vrot.slane %v8539, 1
        %v8542 = vsel %vm576, %v8538, %v8541
        %v8543 = vshrl.u32 %v8384, 16
        %v8545 = vor.u32 %v8543, %v8534
        %v8546 = vshll.u32 %v8386, 16
        %v8548 = vrot.slane %v8546, 1
        %v8549 = vsel %vm576, %v8545, %v8548
        %v8550 = vshrl.u32 %v8440, 16
        %v8552 = vor.u32 %v8550, %v8541
        %v8553 = vshll.u32 %v8441, 16
        %v8555 = vrot.slane %v8553, 1
        %v8556 = vsel %vm576, %v8552, %v8555
        %v8557 = vshrl.u32 %v8386, 16
        %v8559 = vor.u32 %v8557, %v8548
        %v8560 = vshll.u32 %v8388, 16
        %v8562 = vrot.slane %v8560, 1
        %v8563 = vsel %vm576, %v8559, %v8562
        %v8564 = vshrl.u32 %v8441, 16
        %v8566 = vor.u32 %v8564, %v8555
        %v8567 = vshll.u32 %v8442, 16
        %v8569 = vrot.slane %v8567, 1
        %v8570 = vsel %vm576, %v8566, %v8569
        %v8571 = vshrl.u32 %v8388, 16
        %v8573 = vor.u32 %v8571, %v8562
        %v8574 = vshll.u32 %v8390, 16
        %v8576 = vrot.slane %v8574, 1
        %v8577 = vsel %vm576, %v8573, %v8576
        %v8578 = vshrl.u32 %v8442, 16
        %v8580 = vor.u32 %v8578, %v8569
        %v8581 = vshll.u32 %v8444, 16
        %v8583 = vrot.slane %v8581, 1
        %v8584 = vsel %vm576, %v8580, %v8583
        %v8585 = vshrl.u32 %v8390, 16
        %v8587 = vor.u32 %v8585, %v8576
        %v8588 = vshll.u32 %v8392, 16
        %v8590 = vrot.slane %v8588, 1
        %v8591 = vsel %vm576, %v8587, %v8590
        %v8592 = vshrl.u32 %v8444, 16
        %v8594 = vor.u32 %v8592, %v8583
        %v8595 = vshll.u32 %v8446, 16
        %v8597 = vrot.slane %v8595, 1
        %v8598 = vsel %vm576, %v8594, %v8597
        %v8599 = vshrl.u32 %v8392, 16
        %v8601 = vor.u32 %v8599, %v8590
        %v8602 = vshll.u32 %v8394, 16
        %v8604 = vrot.slane %v8602, 1
        %v8605 = vsel %vm576, %v8601, %v8604
        %v8606 = vshrl.u32 %v8446, 16
        %v8608 = vor.u32 %v8606, %v8597
        %v8609 = vshll.u32 %v8448, 16
        %v8611 = vrot.slane %v8609, 1
        %v8612 = vsel %vm576, %v8608, %v8611
        %v8613 = vshrl.u32 %v8394, 16
        %v8615 = vor.u32 %v8613, %v8604
        %v8616 = vshll.u32 %v8396, 16
        %v8618 = vrot.slane %v8616, 1
        %v8619 = vsel %vm576, %v8615, %v8618
        %v8620 = vshrl.u32 %v8448, 16
        %v8622 = vor.u32 %v8620, %v8611
        %v8623 = vshll.u32 %v8450, 16
        %v8625 = vrot.slane %v8623, 1
        %v8626 = vsel %vm576, %v8622, %v8625
        %v8627 = vshrl.u32 %v8396, 16
        %v8629 = vor.u32 %v8627, %v8618
        %v8630 = vshll.u32 %v8398, 16
        %v8632 = vrot.slane %v8630, 1
        %v8633 = vsel %vm576, %v8629, %v8632
        %v8634 = vshrl.u32 %v8450, 16
        %v8636 = vor.u32 %v8634, %v8625
        %v8637 = vshll.u32 %v8452, 16
        %v8639 = vrot.slane %v8637, 1
        %v8640 = vsel %vm576, %v8636, %v8639
        %v8641 = vshrl.u32 %v8398, 16
        %v8643 = vor.u32 %v8641, %v8632
        %v8644 = vshrl.u32 %v8452, 16
        %v8646 = vor.u32 %v8644, %v8639
        %v8661 = vld [vmem:[%s5] sm:$0xf]
        %v8662 = vld [vmem:[%s5 + $0x4] sm:$0xf]
        %v8663 = vld [vmem:[%s5 + $0x8] sm:$0xf]
        %v8664 = vld [vmem:[%s5 + $0xc] sm:$0xf]
        %v8665 = vld [vmem:[%s5 + $0x10] sm:$0xf]
        %v8666 = vld [vmem:[%s5 + $0x14] sm:$0xf]
        %v8667 = vld [vmem:[%s5 + $0x18] sm:$0xf]
        %v8668 = vld [vmem:[%s5 + $0x1c] sm:$0xf]
        %v8669 = vld [vmem:[%s5 + $0x20] sm:$0xf]
        %v8670 = vld [vmem:[%s5 + $0x24] sm:$0xf]
        %v8671 = vld [vmem:[%s5 + $0x28] sm:$0xf]
        %v8672 = vld [vmem:[%s5 + $0x2c] sm:$0xf]
        %v8673 = vld [vmem:[%s5 + $0x30] sm:$0xf]
        %v8674 = vld [vmem:[%s5 + $0x34] sm:$0xf]
        %v8675 = vld [vmem:[%s5 + $0x38] sm:$0xf]
        %v8676 = vld [vmem:[%s5 + $0x3c] sm:$0xf]
        %v8677 = vld [vmem:[%s5 + $0x40] sm:$0xf]
        %v8678 = vld [vmem:[%s5 + $0x44] sm:$0xf]
        %v8679 = vld [vmem:[%s5 + $0x48] sm:$0xf]
        %v8680 = vld [vmem:[%s5 + $0x4c] sm:$0xf]
        %v8681 = vld [vmem:[%s5 + $0x50] sm:$0xf]
        %v8682 = vld [vmem:[%s5 + $0x54] sm:$0xf]
        %v8683 = vld [vmem:[%s5 + $0x58] sm:$0xf]
        %v8684 = vld [vmem:[%s5 + $0x5c] sm:$0xf]
        %v8685 = vld [vmem:[%s5 + $0x60] sm:$0xf]
        %v8686 = vld [vmem:[%s5 + $0x64] sm:$0xf]
        %v8687 = vld [vmem:[%s5 + $0x68] sm:$0xf]
        %v8688 = vld [vmem:[%s5 + $0x6c] sm:$0xf]
        %v8689 = vld [vmem:[%s5 + $0x70] sm:$0xf]
        %v8690 = vld [vmem:[%s5 + $0x74] sm:$0xf]
        %v8691 = vld [vmem:[%s5 + $0x78] sm:$0xf]
        %v8692 = vld [vmem:[%s5 + $0x7c] sm:$0xf]
        %v8693 = vld [vmem:[%s5 + $0x80] sm:$0xf]
        %v8694 = vld [vmem:[%s5 + $0x84] sm:$0xf]
        %v8695 = vld [vmem:[%s5 + $0x88] sm:$0xf]
        %v8696 = vld [vmem:[%s5 + $0x8c] sm:$0xf]
        %v8697 = vld [vmem:[%s5 + $0x90] sm:$0xf]
        %v8698 = vld [vmem:[%s5 + $0x94] sm:$0xf]
        %v8699 = vld [vmem:[%s5 + $0x98] sm:$0xf]
        %v8700 = vld [vmem:[%s5 + $0x9c] sm:$0xf]
        %v8701 = vld [vmem:[%s5 + $0xa0] sm:$0xf]
        %v8702 = vld [vmem:[%s5 + $0xa4] sm:$0xf]
        %v8703 = vld [vmem:[%s5 + $0xa8] sm:$0xf]
        %v8704 = vld [vmem:[%s5 + $0xac] sm:$0xf]
        %v8705 = vld [vmem:[%s5 + $0xb0] sm:$0xf]
        %v8706 = vld [vmem:[%s5 + $0xb4] sm:$0xf]
        %v8707 = vld [vmem:[%s5 + $0xb8] sm:$0xf]
        %v8708 = vld [vmem:[%s5 + $0xbc] sm:$0xf]
        %v8709 = vld [vmem:[%s5 + $0xc0] sm:$0xf]
        %v8710 = vld [vmem:[%s5 + $0xc4] sm:$0xf]
        %v8711 = vld [vmem:[%s5 + $0xc8] sm:$0xf]
        %v8712 = vld [vmem:[%s5 + $0xcc] sm:$0xf]
        %v8713 = vld [vmem:[%s5 + $0xd0] sm:$0xf]
        %v8714 = vld [vmem:[%s5 + $0xd4] sm:$0xf]
        %v8715 = vld [vmem:[%s6] sm:$0x1]
        %v8717 = vlaneseq
        %v8718 = vshrl.u32 %v8717, 7
        %v8719 = vsub.s32 0, %v8718
        %v8720 = vrot.slane %v8715, %v8719
        %v8776 = vunpack.c.l.b16 %v8661
        %v8777 = vunpack.c.l.b16 %v8662
        %v8778 = vunpack.c.l.b16 %v8663
        %v8779 = vunpack.c.l.b16 %v8664
        %v8780 = vunpack.c.l.b16 %v8665
        %v8781 = vunpack.c.l.b16 %v8666
        %v8782 = vunpack.c.l.b16 %v8667
        %v8783 = vunpack.c.l.b16 %v8668
        %v8784 = vunpack.c.l.b16 %v8669
        %v8785 = vunpack.c.l.b16 %v8670
        %v8786 = vunpack.c.l.b16 %v8671
        %v8787 = vunpack.c.l.b16 %v8672
        %v8788 = vunpack.c.l.b16 %v8673
        %v8789 = vunpack.c.l.b16 %v8674
        %v8790 = vunpack.c.l.b16 %v8675
        %v8791 = vunpack.c.l.b16 %v8676
        %v8792 = vunpack.c.l.b16 %v8677
        %v8793 = vunpack.c.l.b16 %v8678
        %v8794 = vunpack.c.l.b16 %v8679
        %v8795 = vunpack.c.l.b16 %v8680
        %v8796 = vunpack.c.l.b16 %v8681
        %v8797 = vunpack.c.l.b16 %v8682
        %v8798 = vunpack.c.l.b16 %v8683
        %v8799 = vunpack.c.l.b16 %v8684
        %v8800 = vunpack.c.l.b16 %v8685
        %v8801 = vunpack.c.l.b16 %v8686
        %v8802 = vunpack.c.l.b16 %v8687
        %v8803 = vunpack.c.l.b16 %v8688
        %v8804 = vunpack.c.l.b16 %v8689
        %v8805 = vunpack.c.l.b16 %v8690
        %v8806 = vunpack.c.l.b16 %v8691
        %v8807 = vunpack.c.l.b16 %v8692
        %v8808 = vunpack.c.l.b16 %v8693
        %v8809 = vunpack.c.l.b16 %v8694
        %v8810 = vunpack.c.l.b16 %v8695
        %v8811 = vunpack.c.l.b16 %v8696
        %v8812 = vunpack.c.l.b16 %v8697
        %v8813 = vunpack.c.l.b16 %v8698
        %v8814 = vunpack.c.l.b16 %v8699
        %v8815 = vunpack.c.l.b16 %v8700
        %v8816 = vunpack.c.l.b16 %v8701
        %v8817 = vunpack.c.l.b16 %v8702
        %v8818 = vunpack.c.l.b16 %v8703
        %v8819 = vunpack.c.l.b16 %v8704
        %v8820 = vunpack.c.l.b16 %v8705
        %v8821 = vunpack.c.l.b16 %v8706
        %v8822 = vunpack.c.l.b16 %v8707
        %v8823 = vunpack.c.l.b16 %v8708
        %v8824 = vunpack.c.l.b16 %v8709
        %v8825 = vunpack.c.l.b16 %v8710
        %v8826 = vunpack.c.l.b16 %v8711
        %v8827 = vunpack.c.l.b16 %v8712
        %v8828 = vunpack.c.l.b16 %v8713
        %v8829 = vunpack.c.l.b16 %v8714
        %v8830 = vpack.c.b16 %v8777, %v8776
        %v8831 = vpack.c.b16 %v8779, %v8778
        %v8832 = vpack.c.b16 %v8781, %v8780
        %v8833 = vpack.c.b16 %v8783, %v8782
        %v8834 = vpack.c.b16 %v8785, %v8784
        %v8835 = vpack.c.b16 %v8787, %v8786
        %v8836 = vpack.c.b16 %v8789, %v8788
        %v8837 = vpack.c.b16 %v8791, %v8790
        %v8838 = vpack.c.b16 %v8793, %v8792
        %v8839 = vpack.c.b16 %v8795, %v8794
        %v8840 = vpack.c.b16 %v8797, %v8796
        %v8841 = vpack.c.b16 %v8799, %v8798
        %v8842 = vpack.c.b16 %v8801, %v8800
        %v8843 = vpack.c.b16 %v8803, %v8802
        %v8844 = vpack.c.b16 %v8805, %v8804
        %v8845 = vpack.c.b16 %v8807, %v8806
        %v8846 = vpack.c.b16 %v8809, %v8808
        %v8847 = vpack.c.b16 %v8811, %v8810
        %v8848 = vpack.c.b16 %v8813, %v8812
        %v8849 = vpack.c.b16 %v8815, %v8814
        %v8850 = vpack.c.b16 %v8817, %v8816
        %v8851 = vpack.c.b16 %v8819, %v8818
        %v8852 = vpack.c.b16 %v8821, %v8820
        %v8853 = vpack.c.b16 %v8823, %v8822
        %v8854 = vpack.c.b16 %v8825, %v8824
        %v8855 = vpack.c.b16 %v8827, %v8826
        %v8856 = vpack.c.b16 %v8829, %v8828
        %v8885 = vsel %vm3601, %v8472, 0
        %v8888 = vsel %vm3601, %v8486, 0
        %v8891 = vsel %vm3601, %v8500, 0
        %v8894 = vsel %vm3601, %v8514, 0
        %v8897 = vsel %vm3601, %v8528, 0
        %v8900 = vsel %vm3601, %v8542, 0
        %v8903 = vsel %vm3601, %v8556, 0
        %v8906 = vsel %vm3601, %v8570, 0
        %v8909 = vsel %vm3601, %v8584, 0
        %v8912 = vsel %vm3601, %v8598, 0
        %v8915 = vsel %vm3601, %v8612, 0
        %v8918 = vsel %vm3601, %v8626, 0
        %v8921 = vsel %vm3601, %v8640, 0
        %v8924 = vsel %vm3601, %v8646, 0
        %8926 = vmatprep.subr.bf16.mxu0 0
        %8927 = vmatpush1.bf16.msra.mxu0 %v8830
        %8928 = vmatprep.subr.bf16.mxu0 0
        %8929 = vmatpush1.bf16.msra.mxu0 %v8831
        %8930 = vmatprep.subr.bf16.mxu0 0
        %8931 = vmatpush1.bf16.msra.mxu0 %v8832
        %8932 = vmatprep.subr.bf16.mxu0 0
        %8933 = vmatpush1.bf16.msra.mxu0 %v8833
        %8934 = vmatprep.subr.bf16.mxu0 0
        %8935 = vmatpush1.bf16.msra.mxu0 %v8834
        %8936 = vmatprep.subr.bf16.mxu0 0
        %8937 = vmatpush1.bf16.msra.mxu0 %v8835
        %8938 = vmatprep.subr.bf16.mxu0 0
        %8939 = vmatpush1.bf16.msra.mxu0 %v8836
        %8940 = vmatprep.subr.bf16.mxu0 0
        %8941 = vmatpush1.bf16.msra.mxu0 %v8837
        %8942 = vmatprep.subr.bf16.mxu0 0
        %8943 = vmatpush1.bf16.msra.mxu0 %v8838
        %8944 = vmatprep.subr.bf16.mxu0 0
        %8945 = vmatpush1.bf16.msra.mxu0 %v8839
        %8946 = vmatprep.subr.bf16.mxu0 0
        %8947 = vmatpush1.bf16.msra.mxu0 %v8840
        %8948 = vmatprep.subr.bf16.mxu0 0
        %8949 = vmatpush1.bf16.msra.mxu0 %v8841
        %8950 = vmatprep.subr.bf16.mxu0 0
        %8951 = vmatpush1.bf16.msra.mxu0 %v8842
        %8952 = vmatprep.subr.bf16.mxu0 0
        %8953 = vmatpush1.bf16.msra.mxu0 %v8843
        %8954 = vmatprep.subr.bf16.mxu0 0
        %8955 = vmatpush1.bf16.msra.mxu0 %v8844
        %8956 = vmatprep.subr.bf16.mxu0 0
        %8957 = vmatpush1.bf16.msra.mxu0 %v8845
        %8958 = vmatprep.mubr.bf16.mxu0 %v7585
        %8959 = vmatmul.mubr.bf16.gmra.mrb[0].mxu0 %v7379
        %v8960 = vpop.f32.mrb[0].mxu0
        %v8961 = vadd.f32 %v8720, %v8960
        %v8962 = vpop.f32.mrb[0].mxu0
        %v8963 = vpop.f32.mrb[0].mxu0
        %v8964 = vadd.f32 %v8720, %v8963
        %v8965 = vpop.f32.mrb[0].mxu0
        %8966 = vmatprep.mubr.bf16.mxu0 %v7588
        %8967 = vmatmul.mubr.bf16.gmra.mrb[0].mxu0 %v7382
        %v8968 = vpop.f32.mrb[0].mxu0
        %v8969 = vadd.f32 %v8720, %v8968
        %v8970 = vpop.f32.mrb[0].mxu0
        %v8971 = vpop.f32.mrb[0].mxu0
        %v8972 = vadd.f32 %v8720, %v8971
        %v8973 = vpop.f32.mrb[0].mxu0
        %8974 = vmatprep.mubr.bf16.mxu0 %v7591
        %8975 = vmatmul.mubr.bf16.gmra.mrb[0].mxu0 %v7385
        %v8976 = vpop.f32.mrb[0].mxu0
        %v8977 = vadd.f32 %v8720, %v8976
        %v8978 = vpop.f32.mrb[0].mxu0
        %v8979 = vpop.f32.mrb[0].mxu0
        %v8980 = vadd.f32 %v8720, %v8979
        %v8981 = vpop.f32.mrb[0].mxu0
        %8982 = vmatprep.mubr.bf16.mxu0 %v7594
        %8983 = vmatmul.mubr.bf16.gmra.mrb[0].mxu0 %v7388
        %v8984 = vpop.f32.mrb[0].mxu0
        %v8985 = vadd.f32 %v8720, %v8984
        %v8986 = vpop.f32.mrb[0].mxu0
        %v8987 = vpop.f32.mrb[0].mxu0
        %v8988 = vadd.f32 %v8720, %v8987
        %v8989 = vpop.f32.mrb[0].mxu0
        %8990 = vmatprep.mubr.bf16.mxu0 %v7597
        %8991 = vmatmul.mubr.bf16.gmra.mrb[0].mxu0 %v7391
        %v8992 = vpop.f32.mrb[0].mxu0
        %v8993 = vadd.f32 %v8720, %v8992
        %v8994 = vpop.f32.mrb[0].mxu0
        %v8995 = vpop.f32.mrb[0].mxu0
        %v8996 = vadd.f32 %v8720, %v8995
        %v8997 = vpop.f32.mrb[0].mxu0
        %8998 = vmatprep.mubr.bf16.mxu0 %v7600
        %8999 = vmatmul.mubr.bf16.gmra.mrb[0].mxu0 %v7394
        %v9000 = vpop.f32.mrb[0].mxu0
        %v9001 = vadd.f32 %v8720, %v9000
        %v9002 = vpop.f32.mrb[0].mxu0
        %v9003 = vpop.f32.mrb[0].mxu0
        %v9004 = vadd.f32 %v8720, %v9003
        %v9005 = vpop.f32.mrb[0].mxu0
        %9006 = vmatprep.mubr.bf16.mxu0 %v7603
        %9007 = vmatmul.mubr.bf16.gmra.mrb[0].mxu0 %v7397
        %v9008 = vpop.f32.mrb[0].mxu0
        %v9009 = vadd.f32 %v8720, %v9008
        %v9010 = vpop.f32.mrb[0].mxu0
        %v9011 = vpop.f32.mrb[0].mxu0
        %v9012 = vadd.f32 %v8720, %v9011
        %v9013 = vpop.f32.mrb[0].mxu0
        %9014 = vmatprep.mubr.bf16.mxu0 %v7606
        %9015 = vmatmul.mubr.bf16.gmra.mrb[0].mxu0 %v7400
        %v9016 = vpop.f32.mrb[0].mxu0
        %v9017 = vadd.f32 %v8720, %v9016
        %v9018 = vpop.f32.mrb[0].mxu0
        %v9019 = vpop.f32.mrb[0].mxu0
        %v9020 = vadd.f32 %v8720, %v9019
        %v9021 = vpop.f32.mrb[0].mxu0
        %9022 = vmatprep.mubr.bf16.mxu0 %v7609
        %9023 = vmatmul.mubr.bf16.gmra.mrb[0].mxu0 %v7403
        %v9024 = vpop.f32.mrb[0].mxu0
        %v9025 = vadd.f32 %v8720, %v9024
        %v9026 = vpop.f32.mrb[0].mxu0
        %v9027 = vpop.f32.mrb[0].mxu0
        %v9028 = vadd.f32 %v8720, %v9027
        %v9029 = vpop.f32.mrb[0].mxu0
        %9030 = vmatprep.mubr.bf16.mxu0 %v7612
        %9031 = vmatmul.mubr.bf16.gmra.mrb[0].mxu0 %v7406
        %v9032 = vpop.f32.mrb[0].mxu0
        %v9033 = vadd.f32 %v8720, %v9032
        %v9034 = vpop.f32.mrb[0].mxu0
        %v9035 = vpop.f32.mrb[0].mxu0
        %v9036 = vadd.f32 %v8720, %v9035
        %v9037 = vpop.f32.mrb[0].mxu0
        %9038 = vmatprep.mubr.bf16.mxu0 %v7615
        %9039 = vmatmul.mubr.bf16.gmra.mrb[0].mxu0 %v7409
        %v9040 = vpop.f32.mrb[0].mxu0
        %v9041 = vadd.f32 %v8720, %v9040
        %v9042 = vpop.f32.mrb[0].mxu0
        %v9043 = vpop.f32.mrb[0].mxu0
        %v9044 = vadd.f32 %v8720, %v9043
        %v9045 = vpop.f32.mrb[0].mxu0
        %9046 = vmatprep.mubr.bf16.mxu0 %v7618
        %9047 = vmatmul.mubr.bf16.gmra.mrb[0].mxu0 %v7412
        %v9048 = vpop.f32.mrb[0].mxu0
        %v9049 = vadd.f32 %v8720, %v9048
        %v9050 = vpop.f32.mrb[0].mxu0
        %v9051 = vpop.f32.mrb[0].mxu0
        %v9052 = vadd.f32 %v8720, %v9051
        %v9053 = vpop.f32.mrb[0].mxu0
        %9054 = vmatprep.mubr.bf16.mxu0 %v7621
        %9055 = vmatmul.mubr.bf16.gmra.mrb[0].mxu0 %v7415
        %v9056 = vpop.f32.mrb[0].mxu0
        %v9057 = vadd.f32 %v8720, %v9056
        %v9058 = vpop.f32.mrb[0].mxu0
        %v9059 = vpop.f32.mrb[0].mxu0
        %v9060 = vadd.f32 %v8720, %v9059
        %v9061 = vpop.f32.mrb[0].mxu0
        %9062 = vmatprep.mubr.bf16.mxu0 %v7624
        %9063 = vmatmul.mubr.bf16.gmra.mrb[0].mxu0 %v7418
        %v9064 = vpop.f32.mrb[0].mxu0
        %v9065 = vadd.f32 %v8720, %v9064
        %v9066 = vpop.f32.mrb[0].mxu0
        %v9067 = vpop.f32.mrb[0].mxu0
        %v9068 = vpop.f32.mrb[0].mxu0
        %9069 = vdwg.mxu0
        %9070 = vmatprep.subr.bf16.mxu0 0
        %9071 = vmatpush1.bf16.msra.mxu0 %v8846
        %9072 = vmatprep.subr.bf16.mxu0 0
        %9073 = vmatpush1.bf16.msra.mxu0 %v8847
        %9074 = vmatprep.subr.bf16.mxu0 0
        %9075 = vmatpush1.bf16.msra.mxu0 %v8848
        %9076 = vmatprep.subr.bf16.mxu0 0
        %9077 = vmatpush1.bf16.msra.mxu0 %v8849
        %9078 = vmatprep.subr.bf16.mxu0 0
        %9079 = vmatpush1.bf16.msra.mxu0 %v8850
        %9080 = vmatprep.subr.bf16.mxu0 0
        %9081 = vmatpush1.bf16.msra.mxu0 %v8851
        %9082 = vmatprep.subr.bf16.mxu0 0
        %9083 = vmatpush1.bf16.msra.mxu0 %v8852
        %9084 = vmatprep.subr.bf16.mxu0 0
        %9085 = vmatpush1.bf16.msra.mxu0 %v8853
        %9086 = vmatprep.subr.bf16.mxu0 0
        %9087 = vmatpush1.bf16.msra.mxu0 %v8854
        %9088 = vmatprep.subr.bf16.mxu0 0
        %9089 = vmatpush1.bf16.msra.mxu0 %v8855
        %9090 = vmatprep.subr.bf16.mxu0 0
        %9091 = vmatpush1.bf16.msra.mxu0 %v8856
        %9092 = vmatprep.subr.bf16.mxu0 0
        %9093 = vmatpush1.bf16.msra.mxu0 0
        %9094 = vmatprep.subr.bf16.mxu0 0
        %9095 = vmatpush1.bf16.msra.mxu0 0
        %9096 = vmatprep.subr.bf16.mxu0 0
        %9097 = vmatpush1.bf16.msra.mxu0 0
        %9098 = vmatprep.subr.bf16.mxu0 0
        %9099 = vmatpush1.bf16.msra.mxu0 0
        %9100 = vmatprep.subr.bf16.mxu0 0
        %9101 = vmatpush1.bf16.msra.mxu0 0
        %9102 = vmatprep.mubr.bf16.mxu0 %v8885
        %9103 = vmatmul.mubr.bf16.gmra.mrb[0].mxu0 %v8462
        %v9104 = vpop.f32.mrb[0].mxu0
        %v9105 = vadd.f32 %v8961, %v9104
        %v9106 = vpop.f32.mrb[0].mxu0
        %v9107 = vpop.f32.mrb[0].mxu0
        %v9108 = vadd.f32 %v8964, %v9107
        %v9109 = vpop.f32.mrb[0].mxu0
        %9110 = vmatprep.mubr.bf16.mxu0 %v8888
        %9111 = vmatmul.mubr.bf16.gmra.mrb[0].mxu0 %v8479
        %v9112 = vpop.f32.mrb[0].mxu0
        %v9113 = vadd.f32 %v8969, %v9112
        %v9114 = vpop.f32.mrb[0].mxu0
        %v9115 = vpop.f32.mrb[0].mxu0
        %v9116 = vadd.f32 %v8972, %v9115
        %v9117 = vpop.f32.mrb[0].mxu0
        %9118 = vmatprep.mubr.bf16.mxu0 %v8891
        %9119 = vmatmul.mubr.bf16.gmra.mrb[0].mxu0 %v8493
        %v9120 = vpop.f32.mrb[0].mxu0
        %v9121 = vadd.f32 %v8977, %v9120
        %v9122 = vpop.f32.mrb[0].mxu0
        %v9123 = vpop.f32.mrb[0].mxu0
        %v9124 = vadd.f32 %v8980, %v9123
        %v9125 = vpop.f32.mrb[0].mxu0
        %9126 = vmatprep.mubr.bf16.mxu0 %v8894
        %9127 = vmatmul.mubr.bf16.gmra.mrb[0].mxu0 %v8507
        %v9128 = vpop.f32.mrb[0].mxu0
        %v9129 = vadd.f32 %v8985, %v9128
        %v9130 = vpop.f32.mrb[0].mxu0
        %v9131 = vpop.f32.mrb[0].mxu0
        %v9132 = vadd.f32 %v8988, %v9131
        %v9133 = vpop.f32.mrb[0].mxu0
        %9134 = vmatprep.mubr.bf16.mxu0 %v8897
        %9135 = vmatmul.mubr.bf16.gmra.mrb[0].mxu0 %v8521
        %v9136 = vpop.f32.mrb[0].mxu0
        %v9137 = vadd.f32 %v8993, %v9136
        %v9138 = vpop.f32.mrb[0].mxu0
        %v9139 = vpop.f32.mrb[0].mxu0
        %v9140 = vadd.f32 %v8996, %v9139
        %v9141 = vpop.f32.mrb[0].mxu0
        %9142 = vmatprep.mubr.bf16.mxu0 %v8900
        %9143 = vmatmul.mubr.bf16.gmra.mrb[0].mxu0 %v8535
        %v9144 = vpop.f32.mrb[0].mxu0
        %v9145 = vadd.f32 %v9001, %v9144
        %v9146 = vpop.f32.mrb[0].mxu0
        %v9147 = vpop.f32.mrb[0].mxu0
        %v9148 = vadd.f32 %v9004, %v9147
        %v9149 = vpop.f32.mrb[0].mxu0
        %9150 = vmatprep.mubr.bf16.mxu0 %v8903
        %9151 = vmatmul.mubr.bf16.gmra.mrb[0].mxu0 %v8549
        %v9152 = vpop.f32.mrb[0].mxu0
        %v9153 = vadd.f32 %v9009, %v9152
        %v9154 = vpop.f32.mrb[0].mxu0
        %v9155 = vpop.f32.mrb[0].mxu0
        %v9156 = vadd.f32 %v9012, %v9155
        %v9157 = vpop.f32.mrb[0].mxu0
        %9158 = vmatprep.mubr.bf16.mxu0 %v8906
        %9159 = vmatmul.mubr.bf16.gmra.mrb[0].mxu0 %v8563
        %v9160 = vpop.f32.mrb[0].mxu0
        %v9161 = vadd.f32 %v9017, %v9160
        %v9162 = vpop.f32.mrb[0].mxu0
        %v9163 = vpop.f32.mrb[0].mxu0
        %v9164 = vadd.f32 %v9020, %v9163
        %v9165 = vpop.f32.mrb[0].mxu0
        %9166 = vmatprep.mubr.bf16.mxu0 %v8909
        %9167 = vmatmul.mubr.bf16.gmra.mrb[0].mxu0 %v8577
        %v9168 = vpop.f32.mrb[0].mxu0
        %v9169 = vadd.f32 %v9025, %v9168
        %v9170 = vpop.f32.mrb[0].mxu0
        %v9171 = vpop.f32.mrb[0].mxu0
        %v9172 = vadd.f32 %v9028, %v9171
        %v9173 = vpop.f32.mrb[0].mxu0
        %9174 = vmatprep.mubr.bf16.mxu0 %v8912
        %9175 = vmatmul.mubr.bf16.gmra.mrb[0].mxu0 %v8591
        %v9176 = vpop.f32.mrb[0].mxu0
        %v9177 = vadd.f32 %v9033, %v9176
        %v9178 = vpop.f32.mrb[0].mxu0
        %v9179 = vpop.f32.mrb[0].mxu0
        %v9180 = vadd.f32 %v9036, %v9179
        %v9181 = vpop.f32.mrb[0].mxu0
        %9182 = vmatprep.mubr.bf16.mxu0 %v8915
        %9183 = vmatmul.mubr.bf16.gmra.mrb[0].mxu0 %v8605
        %v9184 = vpop.f32.mrb[0].mxu0
        %v9185 = vadd.f32 %v9041, %v9184
        %v9186 = vpop.f32.mrb[0].mxu0
        %v9187 = vpop.f32.mrb[0].mxu0
        %v9188 = vadd.f32 %v9044, %v9187
        %v9189 = vpop.f32.mrb[0].mxu0
        %9190 = vmatprep.mubr.bf16.mxu0 %v8918
        %9191 = vmatmul.mubr.bf16.gmra.mrb[0].mxu0 %v8619
        %v9192 = vpop.f32.mrb[0].mxu0
        %v9193 = vadd.f32 %v9049, %v9192
        %v9194 = vpop.f32.mrb[0].mxu0
        %v9195 = vpop.f32.mrb[0].mxu0
        %v9196 = vadd.f32 %v9052, %v9195
        %v9197 = vpop.f32.mrb[0].mxu0
        %9198 = vmatprep.mubr.bf16.mxu0 %v8921
        %9199 = vmatmul.mubr.bf16.gmra.mrb[0].mxu0 %v8633
        %v9200 = vpop.f32.mrb[0].mxu0
        %v9201 = vadd.f32 %v9057, %v9200
        %v9202 = vpop.f32.mrb[0].mxu0
        %v9203 = vpop.f32.mrb[0].mxu0
        %v9204 = vadd.f32 %v9060, %v9203
        %v9205 = vpop.f32.mrb[0].mxu0
        %9206 = vmatprep.mubr.bf16.mxu0 %v8924
        %9207 = vmatmul.mubr.bf16.gmra.mrb[0].mxu0 %v8643
        %v9208 = vpop.f32.mrb[0].mxu0
        %v9209 = vadd.f32 %v9065, %v9208
        %v9210 = vpop.f32.mrb[0].mxu0
        %v9211 = vpop.f32.mrb[0].mxu0
        %v9212 = vpop.f32.mrb[0].mxu0
        %9213 = vdwg.mxu0
        %v9214 = vmax.f32 %v9105, 0.0
        %v9215 = vmax.f32 %v9108, 0.0
        %v9216 = vmax.f32 %v9113, 0.0
        %v9217 = vmax.f32 %v9116, 0.0
        %v9218 = vmax.f32 %v9121, 0.0
        %v9219 = vmax.f32 %v9124, 0.0
        %v9220 = vmax.f32 %v9129, 0.0
        %v9221 = vmax.f32 %v9132, 0.0
        %v9222 = vmax.f32 %v9137, 0.0
        %v9223 = vmax.f32 %v9140, 0.0
        %v9224 = vmax.f32 %v9145, 0.0
        %v9225 = vmax.f32 %v9148, 0.0
        %v9226 = vmax.f32 %v9153, 0.0
        %v9227 = vmax.f32 %v9156, 0.0
        %v9228 = vmax.f32 %v9161, 0.0
        %v9229 = vmax.f32 %v9164, 0.0
        %v9230 = vmax.f32 %v9169, 0.0
        %v9231 = vmax.f32 %v9172, 0.0
        %v9232 = vmax.f32 %v9177, 0.0
        %v9233 = vmax.f32 %v9180, 0.0
        %v9234 = vmax.f32 %v9185, 0.0
        %v9235 = vmax.f32 %v9188, 0.0
        %v9236 = vmax.f32 %v9193, 0.0
        %v9237 = vmax.f32 %v9196, 0.0
        %v9238 = vmax.f32 %v9201, 0.0
        %v9239 = vmax.f32 %v9204, 0.0
        %v9240 = vmax.f32 %v9209, 0.0
        %v9241 = vmul.f32 %v9214, %v1774
        %v9242 = vmul.f32 %v9215, %v1779
        %v9243 = vmul.f32 %v9216, %v1784
        %v9244 = vmul.f32 %v9217, %v1789
        %v9245 = vmul.f32 %v9218, %v1794
        %v9246 = vmul.f32 %v9219, %v1799
        %v9247 = vmul.f32 %v9220, %v1804
        %v9248 = vmul.f32 %v9221, %v1809
        %v9249 = vmul.f32 %v9222, %v1814
        %v9250 = vmul.f32 %v9223, %v1819
        %v9251 = vmul.f32 %v9224, %v1824
        %v9252 = vmul.f32 %v9225, %v1829
        %v9253 = vmul.f32 %v9226, %v1834
        %v9254 = vmul.f32 %v9227, %v1839
        %v9255 = vmul.f32 %v9228, %v1844
        %v9256 = vmul.f32 %v9229, %v1849
        %v9257 = vmul.f32 %v9230, %v1854
        %v9258 = vmul.f32 %v9231, %v1859
        %v9259 = vmul.f32 %v9232, %v1864
        %v9260 = vmul.f32 %v9233, %v1869
        %v9261 = vmul.f32 %v9234, %v1874
        %v9262 = vmul.f32 %v9235, %v1879
        %v9263 = vmul.f32 %v9236, %v1884
        %v9264 = vmul.f32 %v9237, %v1889
        %v9265 = vmul.f32 %v9238, %v1894
        %v9266 = vmul.f32 %v9239, %v1899
        %v9267 = vmul.f32 %v9240, %v1904
        %v9268 = vpack.c.bf16 %v9242, %v9241
        %v9269 = vpack.c.bf16 %v9244, %v9243
        %v9270 = vpack.c.bf16 %v9246, %v9245
        %v9271 = vpack.c.bf16 %v9248, %v9247
        %v9272 = vpack.c.bf16 %v9250, %v9249
        %v9273 = vpack.c.bf16 %v9252, %v9251
        %v9274 = vpack.c.bf16 %v9254, %v9253
        %v9275 = vpack.c.bf16 %v9256, %v9255
        %v9276 = vpack.c.bf16 %v9258, %v9257
        %v9277 = vpack.c.bf16 %v9260, %v9259
        %v9278 = vpack.c.bf16 %v9262, %v9261
        %v9279 = vpack.c.bf16 %v9264, %v9263
        %v9280 = vpack.c.bf16 %v9266, %v9265
        %v9281 = vpack.c.bf16 %v9267, %v9267
        %v9296 = vunpack.c.l.b16 %v9268
        %v9297 = vunpack.c.h.b16 %v9268
        %v9298 = vunpack.c.l.b16 %v9269
        %v9299 = vunpack.c.h.b16 %v9269
        %v9300 = vunpack.c.l.b16 %v9270
        %v9301 = vunpack.c.h.b16 %v9270
        %v9302 = vunpack.c.l.b16 %v9271
        %v9303 = vunpack.c.h.b16 %v9271
        %v9304 = vunpack.c.l.b16 %v9272
        %v9305 = vunpack.c.h.b16 %v9272
        %v9306 = vunpack.c.l.b16 %v9273
        %v9307 = vunpack.c.h.b16 %v9273
        %v9308 = vunpack.c.l.b16 %v9274
        %v9309 = vunpack.c.h.b16 %v9274
        %v9310 = vunpack.c.l.b16 %v9275
        %v9311 = vunpack.c.h.b16 %v9275
        %v9312 = vunpack.c.l.b16 %v9276
        %v9313 = vunpack.c.h.b16 %v9276
        %v9314 = vunpack.c.l.b16 %v9277
        %v9315 = vunpack.c.h.b16 %v9277
        %v9316 = vunpack.c.l.b16 %v9278
        %v9317 = vunpack.c.h.b16 %v9278
        %v9318 = vunpack.c.l.b16 %v9279
        %v9319 = vunpack.c.h.b16 %v9279
        %v9320 = vunpack.c.l.b16 %v9280
        %v9321 = vunpack.c.h.b16 %v9280
        %v9322 = vunpack.c.l.b16 %v9281
        %v9323 = vpack.c.b16 %v9296, %v9296
        %v9324 = vpack.c.b16 %v9297, %v9297
        %v9325 = vpack.c.b16 %v9298, %v9298
        %v9326 = vpack.c.b16 %v9299, %v9299
        %v9327 = vpack.c.b16 %v9300, %v9300
        %v9328 = vpack.c.b16 %v9301, %v9301
        %v9329 = vpack.c.b16 %v9302, %v9302
        %v9330 = vpack.c.b16 %v9303, %v9303
        %v9331 = vpack.c.b16 %v9304, %v9304
        %v9332 = vpack.c.b16 %v9305, %v9305
        %v9333 = vpack.c.b16 %v9306, %v9306
        %v9334 = vpack.c.b16 %v9307, %v9307
        %v9335 = vpack.c.b16 %v9308, %v9308
        %v9336 = vpack.c.b16 %v9309, %v9309
        %v9337 = vpack.c.b16 %v9310, %v9310
        %v9338 = vpack.c.b16 %v9311, %v9311
        %v9339 = vpack.c.b16 %v9312, %v9312
        %v9340 = vpack.c.b16 %v9313, %v9313
        %v9341 = vpack.c.b16 %v9314, %v9314
        %v9342 = vpack.c.b16 %v9315, %v9315
        %v9343 = vpack.c.b16 %v9316, %v9316
        %v9344 = vpack.c.b16 %v9317, %v9317
        %v9345 = vpack.c.b16 %v9318, %v9318
        %v9346 = vpack.c.b16 %v9319, %v9319
        %v9347 = vpack.c.b16 %v9320, %v9320
        %v9348 = vpack.c.b16 %v9321, %v9321
        %v9349 = vpack.c.b16 %v9322, %v9322
        %v9351 = vshrl.u32 %v9323, 16
        %v9353 = vrot.slane %v9351, 6
        %v9354 = vshll.u32 %v9323, 16
        %v9356 = vrot.slane %v9354, 7
        %v9357 = vor.u32 %v9353, %v9356
        %v9358 = vrot.slane %v9357, 4
        %v9360 = vshrl.u32 %v9324, 16
        %v9362 = vrot.slane %v9360, 6
        %v9363 = vshll.u32 %v9324, 16
        %v9365 = vrot.slane %v9363, 7
        %v9366 = vor.u32 %v9362, %v9365
        %v9367 = vsel %vm2017, %v9358, %v9366
        %v9368 = vrot.slane %v9366, 4
        %v9370 = vshrl.u32 %v9325, 16
        %v9372 = vrot.slane %v9370, 6
        %v9373 = vshll.u32 %v9325, 16
        %v9375 = vrot.slane %v9373, 7
        %v9376 = vor.u32 %v9372, %v9375
        %v9377 = vsel %vm2017, %v9368, %v9376
        %v9378 = vrot.slane %v9376, 4
        %v9380 = vshrl.u32 %v9326, 16
        %v9382 = vrot.slane %v9380, 6
        %v9383 = vshll.u32 %v9326, 16
        %v9385 = vrot.slane %v9383, 7
        %v9386 = vor.u32 %v9382, %v9385
        %v9387 = vsel %vm2017, %v9378, %v9386
        %v9388 = vrot.slane %v9386, 4
        %v9390 = vshrl.u32 %v9327, 16
        %v9392 = vrot.slane %v9390, 6
        %v9393 = vshll.u32 %v9327, 16
        %v9395 = vrot.slane %v9393, 7
        %v9396 = vor.u32 %v9392, %v9395
        %v9397 = vsel %vm2017, %v9388, %v9396
        %v9398 = vrot.slane %v9396, 4
        %v9400 = vshrl.u32 %v9328, 16
        %v9402 = vrot.slane %v9400, 6
        %v9403 = vshll.u32 %v9328, 16
        %v9405 = vrot.slane %v9403, 7
        %v9406 = vor.u32 %v9402, %v9405
        %v9407 = vsel %vm2017, %v9398, %v9406
        %v9408 = vrot.slane %v9406, 4
        %v9410 = vshrl.u32 %v9329, 16
        %v9412 = vrot.slane %v9410, 6
        %v9413 = vshll.u32 %v9329, 16
        %v9415 = vrot.slane %v9413, 7
        %v9416 = vor.u32 %v9412, %v9415
        %v9417 = vsel %vm2017, %v9408, %v9416
        %v9418 = vrot.slane %v9416, 4
        %v9420 = vshrl.u32 %v9330, 16
        %v9422 = vrot.slane %v9420, 6
        %v9423 = vshll.u32 %v9330, 16
        %v9425 = vrot.slane %v9423, 7
        %v9426 = vor.u32 %v9422, %v9425
        %v9427 = vsel %vm2017, %v9418, %v9426
        %v9428 = vrot.slane %v9426, 4
        %v9430 = vshrl.u32 %v9331, 16
        %v9432 = vrot.slane %v9430, 6
        %v9433 = vshll.u32 %v9331, 16
        %v9435 = vrot.slane %v9433, 7
        %v9436 = vor.u32 %v9432, %v9435
        %v9437 = vsel %vm2017, %v9428, %v9436
        %v9438 = vrot.slane %v9436, 4
        %v9440 = vshrl.u32 %v9332, 16
        %v9442 = vrot.slane %v9440, 6
        %v9443 = vshll.u32 %v9332, 16
        %v9445 = vrot.slane %v9443, 7
        %v9446 = vor.u32 %v9442, %v9445
        %v9447 = vsel %vm2017, %v9438, %v9446
        %v9448 = vrot.slane %v9446, 4
        %v9450 = vshrl.u32 %v9333, 16
        %v9452 = vrot.slane %v9450, 6
        %v9453 = vshll.u32 %v9333, 16
        %v9455 = vrot.slane %v9453, 7
        %v9456 = vor.u32 %v9452, %v9455
        %v9457 = vsel %vm2017, %v9448, %v9456
        %v9458 = vrot.slane %v9456, 4
        %v9460 = vshrl.u32 %v9334, 16
        %v9462 = vrot.slane %v9460, 6
        %v9463 = vshll.u32 %v9334, 16
        %v9465 = vrot.slane %v9463, 7
        %v9466 = vor.u32 %v9462, %v9465
        %v9467 = vsel %vm2017, %v9458, %v9466
        %v9468 = vrot.slane %v9466, 4
        %v9470 = vshrl.u32 %v9335, 16
        %v9472 = vrot.slane %v9470, 6
        %v9473 = vshll.u32 %v9335, 16
        %v9475 = vrot.slane %v9473, 7
        %v9476 = vor.u32 %v9472, %v9475
        %v9477 = vsel %vm2017, %v9468, %v9476
        %v9478 = vrot.slane %v9476, 4
        %v9480 = vshrl.u32 %v9336, 16
        %v9482 = vrot.slane %v9480, 6
        %v9483 = vshll.u32 %v9336, 16
        %v9485 = vrot.slane %v9483, 7
        %v9486 = vor.u32 %v9482, %v9485
        %v9487 = vsel %vm2017, %v9478, %v9486
        %v9488 = vrot.slane %v9486, 4
        %v9490 = vshrl.u32 %v9337, 16
        %v9492 = vrot.slane %v9490, 6
        %v9493 = vshll.u32 %v9337, 16
        %v9495 = vrot.slane %v9493, 7
        %v9496 = vor.u32 %v9492, %v9495
        %v9497 = vsel %vm2017, %v9488, %v9496
        %v9498 = vrot.slane %v9496, 4
        %v9500 = vshrl.u32 %v9338, 16
        %v9502 = vrot.slane %v9500, 6
        %v9503 = vshll.u32 %v9338, 16
        %v9505 = vrot.slane %v9503, 7
        %v9506 = vor.u32 %v9502, %v9505
        %v9507 = vsel %vm2017, %v9498, %v9506
        %v9508 = vrot.slane %v9506, 4
        %v9510 = vshrl.u32 %v9339, 16
        %v9512 = vrot.slane %v9510, 6
        %v9513 = vshll.u32 %v9339, 16
        %v9515 = vrot.slane %v9513, 7
        %v9516 = vor.u32 %v9512, %v9515
        %v9517 = vsel %vm2017, %v9508, %v9516
        %v9518 = vrot.slane %v9516, 4
        %v9520 = vshrl.u32 %v9340, 16
        %v9522 = vrot.slane %v9520, 6
        %v9523 = vshll.u32 %v9340, 16
        %v9525 = vrot.slane %v9523, 7
        %v9526 = vor.u32 %v9522, %v9525
        %v9527 = vsel %vm2017, %v9518, %v9526
        %v9528 = vrot.slane %v9526, 4
        %v9530 = vshrl.u32 %v9341, 16
        %v9532 = vrot.slane %v9530, 6
        %v9533 = vshll.u32 %v9341, 16
        %v9535 = vrot.slane %v9533, 7
        %v9536 = vor.u32 %v9532, %v9535
        %v9537 = vsel %vm2017, %v9528, %v9536
        %v9538 = vrot.slane %v9536, 4
        %v9540 = vshrl.u32 %v9342, 16
        %v9542 = vrot.slane %v9540, 6
        %v9543 = vshll.u32 %v9342, 16
        %v9545 = vrot.slane %v9543, 7
        %v9546 = vor.u32 %v9542, %v9545
        %v9547 = vsel %vm2017, %v9538, %v9546
        %v9548 = vrot.slane %v9546, 4
        %v9550 = vshrl.u32 %v9343, 16
        %v9552 = vrot.slane %v9550, 6
        %v9553 = vshll.u32 %v9343, 16
        %v9555 = vrot.slane %v9553, 7
        %v9556 = vor.u32 %v9552, %v9555
        %v9557 = vsel %vm2017, %v9548, %v9556
        %v9558 = vrot.slane %v9556, 4
        %v9560 = vshrl.u32 %v9344, 16
        %v9562 = vrot.slane %v9560, 6
        %v9563 = vshll.u32 %v9344, 16
        %v9565 = vrot.slane %v9563, 7
        %v9566 = vor.u32 %v9562, %v9565
        %v9567 = vsel %vm2017, %v9558, %v9566
        %v9568 = vrot.slane %v9566, 4
        %v9570 = vshrl.u32 %v9345, 16
        %v9572 = vrot.slane %v9570, 6
        %v9573 = vshll.u32 %v9345, 16
        %v9575 = vrot.slane %v9573, 7
        %v9576 = vor.u32 %v9572, %v9575
        %v9577 = vsel %vm2017, %v9568, %v9576
        %v9578 = vrot.slane %v9576, 4
        %v9580 = vshrl.u32 %v9346, 16
        %v9582 = vrot.slane %v9580, 6
        %v9583 = vshll.u32 %v9346, 16
        %v9585 = vrot.slane %v9583, 7
        %v9586 = vor.u32 %v9582, %v9585
        %v9587 = vsel %vm2017, %v9578, %v9586
        %v9588 = vrot.slane %v9586, 4
        %v9590 = vshrl.u32 %v9347, 16
        %v9592 = vrot.slane %v9590, 6
        %v9593 = vshll.u32 %v9347, 16
        %v9595 = vrot.slane %v9593, 7
        %v9596 = vor.u32 %v9592, %v9595
        %v9597 = vsel %vm2017, %v9588, %v9596
        %v9598 = vrot.slane %v9596, 4
        %v9600 = vshrl.u32 %v9348, 16
        %v9602 = vrot.slane %v9600, 6
        %v9603 = vshll.u32 %v9348, 16
        %v9605 = vrot.slane %v9603, 7
        %v9606 = vor.u32 %v9602, %v9605
        %v9607 = vsel %vm2017, %v9598, %v9606
        %v9608 = vrot.slane %v9606, 4
        %v9610 = vshrl.u32 %v9349, 16
        %v9612 = vrot.slane %v9610, 6
        %v9613 = vshll.u32 %v9349, 16
        %v9615 = vrot.slane %v9613, 7
        %v9616 = vor.u32 %v9612, %v9615
        %v9617 = vsel %vm2017, %v9608, %v9616
        %v9618 = vrot.slane %v9616, 4
        %v9647 = vld [vmem:[#allocation2 + $0x14] sm:$0xe]
        %v9648 = vsel %vm2317, %v9357, %v9647
        %9649 = vst [vmem:[#allocation2 + $0x14] sm:$0xe] %v9648
        %9650 = vst.msk [vmem:[#allocation2 + $0x18] sm:$0xf] %vm386, %v9367
        %9651 = vst.msk [vmem:[#allocation2 + $0x1c] sm:$0xf] %vm386, %v9377
        %9652 = vst.msk [vmem:[#allocation2 + $0x20] sm:$0xf] %vm386, %v9387
        %9653 = vst.msk [vmem:[#allocation2 + $0x24] sm:$0xf] %vm386, %v9397
        %9654 = vst.msk [vmem:[#allocation2 + $0x28] sm:$0xf] %vm386, %v9407
        %9655 = vst.msk [vmem:[#allocation2 + $0x2c] sm:$0xf] %vm386, %v9417
        %9656 = vst.msk [vmem:[#allocation2 + $0x30] sm:$0xf] %vm386, %v9427
        %9657 = vst.msk [vmem:[#allocation2 + $0x34] sm:$0xf] %vm386, %v9437
        %9658 = vst.msk [vmem:[#allocation2 + $0x38] sm:$0xf] %vm386, %v9447
        %9659 = vst.msk [vmem:[#allocation2 + $0x3c] sm:$0xf] %vm386, %v9457
        %9660 = vst.msk [vmem:[#allocation2 + $0x40] sm:$0xf] %vm386, %v9467
        %9661 = vst.msk [vmem:[#allocation2 + $0x44] sm:$0xf] %vm386, %v9477
        %9662 = vst.msk [vmem:[#allocation2 + $0x48] sm:$0xf] %vm386, %v9487
        %9663 = vst.msk [vmem:[#allocation2 + $0x4c] sm:$0xf] %vm386, %v9497
        %9664 = vst.msk [vmem:[#allocation2 + $0x50] sm:$0xf] %vm386, %v9507
        %9665 = vst.msk [vmem:[#allocation2 + $0x54] sm:$0xf] %vm386, %v9517
        %9666 = vst.msk [vmem:[#allocation2 + $0x58] sm:$0xf] %vm386, %v9527
        %9667 = vst.msk [vmem:[#allocation2 + $0x5c] sm:$0xf] %vm386, %v9537
        %9668 = vst.msk [vmem:[#allocation2 + $0x60] sm:$0xf] %vm386, %v9547
        %9669 = vst.msk [vmem:[#allocation2 + $0x64] sm:$0xf] %vm386, %v9557
        %9670 = vst.msk [vmem:[#allocation2 + $0x68] sm:$0xf] %vm386, %v9567
        %9671 = vst.msk [vmem:[#allocation2 + $0x6c] sm:$0xf] %vm386, %v9577
        %9672 = vst.msk [vmem:[#allocation2 + $0x70] sm:$0xf] %vm386, %v9587
        %9673 = vst.msk [vmem:[#allocation2 + $0x74] sm:$0xf] %vm386, %v9597
        %9674 = vst.msk [vmem:[#allocation2 + $0x78] sm:$0xf] %vm386, %v9607
        %9675 = vst.msk [vmem:[#allocation2 + $0x7c] sm:$0xf] %vm386, %v9617
        %v9676 = vld [vmem:[#allocation2 + $0x80] sm:$0x3]
        %v9677 = vsel %vm2348, %v9618, %v9676
        %9678 = vst [vmem:[#allocation2 + $0x80] sm:$0x3] %v9677
        %v9679 = vld [vmem:[#allocation2] sm:$0xf]
        %v9680 = vld [vmem:[#allocation2 + $0x4] sm:$0xf]
        %v9681 = vld [vmem:[#allocation2 + $0x8] sm:$0xf]
        %v9682 = vld [vmem:[#allocation2 + $0xc] sm:$0xf]
        %v9683 = vld [vmem:[#allocation2 + $0x10] sm:$0xf]
        %v9684 = vld [vmem:[#allocation2 + $0x14] sm:$0xf]
        %v9685 = vld [vmem:[#allocation2 + $0x18] sm:$0xf]
        %v9686 = vld [vmem:[#allocation2 + $0x1c] sm:$0xf]
        %v9687 = vld [vmem:[#allocation2 + $0x20] sm:$0xf]
        %v9688 = vld [vmem:[#allocation2 + $0x24] sm:$0xf]
        %v9689 = vld [vmem:[#allocation2 + $0x28] sm:$0xf]
        %v9690 = vld [vmem:[#allocation2 + $0x2c] sm:$0xf]
        %v9691 = vld [vmem:[#allocation2 + $0x30] sm:$0xf]
        %v9692 = vld [vmem:[#allocation2 + $0x34] sm:$0xf]
        %v9693 = vld [vmem:[#allocation2 + $0x38] sm:$0xf]
        %v9694 = vld [vmem:[#allocation2 + $0x3c] sm:$0xf]
        %v9695 = vld [vmem:[#allocation2 + $0x40] sm:$0xf]
        %v9696 = vld [vmem:[#allocation2 + $0x44] sm:$0xf]
        %v9697 = vld [vmem:[#allocation2 + $0x48] sm:$0xf]
        %v9698 = vld [vmem:[#allocation2 + $0x4c] sm:$0xf]
        %v9699 = vld [vmem:[#allocation2 + $0x50] sm:$0xf]
        %v9700 = vld [vmem:[#allocation2 + $0x54] sm:$0xf]
        %v9701 = vld [vmem:[#allocation2 + $0x58] sm:$0xf]
        %v9702 = vld [vmem:[#allocation2 + $0x5c] sm:$0xf]
        %v9703 = vld [vmem:[#allocation2 + $0x60] sm:$0xf]
        %v9704 = vld [vmem:[#allocation2 + $0x64] sm:$0xf]
        %v9705 = vld [vmem:[#allocation2 + $0x68] sm:$0xf]
        %v9706 = vld [vmem:[#allocation2 + $0x6c] sm:$0x1]
        %v9707 = vld [vmem:[#allocation2] sm:$0xe]
        %v9708 = vld [vmem:[#allocation2] sm:$0x8]
        %v9709 = vld [vmem:[#allocation2 + $0x6c] sm:$0x7]
        %v9710 = vld [vmem:[#allocation2 + $0x6c] sm:$0xf]
        %v9711 = vld [vmem:[#allocation2 + $0x4] sm:$0xc]
        %v9712 = vld [vmem:[#allocation2 + $0x70] sm:$0x3]
        %v9713 = vld [vmem:[#allocation2 + $0x70] sm:$0x7]
        %v9714 = vld [vmem:[#allocation2 + $0x4] sm:$0x8]
        %v9715 = vld [vmem:[#allocation2 + $0x10] sm:$0xc]
        %v9716 = vld [vmem:[#allocation2 + $0x70] sm:$0xf]
        %v9717 = vld [vmem:[#allocation2 + $0x74] sm:$0xf]
        %v9718 = vld [vmem:[#allocation2 + $0x78] sm:$0xf]
        %v9719 = vld [vmem:[#allocation2 + $0x7c] sm:$0x3]
        %v9720 = vld [vmem:[#allocation2 + $0x7c] sm:$0x7]
        %v9721 = vld [vmem:[#allocation2 + $0x10] sm:$0x8]
        %v9722 = vld [vmem:[#allocation2 + $0x14] sm:$0xe]
        %v9723 = vld [vmem:[#allocation2 + $0x7c] sm:$0xf]
        %v9724 = vld [vmem:[#allocation2 + $0x80] sm:$0x1]
        %v9725 = vld [vmem:[#allocation2 + $0x80] sm:$0x3]
        %v9726 = vld [vmem:[#allocation2 + $0x14] sm:$0xc]
        %v9727 = vld [vmem:[#allocation2 + $0x80] sm:$0xf]
        %v9728 = vld [vmem:[#allocation2 + $0x84] sm:$0x1]
        %v9729 = vld [vmem:[#allocation2 + $0x18] sm:$0xe]
        %v9730 = vld [vmem:[#allocation2 + $0x84] sm:$0xf]
        %v9731 = vld [vmem:[#allocation2 + $0x88] sm:$0xf]
        %v9732 = vld [vmem:[#allocation2 + $0x8c] sm:$0xf]
        %v9733 = vld [vmem:[#allocation2 + $0x90] sm:$0x1]
        %v9734 = vld [vmem:[#allocation2 + $0x24] sm:$0xe]
        %v9735 = vld [vmem:[#allocation2 + $0x24] sm:$0x8]
        %v9736 = vld [vmem:[#allocation2 + $0x90] sm:$0x7]
        %v9737 = vld [vmem:[#allocation2 + $0x90] sm:$0xf]
        %v9738 = vld [vmem:[#allocation2 + $0x28] sm:$0xc]
        %v9739 = vld [vmem:[#allocation2 + $0x94] sm:$0x3]
        %v9740 = vld [vmem:[#allocation2 + $0x94] sm:$0x7]
        %v9741 = vld [vmem:[#allocation2 + $0x28] sm:$0x8]
        %v9769 = vunpack.c.l.b16 %v9679
        %v9770 = vunpack.c.l.b16 %v9680
        %v9771 = vunpack.c.l.b16 %v9681
        %v9772 = vunpack.c.l.b16 %v9682
        %v9773 = vunpack.c.l.b16 %v9683
        %v9774 = vunpack.c.l.b16 %v9684
        %v9775 = vunpack.c.l.b16 %v9685
        %v9776 = vunpack.c.l.b16 %v9686
        %v9777 = vunpack.c.l.b16 %v9687
        %v9778 = vunpack.c.l.b16 %v9688
        %v9779 = vunpack.c.l.b16 %v9689
        %v9780 = vunpack.c.l.b16 %v9690
        %v9781 = vunpack.c.l.b16 %v9691
        %v9782 = vunpack.c.l.b16 %v9692
        %v9783 = vunpack.c.l.b16 %v9693
        %v9784 = vunpack.c.l.b16 %v9694
        %v9785 = vunpack.c.l.b16 %v9695
        %v9786 = vunpack.c.l.b16 %v9696
        %v9787 = vunpack.c.l.b16 %v9697
        %v9788 = vunpack.c.l.b16 %v9698
        %v9789 = vunpack.c.l.b16 %v9699
        %v9790 = vunpack.c.l.b16 %v9700
        %v9791 = vunpack.c.l.b16 %v9701
        %v9792 = vunpack.c.l.b16 %v9702
        %v9793 = vunpack.c.l.b16 %v9703
        %v9794 = vunpack.c.l.b16 %v9704
        %v9795 = vunpack.c.l.b16 %v9705
        %v9796 = vpack.c.b16 %v9770, %v9769
        %v9797 = vpack.c.b16 %v9772, %v9771
        %v9798 = vpack.c.b16 %v9774, %v9773
        %v9799 = vpack.c.b16 %v9776, %v9775
        %v9800 = vpack.c.b16 %v9778, %v9777
        %v9801 = vpack.c.b16 %v9780, %v9779
        %v9802 = vpack.c.b16 %v9782, %v9781
        %v9803 = vpack.c.b16 %v9784, %v9783
        %v9804 = vpack.c.b16 %v9786, %v9785
        %v9805 = vpack.c.b16 %v9788, %v9787
        %v9806 = vpack.c.b16 %v9790, %v9789
        %v9807 = vpack.c.b16 %v9792, %v9791
        %v9808 = vpack.c.b16 %v9794, %v9793
        %v9809 = vpack.c.b16 %v9795, %v9795
        %v9811 = vunpack.c.l.b16 %v9706
        %v9812 = vpack.c.b16 %v9811, %v9795
        %v9814 = vshrl.u32 %v9796, 16
        %v9816 = vshll.u32 %v9796, 16
        %v9818 = vrot.slane %v9816, 1
        %v9819 = vor.u32 %v9814, %v9818
        %v9821 = vshll.u32 %v9797, 16
        %v9823 = vrot.slane %v9821, 1
        %v9824 = vsel %vm576, %v9819, %v9823
        %v9825 = vshrl.u32 %v9797, 16
        %v9827 = vor.u32 %v9825, %v9823
        %v9829 = vshll.u32 %v9798, 16
        %v9831 = vrot.slane %v9829, 1
        %v9832 = vsel %vm576, %v9827, %v9831
        %v9833 = vshrl.u32 %v9798, 16
        %v9835 = vor.u32 %v9833, %v9831
        %v9837 = vshll.u32 %v9799, 16
        %v9839 = vrot.slane %v9837, 1
        %v9840 = vsel %vm576, %v9835, %v9839
        %v9841 = vshrl.u32 %v9799, 16
        %v9843 = vor.u32 %v9841, %v9839
        %v9845 = vshll.u32 %v9800, 16
        %v9847 = vrot.slane %v9845, 1
        %v9848 = vsel %vm576, %v9843, %v9847
        %v9849 = vshrl.u32 %v9800, 16
        %v9851 = vor.u32 %v9849, %v9847
        %v9853 = vshll.u32 %v9801, 16
        %v9855 = vrot.slane %v9853, 1
        %v9856 = vsel %vm576, %v9851, %v9855
        %v9857 = vshrl.u32 %v9801, 16
        %v9859 = vor.u32 %v9857, %v9855
        %v9861 = vshll.u32 %v9802, 16
        %v9863 = vrot.slane %v9861, 1
        %v9864 = vsel %vm576, %v9859, %v9863
        %v9865 = vshrl.u32 %v9802, 16
        %v9867 = vor.u32 %v9865, %v9863
        %v9869 = vshll.u32 %v9803, 16
        %v9871 = vrot.slane %v9869, 1
        %v9872 = vsel %vm576, %v9867, %v9871
        %v9873 = vshrl.u32 %v9803, 16
        %v9875 = vor.u32 %v9873, %v9871
        %v9877 = vshll.u32 %v9804, 16
        %v9879 = vrot.slane %v9877, 1
        %v9880 = vsel %vm576, %v9875, %v9879
        %v9881 = vshrl.u32 %v9804, 16
        %v9883 = vor.u32 %v9881, %v9879
        %v9885 = vshll.u32 %v9805, 16
        %v9887 = vrot.slane %v9885, 1
        %v9888 = vsel %vm576, %v9883, %v9887
        %v9889 = vshrl.u32 %v9805, 16
        %v9891 = vor.u32 %v9889, %v9887
        %v9893 = vshll.u32 %v9806, 16
        %v9895 = vrot.slane %v9893, 1
        %v9896 = vsel %vm576, %v9891, %v9895
        %v9897 = vshrl.u32 %v9806, 16
        %v9899 = vor.u32 %v9897, %v9895
        %v9901 = vshll.u32 %v9807, 16
        %v9903 = vrot.slane %v9901, 1
        %v9904 = vsel %vm576, %v9899, %v9903
        %v9905 = vshrl.u32 %v9807, 16
        %v9907 = vor.u32 %v9905, %v9903
        %v9909 = vshll.u32 %v9808, 16
        %v9911 = vrot.slane %v9909, 1
        %v9912 = vsel %vm576, %v9907, %v9911
        %v9913 = vshrl.u32 %v9808, 16
        %v9915 = vor.u32 %v9913, %v9911
        %v9917 = vshll.u32 %v9812, 16
        %v9919 = vrot.slane %v9917, 1
        %v9920 = vsel %vm576, %v9915, %v9919
        %v9921 = vshrl.u32 %v9812, 16
        %v9923 = vor.u32 %v9921, %v9919
        %9924 = vrot.lane.b32.xlu0 %v9824, 16
        %v9925 = vpop.permute.xlu0 %9924
        %9926 = vrot.lane.b32.xlu0 %v9832, 16
        %v9927 = vpop.permute.xlu0 %9926
        %9928 = vrot.lane.b32.xlu0 %v9840, 16
        %v9929 = vpop.permute.xlu0 %9928
        %9930 = vrot.lane.b32.xlu0 %v9848, 16
        %v9931 = vpop.permute.xlu0 %9930
        %9932 = vrot.lane.b32.xlu0 %v9856, 16
        %v9933 = vpop.permute.xlu0 %9932
        %9934 = vrot.lane.b32.xlu0 %v9864, 16
        %v9935 = vpop.permute.xlu0 %9934
        %9936 = vrot.lane.b32.xlu0 %v9872, 16
        %v9937 = vpop.permute.xlu0 %9936
        %9938 = vrot.lane.b32.xlu0 %v9880, 16
        %v9939 = vpop.permute.xlu0 %9938
        %9940 = vrot.lane.b32.xlu0 %v9888, 16
        %v9941 = vpop.permute.xlu0 %9940
        %9942 = vrot.lane.b32.xlu0 %v9896, 16
        %v9943 = vpop.permute.xlu0 %9942
        %9944 = vrot.lane.b32.xlu0 %v9904, 16
        %v9945 = vpop.permute.xlu0 %9944
        %9946 = vrot.lane.b32.xlu0 %v9912, 16
        %v9947 = vpop.permute.xlu0 %9946
        %9948 = vrot.lane.b32.xlu0 %v9920, 16
        %v9949 = vpop.permute.xlu0 %9948
        %9950 = vrot.lane.b32.xlu0 %v9923, 16
        %v9951 = vpop.permute.xlu0 %9950
        %v9953 = vunpack.c.l.b16 %v9707
        %v9954 = vpack.c.b16 %v9770, %v9953
        %v9955 = vrot.slane %v9954, 1
        %v9956 = vrot.slane %v9797, 1
        %v9957 = vsel %vm1038, %v9955, %v9956
        %v9958 = vrot.slane %v9798, 1
        %v9959 = vsel %vm1038, %v9956, %v9958
        %v9960 = vrot.slane %v9799, 1
        %v9961 = vsel %vm1038, %v9958, %v9960
        %v9962 = vrot.slane %v9800, 1
        %v9963 = vsel %vm1038, %v9960, %v9962
        %v9964 = vrot.slane %v9801, 1
        %v9965 = vsel %vm1038, %v9962, %v9964
        %v9966 = vrot.slane %v9802, 1
        %v9967 = vsel %vm1038, %v9964, %v9966
        %v9968 = vrot.slane %v9803, 1
        %v9969 = vsel %vm1038, %v9966, %v9968
        %v9970 = vrot.slane %v9804, 1
        %v9971 = vsel %vm1038, %v9968, %v9970
        %v9972 = vrot.slane %v9805, 1
        %v9973 = vsel %vm1038, %v9970, %v9972
        %v9974 = vrot.slane %v9806, 1
        %v9975 = vsel %vm1038, %v9972, %v9974
        %v9976 = vrot.slane %v9807, 1
        %v9977 = vsel %vm1038, %v9974, %v9976
        %v9978 = vrot.slane %v9808, 1
        %v9979 = vsel %vm1038, %v9976, %v9978
        %v9980 = vrot.slane %v9812, 1
        %v9981 = vsel %vm1038, %v9978, %v9980
        %9982 = vrot.lane.b32.xlu0 %v9957, 32
        %v9983 = vpop.permute.xlu0 %9982
        %9984 = vrot.lane.b32.xlu0 %v9959, 32
        %v9985 = vpop.permute.xlu0 %9984
        %9986 = vrot.lane.b32.xlu0 %v9961, 32
        %v9987 = vpop.permute.xlu0 %9986
        %9988 = vrot.lane.b32.xlu0 %v9963, 32
        %v9989 = vpop.permute.xlu0 %9988
        %9990 = vrot.lane.b32.xlu0 %v9965, 32
        %v9991 = vpop.permute.xlu0 %9990
        %9992 = vrot.lane.b32.xlu0 %v9967, 32
        %v9993 = vpop.permute.xlu0 %9992
        %9994 = vrot.lane.b32.xlu0 %v9969, 32
        %v9995 = vpop.permute.xlu0 %9994
        %9996 = vrot.lane.b32.xlu0 %v9971, 32
        %v9997 = vpop.permute.xlu0 %9996
        %9998 = vrot.lane.b32.xlu0 %v9973, 32
        %v9999 = vpop.permute.xlu0 %9998
        %10000 = vrot.lane.b32.xlu0 %v9975, 32
        %v10001 = vpop.permute.xlu0 %10000
        %10002 = vrot.lane.b32.xlu0 %v9977, 32
        %v10003 = vpop.permute.xlu0 %10002
        %10004 = vrot.lane.b32.xlu0 %v9979, 32
        %v10005 = vpop.permute.xlu0 %10004
        %10006 = vrot.lane.b32.xlu0 %v9981, 32
        %v10007 = vpop.permute.xlu0 %10006
        %10008 = vrot.lane.b32.xlu0 %v9980, 32
        %v10009 = vpop.permute.xlu0 %10008
        %v10012 = vunpack.c.l.b16 %v9708
        %v10013 = vunpack.c.l.b16 %v9709
        %v10014 = vpack.c.b16 %v9770, %v10012
        %v10015 = vpack.c.b16 %v10013, %v9795
        %v10016 = vrot.slane %v10014, 3
        %v10017 = vrot.slane %v9797, 3
        %v10018 = vsel %vm722, %v10016, %v10017
        %v10019 = vrot.slane %v9798, 3
        %v10020 = vsel %vm722, %v10017, %v10019
        %v10021 = vrot.slane %v9799, 3
        %v10022 = vsel %vm722, %v10019, %v10021
        %v10023 = vrot.slane %v9800, 3
        %v10024 = vsel %vm722, %v10021, %v10023
        %v10025 = vrot.slane %v9801, 3
        %v10026 = vsel %vm722, %v10023, %v10025
        %v10027 = vrot.slane %v9802, 3
        %v10028 = vsel %vm722, %v10025, %v10027
        %v10029 = vrot.slane %v9803, 3
        %v10030 = vsel %vm722, %v10027, %v10029
        %v10031 = vrot.slane %v9804, 3
        %v10032 = vsel %vm722, %v10029, %v10031
        %v10033 = vrot.slane %v9805, 3
        %v10034 = vsel %vm722, %v10031, %v10033
        %v10035 = vrot.slane %v9806, 3
        %v10036 = vsel %vm722, %v10033, %v10035
        %v10037 = vrot.slane %v9807, 3
        %v10038 = vsel %vm722, %v10035, %v10037
        %v10039 = vrot.slane %v9808, 3
        %v10040 = vsel %vm722, %v10037, %v10039
        %v10041 = vrot.slane %v10015, 3
        %v10042 = vsel %vm722, %v10039, %v10041
        %10043 = vrot.lane.b32.xlu0 %v10018, 48
        %v10044 = vpop.permute.xlu0 %10043
        %10045 = vrot.lane.b32.xlu0 %v10020, 48
        %v10046 = vpop.permute.xlu0 %10045
        %10047 = vrot.lane.b32.xlu0 %v10022, 48
        %v10048 = vpop.permute.xlu0 %10047
        %10049 = vrot.lane.b32.xlu0 %v10024, 48
        %v10050 = vpop.permute.xlu0 %10049
        %10051 = vrot.lane.b32.xlu0 %v10026, 48
        %v10052 = vpop.permute.xlu0 %10051
        %10053 = vrot.lane.b32.xlu0 %v10028, 48
        %v10054 = vpop.permute.xlu0 %10053
        %10055 = vrot.lane.b32.xlu0 %v10030, 48
        %v10056 = vpop.permute.xlu0 %10055
        %10057 = vrot.lane.b32.xlu0 %v10032, 48
        %v10058 = vpop.permute.xlu0 %10057
        %10059 = vrot.lane.b32.xlu0 %v10034, 48
        %v10060 = vpop.permute.xlu0 %10059
        %10061 = vrot.lane.b32.xlu0 %v10036, 48
        %v10062 = vpop.permute.xlu0 %10061
        %10063 = vrot.lane.b32.xlu0 %v10038, 48
        %v10064 = vpop.permute.xlu0 %10063
        %10065 = vrot.lane.b32.xlu0 %v10040, 48
        %v10066 = vpop.permute.xlu0 %10065
        %10067 = vrot.lane.b32.xlu0 %v10042, 48
        %v10068 = vpop.permute.xlu0 %10067
        %10069 = vrot.lane.b32.xlu0 %v10041, 48
        %v10070 = vpop.permute.xlu0 %10069
        %v10072 = vunpack.c.l.b16 %v9710
        %v10073 = vpack.c.b16 %v10072, %v9795
        %v10075 = vshrl.u32 %v10014, 16
        %v10077 = vrot.slane %v10075, 3
        %v10078 = vshll.u32 %v10014, 16
        %v10080 = vrot.slane %v10078, 4
        %v10081 = vor.u32 %v10077, %v10080
        %v10082 = vrot.slane %v9825, 3
        %v10083 = vrot.slane %v9821, 4
        %v10084 = vor.u32 %v10082, %v10083
        %v10085 = vsel %vm781, %v10081, %v10084
        %v10086 = vrot.slane %v9833, 3
        %v10087 = vrot.slane %v9829, 4
        %v10088 = vor.u32 %v10086, %v10087
        %v10089 = vsel %vm781, %v10084, %v10088
        %v10090 = vrot.slane %v9841, 3
        %v10091 = vrot.slane %v9837, 4
        %v10092 = vor.u32 %v10090, %v10091
        %v10093 = vsel %vm781, %v10088, %v10092
        %v10094 = vrot.slane %v9849, 3
        %v10095 = vrot.slane %v9845, 4
        %v10096 = vor.u32 %v10094, %v10095
        %v10097 = vsel %vm781, %v10092, %v10096
        %v10098 = vrot.slane %v9857, 3
        %v10099 = vrot.slane %v9853, 4
        %v10100 = vor.u32 %v10098, %v10099
        %v10101 = vsel %vm781, %v10096, %v10100
        %v10102 = vrot.slane %v9865, 3
        %v10103 = vrot.slane %v9861, 4
        %v10104 = vor.u32 %v10102, %v10103
        %v10105 = vsel %vm781, %v10100, %v10104
        %v10106 = vrot.slane %v9873, 3
        %v10107 = vrot.slane %v9869, 4
        %v10108 = vor.u32 %v10106, %v10107
        %v10109 = vsel %vm781, %v10104, %v10108
        %v10110 = vrot.slane %v9881, 3
        %v10111 = vrot.slane %v9877, 4
        %v10112 = vor.u32 %v10110, %v10111
        %v10113 = vsel %vm781, %v10108, %v10112
        %v10114 = vrot.slane %v9889, 3
        %v10115 = vrot.slane %v9885, 4
        %v10116 = vor.u32 %v10114, %v10115
        %v10117 = vsel %vm781, %v10112, %v10116
        %v10118 = vrot.slane %v9897, 3
        %v10119 = vrot.slane %v9893, 4
        %v10120 = vor.u32 %v10118, %v10119
        %v10121 = vsel %vm781, %v10116, %v10120
        %v10122 = vrot.slane %v9905, 3
        %v10123 = vrot.slane %v9901, 4
        %v10124 = vor.u32 %v10122, %v10123
        %v10125 = vsel %vm781, %v10120, %v10124
        %v10126 = vrot.slane %v9913, 3
        %v10127 = vrot.slane %v9909, 4
        %v10128 = vor.u32 %v10126, %v10127
        %v10129 = vsel %vm781, %v10124, %v10128
        %v10131 = vshrl.u32 %v10073, 16
        %v10133 = vrot.slane %v10131, 3
        %v10134 = vshll.u32 %v10073, 16
        %v10136 = vrot.slane %v10134, 4
        %v10137 = vor.u32 %v10133, %v10136
        %v10138 = vsel %vm781, %v10128, %v10137
        %10139 = vrot.lane.b32.xlu0 %v10085, 64
        %v10140 = vpop.permute.xlu0 %10139
        %10141 = vrot.lane.b32.xlu0 %v10089, 64
        %v10142 = vpop.permute.xlu0 %10141
        %10143 = vrot.lane.b32.xlu0 %v10093, 64
        %v10144 = vpop.permute.xlu0 %10143
        %10145 = vrot.lane.b32.xlu0 %v10097, 64
        %v10146 = vpop.permute.xlu0 %10145
        %10147 = vrot.lane.b32.xlu0 %v10101, 64
        %v10148 = vpop.permute.xlu0 %10147
        %10149 = vrot.lane.b32.xlu0 %v10105, 64
        %v10150 = vpop.permute.xlu0 %10149
        %10151 = vrot.lane.b32.xlu0 %v10109, 64
        %v10152 = vpop.permute.xlu0 %10151
        %10153 = vrot.lane.b32.xlu0 %v10113, 64
        %v10154 = vpop.permute.xlu0 %10153
        %10155 = vrot.lane.b32.xlu0 %v10117, 64
        %v10156 = vpop.permute.xlu0 %10155
        %10157 = vrot.lane.b32.xlu0 %v10121, 64
        %v10158 = vpop.permute.xlu0 %10157
        %10159 = vrot.lane.b32.xlu0 %v10125, 64
        %v10160 = vpop.permute.xlu0 %10159
        %10161 = vrot.lane.b32.xlu0 %v10129, 64
        %v10162 = vpop.permute.xlu0 %10161
        %10163 = vrot.lane.b32.xlu0 %v10138, 64
        %v10164 = vpop.permute.xlu0 %10163
        %10165 = vrot.lane.b32.xlu0 %v10137, 64
        %v10166 = vpop.permute.xlu0 %10165
        %v10167 = vpack.c.b16 %v9771, %v9770
        %v10168 = vpack.c.b16 %v9773, %v9772
        %v10169 = vpack.c.b16 %v9775, %v9774
        %v10170 = vpack.c.b16 %v9777, %v9776
        %v10171 = vpack.c.b16 %v9779, %v9778
        %v10172 = vpack.c.b16 %v9781, %v9780
        %v10173 = vpack.c.b16 %v9783, %v9782
        %v10174 = vpack.c.b16 %v9785, %v9784
        %v10175 = vpack.c.b16 %v9787, %v9786
        %v10176 = vpack.c.b16 %v9789, %v9788
        %v10177 = vpack.c.b16 %v9791, %v9790
        %v10178 = vpack.c.b16 %v9793, %v9792
        %v10179 = vpack.c.b16 %v9795, %v9794
        %v10180 = vpack.c.b16 %v10072, %v10072
        %10181 = vrot.lane.b32.xlu0 %v10167, 80
        %v10182 = vpop.permute.xlu0 %10181
        %10183 = vrot.lane.b32.xlu0 %v10168, 80
        %v10184 = vpop.permute.xlu0 %10183
        %10185 = vrot.lane.b32.xlu0 %v10169, 80
        %v10186 = vpop.permute.xlu0 %10185
        %10187 = vrot.lane.b32.xlu0 %v10170, 80
        %v10188 = vpop.permute.xlu0 %10187
        %10189 = vrot.lane.b32.xlu0 %v10171, 80
        %v10190 = vpop.permute.xlu0 %10189
        %10191 = vrot.lane.b32.xlu0 %v10172, 80
        %v10192 = vpop.permute.xlu0 %10191
        %10193 = vrot.lane.b32.xlu0 %v10173, 80
        %v10194 = vpop.permute.xlu0 %10193
        %10195 = vrot.lane.b32.xlu0 %v10174, 80
        %v10196 = vpop.permute.xlu0 %10195
        %10197 = vrot.lane.b32.xlu0 %v10175, 80
        %v10198 = vpop.permute.xlu0 %10197
        %10199 = vrot.lane.b32.xlu0 %v10176, 80
        %v10200 = vpop.permute.xlu0 %10199
        %10201 = vrot.lane.b32.xlu0 %v10177, 80
        %v10202 = vpop.permute.xlu0 %10201
        %10203 = vrot.lane.b32.xlu0 %v10178, 80
        %v10204 = vpop.permute.xlu0 %10203
        %10205 = vrot.lane.b32.xlu0 %v10179, 80
        %v10206 = vpop.permute.xlu0 %10205
        %10207 = vrot.lane.b32.xlu0 %v10180, 80
        %v10208 = vpop.permute.xlu0 %10207
        %v10211 = vunpack.c.l.b16 %v9711
        %v10212 = vunpack.c.l.b16 %v9712
        %v10213 = vpack.c.b16 %v9771, %v10211
        %v10214 = vpack.c.b16 %v10212, %v10072
        %v10215 = vrot.slane %v10213, 2
        %v10216 = vrot.slane %v10168, 2
        %v10217 = vsel %vm888, %v10215, %v10216
        %v10218 = vrot.slane %v10169, 2
        %v10219 = vsel %vm888, %v10216, %v10218
        %v10220 = vrot.slane %v10170, 2
        %v10221 = vsel %vm888, %v10218, %v10220
        %v10222 = vrot.slane %v10171, 2
        %v10223 = vsel %vm888, %v10220, %v10222
        %v10224 = vrot.slane %v10172, 2
        %v10225 = vsel %vm888, %v10222, %v10224
        %v10226 = vrot.slane %v10173, 2
        %v10227 = vsel %vm888, %v10224, %v10226
        %v10228 = vrot.slane %v10174, 2
        %v10229 = vsel %vm888, %v10226, %v10228
        %v10230 = vrot.slane %v10175, 2
        %v10231 = vsel %vm888, %v10228, %v10230
        %v10232 = vrot.slane %v10176, 2
        %v10233 = vsel %vm888, %v10230, %v10232
        %v10234 = vrot.slane %v10177, 2
        %v10235 = vsel %vm888, %v10232, %v10234
        %v10236 = vrot.slane %v10178, 2
        %v10237 = vsel %vm888, %v10234, %v10236
        %v10238 = vrot.slane %v10179, 2
        %v10239 = vsel %vm888, %v10236, %v10238
        %v10240 = vrot.slane %v10214, 2
        %v10241 = vsel %vm888, %v10238, %v10240
        %10242 = vrot.lane.b32.xlu0 %v10217, 96
        %v10243 = vpop.permute.xlu0 %10242
        %10244 = vrot.lane.b32.xlu0 %v10219, 96
        %v10245 = vpop.permute.xlu0 %10244
        %10246 = vrot.lane.b32.xlu0 %v10221, 96
        %v10247 = vpop.permute.xlu0 %10246
        %10248 = vrot.lane.b32.xlu0 %v10223, 96
        %v10249 = vpop.permute.xlu0 %10248
        %10250 = vrot.lane.b32.xlu0 %v10225, 96
        %v10251 = vpop.permute.xlu0 %10250
        %10252 = vrot.lane.b32.xlu0 %v10227, 96
        %v10253 = vpop.permute.xlu0 %10252
        %10254 = vrot.lane.b32.xlu0 %v10229, 96
        %v10255 = vpop.permute.xlu0 %10254
        %10256 = vrot.lane.b32.xlu0 %v10231, 96
        %v10257 = vpop.permute.xlu0 %10256
        %10258 = vrot.lane.b32.xlu0 %v10233, 96
        %v10259 = vpop.permute.xlu0 %10258
        %10260 = vrot.lane.b32.xlu0 %v10235, 96
        %v10261 = vpop.permute.xlu0 %10260
        %10262 = vrot.lane.b32.xlu0 %v10237, 96
        %v10263 = vpop.permute.xlu0 %10262
        %10264 = vrot.lane.b32.xlu0 %v10239, 96
        %v10265 = vpop.permute.xlu0 %10264
        %10266 = vrot.lane.b32.xlu0 %v10241, 96
        %v10267 = vpop.permute.xlu0 %10266
        %10268 = vrot.lane.b32.xlu0 %v10240, 96
        %v10269 = vpop.permute.xlu0 %10268
        %v10271 = vunpack.c.l.b16 %v9713
        %v10272 = vpack.c.b16 %v10271, %v10072
        %v10274 = vshrl.u32 %v10213, 16
        %v10276 = vrot.slane %v10274, 2
        %v10277 = vshll.u32 %v10213, 16
        %v10279 = vrot.slane %v10277, 3
        %v10280 = vor.u32 %v10276, %v10279
        %v10282 = vshrl.u32 %v10168, 16
        %v10284 = vrot.slane %v10282, 2
        %v10285 = vshll.u32 %v10168, 16
        %v10287 = vrot.slane %v10285, 3
        %v10288 = vor.u32 %v10284, %v10287
        %v10289 = vsel %vm919, %v10280, %v10288
        %v10291 = vshrl.u32 %v10169, 16
        %v10293 = vrot.slane %v10291, 2
        %v10294 = vshll.u32 %v10169, 16
        %v10296 = vrot.slane %v10294, 3
        %v10297 = vor.u32 %v10293, %v10296
        %v10298 = vsel %vm919, %v10288, %v10297
        %v10300 = vshrl.u32 %v10170, 16
        %v10302 = vrot.slane %v10300, 2
        %v10303 = vshll.u32 %v10170, 16
        %v10305 = vrot.slane %v10303, 3
        %v10306 = vor.u32 %v10302, %v10305
        %v10307 = vsel %vm919, %v10297, %v10306
        %v10309 = vshrl.u32 %v10171, 16
        %v10311 = vrot.slane %v10309, 2
        %v10312 = vshll.u32 %v10171, 16
        %v10314 = vrot.slane %v10312, 3
        %v10315 = vor.u32 %v10311, %v10314
        %v10316 = vsel %vm919, %v10306, %v10315
        %v10318 = vshrl.u32 %v10172, 16
        %v10320 = vrot.slane %v10318, 2
        %v10321 = vshll.u32 %v10172, 16
        %v10323 = vrot.slane %v10321, 3
        %v10324 = vor.u32 %v10320, %v10323
        %v10325 = vsel %vm919, %v10315, %v10324
        %v10327 = vshrl.u32 %v10173, 16
        %v10329 = vrot.slane %v10327, 2
        %v10330 = vshll.u32 %v10173, 16
        %v10332 = vrot.slane %v10330, 3
        %v10333 = vor.u32 %v10329, %v10332
        %v10334 = vsel %vm919, %v10324, %v10333
        %v10336 = vshrl.u32 %v10174, 16
        %v10338 = vrot.slane %v10336, 2
        %v10339 = vshll.u32 %v10174, 16
        %v10341 = vrot.slane %v10339, 3
        %v10342 = vor.u32 %v10338, %v10341
        %v10343 = vsel %vm919, %v10333, %v10342
        %v10345 = vshrl.u32 %v10175, 16
        %v10347 = vrot.slane %v10345, 2
        %v10348 = vshll.u32 %v10175, 16
        %v10350 = vrot.slane %v10348, 3
        %v10351 = vor.u32 %v10347, %v10350
        %v10352 = vsel %vm919, %v10342, %v10351
        %v10354 = vshrl.u32 %v10176, 16
        %v10356 = vrot.slane %v10354, 2
        %v10357 = vshll.u32 %v10176, 16
        %v10359 = vrot.slane %v10357, 3
        %v10360 = vor.u32 %v10356, %v10359
        %v10361 = vsel %vm919, %v10351, %v10360
        %v10363 = vshrl.u32 %v10177, 16
        %v10365 = vrot.slane %v10363, 2
        %v10366 = vshll.u32 %v10177, 16
        %v10368 = vrot.slane %v10366, 3
        %v10369 = vor.u32 %v10365, %v10368
        %v10370 = vsel %vm919, %v10360, %v10369
        %v10372 = vshrl.u32 %v10178, 16
        %v10374 = vrot.slane %v10372, 2
        %v10375 = vshll.u32 %v10178, 16
        %v10377 = vrot.slane %v10375, 3
        %v10378 = vor.u32 %v10374, %v10377
        %v10379 = vsel %vm919, %v10369, %v10378
        %v10381 = vshrl.u32 %v10179, 16
        %v10383 = vrot.slane %v10381, 2
        %v10384 = vshll.u32 %v10179, 16
        %v10386 = vrot.slane %v10384, 3
        %v10387 = vor.u32 %v10383, %v10386
        %v10388 = vsel %vm919, %v10378, %v10387
        %v10390 = vshrl.u32 %v10272, 16
        %v10392 = vrot.slane %v10390, 2
        %v10393 = vshll.u32 %v10272, 16
        %v10395 = vrot.slane %v10393, 3
        %v10396 = vor.u32 %v10392, %v10395
        %v10397 = vsel %vm919, %v10387, %v10396
        %10398 = vrot.lane.b32.xlu0 %v10289, 112
        %v10399 = vpop.permute.xlu0 %10398
        %10400 = vrot.lane.b32.xlu0 %v10298, 112
        %v10401 = vpop.permute.xlu0 %10400
        %10402 = vrot.lane.b32.xlu0 %v10307, 112
        %v10403 = vpop.permute.xlu0 %10402
        %10404 = vrot.lane.b32.xlu0 %v10316, 112
        %v10405 = vpop.permute.xlu0 %10404
        %10406 = vrot.lane.b32.xlu0 %v10325, 112
        %v10407 = vpop.permute.xlu0 %10406
        %10408 = vrot.lane.b32.xlu0 %v10334, 112
        %v10409 = vpop.permute.xlu0 %10408
        %10410 = vrot.lane.b32.xlu0 %v10343, 112
        %v10411 = vpop.permute.xlu0 %10410
        %10412 = vrot.lane.b32.xlu0 %v10352, 112
        %v10413 = vpop.permute.xlu0 %10412
        %10414 = vrot.lane.b32.xlu0 %v10361, 112
        %v10415 = vpop.permute.xlu0 %10414
        %10416 = vrot.lane.b32.xlu0 %v10370, 112
        %v10417 = vpop.permute.xlu0 %10416
        %10418 = vrot.lane.b32.xlu0 %v10379, 112
        %v10419 = vpop.permute.xlu0 %10418
        %10420 = vrot.lane.b32.xlu0 %v10388, 112
        %v10421 = vpop.permute.xlu0 %10420
        %10422 = vrot.lane.b32.xlu0 %v10397, 112
        %v10423 = vpop.permute.xlu0 %10422
        %10424 = vrot.lane.b32.xlu0 %v10396, 112
        %v10425 = vpop.permute.xlu0 %10424
        %v10427 = vunpack.c.l.b16 %v9714
        %v10428 = vpack.c.b16 %v9771, %v10427
        %v10429 = vrot.slane %v10428, 3
        %v10430 = vrot.slane %v10168, 3
        %v10431 = vsel %vm722, %v10429, %v10430
        %v10432 = vrot.slane %v10169, 3
        %v10433 = vsel %vm722, %v10430, %v10432
        %v10434 = vrot.slane %v10170, 3
        %v10435 = vsel %vm722, %v10432, %v10434
        %v10436 = vrot.slane %v10171, 3
        %v10437 = vsel %vm722, %v10434, %v10436
        %v10438 = vrot.slane %v10172, 3
        %v10439 = vsel %vm722, %v10436, %v10438
        %v10440 = vrot.slane %v10173, 3
        %v10441 = vsel %vm722, %v10438, %v10440
        %v10442 = vrot.slane %v10174, 3
        %v10443 = vsel %vm722, %v10440, %v10442
        %v10444 = vrot.slane %v10175, 3
        %v10445 = vsel %vm722, %v10442, %v10444
        %v10446 = vrot.slane %v10176, 3
        %v10447 = vsel %vm722, %v10444, %v10446
        %v10448 = vrot.slane %v10177, 3
        %v10449 = vsel %vm722, %v10446, %v10448
        %v10450 = vrot.slane %v10178, 3
        %v10451 = vsel %vm722, %v10448, %v10450
        %v10452 = vrot.slane %v10179, 3
        %v10453 = vsel %vm722, %v10450, %v10452
        %v10454 = vrot.slane %v10272, 3
        %v10455 = vsel %vm722, %v10452, %v10454
        %v10461 = vunpack.c.l.b16 %v9715
        %v10462 = vunpack.c.l.b16 %v9716
        %v10463 = vunpack.c.l.b16 %v9717
        %v10464 = vunpack.c.l.b16 %v9718
        %v10465 = vunpack.c.l.b16 %v9719
        %v10466 = vpack.c.b16 %v9774, %v10461
        %v10467 = vpack.c.b16 %v10463, %v10462
        %v10468 = vpack.c.b16 %v10465, %v10464
        %v10469 = vrot.slane %v10466, 2
        %v10470 = vrot.slane %v9799, 2
        %v10471 = vsel %vm888, %v10469, %v10470
        %v10472 = vrot.slane %v9800, 2
        %v10473 = vsel %vm888, %v10470, %v10472
        %v10474 = vrot.slane %v9801, 2
        %v10475 = vsel %vm888, %v10472, %v10474
        %v10476 = vrot.slane %v9802, 2
        %v10477 = vsel %vm888, %v10474, %v10476
        %v10478 = vrot.slane %v9803, 2
        %v10479 = vsel %vm888, %v10476, %v10478
        %v10480 = vrot.slane %v9804, 2
        %v10481 = vsel %vm888, %v10478, %v10480
        %v10482 = vrot.slane %v9805, 2
        %v10483 = vsel %vm888, %v10480, %v10482
        %v10484 = vrot.slane %v9806, 2
        %v10485 = vsel %vm888, %v10482, %v10484
        %v10486 = vrot.slane %v9807, 2
        %v10487 = vsel %vm888, %v10484, %v10486
        %v10488 = vrot.slane %v9808, 2
        %v10489 = vsel %vm888, %v10486, %v10488
        %v10490 = vrot.slane %v10073, 2
        %v10491 = vsel %vm888, %v10488, %v10490
        %v10492 = vrot.slane %v10467, 2
        %v10493 = vsel %vm888, %v10490, %v10492
        %v10494 = vrot.slane %v10468, 2
        %v10495 = vsel %vm888, %v10492, %v10494
        %10496 = vrot.lane.b32.xlu0 %v10471, 16
        %v10497 = vpop.permute.xlu0 %10496
        %10498 = vrot.lane.b32.xlu0 %v10473, 16
        %v10499 = vpop.permute.xlu0 %10498
        %10500 = vrot.lane.b32.xlu0 %v10475, 16
        %v10501 = vpop.permute.xlu0 %10500
        %10502 = vrot.lane.b32.xlu0 %v10477, 16
        %v10503 = vpop.permute.xlu0 %10502
        %10504 = vrot.lane.b32.xlu0 %v10479, 16
        %v10505 = vpop.permute.xlu0 %10504
        %10506 = vrot.lane.b32.xlu0 %v10481, 16
        %v10507 = vpop.permute.xlu0 %10506
        %10508 = vrot.lane.b32.xlu0 %v10483, 16
        %v10509 = vpop.permute.xlu0 %10508
        %10510 = vrot.lane.b32.xlu0 %v10485, 16
        %v10511 = vpop.permute.xlu0 %10510
        %10512 = vrot.lane.b32.xlu0 %v10487, 16
        %v10513 = vpop.permute.xlu0 %10512
        %10514 = vrot.lane.b32.xlu0 %v10489, 16
        %v10515 = vpop.permute.xlu0 %10514
        %10516 = vrot.lane.b32.xlu0 %v10491, 16
        %v10517 = vpop.permute.xlu0 %10516
        %10518 = vrot.lane.b32.xlu0 %v10493, 16
        %v10519 = vpop.permute.xlu0 %10518
        %10520 = vrot.lane.b32.xlu0 %v10495, 16
        %v10521 = vpop.permute.xlu0 %10520
        %10522 = vrot.lane.b32.xlu0 %v10494, 16
        %v10523 = vpop.permute.xlu0 %10522
        %v10525 = vunpack.c.l.b16 %v9720
        %v10526 = vpack.c.b16 %v10525, %v10464
        %v10528 = vshrl.u32 %v10466, 16
        %v10530 = vrot.slane %v10528, 2
        %v10531 = vshll.u32 %v10466, 16
        %v10533 = vrot.slane %v10531, 3
        %v10534 = vor.u32 %v10530, %v10533
        %v10535 = vrot.slane %v9841, 2
        %v10536 = vrot.slane %v9837, 3
        %v10537 = vor.u32 %v10535, %v10536
        %v10538 = vsel %vm919, %v10534, %v10537
        %v10539 = vrot.slane %v9849, 2
        %v10540 = vrot.slane %v9845, 3
        %v10541 = vor.u32 %v10539, %v10540
        %v10542 = vsel %vm919, %v10537, %v10541
        %v10543 = vrot.slane %v9857, 2
        %v10544 = vrot.slane %v9853, 3
        %v10545 = vor.u32 %v10543, %v10544
        %v10546 = vsel %vm919, %v10541, %v10545
        %v10547 = vrot.slane %v9865, 2
        %v10548 = vrot.slane %v9861, 3
        %v10549 = vor.u32 %v10547, %v10548
        %v10550 = vsel %vm919, %v10545, %v10549
        %v10551 = vrot.slane %v9873, 2
        %v10552 = vrot.slane %v9869, 3
        %v10553 = vor.u32 %v10551, %v10552
        %v10554 = vsel %vm919, %v10549, %v10553
        %v10555 = vrot.slane %v9881, 2
        %v10556 = vrot.slane %v9877, 3
        %v10557 = vor.u32 %v10555, %v10556
        %v10558 = vsel %vm919, %v10553, %v10557
        %v10559 = vrot.slane %v9889, 2
        %v10560 = vrot.slane %v9885, 3
        %v10561 = vor.u32 %v10559, %v10560
        %v10562 = vsel %vm919, %v10557, %v10561
        %v10563 = vrot.slane %v9897, 2
        %v10564 = vrot.slane %v9893, 3
        %v10565 = vor.u32 %v10563, %v10564
        %v10566 = vsel %vm919, %v10561, %v10565
        %v10567 = vrot.slane %v9905, 2
        %v10568 = vrot.slane %v9901, 3
        %v10569 = vor.u32 %v10567, %v10568
        %v10570 = vsel %vm919, %v10565, %v10569
        %v10571 = vrot.slane %v9913, 2
        %v10572 = vrot.slane %v9909, 3
        %v10573 = vor.u32 %v10571, %v10572
        %v10574 = vsel %vm919, %v10569, %v10573
        %v10575 = vrot.slane %v10131, 2
        %v10576 = vrot.slane %v10134, 3
        %v10577 = vor.u32 %v10575, %v10576
        %v10578 = vsel %vm919, %v10573, %v10577
        %v10580 = vshrl.u32 %v10467, 16
        %v10582 = vrot.slane %v10580, 2
        %v10583 = vshll.u32 %v10467, 16
        %v10585 = vrot.slane %v10583, 3
        %v10586 = vor.u32 %v10582, %v10585
        %v10587 = vsel %vm919, %v10577, %v10586
        %v10589 = vshrl.u32 %v10526, 16
        %v10591 = vrot.slane %v10589, 2
        %v10592 = vshll.u32 %v10526, 16
        %v10594 = vrot.slane %v10592, 3
        %v10595 = vor.u32 %v10591, %v10594
        %v10596 = vsel %vm919, %v10586, %v10595
        %10597 = vrot.lane.b32.xlu0 %v10538, 32
        %v10598 = vpop.permute.xlu0 %10597
        %10599 = vrot.lane.b32.xlu0 %v10542, 32
        %v10600 = vpop.permute.xlu0 %10599
        %10601 = vrot.lane.b32.xlu0 %v10546, 32
        %v10602 = vpop.permute.xlu0 %10601
        %10603 = vrot.lane.b32.xlu0 %v10550, 32
        %v10604 = vpop.permute.xlu0 %10603
        %10605 = vrot.lane.b32.xlu0 %v10554, 32
        %v10606 = vpop.permute.xlu0 %10605
        %10607 = vrot.lane.b32.xlu0 %v10558, 32
        %v10608 = vpop.permute.xlu0 %10607
        %10609 = vrot.lane.b32.xlu0 %v10562, 32
        %v10610 = vpop.permute.xlu0 %10609
        %10611 = vrot.lane.b32.xlu0 %v10566, 32
        %v10612 = vpop.permute.xlu0 %10611
        %10613 = vrot.lane.b32.xlu0 %v10570, 32
        %v10614 = vpop.permute.xlu0 %10613
        %10615 = vrot.lane.b32.xlu0 %v10574, 32
        %v10616 = vpop.permute.xlu0 %10615
        %10617 = vrot.lane.b32.xlu0 %v10578, 32
        %v10618 = vpop.permute.xlu0 %10617
        %10619 = vrot.lane.b32.xlu0 %v10587, 32
        %v10620 = vpop.permute.xlu0 %10619
        %10621 = vrot.lane.b32.xlu0 %v10596, 32
        %v10622 = vpop.permute.xlu0 %10621
        %10623 = vrot.lane.b32.xlu0 %v10595, 32
        %v10624 = vpop.permute.xlu0 %10623
        %v10626 = vunpack.c.l.b16 %v9721
        %v10627 = vpack.c.b16 %v9774, %v10626
        %v10628 = vrot.slane %v10627, 3
        %v10629 = vsel %vm722, %v10628, %v10021
        %v10630 = vrot.slane %v10073, 3
        %v10631 = vsel %vm722, %v10039, %v10630
        %v10632 = vrot.slane %v10467, 3
        %v10633 = vsel %vm722, %v10630, %v10632
        %v10634 = vrot.slane %v10526, 3
        %v10635 = vsel %vm722, %v10632, %v10634
        %10636 = vrot.lane.b32.xlu0 %v10629, 48
        %v10637 = vpop.permute.xlu0 %10636
        %10638 = vrot.lane.b32.xlu0 %v10631, 48
        %v10639 = vpop.permute.xlu0 %10638
        %10640 = vrot.lane.b32.xlu0 %v10633, 48
        %v10641 = vpop.permute.xlu0 %10640
        %10642 = vrot.lane.b32.xlu0 %v10635, 48
        %v10643 = vpop.permute.xlu0 %10642
        %10644 = vrot.lane.b32.xlu0 %v10634, 48
        %v10645 = vpop.permute.xlu0 %10644
        %v10649 = vunpack.c.l.b16 %v9722
        %v10650 = vunpack.c.l.b16 %v9723
        %v10651 = vunpack.c.l.b16 %v9724
        %v10652 = vpack.c.b16 %v9775, %v10649
        %v10653 = vpack.c.b16 %v10462, %v10072
        %v10654 = vpack.c.b16 %v10464, %v10463
        %v10655 = vpack.c.b16 %v10651, %v10650
        %v10656 = vrot.slane %v10652, 1
        %v10657 = vrot.slane %v10170, 1
        %v10658 = vsel %vm1038, %v10656, %v10657
        %v10659 = vrot.slane %v10171, 1
        %v10660 = vsel %vm1038, %v10657, %v10659
        %v10661 = vrot.slane %v10172, 1
        %v10662 = vsel %vm1038, %v10659, %v10661
        %v10663 = vrot.slane %v10173, 1
        %v10664 = vsel %vm1038, %v10661, %v10663
        %v10665 = vrot.slane %v10174, 1
        %v10666 = vsel %vm1038, %v10663, %v10665
        %v10667 = vrot.slane %v10175, 1
        %v10668 = vsel %vm1038, %v10665, %v10667
        %v10669 = vrot.slane %v10176, 1
        %v10670 = vsel %vm1038, %v10667, %v10669
        %v10671 = vrot.slane %v10177, 1
        %v10672 = vsel %vm1038, %v10669, %v10671
        %v10673 = vrot.slane %v10178, 1
        %v10674 = vsel %vm1038, %v10671, %v10673
        %v10675 = vrot.slane %v10179, 1
        %v10676 = vsel %vm1038, %v10673, %v10675
        %v10677 = vrot.slane %v10653, 1
        %v10678 = vsel %vm1038, %v10675, %v10677
        %v10679 = vrot.slane %v10654, 1
        %v10680 = vsel %vm1038, %v10677, %v10679
        %v10681 = vrot.slane %v10655, 1
        %v10682 = vsel %vm1038, %v10679, %v10681
        %10683 = vrot.lane.b32.xlu0 %v10658, 64
        %v10684 = vpop.permute.xlu0 %10683
        %10685 = vrot.lane.b32.xlu0 %v10660, 64
        %v10686 = vpop.permute.xlu0 %10685
        %10687 = vrot.lane.b32.xlu0 %v10662, 64
        %v10688 = vpop.permute.xlu0 %10687
        %10689 = vrot.lane.b32.xlu0 %v10664, 64
        %v10690 = vpop.permute.xlu0 %10689
        %10691 = vrot.lane.b32.xlu0 %v10666, 64
        %v10692 = vpop.permute.xlu0 %10691
        %10693 = vrot.lane.b32.xlu0 %v10668, 64
        %v10694 = vpop.permute.xlu0 %10693
        %10695 = vrot.lane.b32.xlu0 %v10670, 64
        %v10696 = vpop.permute.xlu0 %10695
        %10697 = vrot.lane.b32.xlu0 %v10672, 64
        %v10698 = vpop.permute.xlu0 %10697
        %10699 = vrot.lane.b32.xlu0 %v10674, 64
        %v10700 = vpop.permute.xlu0 %10699
        %10701 = vrot.lane.b32.xlu0 %v10676, 64
        %v10702 = vpop.permute.xlu0 %10701
        %10703 = vrot.lane.b32.xlu0 %v10678, 64
        %v10704 = vpop.permute.xlu0 %10703
        %10705 = vrot.lane.b32.xlu0 %v10680, 64
        %v10706 = vpop.permute.xlu0 %10705
        %10707 = vrot.lane.b32.xlu0 %v10682, 64
        %v10708 = vpop.permute.xlu0 %10707
        %10709 = vrot.lane.b32.xlu0 %v10681, 64
        %v10710 = vpop.permute.xlu0 %10709
        %v10712 = vunpack.c.l.b16 %v9725
        %v10713 = vpack.c.b16 %v10712, %v10650
        %v10715 = vshrl.u32 %v10652, 16
        %v10717 = vrot.slane %v10715, 1
        %v10718 = vshll.u32 %v10652, 16
        %v10720 = vrot.slane %v10718, 2
        %v10721 = vor.u32 %v10717, %v10720
        %v10722 = vrot.slane %v10300, 1
        %v10723 = vrot.slane %v10303, 2
        %v10724 = vor.u32 %v10722, %v10723
        %v10725 = vsel %vm1097, %v10721, %v10724
        %v10726 = vrot.slane %v10309, 1
        %v10727 = vrot.slane %v10312, 2
        %v10728 = vor.u32 %v10726, %v10727
        %v10729 = vsel %vm1097, %v10724, %v10728
        %v10730 = vrot.slane %v10318, 1
        %v10731 = vrot.slane %v10321, 2
        %v10732 = vor.u32 %v10730, %v10731
        %v10733 = vsel %vm1097, %v10728, %v10732
        %v10734 = vrot.slane %v10327, 1
        %v10735 = vrot.slane %v10330, 2
        %v10736 = vor.u32 %v10734, %v10735
        %v10737 = vsel %vm1097, %v10732, %v10736
        %v10738 = vrot.slane %v10336, 1
        %v10739 = vrot.slane %v10339, 2
        %v10740 = vor.u32 %v10738, %v10739
        %v10741 = vsel %vm1097, %v10736, %v10740
        %v10742 = vrot.slane %v10345, 1
        %v10743 = vrot.slane %v10348, 2
        %v10744 = vor.u32 %v10742, %v10743
        %v10745 = vsel %vm1097, %v10740, %v10744
        %v10746 = vrot.slane %v10354, 1
        %v10747 = vrot.slane %v10357, 2
        %v10748 = vor.u32 %v10746, %v10747
        %v10749 = vsel %vm1097, %v10744, %v10748
        %v10750 = vrot.slane %v10363, 1
        %v10751 = vrot.slane %v10366, 2
        %v10752 = vor.u32 %v10750, %v10751
        %v10753 = vsel %vm1097, %v10748, %v10752
        %v10754 = vrot.slane %v10372, 1
        %v10755 = vrot.slane %v10375, 2
        %v10756 = vor.u32 %v10754, %v10755
        %v10757 = vsel %vm1097, %v10752, %v10756
        %v10758 = vrot.slane %v10381, 1
        %v10759 = vrot.slane %v10384, 2
        %v10760 = vor.u32 %v10758, %v10759
        %v10761 = vsel %vm1097, %v10756, %v10760
        %v10763 = vshrl.u32 %v10653, 16
        %v10765 = vrot.slane %v10763, 1
        %v10766 = vshll.u32 %v10653, 16
        %v10768 = vrot.slane %v10766, 2
        %v10769 = vor.u32 %v10765, %v10768
        %v10770 = vsel %vm1097, %v10760, %v10769
        %v10772 = vshrl.u32 %v10654, 16
        %v10774 = vrot.slane %v10772, 1
        %v10775 = vshll.u32 %v10654, 16
        %v10777 = vrot.slane %v10775, 2
        %v10778 = vor.u32 %v10774, %v10777
        %v10779 = vsel %vm1097, %v10769, %v10778
        %v10781 = vshrl.u32 %v10713, 16
        %v10783 = vrot.slane %v10781, 1
        %v10784 = vshll.u32 %v10713, 16
        %v10786 = vrot.slane %v10784, 2
        %v10787 = vor.u32 %v10783, %v10786
        %v10788 = vsel %vm1097, %v10778, %v10787
        %10789 = vrot.lane.b32.xlu0 %v10725, 80
        %v10790 = vpop.permute.xlu0 %10789
        %10791 = vrot.lane.b32.xlu0 %v10729, 80
        %v10792 = vpop.permute.xlu0 %10791
        %10793 = vrot.lane.b32.xlu0 %v10733, 80
        %v10794 = vpop.permute.xlu0 %10793
        %10795 = vrot.lane.b32.xlu0 %v10737, 80
        %v10796 = vpop.permute.xlu0 %10795
        %10797 = vrot.lane.b32.xlu0 %v10741, 80
        %v10798 = vpop.permute.xlu0 %10797
        %10799 = vrot.lane.b32.xlu0 %v10745, 80
        %v10800 = vpop.permute.xlu0 %10799
        %10801 = vrot.lane.b32.xlu0 %v10749, 80
        %v10802 = vpop.permute.xlu0 %10801
        %10803 = vrot.lane.b32.xlu0 %v10753, 80
        %v10804 = vpop.permute.xlu0 %10803
        %10805 = vrot.lane.b32.xlu0 %v10757, 80
        %v10806 = vpop.permute.xlu0 %10805
        %10807 = vrot.lane.b32.xlu0 %v10761, 80
        %v10808 = vpop.permute.xlu0 %10807
        %10809 = vrot.lane.b32.xlu0 %v10770, 80
        %v10810 = vpop.permute.xlu0 %10809
        %10811 = vrot.lane.b32.xlu0 %v10779, 80
        %v10812 = vpop.permute.xlu0 %10811
        %10813 = vrot.lane.b32.xlu0 %v10788, 80
        %v10814 = vpop.permute.xlu0 %10813
        %10815 = vrot.lane.b32.xlu0 %v10787, 80
        %v10816 = vpop.permute.xlu0 %10815
        %v10818 = vunpack.c.l.b16 %v9726
        %v10819 = vpack.c.b16 %v9775, %v10818
        %v10820 = vrot.slane %v10819, 2
        %v10821 = vsel %vm888, %v10820, %v10220
        %v10822 = vrot.slane %v10653, 2
        %v10823 = vsel %vm888, %v10238, %v10822
        %v10824 = vrot.slane %v10654, 2
        %v10825 = vsel %vm888, %v10822, %v10824
        %v10826 = vrot.slane %v10713, 2
        %v10827 = vsel %vm888, %v10824, %v10826
        %10828 = vrot.lane.b32.xlu0 %v10821, 96
        %v10829 = vpop.permute.xlu0 %10828
        %10830 = vrot.lane.b32.xlu0 %v10823, 96
        %v10831 = vpop.permute.xlu0 %10830
        %10832 = vrot.lane.b32.xlu0 %v10825, 96
        %v10833 = vpop.permute.xlu0 %10832
        %10834 = vrot.lane.b32.xlu0 %v10827, 96
        %v10835 = vpop.permute.xlu0 %10834
        %10836 = vrot.lane.b32.xlu0 %v10826, 96
        %v10837 = vpop.permute.xlu0 %10836
        %v10839 = vunpack.c.l.b16 %v9727
        %v10840 = vpack.c.b16 %v10650, %v10464
        %v10841 = vpack.c.b16 %v10839, %v10839
        %10842 = vrot.lane.b32.xlu0 %v9799, 112
        %v10843 = vpop.permute.xlu0 %10842
        %10844 = vrot.lane.b32.xlu0 %v9800, 112
        %v10845 = vpop.permute.xlu0 %10844
        %10846 = vrot.lane.b32.xlu0 %v9801, 112
        %v10847 = vpop.permute.xlu0 %10846
        %10848 = vrot.lane.b32.xlu0 %v9802, 112
        %v10849 = vpop.permute.xlu0 %10848
        %10850 = vrot.lane.b32.xlu0 %v9803, 112
        %v10851 = vpop.permute.xlu0 %10850
        %10852 = vrot.lane.b32.xlu0 %v9804, 112
        %v10853 = vpop.permute.xlu0 %10852
        %10854 = vrot.lane.b32.xlu0 %v9805, 112
        %v10855 = vpop.permute.xlu0 %10854
        %10856 = vrot.lane.b32.xlu0 %v9806, 112
        %v10857 = vpop.permute.xlu0 %10856
        %10858 = vrot.lane.b32.xlu0 %v9807, 112
        %v10859 = vpop.permute.xlu0 %10858
        %10860 = vrot.lane.b32.xlu0 %v9808, 112
        %v10861 = vpop.permute.xlu0 %10860
        %10862 = vrot.lane.b32.xlu0 %v10073, 112
        %v10863 = vpop.permute.xlu0 %10862
        %10864 = vrot.lane.b32.xlu0 %v10467, 112
        %v10865 = vpop.permute.xlu0 %10864
        %10866 = vrot.lane.b32.xlu0 %v10840, 112
        %v10867 = vpop.permute.xlu0 %10866
        %10868 = vrot.lane.b32.xlu0 %v10841, 112
        %v10869 = vpop.permute.xlu0 %10868
        %v10871 = vsel %vm3543, %v9796, %v9925
        %v10873 = vsel %vm3543, %v9797, %v9927
        %v10875 = vsel %vm3543, %v9798, %v9929
        %v10877 = vsel %vm3543, %v9799, %v9931
        %v10879 = vsel %vm3543, %v9800, %v9933
        %v10881 = vsel %vm3543, %v9801, %v9935
        %v10883 = vsel %vm3543, %v9802, %v9937
        %v10885 = vsel %vm3543, %v9803, %v9939
        %v10887 = vsel %vm3543, %v9804, %v9941
        %v10889 = vsel %vm3543, %v9805, %v9943
        %v10891 = vsel %vm3543, %v9806, %v9945
        %v10893 = vsel %vm3543, %v9807, %v9947
        %v10895 = vsel %vm3543, %v9808, %v9949
        %v10898 = vsel %vm3543, %v9809, %v9951
        %v10900 = vsel %vm1251, %v10871, %v9983
        %v10902 = vsel %vm1251, %v10873, %v9985
        %v10904 = vsel %vm1251, %v10875, %v9987
        %v10906 = vsel %vm1251, %v10877, %v9989
        %v10908 = vsel %vm1251, %v10879, %v9991
        %v10910 = vsel %vm1251, %v10881, %v9993
        %v10912 = vsel %vm1251, %v10883, %v9995
        %v10914 = vsel %vm1251, %v10885, %v9997
        %v10916 = vsel %vm1251, %v10887, %v9999
        %v10918 = vsel %vm1251, %v10889, %v10001
        %v10920 = vsel %vm1251, %v10891, %v10003
        %v10922 = vsel %vm1251, %v10893, %v10005
        %v10924 = vsel %vm1251, %v10895, %v10007
        %v10926 = vsel %vm1251, %v10898, %v10009
        %v10928 = vsel %vm3601, %v10900, %v10044
        %v10930 = vsel %vm3601, %v10902, %v10046
        %v10932 = vsel %vm3601, %v10904, %v10048
        %v10934 = vsel %vm3601, %v10906, %v10050
        %v10936 = vsel %vm3601, %v10908, %v10052
        %v10938 = vsel %vm3601, %v10910, %v10054
        %v10940 = vsel %vm3601, %v10912, %v10056
        %v10942 = vsel %vm3601, %v10914, %v10058
        %v10944 = vsel %vm3601, %v10916, %v10060
        %v10946 = vsel %vm3601, %v10918, %v10062
        %v10948 = vsel %vm3601, %v10920, %v10064
        %v10950 = vsel %vm3601, %v10922, %v10066
        %v10952 = vsel %vm3601, %v10924, %v10068
        %v10954 = vsel %vm3601, %v10926, %v10070
        %v10956 = vsel %vm1281, %v10928, %v10140
        %v10958 = vsel %vm1281, %v10930, %v10142
        %v10960 = vsel %vm1281, %v10932, %v10144
        %v10962 = vsel %vm1281, %v10934, %v10146
        %v10964 = vsel %vm1281, %v10936, %v10148
        %v10966 = vsel %vm1281, %v10938, %v10150
        %v10968 = vsel %vm1281, %v10940, %v10152
        %v10970 = vsel %vm1281, %v10942, %v10154
        %v10972 = vsel %vm1281, %v10944, %v10156
        %v10974 = vsel %vm1281, %v10946, %v10158
        %v10976 = vsel %vm1281, %v10948, %v10160
        %v10978 = vsel %vm1281, %v10950, %v10162
        %v10980 = vsel %vm1281, %v10952, %v10164
        %v10982 = vsel %vm1281, %v10954, %v10166
        %v10984 = vsel %vm3658, %v10956, %v10182
        %v10986 = vsel %vm3658, %v10958, %v10184
        %v10988 = vsel %vm3658, %v10960, %v10186
        %v10990 = vsel %vm3658, %v10962, %v10188
        %v10992 = vsel %vm3658, %v10964, %v10190
        %v10994 = vsel %vm3658, %v10966, %v10192
        %v10996 = vsel %vm3658, %v10968, %v10194
        %v10998 = vsel %vm3658, %v10970, %v10196
        %v11000 = vsel %vm3658, %v10972, %v10198
        %v11002 = vsel %vm3658, %v10974, %v10200
        %v11004 = vsel %vm3658, %v10976, %v10202
        %v11006 = vsel %vm3658, %v10978, %v10204
        %v11008 = vsel %vm3658, %v10980, %v10206
        %v11010 = vsel %vm3658, %v10982, %v10208
        %v11012 = vsel %vm1310, %v10984, %v10243
        %v11014 = vsel %vm1310, %v10986, %v10245
        %v11016 = vsel %vm1310, %v10988, %v10247
        %v11018 = vsel %vm1310, %v10990, %v10249
        %v11020 = vsel %vm1310, %v10992, %v10251
        %v11022 = vsel %vm1310, %v10994, %v10253
        %v11024 = vsel %vm1310, %v10996, %v10255
        %v11026 = vsel %vm1310, %v10998, %v10257
        %v11028 = vsel %vm1310, %v11000, %v10259
        %v11030 = vsel %vm1310, %v11002, %v10261
        %v11032 = vsel %vm1310, %v11004, %v10263
        %v11034 = vsel %vm1310, %v11006, %v10265
        %v11036 = vsel %vm1310, %v11008, %v10267
        %v11038 = vsel %vm1310, %v11010, %v10269
        %v11040 = vsel %vm3715, %v11012, %v10399
        %v11043 = vsel %vm3715, %v11014, %v10401
        %v11046 = vsel %vm3715, %v11016, %v10403
        %v11049 = vsel %vm3715, %v11018, %v10405
        %v11052 = vsel %vm3715, %v11020, %v10407
        %v11055 = vsel %vm3715, %v11022, %v10409
        %v11058 = vsel %vm3715, %v11024, %v10411
        %v11061 = vsel %vm3715, %v11026, %v10413
        %v11064 = vsel %vm3715, %v11028, %v10415
        %v11067 = vsel %vm3715, %v11030, %v10417
        %v11070 = vsel %vm3715, %v11032, %v10419
        %v11073 = vsel %vm3715, %v11034, %v10421
        %v11076 = vsel %vm3715, %v11036, %v10423
        %v11079 = vsel %vm3715, %v11038, %v10425
        %v11083 = vsel %vm3543, %v10431, %v10497
        %v11086 = vsel %vm3543, %v10433, %v10499
        %v11089 = vsel %vm3543, %v10435, %v10501
        %v11092 = vsel %vm3543, %v10437, %v10503
        %v11095 = vsel %vm3543, %v10439, %v10505
        %v11098 = vsel %vm3543, %v10441, %v10507
        %v11101 = vsel %vm3543, %v10443, %v10509
        %v11104 = vsel %vm3543, %v10445, %v10511
        %v11107 = vsel %vm3543, %v10447, %v10513
        %v11110 = vsel %vm3543, %v10449, %v10515
        %v11113 = vsel %vm3543, %v10451, %v10517
        %v11116 = vsel %vm3543, %v10453, %v10519
        %v11119 = vsel %vm3543, %v10455, %v10521
        %v11122 = vsel %vm3543, %v10454, %v10523
        %v11124 = vsel %vm1251, %v11083, %v10598
        %v11126 = vsel %vm1251, %v11086, %v10600
        %v11128 = vsel %vm1251, %v11089, %v10602
        %v11130 = vsel %vm1251, %v11092, %v10604
        %v11132 = vsel %vm1251, %v11095, %v10606
        %v11134 = vsel %vm1251, %v11098, %v10608
        %v11136 = vsel %vm1251, %v11101, %v10610
        %v11138 = vsel %vm1251, %v11104, %v10612
        %v11140 = vsel %vm1251, %v11107, %v10614
        %v11142 = vsel %vm1251, %v11110, %v10616
        %v11144 = vsel %vm1251, %v11113, %v10618
        %v11146 = vsel %vm1251, %v11116, %v10620
        %v11148 = vsel %vm1251, %v11119, %v10622
        %v11150 = vsel %vm1251, %v11122, %v10624
        %v11152 = vsel %vm3601, %v11124, %v10637
        %v11153 = vsel %vm3601, %v11126, %v10050
        %v11154 = vsel %vm3601, %v11128, %v10052
        %v11155 = vsel %vm3601, %v11130, %v10054
        %v11156 = vsel %vm3601, %v11132, %v10056
        %v11157 = vsel %vm3601, %v11134, %v10058
        %v11158 = vsel %vm3601, %v11136, %v10060
        %v11159 = vsel %vm3601, %v11138, %v10062
        %v11160 = vsel %vm3601, %v11140, %v10064
        %v11161 = vsel %vm3601, %v11142, %v10066
        %v11163 = vsel %vm3601, %v11144, %v10639
        %v11165 = vsel %vm3601, %v11146, %v10641
        %v11167 = vsel %vm3601, %v11148, %v10643
        %v11169 = vsel %vm3601, %v11150, %v10645
        %v11171 = vsel %vm1281, %v11152, %v10684
        %v11173 = vsel %vm1281, %v11153, %v10686
        %v11175 = vsel %vm1281, %v11154, %v10688
        %v11177 = vsel %vm1281, %v11155, %v10690
        %v11179 = vsel %vm1281, %v11156, %v10692
        %v11181 = vsel %vm1281, %v11157, %v10694
        %v11183 = vsel %vm1281, %v11158, %v10696
        %v11185 = vsel %vm1281, %v11159, %v10698
        %v11187 = vsel %vm1281, %v11160, %v10700
        %v11189 = vsel %vm1281, %v11161, %v10702
        %v11191 = vsel %vm1281, %v11163, %v10704
        %v11193 = vsel %vm1281, %v11165, %v10706
        %v11195 = vsel %vm1281, %v11167, %v10708
        %v11197 = vsel %vm1281, %v11169, %v10710
        %v11199 = vsel %vm3658, %v11171, %v10790
        %v11201 = vsel %vm3658, %v11173, %v10792
        %v11203 = vsel %vm3658, %v11175, %v10794
        %v11205 = vsel %vm3658, %v11177, %v10796
        %v11207 = vsel %vm3658, %v11179, %v10798
        %v11209 = vsel %vm3658, %v11181, %v10800
        %v11211 = vsel %vm3658, %v11183, %v10802
        %v11213 = vsel %vm3658, %v11185, %v10804
        %v11215 = vsel %vm3658, %v11187, %v10806
        %v11217 = vsel %vm3658, %v11189, %v10808
        %v11219 = vsel %vm3658, %v11191, %v10810
        %v11221 = vsel %vm3658, %v11193, %v10812
        %v11223 = vsel %vm3658, %v11195, %v10814
        %v11225 = vsel %vm3658, %v11197, %v10816
        %v11227 = vsel %vm1310, %v11199, %v10829
        %v11228 = vsel %vm1310, %v11201, %v10249
        %v11229 = vsel %vm1310, %v11203, %v10251
        %v11230 = vsel %vm1310, %v11205, %v10253
        %v11231 = vsel %vm1310, %v11207, %v10255
        %v11232 = vsel %vm1310, %v11209, %v10257
        %v11233 = vsel %vm1310, %v11211, %v10259
        %v11234 = vsel %vm1310, %v11213, %v10261
        %v11235 = vsel %vm1310, %v11215, %v10263
        %v11236 = vsel %vm1310, %v11217, %v10265
        %v11238 = vsel %vm1310, %v11219, %v10831
        %v11240 = vsel %vm1310, %v11221, %v10833
        %v11242 = vsel %vm1310, %v11223, %v10835
        %v11244 = vsel %vm1310, %v11225, %v10837
        %v11246 = vsel %vm3715, %v11227, %v10843
        %v11249 = vsel %vm3715, %v11228, %v10845
        %v11252 = vsel %vm3715, %v11229, %v10847
        %v11255 = vsel %vm3715, %v11230, %v10849
        %v11258 = vsel %vm3715, %v11231, %v10851
        %v11261 = vsel %vm3715, %v11232, %v10853
        %v11264 = vsel %vm3715, %v11233, %v10855
        %v11267 = vsel %vm3715, %v11234, %v10857
        %v11270 = vsel %vm3715, %v11235, %v10859
        %v11273 = vsel %vm3715, %v11236, %v10861
        %v11276 = vsel %vm3715, %v11238, %v10863
        %v11279 = vsel %vm3715, %v11240, %v10865
        %v11282 = vsel %vm3715, %v11242, %v10867
        %v11285 = vsel %vm3715, %v11244, %v10869
        %v11288 = vunpack.c.l.b16 %v9728
        %v11289 = vpack.c.b16 %v11288, %v10839
        %v11291 = vunpack.c.l.b16 %v9729
        %v11292 = vpack.c.b16 %v9776, %v11291
        %v11294 = vshrl.u32 %v11292, 16
        %v11296 = vshll.u32 %v11292, 16
        %v11298 = vrot.slane %v11296, 1
        %v11299 = vor.u32 %v11294, %v11298
        %v11300 = vsel %vm576, %v11299, %v9847
        %v11301 = vrot.slane %v10134, 1
        %v11302 = vsel %vm576, %v9915, %v11301
        %v11303 = vor.u32 %v10131, %v11301
        %v11304 = vrot.slane %v10583, 1
        %v11305 = vsel %vm576, %v11303, %v11304
        %v11306 = vor.u32 %v10580, %v11304
        %v11308 = vshll.u32 %v10840, 16
        %v11310 = vrot.slane %v11308, 1
        %v11311 = vsel %vm576, %v11306, %v11310
        %v11312 = vshrl.u32 %v10840, 16
        %v11314 = vor.u32 %v11312, %v11310
        %v11316 = vshll.u32 %v11289, 16
        %v11318 = vrot.slane %v11316, 1
        %v11319 = vsel %vm576, %v11314, %v11318
        %v11320 = vshrl.u32 %v11289, 16
        %v11322 = vor.u32 %v11320, %v11318
        %11323 = vrot.lane.b32.xlu0 %v11300, 16
        %v11324 = vpop.permute.xlu0 %11323
        %11325 = vrot.lane.b32.xlu0 %v11302, 16
        %v11326 = vpop.permute.xlu0 %11325
        %11327 = vrot.lane.b32.xlu0 %v11305, 16
        %v11328 = vpop.permute.xlu0 %11327
        %11329 = vrot.lane.b32.xlu0 %v11311, 16
        %v11330 = vpop.permute.xlu0 %11329
        %11331 = vrot.lane.b32.xlu0 %v11319, 16
        %v11332 = vpop.permute.xlu0 %11331
        %11333 = vrot.lane.b32.xlu0 %v11322, 16
        %v11334 = vpop.permute.xlu0 %11333
        %v11338 = vunpack.c.l.b16 %v9730
        %v11339 = vunpack.c.l.b16 %v9731
        %v11340 = vunpack.c.l.b16 %v9732
        %v11341 = vpack.c.b16 %v10839, %v10650
        %v11342 = vpack.c.b16 %v11339, %v11338
        %v11343 = vpack.c.b16 %v11340, %v11340
        %v11344 = vrot.slane %v10309, 7
        %v11345 = vor.u32 %v11344, %v10312
        %v11346 = vrot.slane %v10318, 7
        %v11347 = vor.u32 %v11346, %v10321
        %v11348 = vsel %vm4021, %v11344, %v11347
        %v11349 = vrot.slane %v10327, 7
        %v11350 = vor.u32 %v11349, %v10330
        %v11351 = vsel %vm4021, %v11346, %v11350
        %v11352 = vrot.slane %v10336, 7
        %v11353 = vor.u32 %v11352, %v10339
        %v11354 = vsel %vm4021, %v11349, %v11353
        %v11355 = vrot.slane %v10345, 7
        %v11356 = vor.u32 %v11355, %v10348
        %v11357 = vsel %vm4021, %v11352, %v11356
        %v11358 = vrot.slane %v10354, 7
        %v11359 = vor.u32 %v11358, %v10357
        %v11360 = vsel %vm4021, %v11355, %v11359
        %v11361 = vrot.slane %v10363, 7
        %v11362 = vor.u32 %v11361, %v10366
        %v11363 = vsel %vm4021, %v11358, %v11362
        %v11364 = vrot.slane %v10372, 7
        %v11365 = vor.u32 %v11364, %v10375
        %v11366 = vsel %vm4021, %v11361, %v11365
        %v11367 = vrot.slane %v10381, 7
        %v11368 = vor.u32 %v11367, %v10384
        %v11369 = vsel %vm4021, %v11364, %v11368
        %v11370 = vrot.slane %v10763, 7
        %v11371 = vor.u32 %v11370, %v10766
        %v11372 = vsel %vm4021, %v11367, %v11371
        %v11373 = vrot.slane %v10772, 7
        %v11374 = vor.u32 %v11373, %v10775
        %v11375 = vsel %vm4021, %v11370, %v11374
        %v11377 = vshrl.u32 %v11341, 16
        %v11379 = vrot.slane %v11377, 7
        %v11380 = vshll.u32 %v11341, 16
        %v11382 = vor.u32 %v11379, %v11380
        %v11383 = vsel %vm4021, %v11373, %v11382
        %v11385 = vshrl.u32 %v11342, 16
        %v11387 = vrot.slane %v11385, 7
        %v11388 = vshll.u32 %v11342, 16
        %v11390 = vor.u32 %v11387, %v11388
        %v11391 = vsel %vm4021, %v11379, %v11390
        %v11393 = vshrl.u32 %v11343, 16
        %v11395 = vrot.slane %v11393, 7
        %v11396 = vshll.u32 %v11343, 16
        %v11398 = vor.u32 %v11395, %v11396
        %v11399 = vsel %vm4021, %v11387, %v11398
        %11400 = vrot.lane.b32.xlu0 %v11345, 32
        %v11401 = vpop.permute.xlu0 %11400
        %11402 = vrot.lane.b32.xlu0 %v11348, 32
        %v11403 = vpop.permute.xlu0 %11402
        %11404 = vrot.lane.b32.xlu0 %v11351, 32
        %v11405 = vpop.permute.xlu0 %11404
        %11406 = vrot.lane.b32.xlu0 %v11354, 32
        %v11407 = vpop.permute.xlu0 %11406
        %11408 = vrot.lane.b32.xlu0 %v11357, 32
        %v11409 = vpop.permute.xlu0 %11408
        %11410 = vrot.lane.b32.xlu0 %v11360, 32
        %v11411 = vpop.permute.xlu0 %11410
        %11412 = vrot.lane.b32.xlu0 %v11363, 32
        %v11413 = vpop.permute.xlu0 %11412
        %11414 = vrot.lane.b32.xlu0 %v11366, 32
        %v11415 = vpop.permute.xlu0 %11414
        %11416 = vrot.lane.b32.xlu0 %v11369, 32
        %v11417 = vpop.permute.xlu0 %11416
        %11418 = vrot.lane.b32.xlu0 %v11372, 32
        %v11419 = vpop.permute.xlu0 %11418
        %11420 = vrot.lane.b32.xlu0 %v11375, 32
        %v11421 = vpop.permute.xlu0 %11420
        %11422 = vrot.lane.b32.xlu0 %v11383, 32
        %v11423 = vpop.permute.xlu0 %11422
        %11424 = vrot.lane.b32.xlu0 %v11391, 32
        %v11425 = vpop.permute.xlu0 %11424
        %11426 = vrot.lane.b32.xlu0 %v11399, 32
        %v11427 = vpop.permute.xlu0 %11426
        %v11429 = vunpack.c.l.b16 %v9733
        %v11430 = vpack.c.b16 %v11429, %v11340
        %11431 = vrot.lane.b32.xlu0 %v10171, 48
        %v11432 = vpop.permute.xlu0 %11431
        %11433 = vrot.lane.b32.xlu0 %v10172, 48
        %v11434 = vpop.permute.xlu0 %11433
        %11435 = vrot.lane.b32.xlu0 %v10173, 48
        %v11436 = vpop.permute.xlu0 %11435
        %11437 = vrot.lane.b32.xlu0 %v10174, 48
        %v11438 = vpop.permute.xlu0 %11437
        %11439 = vrot.lane.b32.xlu0 %v10175, 48
        %v11440 = vpop.permute.xlu0 %11439
        %11441 = vrot.lane.b32.xlu0 %v10176, 48
        %v11442 = vpop.permute.xlu0 %11441
        %11443 = vrot.lane.b32.xlu0 %v10177, 48
        %v11444 = vpop.permute.xlu0 %11443
        %11445 = vrot.lane.b32.xlu0 %v10178, 48
        %v11446 = vpop.permute.xlu0 %11445
        %11447 = vrot.lane.b32.xlu0 %v10179, 48
        %v11448 = vpop.permute.xlu0 %11447
        %11449 = vrot.lane.b32.xlu0 %v10653, 48
        %v11450 = vpop.permute.xlu0 %11449
        %11451 = vrot.lane.b32.xlu0 %v10654, 48
        %v11452 = vpop.permute.xlu0 %11451
        %11453 = vrot.lane.b32.xlu0 %v11341, 48
        %v11454 = vpop.permute.xlu0 %11453
        %11455 = vrot.lane.b32.xlu0 %v11342, 48
        %v11456 = vpop.permute.xlu0 %11455
        %11457 = vrot.lane.b32.xlu0 %v11430, 48
        %v11458 = vpop.permute.xlu0 %11457
        %v11460 = vunpack.c.l.b16 %v9734
        %v11461 = vpack.c.b16 %v9779, %v11460
        %v11463 = vshrl.u32 %v11461, 16
        %v11465 = vshll.u32 %v11461, 16
        %v11467 = vrot.slane %v11465, 1
        %v11468 = vor.u32 %v11463, %v11467
        %v11469 = vrot.slane %v10321, 1
        %v11470 = vsel %vm576, %v11468, %v11469
        %v11471 = vor.u32 %v10318, %v11469
        %v11472 = vrot.slane %v10330, 1
        %v11473 = vsel %vm576, %v11471, %v11472
        %v11474 = vor.u32 %v10327, %v11472
        %v11475 = vrot.slane %v10339, 1
        %v11476 = vsel %vm576, %v11474, %v11475
        %v11477 = vor.u32 %v10336, %v11475
        %v11478 = vrot.slane %v10348, 1
        %v11479 = vsel %vm576, %v11477, %v11478
        %v11480 = vor.u32 %v10345, %v11478
        %v11481 = vrot.slane %v10357, 1
        %v11482 = vsel %vm576, %v11480, %v11481
        %v11483 = vor.u32 %v10354, %v11481
        %v11484 = vrot.slane %v10366, 1
        %v11485 = vsel %vm576, %v11483, %v11484
        %v11486 = vor.u32 %v10363, %v11484
        %v11487 = vrot.slane %v10375, 1
        %v11488 = vsel %vm576, %v11486, %v11487
        %v11489 = vor.u32 %v10372, %v11487
        %v11490 = vrot.slane %v10384, 1
        %v11491 = vsel %vm576, %v11489, %v11490
        %v11492 = vor.u32 %v10381, %v11490
        %v11493 = vrot.slane %v10766, 1
        %v11494 = vsel %vm576, %v11492, %v11493
        %v11495 = vor.u32 %v10763, %v11493
        %v11496 = vrot.slane %v10775, 1
        %v11497 = vsel %vm576, %v11495, %v11496
        %v11498 = vor.u32 %v10772, %v11496
        %v11499 = vrot.slane %v11380, 1
        %v11500 = vsel %vm576, %v11498, %v11499
        %v11501 = vor.u32 %v11377, %v11499
        %v11502 = vrot.slane %v11388, 1
        %v11503 = vsel %vm576, %v11501, %v11502
        %v11504 = vor.u32 %v11385, %v11502
        %v11506 = vshll.u32 %v11430, 16
        %v11508 = vrot.slane %v11506, 1
        %v11509 = vsel %vm576, %v11504, %v11508
        %v11510 = vshrl.u32 %v11430, 16
        %v11512 = vor.u32 %v11510, %v11508
        %11513 = vrot.lane.b32.xlu0 %v11470, 64
        %v11514 = vpop.permute.xlu0 %11513
        %11515 = vrot.lane.b32.xlu0 %v11473, 64
        %v11516 = vpop.permute.xlu0 %11515
        %11517 = vrot.lane.b32.xlu0 %v11476, 64
        %v11518 = vpop.permute.xlu0 %11517
        %11519 = vrot.lane.b32.xlu0 %v11479, 64
        %v11520 = vpop.permute.xlu0 %11519
        %11521 = vrot.lane.b32.xlu0 %v11482, 64
        %v11522 = vpop.permute.xlu0 %11521
        %11523 = vrot.lane.b32.xlu0 %v11485, 64
        %v11524 = vpop.permute.xlu0 %11523
        %11525 = vrot.lane.b32.xlu0 %v11488, 64
        %v11526 = vpop.permute.xlu0 %11525
        %11527 = vrot.lane.b32.xlu0 %v11491, 64
        %v11528 = vpop.permute.xlu0 %11527
        %11529 = vrot.lane.b32.xlu0 %v11494, 64
        %v11530 = vpop.permute.xlu0 %11529
        %11531 = vrot.lane.b32.xlu0 %v11497, 64
        %v11532 = vpop.permute.xlu0 %11531
        %11533 = vrot.lane.b32.xlu0 %v11500, 64
        %v11534 = vpop.permute.xlu0 %11533
        %11535 = vrot.lane.b32.xlu0 %v11503, 64
        %v11536 = vpop.permute.xlu0 %11535
        %11537 = vrot.lane.b32.xlu0 %v11509, 64
        %v11538 = vpop.permute.xlu0 %11537
        %11539 = vrot.lane.b32.xlu0 %v11512, 64
        %v11540 = vpop.permute.xlu0 %11539
        %v11543 = vunpack.c.l.b16 %v9735
        %v11544 = vunpack.c.l.b16 %v9736
        %v11545 = vpack.c.b16 %v9779, %v11543
        %v11546 = vpack.c.b16 %v11544, %v11340
        %v11548 = vshrl.u32 %v11545, 16
        %v11550 = vrot.slane %v11548, 2
        %v11551 = vshll.u32 %v11545, 16
        %v11553 = vrot.slane %v11551, 3
        %v11554 = vor.u32 %v11550, %v11553
        %v11555 = vsel %vm919, %v11554, %v10324
        %v11556 = vrot.slane %v10763, 2
        %v11557 = vrot.slane %v10766, 3
        %v11558 = vor.u32 %v11556, %v11557
        %v11559 = vsel %vm919, %v10387, %v11558
        %v11560 = vrot.slane %v10772, 2
        %v11561 = vrot.slane %v10775, 3
        %v11562 = vor.u32 %v11560, %v11561
        %v11563 = vsel %vm919, %v11558, %v11562
        %v11564 = vrot.slane %v11377, 2
        %v11565 = vrot.slane %v11380, 3
        %v11566 = vor.u32 %v11564, %v11565
        %v11567 = vsel %vm919, %v11562, %v11566
        %v11568 = vrot.slane %v11385, 2
        %v11569 = vrot.slane %v11388, 3
        %v11570 = vor.u32 %v11568, %v11569
        %v11571 = vsel %vm919, %v11566, %v11570
        %v11573 = vshrl.u32 %v11546, 16
        %v11575 = vrot.slane %v11573, 2
        %v11576 = vshll.u32 %v11546, 16
        %v11578 = vrot.slane %v11576, 3
        %v11579 = vor.u32 %v11575, %v11578
        %v11580 = vsel %vm919, %v11570, %v11579
        %11581 = vrot.lane.b32.xlu0 %v11555, 80
        %v11582 = vpop.permute.xlu0 %11581
        %11583 = vrot.lane.b32.xlu0 %v10334, 80
        %v11584 = vpop.permute.xlu0 %11583
        %11585 = vrot.lane.b32.xlu0 %v10343, 80
        %v11586 = vpop.permute.xlu0 %11585
        %11587 = vrot.lane.b32.xlu0 %v10352, 80
        %v11588 = vpop.permute.xlu0 %11587
        %11589 = vrot.lane.b32.xlu0 %v10361, 80
        %v11590 = vpop.permute.xlu0 %11589
        %11591 = vrot.lane.b32.xlu0 %v10370, 80
        %v11592 = vpop.permute.xlu0 %11591
        %11593 = vrot.lane.b32.xlu0 %v10379, 80
        %v11594 = vpop.permute.xlu0 %11593
        %11595 = vrot.lane.b32.xlu0 %v10388, 80
        %v11596 = vpop.permute.xlu0 %11595
        %11597 = vrot.lane.b32.xlu0 %v11559, 80
        %v11598 = vpop.permute.xlu0 %11597
        %11599 = vrot.lane.b32.xlu0 %v11563, 80
        %v11600 = vpop.permute.xlu0 %11599
        %11601 = vrot.lane.b32.xlu0 %v11567, 80
        %v11602 = vpop.permute.xlu0 %11601
        %11603 = vrot.lane.b32.xlu0 %v11571, 80
        %v11604 = vpop.permute.xlu0 %11603
        %11605 = vrot.lane.b32.xlu0 %v11580, 80
        %v11606 = vpop.permute.xlu0 %11605
        %11607 = vrot.lane.b32.xlu0 %v11579, 80
        %v11608 = vpop.permute.xlu0 %11607
        %v11610 = vunpack.c.l.b16 %v9737
        %v11611 = vpack.c.b16 %v11610, %v11340
        %v11612 = vrot.slane %v11545, 3
        %v11613 = vsel %vm722, %v11612, %v10438
        %v11614 = vrot.slane %v10653, 3
        %v11615 = vsel %vm722, %v10452, %v11614
        %v11616 = vrot.slane %v10654, 3
        %v11617 = vsel %vm722, %v11614, %v11616
        %v11618 = vrot.slane %v11341, 3
        %v11619 = vsel %vm722, %v11616, %v11618
        %v11620 = vrot.slane %v11342, 3
        %v11621 = vsel %vm722, %v11618, %v11620
        %v11622 = vrot.slane %v11611, 3
        %v11623 = vsel %vm722, %v11620, %v11622
        %11624 = vrot.lane.b32.xlu0 %v11613, 96
        %v11625 = vpop.permute.xlu0 %11624
        %11626 = vrot.lane.b32.xlu0 %v10441, 96
        %v11627 = vpop.permute.xlu0 %11626
        %11628 = vrot.lane.b32.xlu0 %v10443, 96
        %v11629 = vpop.permute.xlu0 %11628
        %11630 = vrot.lane.b32.xlu0 %v10445, 96
        %v11631 = vpop.permute.xlu0 %11630
        %11632 = vrot.lane.b32.xlu0 %v10447, 96
        %v11633 = vpop.permute.xlu0 %11632
        %11634 = vrot.lane.b32.xlu0 %v10449, 96
        %v11635 = vpop.permute.xlu0 %11634
        %11636 = vrot.lane.b32.xlu0 %v10451, 96
        %v11637 = vpop.permute.xlu0 %11636
        %11638 = vrot.lane.b32.xlu0 %v10453, 96
        %v11639 = vpop.permute.xlu0 %11638
        %11640 = vrot.lane.b32.xlu0 %v11615, 96
        %v11641 = vpop.permute.xlu0 %11640
        %11642 = vrot.lane.b32.xlu0 %v11617, 96
        %v11643 = vpop.permute.xlu0 %11642
        %11644 = vrot.lane.b32.xlu0 %v11619, 96
        %v11645 = vpop.permute.xlu0 %11644
        %11646 = vrot.lane.b32.xlu0 %v11621, 96
        %v11647 = vpop.permute.xlu0 %11646
        %11648 = vrot.lane.b32.xlu0 %v11623, 96
        %v11649 = vpop.permute.xlu0 %11648
        %11650 = vrot.lane.b32.xlu0 %v11622, 96
        %v11651 = vpop.permute.xlu0 %11650
        %v11652 = vpack.c.b16 %v11338, %v10839
        %v11653 = vpack.c.b16 %v11340, %v11339
        %v11654 = vpack.c.b16 %v11610, %v11610
        %v11655 = vrot.slane %v9857, 7
        %v11656 = vor.u32 %v11655, %v9853
        %v11657 = vrot.slane %v9865, 7
        %v11658 = vor.u32 %v11657, %v9861
        %v11659 = vsel %vm4021, %v11655, %v11658
        %v11660 = vrot.slane %v9873, 7
        %v11661 = vor.u32 %v11660, %v9869
        %v11662 = vsel %vm4021, %v11657, %v11661
        %v11663 = vrot.slane %v9881, 7
        %v11664 = vor.u32 %v11663, %v9877
        %v11665 = vsel %vm4021, %v11660, %v11664
        %v11666 = vrot.slane %v9889, 7
        %v11667 = vor.u32 %v11666, %v9885
        %v11668 = vsel %vm4021, %v11663, %v11667
        %v11669 = vrot.slane %v9897, 7
        %v11670 = vor.u32 %v11669, %v9893
        %v11671 = vsel %vm4021, %v11666, %v11670
        %v11672 = vrot.slane %v9905, 7
        %v11673 = vor.u32 %v11672, %v9901
        %v11674 = vsel %vm4021, %v11669, %v11673
        %v11675 = vrot.slane %v9913, 7
        %v11676 = vor.u32 %v11675, %v9909
        %v11677 = vsel %vm4021, %v11672, %v11676
        %v11678 = vrot.slane %v10131, 7
        %v11679 = vor.u32 %v11678, %v10134
        %v11680 = vsel %vm4021, %v11675, %v11679
        %v11681 = vrot.slane %v10580, 7
        %v11682 = vor.u32 %v11681, %v10583
        %v11683 = vsel %vm4021, %v11678, %v11682
        %v11684 = vrot.slane %v11312, 7
        %v11685 = vor.u32 %v11684, %v11308
        %v11686 = vsel %vm4021, %v11681, %v11685
        %v11688 = vshrl.u32 %v11652, 16
        %v11690 = vrot.slane %v11688, 7
        %v11691 = vshll.u32 %v11652, 16
        %v11693 = vor.u32 %v11690, %v11691
        %v11694 = vsel %vm4021, %v11684, %v11693
        %v11696 = vshrl.u32 %v11653, 16
        %v11698 = vrot.slane %v11696, 7
        %v11699 = vshll.u32 %v11653, 16
        %v11701 = vor.u32 %v11698, %v11699
        %v11702 = vsel %vm4021, %v11690, %v11701
        %v11704 = vshrl.u32 %v11654, 16
        %v11706 = vrot.slane %v11704, 7
        %v11707 = vshll.u32 %v11654, 16
        %v11709 = vor.u32 %v11706, %v11707
        %v11710 = vsel %vm4021, %v11698, %v11709
        %11711 = vrot.lane.b32.xlu0 %v11656, 112
        %v11712 = vpop.permute.xlu0 %11711
        %11713 = vrot.lane.b32.xlu0 %v11659, 112
        %v11714 = vpop.permute.xlu0 %11713
        %11715 = vrot.lane.b32.xlu0 %v11662, 112
        %v11716 = vpop.permute.xlu0 %11715
        %11717 = vrot.lane.b32.xlu0 %v11665, 112
        %v11718 = vpop.permute.xlu0 %11717
        %11719 = vrot.lane.b32.xlu0 %v11668, 112
        %v11720 = vpop.permute.xlu0 %11719
        %11721 = vrot.lane.b32.xlu0 %v11671, 112
        %v11722 = vpop.permute.xlu0 %11721
        %11723 = vrot.lane.b32.xlu0 %v11674, 112
        %v11724 = vpop.permute.xlu0 %11723
        %11725 = vrot.lane.b32.xlu0 %v11677, 112
        %v11726 = vpop.permute.xlu0 %11725
        %11727 = vrot.lane.b32.xlu0 %v11680, 112
        %v11728 = vpop.permute.xlu0 %11727
        %11729 = vrot.lane.b32.xlu0 %v11683, 112
        %v11730 = vpop.permute.xlu0 %11729
        %11731 = vrot.lane.b32.xlu0 %v11686, 112
        %v11732 = vpop.permute.xlu0 %11731
        %11733 = vrot.lane.b32.xlu0 %v11694, 112
        %v11734 = vpop.permute.xlu0 %11733
        %11735 = vrot.lane.b32.xlu0 %v11702, 112
        %v11736 = vpop.permute.xlu0 %11735
        %11737 = vrot.lane.b32.xlu0 %v11710, 112
        %v11738 = vpop.permute.xlu0 %11737
        %v11741 = vunpack.c.l.b16 %v9738
        %v11742 = vunpack.c.l.b16 %v9739
        %v11743 = vpack.c.b16 %v9780, %v11741
        %v11744 = vpack.c.b16 %v11742, %v11610
        %v11746 = vshrl.u32 %v11743, 16
        %v11748 = vrot.slane %v11746, 1
        %v11749 = vshll.u32 %v11743, 16
        %v11751 = vrot.slane %v11749, 2
        %v11752 = vor.u32 %v11748, %v11751
        %v11753 = vrot.slane %v9865, 1
        %v11754 = vrot.slane %v9861, 2
        %v11755 = vor.u32 %v11753, %v11754
        %v11756 = vsel %vm1097, %v11752, %v11755
        %v11757 = vrot.slane %v9873, 1
        %v11758 = vrot.slane %v9869, 2
        %v11759 = vor.u32 %v11757, %v11758
        %v11760 = vsel %vm1097, %v11755, %v11759
        %v11761 = vrot.slane %v9881, 1
        %v11762 = vrot.slane %v9877, 2
        %v11763 = vor.u32 %v11761, %v11762
        %v11764 = vsel %vm1097, %v11759, %v11763
        %v11765 = vrot.slane %v9889, 1
        %v11766 = vrot.slane %v9885, 2
        %v11767 = vor.u32 %v11765, %v11766
        %v11768 = vsel %vm1097, %v11763, %v11767
        %v11769 = vrot.slane %v9897, 1
        %v11770 = vrot.slane %v9893, 2
        %v11771 = vor.u32 %v11769, %v11770
        %v11772 = vsel %vm1097, %v11767, %v11771
        %v11773 = vrot.slane %v9905, 1
        %v11774 = vrot.slane %v9901, 2
        %v11775 = vor.u32 %v11773, %v11774
        %v11776 = vsel %vm1097, %v11771, %v11775
        %v11777 = vrot.slane %v9913, 1
        %v11778 = vrot.slane %v9909, 2
        %v11779 = vor.u32 %v11777, %v11778
        %v11780 = vsel %vm1097, %v11775, %v11779
        %v11781 = vrot.slane %v10131, 1
        %v11782 = vrot.slane %v10134, 2
        %v11783 = vor.u32 %v11781, %v11782
        %v11784 = vsel %vm1097, %v11779, %v11783
        %v11785 = vrot.slane %v10580, 1
        %v11786 = vrot.slane %v10583, 2
        %v11787 = vor.u32 %v11785, %v11786
        %v11788 = vsel %vm1097, %v11783, %v11787
        %v11789 = vrot.slane %v11312, 1
        %v11790 = vrot.slane %v11308, 2
        %v11791 = vor.u32 %v11789, %v11790
        %v11792 = vsel %vm1097, %v11787, %v11791
        %v11793 = vrot.slane %v11688, 1
        %v11794 = vrot.slane %v11691, 2
        %v11795 = vor.u32 %v11793, %v11794
        %v11796 = vsel %vm1097, %v11791, %v11795
        %v11797 = vrot.slane %v11696, 1
        %v11798 = vrot.slane %v11699, 2
        %v11799 = vor.u32 %v11797, %v11798
        %v11800 = vsel %vm1097, %v11795, %v11799
        %v11802 = vshrl.u32 %v11744, 16
        %v11804 = vrot.slane %v11802, 1
        %v11805 = vshll.u32 %v11744, 16
        %v11807 = vrot.slane %v11805, 2
        %v11808 = vor.u32 %v11804, %v11807
        %v11809 = vsel %vm1097, %v11799, %v11808
        %v11811 = vunpack.c.l.b16 %v9740
        %v11812 = vpack.c.b16 %v11811, %v11610
        %v11813 = vrot.slane %v11743, 2
        %v11814 = vsel %vm888, %v11813, %v10476
        %v11815 = vrot.slane %v10840, 2
        %v11816 = vsel %vm888, %v10492, %v11815
        %v11817 = vrot.slane %v11652, 2
        %v11818 = vsel %vm888, %v11815, %v11817
        %v11819 = vrot.slane %v11653, 2
        %v11820 = vsel %vm888, %v11817, %v11819
        %v11821 = vrot.slane %v11812, 2
        %v11822 = vsel %vm888, %v11819, %v11821
        %11823 = vrot.lane.b32.xlu0 %v11814, 16
        %v11824 = vpop.permute.xlu0 %11823
        %11825 = vrot.lane.b32.xlu0 %v11816, 16
        %v11826 = vpop.permute.xlu0 %11825
        %11827 = vrot.lane.b32.xlu0 %v11818, 16
        %v11828 = vpop.permute.xlu0 %11827
        %11829 = vrot.lane.b32.xlu0 %v11820, 16
        %v11830 = vpop.permute.xlu0 %11829
        %11831 = vrot.lane.b32.xlu0 %v11822, 16
        %v11832 = vpop.permute.xlu0 %11831
        %11833 = vrot.lane.b32.xlu0 %v11821, 16
        %v11834 = vpop.permute.xlu0 %11833
        %v11836 = vunpack.c.l.b16 %v9741
        %v11837 = vpack.c.b16 %v9780, %v11836
        %v11839 = vshrl.u32 %v11837, 16
        %v11841 = vrot.slane %v11839, 2
        %v11842 = vshll.u32 %v11837, 16
        %v11844 = vrot.slane %v11842, 3
        %v11845 = vor.u32 %v11841, %v11844
        %v11846 = vsel %vm919, %v11845, %v10549
        %v11847 = vrot.slane %v11312, 2
        %v11848 = vrot.slane %v11308, 3
        %v11849 = vor.u32 %v11847, %v11848
        %v11850 = vsel %vm919, %v10586, %v11849
        %v11851 = vrot.slane %v11688, 2
        %v11852 = vrot.slane %v11691, 3
        %v11853 = vor.u32 %v11851, %v11852
        %v11854 = vsel %vm919, %v11849, %v11853
        %v11855 = vrot.slane %v11696, 2
        %v11856 = vrot.slane %v11699, 3
        %v11857 = vor.u32 %v11855, %v11856
        %v11858 = vsel %vm919, %v11853, %v11857
        %v11860 = vshrl.u32 %v11812, 16
        %v11862 = vrot.slane %v11860, 2
        %v11863 = vshll.u32 %v11812, 16
        %v11865 = vrot.slane %v11863, 3
        %v11866 = vor.u32 %v11862, %v11865
        %v11867 = vsel %vm919, %v11857, %v11866
        %11868 = vrot.lane.b32.xlu0 %v11846, 32
        %v11869 = vpop.permute.xlu0 %11868
        %11870 = vrot.lane.b32.xlu0 %v11850, 32
        %v11871 = vpop.permute.xlu0 %11870
        %11872 = vrot.lane.b32.xlu0 %v11854, 32
        %v11873 = vpop.permute.xlu0 %11872
        %11874 = vrot.lane.b32.xlu0 %v11858, 32
        %v11875 = vpop.permute.xlu0 %11874
        %11876 = vrot.lane.b32.xlu0 %v11867, 32
        %v11877 = vpop.permute.xlu0 %11876
        %11878 = vrot.lane.b32.xlu0 %v11866, 32
        %v11879 = vpop.permute.xlu0 %11878
        %v11881 = vsel %vm3543, %v9799, %v11324
        %v11883 = vsel %vm3543, %v9808, %v11326
        %v11885 = vsel %vm3543, %v10073, %v11328
        %v11887 = vsel %vm3543, %v10467, %v11330
        %v11889 = vsel %vm3543, %v10840, %v11332
        %v11891 = vsel %vm3543, %v11289, %v11334
        %v11893 = vsel %vm1251, %v11881, %v11401
        %v11895 = vsel %vm1251, %v10879, %v11403
        %v11897 = vsel %vm1251, %v10881, %v11405
        %v11899 = vsel %vm1251, %v10883, %v11407
        %v11901 = vsel %vm1251, %v10885, %v11409
        %v11903 = vsel %vm1251, %v10887, %v11411
        %v11905 = vsel %vm1251, %v10889, %v11413
        %v11907 = vsel %vm1251, %v10891, %v11415
        %v11909 = vsel %vm1251, %v10893, %v11417
        %v11911 = vsel %vm1251, %v11883, %v11419
        %v11913 = vsel %vm1251, %v11885, %v11421
        %v11915 = vsel %vm1251, %v11887, %v11423
        %v11917 = vsel %vm1251, %v11889, %v11425
        %v11919 = vsel %vm1251, %v11891, %v11427
        %v11921 = vsel %vm3601, %v11893, %v11432
        %v11923 = vsel %vm3601, %v11895, %v11434
        %v11925 = vsel %vm3601, %v11897, %v11436
        %v11927 = vsel %vm3601, %v11899, %v11438
        %v11929 = vsel %vm3601, %v11901, %v11440
        %v11931 = vsel %vm3601, %v11903, %v11442
        %v11933 = vsel %vm3601, %v11905, %v11444
        %v11935 = vsel %vm3601, %v11907, %v11446
        %v11937 = vsel %vm3601, %v11909, %v11448
        %v11939 = vsel %vm3601, %v11911, %v11450
        %v11941 = vsel %vm3601, %v11913, %v11452
        %v11943 = vsel %vm3601, %v11915, %v11454
        %v11945 = vsel %vm3601, %v11917, %v11456
        %v11947 = vsel %vm3601, %v11919, %v11458
        %v11949 = vsel %vm1281, %v11921, %v11514
        %v11951 = vsel %vm1281, %v11923, %v11516
        %v11953 = vsel %vm1281, %v11925, %v11518
        %v11955 = vsel %vm1281, %v11927, %v11520
        %v11957 = vsel %vm1281, %v11929, %v11522
        %v11959 = vsel %vm1281, %v11931, %v11524
        %v11961 = vsel %vm1281, %v11933, %v11526
        %v11963 = vsel %vm1281, %v11935, %v11528
        %v11965 = vsel %vm1281, %v11937, %v11530
        %v11967 = vsel %vm1281, %v11939, %v11532
        %v11969 = vsel %vm1281, %v11941, %v11534
        %v11971 = vsel %vm1281, %v11943, %v11536
        %v11973 = vsel %vm1281, %v11945, %v11538
        %v11975 = vsel %vm1281, %v11947, %v11540
        %v11977 = vsel %vm3658, %v11949, %v11582
        %v11979 = vsel %vm3658, %v11951, %v11584
        %v11981 = vsel %vm3658, %v11953, %v11586
        %v11983 = vsel %vm3658, %v11955, %v11588
        %v11985 = vsel %vm3658, %v11957, %v11590
        %v11987 = vsel %vm3658, %v11959, %v11592
        %v11989 = vsel %vm3658, %v11961, %v11594
        %v11991 = vsel %vm3658, %v11963, %v11596
        %v11993 = vsel %vm3658, %v11965, %v11598
        %v11995 = vsel %vm3658, %v11967, %v11600
        %v11997 = vsel %vm3658, %v11969, %v11602
        %v11999 = vsel %vm3658, %v11971, %v11604
        %v12001 = vsel %vm3658, %v11973, %v11606
        %v12003 = vsel %vm3658, %v11975, %v11608
        %v12005 = vsel %vm1310, %v11977, %v11625
        %v12007 = vsel %vm1310, %v11979, %v11627
        %v12009 = vsel %vm1310, %v11981, %v11629
        %v12011 = vsel %vm1310, %v11983, %v11631
        %v12013 = vsel %vm1310, %v11985, %v11633
        %v12015 = vsel %vm1310, %v11987, %v11635
        %v12017 = vsel %vm1310, %v11989, %v11637
        %v12019 = vsel %vm1310, %v11991, %v11639
        %v12021 = vsel %vm1310, %v11993, %v11641
        %v12023 = vsel %vm1310, %v11995, %v11643
        %v12025 = vsel %vm1310, %v11997, %v11645
        %v12027 = vsel %vm1310, %v11999, %v11647
        %v12029 = vsel %vm1310, %v12001, %v11649
        %v12031 = vsel %vm1310, %v12003, %v11651
        %v12033 = vsel %vm3715, %v12005, %v11712
        %v12035 = vsel %vm3715, %v12007, %v11714
        %v12037 = vsel %vm3715, %v12009, %v11716
        %v12039 = vsel %vm3715, %v12011, %v11718
        %v12041 = vsel %vm3715, %v12013, %v11720
        %v12043 = vsel %vm3715, %v12015, %v11722
        %v12045 = vsel %vm3715, %v12017, %v11724
        %v12047 = vsel %vm3715, %v12019, %v11726
        %v12049 = vsel %vm3715, %v12021, %v11728
        %v12051 = vsel %vm3715, %v12023, %v11730
        %v12053 = vsel %vm3715, %v12025, %v11732
        %v12055 = vsel %vm3715, %v12027, %v11734
        %v12057 = vsel %vm3715, %v12029, %v11736
        %v12059 = vsel %vm3715, %v12031, %v11738
        %v12062 = vsel %vm3543, %v11756, %v11824
        %v12064 = vsel %vm3543, %v11760, %v10505
        %v12066 = vsel %vm3543, %v11764, %v10507
        %v12068 = vsel %vm3543, %v11768, %v10509
        %v12070 = vsel %vm3543, %v11772, %v10511
        %v12072 = vsel %vm3543, %v11776, %v10513
        %v12074 = vsel %vm3543, %v11780, %v10515
        %v12076 = vsel %vm3543, %v11784, %v10517
        %v12078 = vsel %vm3543, %v11788, %v10519
        %v12081 = vsel %vm3543, %v11792, %v11826
        %v12084 = vsel %vm3543, %v11796, %v11828
        %v12087 = vsel %vm3543, %v11800, %v11830
        %v12090 = vsel %vm3543, %v11809, %v11832
        %v12093 = vsel %vm3543, %v11808, %v11834
        %v12095 = vsel %vm1251, %v12062, %v11869
        %v12096 = vsel %vm1251, %v12064, %v10606
        %v12097 = vsel %vm1251, %v12066, %v10608
        %v12098 = vsel %vm1251, %v12068, %v10610
        %v12099 = vsel %vm1251, %v12070, %v10612
        %v12100 = vsel %vm1251, %v12072, %v10614
        %v12101 = vsel %vm1251, %v12074, %v10616
        %v12102 = vsel %vm1251, %v12076, %v10618
        %v12103 = vsel %vm1251, %v12078, %v10620
        %v12105 = vsel %vm1251, %v12081, %v11871
        %v12107 = vsel %vm1251, %v12084, %v11873
        %v12109 = vsel %vm1251, %v12087, %v11875
        %v12111 = vsel %vm1251, %v12090, %v11877
        %v12113 = vsel %vm1251, %v12093, %v11879
        %v12114 = vshrl.u32 %v12033, 16
        %v12116 = vshll.u32 %v12033, 16
        %v12118 = vrot.slane %v12116, 1
        %v12119 = vor.u32 %v12114, %v12118
        %v12120 = vshll.u32 %v12035, 16
        %v12122 = vrot.slane %v12120, 1
        %v12123 = vsel %vm576, %v12119, %v12122
        %v12124 = vshrl.u32 %v12095, 16
        %v12126 = vshll.u32 %v12095, 16
        %v12128 = vrot.slane %v12126, 1
        %v12129 = vor.u32 %v12124, %v12128
        %v12130 = vshll.u32 %v12096, 16
        %v12132 = vrot.slane %v12130, 1
        %v12133 = vsel %vm576, %v12129, %v12132
        %v12134 = vshrl.u32 %v12035, 16
        %v12136 = vor.u32 %v12134, %v12122
        %v12137 = vshll.u32 %v12037, 16
        %v12139 = vrot.slane %v12137, 1
        %v12140 = vsel %vm576, %v12136, %v12139
        %v12141 = vshrl.u32 %v12096, 16
        %v12143 = vor.u32 %v12141, %v12132
        %v12144 = vshll.u32 %v12097, 16
        %v12146 = vrot.slane %v12144, 1
        %v12147 = vsel %vm576, %v12143, %v12146
        %v12148 = vshrl.u32 %v12037, 16
        %v12150 = vor.u32 %v12148, %v12139
        %v12151 = vshll.u32 %v12039, 16
        %v12153 = vrot.slane %v12151, 1
        %v12154 = vsel %vm576, %v12150, %v12153
        %v12155 = vshrl.u32 %v12097, 16
        %v12157 = vor.u32 %v12155, %v12146
        %v12158 = vshll.u32 %v12098, 16
        %v12160 = vrot.slane %v12158, 1
        %v12161 = vsel %vm576, %v12157, %v12160
        %v12162 = vshrl.u32 %v12039, 16
        %v12164 = vor.u32 %v12162, %v12153
        %v12165 = vshll.u32 %v12041, 16
        %v12167 = vrot.slane %v12165, 1
        %v12168 = vsel %vm576, %v12164, %v12167
        %v12169 = vshrl.u32 %v12098, 16
        %v12171 = vor.u32 %v12169, %v12160
        %v12172 = vshll.u32 %v12099, 16
        %v12174 = vrot.slane %v12172, 1
        %v12175 = vsel %vm576, %v12171, %v12174
        %v12176 = vshrl.u32 %v12041, 16
        %v12178 = vor.u32 %v12176, %v12167
        %v12179 = vshll.u32 %v12043, 16
        %v12181 = vrot.slane %v12179, 1
        %v12182 = vsel %vm576, %v12178, %v12181
        %v12183 = vshrl.u32 %v12099, 16
        %v12185 = vor.u32 %v12183, %v12174
        %v12186 = vshll.u32 %v12100, 16
        %v12188 = vrot.slane %v12186, 1
        %v12189 = vsel %vm576, %v12185, %v12188
        %v12190 = vshrl.u32 %v12043, 16
        %v12192 = vor.u32 %v12190, %v12181
        %v12193 = vshll.u32 %v12045, 16
        %v12195 = vrot.slane %v12193, 1
        %v12196 = vsel %vm576, %v12192, %v12195
        %v12197 = vshrl.u32 %v12100, 16
        %v12199 = vor.u32 %v12197, %v12188
        %v12200 = vshll.u32 %v12101, 16
        %v12202 = vrot.slane %v12200, 1
        %v12203 = vsel %vm576, %v12199, %v12202
        %v12204 = vshrl.u32 %v12045, 16
        %v12206 = vor.u32 %v12204, %v12195
        %v12207 = vshll.u32 %v12047, 16
        %v12209 = vrot.slane %v12207, 1
        %v12210 = vsel %vm576, %v12206, %v12209
        %v12211 = vshrl.u32 %v12101, 16
        %v12213 = vor.u32 %v12211, %v12202
        %v12214 = vshll.u32 %v12102, 16
        %v12216 = vrot.slane %v12214, 1
        %v12217 = vsel %vm576, %v12213, %v12216
        %v12218 = vshrl.u32 %v12047, 16
        %v12220 = vor.u32 %v12218, %v12209
        %v12221 = vshll.u32 %v12049, 16
        %v12223 = vrot.slane %v12221, 1
        %v12224 = vsel %vm576, %v12220, %v12223
        %v12225 = vshrl.u32 %v12102, 16
        %v12227 = vor.u32 %v12225, %v12216
        %v12228 = vshll.u32 %v12103, 16
        %v12230 = vrot.slane %v12228, 1
        %v12231 = vsel %vm576, %v12227, %v12230
        %v12232 = vshrl.u32 %v12049, 16
        %v12234 = vor.u32 %v12232, %v12223
        %v12235 = vshll.u32 %v12051, 16
        %v12237 = vrot.slane %v12235, 1
        %v12238 = vsel %vm576, %v12234, %v12237
        %v12239 = vshrl.u32 %v12103, 16
        %v12241 = vor.u32 %v12239, %v12230
        %v12242 = vshll.u32 %v12105, 16
        %v12244 = vrot.slane %v12242, 1
        %v12245 = vsel %vm576, %v12241, %v12244
        %v12246 = vshrl.u32 %v12051, 16
        %v12248 = vor.u32 %v12246, %v12237
        %v12249 = vshll.u32 %v12053, 16
        %v12251 = vrot.slane %v12249, 1
        %v12252 = vsel %vm576, %v12248, %v12251
        %v12253 = vshrl.u32 %v12105, 16
        %v12255 = vor.u32 %v12253, %v12244
        %v12256 = vshll.u32 %v12107, 16
        %v12258 = vrot.slane %v12256, 1
        %v12259 = vsel %vm576, %v12255, %v12258
        %v12260 = vshrl.u32 %v12053, 16
        %v12262 = vor.u32 %v12260, %v12251
        %v12263 = vshll.u32 %v12055, 16
        %v12265 = vrot.slane %v12263, 1
        %v12266 = vsel %vm576, %v12262, %v12265
        %v12267 = vshrl.u32 %v12107, 16
        %v12269 = vor.u32 %v12267, %v12258
        %v12270 = vshll.u32 %v12109, 16
        %v12272 = vrot.slane %v12270, 1
        %v12273 = vsel %vm576, %v12269, %v12272
        %v12274 = vshrl.u32 %v12055, 16
        %v12276 = vor.u32 %v12274, %v12265
        %v12277 = vshll.u32 %v12057, 16
        %v12279 = vrot.slane %v12277, 1
        %v12280 = vsel %vm576, %v12276, %v12279
        %v12281 = vshrl.u32 %v12109, 16
        %v12283 = vor.u32 %v12281, %v12272
        %v12284 = vshll.u32 %v12111, 16
        %v12286 = vrot.slane %v12284, 1
        %v12287 = vsel %vm576, %v12283, %v12286
        %v12288 = vshrl.u32 %v12057, 16
        %v12290 = vor.u32 %v12288, %v12279
        %v12291 = vshll.u32 %v12059, 16
        %v12293 = vrot.slane %v12291, 1
        %v12294 = vsel %vm576, %v12290, %v12293
        %v12295 = vshrl.u32 %v12111, 16
        %v12297 = vor.u32 %v12295, %v12286
        %v12298 = vshll.u32 %v12113, 16
        %v12300 = vrot.slane %v12298, 1
        %v12301 = vsel %vm576, %v12297, %v12300
        %v12302 = vshrl.u32 %v12059, 16
        %v12304 = vor.u32 %v12302, %v12293
        %v12305 = vshrl.u32 %v12113, 16
        %v12307 = vor.u32 %v12305, %v12300
        %v12322 = vld [vmem:[%s7] sm:$0xf]
        %v12323 = vld [vmem:[%s7 + $0x4] sm:$0xf]
        %v12324 = vld [vmem:[%s7 + $0x8] sm:$0xf]
        %v12325 = vld [vmem:[%s7 + $0xc] sm:$0xf]
        %v12326 = vld [vmem:[%s7 + $0x10] sm:$0xf]
        %v12327 = vld [vmem:[%s7 + $0x14] sm:$0xf]
        %v12328 = vld [vmem:[%s7 + $0x18] sm:$0xf]
        %v12329 = vld [vmem:[%s7 + $0x1c] sm:$0xf]
        %v12330 = vld [vmem:[%s7 + $0x20] sm:$0xf]
        %v12331 = vld [vmem:[%s7 + $0x24] sm:$0xf]
        %v12332 = vld [vmem:[%s7 + $0x28] sm:$0xf]
        %v12333 = vld [vmem:[%s7 + $0x2c] sm:$0xf]
        %v12334 = vld [vmem:[%s7 + $0x30] sm:$0xf]
        %v12335 = vld [vmem:[%s7 + $0x34] sm:$0xf]
        %v12336 = vld [vmem:[%s7 + $0x38] sm:$0xf]
        %v12337 = vld [vmem:[%s7 + $0x3c] sm:$0xf]
        %v12338 = vld [vmem:[%s7 + $0x40] sm:$0xf]
        %v12339 = vld [vmem:[%s7 + $0x44] sm:$0xf]
        %v12340 = vld [vmem:[%s7 + $0x48] sm:$0xf]
        %v12341 = vld [vmem:[%s7 + $0x4c] sm:$0xf]
        %v12342 = vld [vmem:[%s7 + $0x50] sm:$0xf]
        %v12343 = vld [vmem:[%s7 + $0x54] sm:$0xf]
        %v12344 = vld [vmem:[%s7 + $0x58] sm:$0xf]
        %v12345 = vld [vmem:[%s7 + $0x5c] sm:$0xf]
        %v12346 = vld [vmem:[%s7 + $0x60] sm:$0xf]
        %v12347 = vld [vmem:[%s7 + $0x64] sm:$0xf]
        %v12348 = vld [vmem:[%s7 + $0x68] sm:$0xf]
        %v12349 = vld [vmem:[%s7 + $0x6c] sm:$0xf]
        %v12350 = vld [vmem:[%s7 + $0x70] sm:$0xf]
        %v12351 = vld [vmem:[%s7 + $0x74] sm:$0xf]
        %v12352 = vld [vmem:[%s7 + $0x78] sm:$0xf]
        %v12353 = vld [vmem:[%s7 + $0x7c] sm:$0xf]
        %v12354 = vld [vmem:[%s7 + $0x80] sm:$0xf]
        %v12355 = vld [vmem:[%s7 + $0x84] sm:$0xf]
        %v12356 = vld [vmem:[%s7 + $0x88] sm:$0xf]
        %v12357 = vld [vmem:[%s7 + $0x8c] sm:$0xf]
        %v12358 = vld [vmem:[%s7 + $0x90] sm:$0xf]
        %v12359 = vld [vmem:[%s7 + $0x94] sm:$0xf]
        %v12360 = vld [vmem:[%s7 + $0x98] sm:$0xf]
        %v12361 = vld [vmem:[%s7 + $0x9c] sm:$0xf]
        %v12362 = vld [vmem:[%s7 + $0xa0] sm:$0xf]
        %v12363 = vld [vmem:[%s7 + $0xa4] sm:$0xf]
        %v12364 = vld [vmem:[%s7 + $0xa8] sm:$0xf]
        %v12365 = vld [vmem:[%s7 + $0xac] sm:$0xf]
        %v12366 = vld [vmem:[%s7 + $0xb0] sm:$0xf]
        %v12367 = vld [vmem:[%s7 + $0xb4] sm:$0xf]
        %v12368 = vld [vmem:[%s7 + $0xb8] sm:$0xf]
        %v12369 = vld [vmem:[%s7 + $0xbc] sm:$0xf]
        %v12370 = vld [vmem:[%s7 + $0xc0] sm:$0xf]
        %v12371 = vld [vmem:[%s7 + $0xc4] sm:$0xf]
        %v12372 = vld [vmem:[%s7 + $0xc8] sm:$0xf]
        %v12373 = vld [vmem:[%s7 + $0xcc] sm:$0xf]
        %v12374 = vld [vmem:[%s7 + $0xd0] sm:$0xf]
        %v12375 = vld [vmem:[%s7 + $0xd4] sm:$0xf]
        %v12376 = vld [vmem:[%s8] sm:$0x1]
        %v12378 = vlaneseq
        %v12379 = vshrl.u32 %v12378, 7
        %v12380 = vsub.s32 0, %v12379
        %v12381 = vrot.slane %v12376, %v12380
        %v12437 = vunpack.c.l.b16 %v12322
        %v12438 = vunpack.c.l.b16 %v12323
        %v12439 = vunpack.c.l.b16 %v12324
        %v12440 = vunpack.c.l.b16 %v12325
        %v12441 = vunpack.c.l.b16 %v12326
        %v12442 = vunpack.c.l.b16 %v12327
        %v12443 = vunpack.c.l.b16 %v12328
        %v12444 = vunpack.c.l.b16 %v12329
        %v12445 = vunpack.c.l.b16 %v12330
        %v12446 = vunpack.c.l.b16 %v12331
        %v12447 = vunpack.c.l.b16 %v12332
        %v12448 = vunpack.c.l.b16 %v12333
        %v12449 = vunpack.c.l.b16 %v12334
        %v12450 = vunpack.c.l.b16 %v12335
        %v12451 = vunpack.c.l.b16 %v12336
        %v12452 = vunpack.c.l.b16 %v12337
        %v12453 = vunpack.c.l.b16 %v12338
        %v12454 = vunpack.c.l.b16 %v12339
        %v12455 = vunpack.c.l.b16 %v12340
        %v12456 = vunpack.c.l.b16 %v12341
        %v12457 = vunpack.c.l.b16 %v12342
        %v12458 = vunpack.c.l.b16 %v12343
        %v12459 = vunpack.c.l.b16 %v12344
        %v12460 = vunpack.c.l.b16 %v12345
        %v12461 = vunpack.c.l.b16 %v12346
        %v12462 = vunpack.c.l.b16 %v12347
        %v12463 = vunpack.c.l.b16 %v12348
        %v12464 = vunpack.c.l.b16 %v12349
        %v12465 = vunpack.c.l.b16 %v12350
        %v12466 = vunpack.c.l.b16 %v12351
        %v12467 = vunpack.c.l.b16 %v12352
        %v12468 = vunpack.c.l.b16 %v12353
        %v12469 = vunpack.c.l.b16 %v12354
        %v12470 = vunpack.c.l.b16 %v12355
        %v12471 = vunpack.c.l.b16 %v12356
        %v12472 = vunpack.c.l.b16 %v12357
        %v12473 = vunpack.c.l.b16 %v12358
        %v12474 = vunpack.c.l.b16 %v12359
        %v12475 = vunpack.c.l.b16 %v12360
        %v12476 = vunpack.c.l.b16 %v12361
        %v12477 = vunpack.c.l.b16 %v12362
        %v12478 = vunpack.c.l.b16 %v12363
        %v12479 = vunpack.c.l.b16 %v12364
        %v12480 = vunpack.c.l.b16 %v12365
        %v12481 = vunpack.c.l.b16 %v12366
        %v12482 = vunpack.c.l.b16 %v12367
        %v12483 = vunpack.c.l.b16 %v12368
        %v12484 = vunpack.c.l.b16 %v12369
        %v12485 = vunpack.c.l.b16 %v12370
        %v12486 = vunpack.c.l.b16 %v12371
        %v12487 = vunpack.c.l.b16 %v12372
        %v12488 = vunpack.c.l.b16 %v12373
        %v12489 = vunpack.c.l.b16 %v12374
        %v12490 = vunpack.c.l.b16 %v12375
        %v12491 = vpack.c.b16 %v12438, %v12437
        %v12492 = vpack.c.b16 %v12440, %v12439
        %v12493 = vpack.c.b16 %v12442, %v12441
        %v12494 = vpack.c.b16 %v12444, %v12443
        %v12495 = vpack.c.b16 %v12446, %v12445
        %v12496 = vpack.c.b16 %v12448, %v12447
        %v12497 = vpack.c.b16 %v12450, %v12449
        %v12498 = vpack.c.b16 %v12452, %v12451
        %v12499 = vpack.c.b16 %v12454, %v12453
        %v12500 = vpack.c.b16 %v12456, %v12455
        %v12501 = vpack.c.b16 %v12458, %v12457
        %v12502 = vpack.c.b16 %v12460, %v12459
        %v12503 = vpack.c.b16 %v12462, %v12461
        %v12504 = vpack.c.b16 %v12464, %v12463
        %v12505 = vpack.c.b16 %v12466, %v12465
        %v12506 = vpack.c.b16 %v12468, %v12467
        %v12507 = vpack.c.b16 %v12470, %v12469
        %v12508 = vpack.c.b16 %v12472, %v12471
        %v12509 = vpack.c.b16 %v12474, %v12473
        %v12510 = vpack.c.b16 %v12476, %v12475
        %v12511 = vpack.c.b16 %v12478, %v12477
        %v12512 = vpack.c.b16 %v12480, %v12479
        %v12513 = vpack.c.b16 %v12482, %v12481
        %v12514 = vpack.c.b16 %v12484, %v12483
        %v12515 = vpack.c.b16 %v12486, %v12485
        %v12516 = vpack.c.b16 %v12488, %v12487
        %v12517 = vpack.c.b16 %v12490, %v12489
        %v12546 = vsel %vm3601, %v12133, 0
        %v12549 = vsel %vm3601, %v12147, 0
        %v12552 = vsel %vm3601, %v12161, 0
        %v12555 = vsel %vm3601, %v12175, 0
        %v12558 = vsel %vm3601, %v12189, 0
        %v12561 = vsel %vm3601, %v12203, 0
        %v12564 = vsel %vm3601, %v12217, 0
        %v12567 = vsel %vm3601, %v12231, 0
        %v12570 = vsel %vm3601, %v12245, 0
        %v12573 = vsel %vm3601, %v12259, 0
        %v12576 = vsel %vm3601, %v12273, 0
        %v12579 = vsel %vm3601, %v12287, 0
        %v12582 = vsel %vm3601, %v12301, 0
        %v12585 = vsel %vm3601, %v12307, 0
        %12587 = vmatprep.subr.bf16.mxu0 0
        %12588 = vmatpush1.bf16.msra.mxu0 %v12491
        %12589 = vmatprep.subr.bf16.mxu0 0
        %12590 = vmatpush1.bf16.msra.mxu0 %v12492
        %12591 = vmatprep.subr.bf16.mxu0 0
        %12592 = vmatpush1.bf16.msra.mxu0 %v12493
        %12593 = vmatprep.subr.bf16.mxu0 0
        %12594 = vmatpush1.bf16.msra.mxu0 %v12494
        %12595 = vmatprep.subr.bf16.mxu0 0
        %12596 = vmatpush1.bf16.msra.mxu0 %v12495
        %12597 = vmatprep.subr.bf16.mxu0 0
        %12598 = vmatpush1.bf16.msra.mxu0 %v12496
        %12599 = vmatprep.subr.bf16.mxu0 0
        %12600 = vmatpush1.bf16.msra.mxu0 %v12497
        %12601 = vmatprep.subr.bf16.mxu0 0
        %12602 = vmatpush1.bf16.msra.mxu0 %v12498
        %12603 = vmatprep.subr.bf16.mxu0 0
        %12604 = vmatpush1.bf16.msra.mxu0 %v12499
        %12605 = vmatprep.subr.bf16.mxu0 0
        %12606 = vmatpush1.bf16.msra.mxu0 %v12500
        %12607 = vmatprep.subr.bf16.mxu0 0
        %12608 = vmatpush1.bf16.msra.mxu0 %v12501
        %12609 = vmatprep.subr.bf16.mxu0 0
        %12610 = vmatpush1.bf16.msra.mxu0 %v12502
        %12611 = vmatprep.subr.bf16.mxu0 0
        %12612 = vmatpush1.bf16.msra.mxu0 %v12503
        %12613 = vmatprep.subr.bf16.mxu0 0
        %12614 = vmatpush1.bf16.msra.mxu0 %v12504
        %12615 = vmatprep.subr.bf16.mxu0 0
        %12616 = vmatpush1.bf16.msra.mxu0 %v12505
        %12617 = vmatprep.subr.bf16.mxu0 0
        %12618 = vmatpush1.bf16.msra.mxu0 %v12506
        %12619 = vmatprep.mubr.bf16.mxu0 %v11246
        %12620 = vmatmul.mubr.bf16.gmra.mrb[0].mxu0 %v11040
        %v12621 = vpop.f32.mrb[0].mxu0
        %v12622 = vpop.f32.mrb[0].mxu0
        %v12623 = vpop.f32.mrb[0].mxu0
        %v12624 = vpop.f32.mrb[0].mxu0
        %12625 = vmatprep.mubr.bf16.mxu0 %v11249
        %12626 = vmatmul.mubr.bf16.gmra.mrb[0].mxu0 %v11043
        %v12627 = vpop.f32.mrb[0].mxu0
        %v12628 = vpop.f32.mrb[0].mxu0
        %v12629 = vpop.f32.mrb[0].mxu0
        %v12630 = vpop.f32.mrb[0].mxu0
        %12631 = vmatprep.mubr.bf16.mxu0 %v11252
        %12632 = vmatmul.mubr.bf16.gmra.mrb[0].mxu0 %v11046
        %v12633 = vpop.f32.mrb[0].mxu0
        %v12634 = vpop.f32.mrb[0].mxu0
        %v12635 = vpop.f32.mrb[0].mxu0
        %v12636 = vadd.f32 %v12381, %v12635
        %v12637 = vpop.f32.mrb[0].mxu0
        %12638 = vmatprep.mubr.bf16.mxu0 %v11255
        %12639 = vmatmul.mubr.bf16.gmra.mrb[0].mxu0 %v11049
        %v12640 = vpop.f32.mrb[0].mxu0
        %v12641 = vadd.f32 %v12381, %v12640
        %v12642 = vpop.f32.mrb[0].mxu0
        %v12643 = vpop.f32.mrb[0].mxu0
        %v12644 = vadd.f32 %v12381, %v12643
        %v12645 = vpop.f32.mrb[0].mxu0
        %12646 = vmatprep.mubr.bf16.mxu0 %v11258
        %12647 = vmatmul.mubr.bf16.gmra.mrb[0].mxu0 %v11052
        %v12648 = vpop.f32.mrb[0].mxu0
        %v12649 = vadd.f32 %v12381, %v12648
        %v12650 = vpop.f32.mrb[0].mxu0
        %v12651 = vpop.f32.mrb[0].mxu0
        %v12652 = vadd.f32 %v12381, %v12651
        %v12653 = vpop.f32.mrb[0].mxu0
        %12654 = vmatprep.mubr.bf16.mxu0 %v11261
        %12655 = vmatmul.mubr.bf16.gmra.mrb[0].mxu0 %v11055
        %v12656 = vpop.f32.mrb[0].mxu0
        %v12657 = vadd.f32 %v12381, %v12656
        %v12658 = vpop.f32.mrb[0].mxu0
        %v12659 = vpop.f32.mrb[0].mxu0
        %v12660 = vadd.f32 %v12381, %v12659
        %v12661 = vpop.f32.mrb[0].mxu0
        %12662 = vmatprep.mubr.bf16.mxu0 %v11264
        %12663 = vmatmul.mubr.bf16.gmra.mrb[0].mxu0 %v11058
        %v12664 = vpop.f32.mrb[0].mxu0
        %v12665 = vadd.f32 %v12381, %v12664
        %v12666 = vpop.f32.mrb[0].mxu0
        %v12667 = vpop.f32.mrb[0].mxu0
        %v12668 = vpop.f32.mrb[0].mxu0
        %12669 = vmatprep.mubr.bf16.mxu0 %v11267
        %12670 = vmatmul.mubr.bf16.gmra.mrb[0].mxu0 %v11061
        %v12671 = vpop.f32.mrb[0].mxu0
        %v12672 = vadd.f32 %v12381, %v12671
        %v12673 = vpop.f32.mrb[0].mxu0
        %v12674 = vpop.f32.mrb[0].mxu0
        %v12675 = vadd.f32 %v12381, %v12674
        %v12676 = vpop.f32.mrb[0].mxu0
        %12677 = vmatprep.mubr.bf16.mxu0 %v11270
        %12678 = vmatmul.mubr.bf16.gmra.mrb[0].mxu0 %v11064
        %v12679 = vpop.f32.mrb[0].mxu0
        %v12680 = vadd.f32 %v12381, %v12679
        %v12681 = vpop.f32.mrb[0].mxu0
        %v12682 = vpop.f32.mrb[0].mxu0
        %v12683 = vadd.f32 %v12381, %v12682
        %v12684 = vpop.f32.mrb[0].mxu0
        %12685 = vmatprep.mubr.bf16.mxu0 %v11273
        %12686 = vmatmul.mubr.bf16.gmra.mrb[0].mxu0 %v11067
        %v12687 = vpop.f32.mrb[0].mxu0
        %v12688 = vadd.f32 %v12381, %v12687
        %v12689 = vpop.f32.mrb[0].mxu0
        %v12690 = vpop.f32.mrb[0].mxu0
        %v12691 = vadd.f32 %v12381, %v12690
        %v12692 = vpop.f32.mrb[0].mxu0
        %12693 = vmatprep.mubr.bf16.mxu0 %v11276
        %12694 = vmatmul.mubr.bf16.gmra.mrb[0].mxu0 %v11070
        %v12695 = vpop.f32.mrb[0].mxu0
        %v12696 = vadd.f32 %v12381, %v12695
        %v12697 = vpop.f32.mrb[0].mxu0
        %v12698 = vpop.f32.mrb[0].mxu0
        %v12699 = vadd.f32 %v12381, %v12698
        %v12700 = vpop.f32.mrb[0].mxu0
        %12701 = vmatprep.mubr.bf16.mxu0 %v11279
        %12702 = vmatmul.mubr.bf16.gmra.mrb[0].mxu0 %v11073
        %v12703 = vpop.f32.mrb[0].mxu0
        %v12704 = vpop.f32.mrb[0].mxu0
        %v12705 = vpop.f32.mrb[0].mxu0
        %v12706 = vpop.f32.mrb[0].mxu0
        %12707 = vmatprep.mubr.bf16.mxu0 %v11282
        %12708 = vmatmul.mubr.bf16.gmra.mrb[0].mxu0 %v11076
        %v12709 = vpop.f32.mrb[0].mxu0
        %v12710 = vpop.f32.mrb[0].mxu0
        %v12711 = vpop.f32.mrb[0].mxu0
        %v12712 = vpop.f32.mrb[0].mxu0
        %12713 = vmatprep.mubr.bf16.mxu0 %v11285
        %12714 = vmatmul.mubr.bf16.gmra.mrb[0].mxu0 %v11079
        %v12715 = vpop.f32.mrb[0].mxu0
        %v12716 = vpop.f32.mrb[0].mxu0
        %v12717 = vpop.f32.mrb[0].mxu0
        %v12718 = vpop.f32.mrb[0].mxu0
        %12719 = vdwg.mxu0
        %12720 = vmatprep.subr.bf16.mxu0 0
        %12721 = vmatpush1.bf16.msra.mxu0 %v12507
        %12722 = vmatprep.subr.bf16.mxu0 0
        %12723 = vmatpush1.bf16.msra.mxu0 %v12508
        %12724 = vmatprep.subr.bf16.mxu0 0
        %12725 = vmatpush1.bf16.msra.mxu0 %v12509
        %12726 = vmatprep.subr.bf16.mxu0 0
        %12727 = vmatpush1.bf16.msra.mxu0 %v12510
        %12728 = vmatprep.subr.bf16.mxu0 0
        %12729 = vmatpush1.bf16.msra.mxu0 %v12511
        %12730 = vmatprep.subr.bf16.mxu0 0
        %12731 = vmatpush1.bf16.msra.mxu0 %v12512
        %12732 = vmatprep.subr.bf16.mxu0 0
        %12733 = vmatpush1.bf16.msra.mxu0 %v12513
        %12734 = vmatprep.subr.bf16.mxu0 0
        %12735 = vmatpush1.bf16.msra.mxu0 %v12514
        %12736 = vmatprep.subr.bf16.mxu0 0
        %12737 = vmatpush1.bf16.msra.mxu0 %v12515
        %12738 = vmatprep.subr.bf16.mxu0 0
        %12739 = vmatpush1.bf16.msra.mxu0 %v12516
        %12740 = vmatprep.subr.bf16.mxu0 0
        %12741 = vmatpush1.bf16.msra.mxu0 %v12517
        %12742 = vmatprep.subr.bf16.mxu0 0
        %12743 = vmatpush1.bf16.msra.mxu0 0
        %12744 = vmatprep.subr.bf16.mxu0 0
        %12745 = vmatpush1.bf16.msra.mxu0 0
        %12746 = vmatprep.subr.bf16.mxu0 0
        %12747 = vmatpush1.bf16.msra.mxu0 0
        %12748 = vmatprep.subr.bf16.mxu0 0
        %12749 = vmatpush1.bf16.msra.mxu0 0
        %12750 = vmatprep.subr.bf16.mxu0 0
        %12751 = vmatpush1.bf16.msra.mxu0 0
        %12752 = vmatprep.mubr.bf16.mxu0 %v12546
        %12753 = vmatmul.mubr.bf16.gmra.mrb[0].mxu0 %v12123
        %v12754 = vpop.f32.mrb[0].mxu0
        %v12755 = vpop.f32.mrb[0].mxu0
        %v12756 = vpop.f32.mrb[0].mxu0
        %v12757 = vpop.f32.mrb[0].mxu0
        %12758 = vmatprep.mubr.bf16.mxu0 %v12549
        %12759 = vmatmul.mubr.bf16.gmra.mrb[0].mxu0 %v12140
        %v12760 = vpop.f32.mrb[0].mxu0
        %v12761 = vpop.f32.mrb[0].mxu0
        %v12762 = vpop.f32.mrb[0].mxu0
        %v12763 = vpop.f32.mrb[0].mxu0
        %12764 = vmatprep.mubr.bf16.mxu0 %v12552
        %12765 = vmatmul.mubr.bf16.gmra.mrb[0].mxu0 %v12154
        %v12766 = vpop.f32.mrb[0].mxu0
        %v12767 = vpop.f32.mrb[0].mxu0
        %v12768 = vpop.f32.mrb[0].mxu0
        %v12769 = vadd.f32 %v12636, %v12768
        %v12770 = vpop.f32.mrb[0].mxu0
        %12771 = vmatprep.mubr.bf16.mxu0 %v12555
        %12772 = vmatmul.mubr.bf16.gmra.mrb[0].mxu0 %v12168
        %v12773 = vpop.f32.mrb[0].mxu0
        %v12774 = vadd.f32 %v12641, %v12773
        %v12775 = vpop.f32.mrb[0].mxu0
        %v12776 = vpop.f32.mrb[0].mxu0
        %v12777 = vadd.f32 %v12644, %v12776
        %v12778 = vpop.f32.mrb[0].mxu0
        %12779 = vmatprep.mubr.bf16.mxu0 %v12558
        %12780 = vmatmul.mubr.bf16.gmra.mrb[0].mxu0 %v12182
        %v12781 = vpop.f32.mrb[0].mxu0
        %v12782 = vadd.f32 %v12649, %v12781
        %v12783 = vpop.f32.mrb[0].mxu0
        %v12784 = vpop.f32.mrb[0].mxu0
        %v12785 = vadd.f32 %v12652, %v12784
        %v12786 = vpop.f32.mrb[0].mxu0
        %12787 = vmatprep.mubr.bf16.mxu0 %v12561
        %12788 = vmatmul.mubr.bf16.gmra.mrb[0].mxu0 %v12196
        %v12789 = vpop.f32.mrb[0].mxu0
        %v12790 = vadd.f32 %v12657, %v12789
        %v12791 = vpop.f32.mrb[0].mxu0
        %v12792 = vpop.f32.mrb[0].mxu0
        %v12793 = vadd.f32 %v12660, %v12792
        %v12794 = vpop.f32.mrb[0].mxu0
        %12795 = vmatprep.mubr.bf16.mxu0 %v12564
        %12796 = vmatmul.mubr.bf16.gmra.mrb[0].mxu0 %v12210
        %v12797 = vpop.f32.mrb[0].mxu0
        %v12798 = vadd.f32 %v12665, %v12797
        %v12799 = vpop.f32.mrb[0].mxu0
        %v12800 = vpop.f32.mrb[0].mxu0
        %v12801 = vpop.f32.mrb[0].mxu0
        %12802 = vmatprep.mubr.bf16.mxu0 %v12567
        %12803 = vmatmul.mubr.bf16.gmra.mrb[0].mxu0 %v12224
        %v12804 = vpop.f32.mrb[0].mxu0
        %v12805 = vadd.f32 %v12672, %v12804
        %v12806 = vpop.f32.mrb[0].mxu0
        %v12807 = vpop.f32.mrb[0].mxu0
        %v12808 = vadd.f32 %v12675, %v12807
        %v12809 = vpop.f32.mrb[0].mxu0
        %12810 = vmatprep.mubr.bf16.mxu0 %v12570
        %12811 = vmatmul.mubr.bf16.gmra.mrb[0].mxu0 %v12238
        %v12812 = vpop.f32.mrb[0].mxu0
        %v12813 = vadd.f32 %v12680, %v12812
        %v12814 = vpop.f32.mrb[0].mxu0
        %v12815 = vpop.f32.mrb[0].mxu0
        %v12816 = vadd.f32 %v12683, %v12815
        %v12817 = vpop.f32.mrb[0].mxu0
        %12818 = vmatprep.mubr.bf16.mxu0 %v12573
        %12819 = vmatmul.mubr.bf16.gmra.mrb[0].mxu0 %v12252
        %v12820 = vpop.f32.mrb[0].mxu0
        %v12821 = vadd.f32 %v12688, %v12820
        %v12822 = vpop.f32.mrb[0].mxu0
        %v12823 = vpop.f32.mrb[0].mxu0
        %v12824 = vadd.f32 %v12691, %v12823
        %v12825 = vpop.f32.mrb[0].mxu0
        %12826 = vmatprep.mubr.bf16.mxu0 %v12576
        %12827 = vmatmul.mubr.bf16.gmra.mrb[0].mxu0 %v12266
        %v12828 = vpop.f32.mrb[0].mxu0
        %v12829 = vadd.f32 %v12696, %v12828
        %v12830 = vpop.f32.mrb[0].mxu0
        %v12831 = vpop.f32.mrb[0].mxu0
        %v12832 = vadd.f32 %v12699, %v12831
        %v12833 = vpop.f32.mrb[0].mxu0
        %12834 = vmatprep.mubr.bf16.mxu0 %v12579
        %12835 = vmatmul.mubr.bf16.gmra.mrb[0].mxu0 %v12280
        %v12836 = vpop.f32.mrb[0].mxu0
        %v12837 = vpop.f32.mrb[0].mxu0
        %v12838 = vpop.f32.mrb[0].mxu0
        %v12839 = vpop.f32.mrb[0].mxu0
        %12840 = vmatprep.mubr.bf16.mxu0 %v12582
        %12841 = vmatmul.mubr.bf16.gmra.mrb[0].mxu0 %v12294
        %v12842 = vpop.f32.mrb[0].mxu0
        %v12843 = vpop.f32.mrb[0].mxu0
        %v12844 = vpop.f32.mrb[0].mxu0
        %v12845 = vpop.f32.mrb[0].mxu0
        %12846 = vmatprep.mubr.bf16.mxu0 %v12585
        %12847 = vmatmul.mubr.bf16.gmra.mrb[0].mxu0 %v12304
        %v12848 = vpop.f32.mrb[0].mxu0
        %v12849 = vpop.f32.mrb[0].mxu0
        %v12850 = vpop.f32.mrb[0].mxu0
        %v12851 = vpop.f32.mrb[0].mxu0
        %12852 = vdwg.mxu0
        %vm12853 = vcmask 63491
        %12854 = vst.msk [vmem:[%s352 - $0x3] sm:$0x78] %vm12853, %v12769
        %vm12855 = vcmask 61441
        %12856 = vst.msk [vmem:[%s352 + $0x3] sm:$0x1e] %vm12855, %v12774
        %vm12857 = vcmask 64519
        %12858 = vst.msk [vmem:[%s352 + $0x1] sm:$0x80] %vm12857, %v12774
        %vm12859 = vcmask 59392
        %12860 = vst.msk [vmem:[%s352 + $0x9] sm:$0x7] %vm12859, %v12777
        %vm12861 = vcmask 64517
        %12862 = vst.msk [vmem:[%s352 + $0x7] sm:$0xe0] %vm12861, %v12777
        %vm12863 = vcmask 57344
        %12864 = vst.msk [vmem:[%s352 + $0xf] sm:$0x1] %vm12863, %v12782
        %12865 = vst.msk [vmem:[%s352 + $0x9] sm:$0x80] %vm12857, %v12785
        %12866 = vst.msk [vmem:[%s352 + $0x11] sm:$0x7] %vm12859, %v12790
        %12867 = vst.msk [vmem:[%s352 + $0xf] sm:$0xe0] %vm12861, %v12790
        %12868 = vst.msk [vmem:[%s352 + $0x17] sm:$0x1] %vm12863, %v12793
        %12869 = vst.msk [vmem:[%s352 + $0x15] sm:$0x78] %vm12853, %v12793
        %12870 = vst.msk [vmem:[%s352 + $0x1b] sm:$0x1e] %vm12855, %v12798
        %12871 = vst.msk [vmem:[%s352 + $0x1d] sm:$0x78] %vm12853, %v12805
        %12872 = vst.msk [vmem:[%s352 + $0x23] sm:$0x1e] %vm12855, %v12808
        %12873 = vst.msk [vmem:[%s352 + $0x21] sm:$0x80] %vm12857, %v12808
        %12874 = vst.msk [vmem:[%s352 + $0x29] sm:$0x7] %vm12859, %v12813
        %12875 = vst.msk [vmem:[%s352 + $0x27] sm:$0xe0] %vm12861, %v12813
        %12876 = vst.msk [vmem:[%s352 + $0x2f] sm:$0x1] %vm12863, %v12816
        %12877 = vst.msk [vmem:[%s352 + $0x29] sm:$0x80] %vm12857, %v12821
        %12878 = vst.msk [vmem:[%s352 + $0x31] sm:$0x7] %vm12859, %v12824
        %12879 = vst.msk [vmem:[%s352 + $0x2f] sm:$0xe0] %vm12861, %v12824
        %12880 = vst.msk [vmem:[%s352 + $0x37] sm:$0x1] %vm12863, %v12829
        %12881 = vst.msk [vmem:[%s352 + $0x35] sm:$0x78] %vm12853, %v12829
        %12882 = vst.msk [vmem:[%s352 + $0x3b] sm:$0x1e] %vm12855, %v12832
        %s12883 = sand.u32 %s247, 1
        %s12884 = scalar_lea.sflag [#allocation5], %s12883
        %s12885 = sand.u32 %s247, 1
        %s12886 = smul.addr %s12885, 64
        %s12887 = scalar_lea.vmem [#allocation4], %s12886
        // Predicated region
        $region61: #{encoder_forward.1} parent=59 // pred_check
          %p12888 = pneg %p257
        $region62: #{encoder_forward.1} parent=59 // pred_check_branch
          %12890 = sbr.rel (%p12888) target = $region64
        $region63: #{encoder_forward.1} parent=59 // pred_region
          %s12892 = ssub.s32 1024, 1024
          %12893 = vsyncadd %s12884, %s12892
          %s12894 = smul.addr %s24, 8
          %s12895 = smul.addr %s12894, 128
          %s12896 = scalar_lea.hbm %s10, %s12895
          %s12897 = sshll.u32 %s12887, 4
          %s12898 = int_to_ptr.vmem [resolvable:$true] %s12897
          %12903 = dma.vmem_to_hbm [thread:$0]  %s12898, 1024, %s12896, %s12884, 128, 128, 8
        $region64: #{encoder_forward.1} parent=59 // pred_fallthru
          _
      $region60: #{encoder_forward.1} parent=5 // pred_fallthru
        _
      %p12904 = scmp.le.s32.totalorder 2, %s19
      // Predicated region
      $region65: #{encoder_forward.1} parent=5 // pred_check
        %p12905 = pneg %p12904
      $region66: #{encoder_forward.1} parent=5 // pred_check_branch
        %12907 = sbr.rel (%p12905) target = $region68
      $region67: #{encoder_forward.1} parent=5 // pred_region
        %s12908 = ssub.s32 %s19, 2
        // Predicated region
        $region69: #{encoder_forward.1} parent=67 // pred_check
          %p12909 = pneg %p263
        $region70: #{encoder_forward.1} parent=67 // pred_check_branch
          %12911 = sbr.rel (%p12909) target = $region72
        $region71: #{encoder_forward.1} parent=67 // pred_region
          %s12912 = sand.u32 %s248, 1
          %s12913 = scalar_lea.sflag [#allocation5], %s12912
          %s12914 = sand.u32 %s248, 1
          %s12915 = smul.addr %s12914, 64
          %s12916 = scalar_lea.vmem [#allocation4], %s12915
          %12917 = dma.done %s12913, 1024
        $region72: #{encoder_forward.1} parent=67 // pred_fallthru
          _
      $region68: #{encoder_forward.1} parent=5 // pred_fallthru
        _
    $region6: #{encoder_forward.1} parent=1 // loop_footer
      %s23 = sadd.s32 1, %s19
    $region7: #{encoder_forward.1} parent=1 // loop_footer_branch
      %18 = sbr.rel target = $region3
    $region8: #{encoder_forward.1} parent=1 // loop_exit
      _
    %12918 = vsyncpa [#allocation5], 1
    %s12919 = scalar_lea.sflag [#allocation5], 1
    %12920 = vsyncpa %s12919, 1

</llo_original>
